<compile_context>
chip_gen: v7x
topology: tpu7x:2x2x1
jax: 0.10.0
libtpu: 0.0.40
codegen_flags: <defaults>
</compile_context>

<pallas_src>
import functools

import jax
import jax.numpy as jnp
from jax.experimental import pallas as pl
from jax.experimental.pallas import tpu as pltpu

NUM_INPUTS = 4
NUM_ACTIONS = 7          # len(SIMPLE_MOVEMENT) for gym-super-mario-bros
HEAD_WIDTH = 128         # lane-dense head output (7 probs + 1 value + zeros)


def _round_up(x, m):
    return ((x + m - 1) // m) * m


@functools.lru_cache(maxsize=None)
def _vmem_limit_bytes():
    """Generation-aware VMEM budget: 64 MiB on v5e/v6e, 32 MiB on v7x."""
    try:
        cap = int(getattr(pltpu.get_tpu_info(), "vmem_capacity_bytes", 128 << 20))
    except Exception:
        cap = 128 << 20
    return int(min(cap // 2, 64 << 20))


def _compiler_params():
    return pltpu.CompilerParams(
        dimension_semantics=("parallel",),
        vmem_limit_bytes=_vmem_limit_bytes(),
    )


def _batch_tiling(b):
    """(conv batch tile, head row tile, padded batch).  Tiles are powers of two
    that evenly divide the padded batch and give >= 2 grid steps when b >= 2,
    so megacore sharding engages and no tail block reads out of bounds."""
    if b <= 8:
        return 1, b, b
    head = 8
    while head * 2 <= min(256, b // 2):
        head *= 2
    conv = 1
    while conv * 2 <= min(16, b // 2):
        conv *= 2
    return conv, head, _round_up(b, head)


# ----------------------------------------------------------------------------
# Pallas kernels
# ----------------------------------------------------------------------------
def _conv_relu_kernel(x_ref, w_ref, b_ref, o_ref, *, khe, kwe, wp, lp):
    """Fused im2col + matmul + bias + ReLU for a stride-1 conv (post s2d).

    x_ref: (bt, rows, cin)  flattened (h*w) spatial rows, zero padded.
    w_ref: (khe*kwe*cin, cout) kernel-position-major weight matrix.
    b_ref: (1, cout) f32 bias.
    o_ref: (bt*lp, cout) "wide" output rows (cols >= OW are garbage, dropped
           by the wrapper); lp = round_up(OH*wp, 8).
    Each kernel position (i, j) is a shifted contiguous row window of x, so
    no patch matrix is ever materialized in HBM.
    """
    bt = x_ref.shape[0]
    cin = x_ref.shape[2]
    acc = None
    for k in range(khe * kwe):
        off = (k // kwe) * wp + (k % kwe)
        xs = x_ref[:, pl.ds(off, lp), :]            # (bt, lp, cin)
        xs = xs.reshape(bt * lp, cin)               # lp % 8 == 0 -> cheap fold
        wk = w_ref[pl.ds(k * cin, cin), :]
        part = jnp.dot(xs, wk, preferred_element_type=jnp.float32)
        acc = part if acc is None else acc + part
    y = jnp.maximum(acc + b_ref[...], 0.0)
    o_ref[...] = y.astype(o_ref.dtype)


def _fc_heads_kernel(x_ref, w1_ref, b1_ref, w2_ref, b2_ref, o_ref):
    """Fused fc1 (+ReLU) -> [actor|critic|zeros] matmul -> exact softmax.

    Output is a single lane-dense (bm, 128) f32 block: probs in lanes 0..6,
    value in lane 7, zeros elsewhere (no masked sub-tile stores)."""
    h = jnp.dot(x_ref[...], w1_ref[...], preferred_element_type=jnp.float32)
    h = jnp.maximum(h + b1_ref[...], 0.0)
    z = jnp.dot(h.astype(w2_ref.dtype), w2_ref[...],
                preferred_element_type=jnp.float32) + b2_ref[...]
    lane = jax.lax.broadcasted_iota(jnp.int32, z.shape, 1)
    is_logit = lane < NUM_ACTIONS
    m = jnp.max(jnp.where(is_logit, z, -1e30), axis=1, keepdims=True)
    e = jnp.where(is_logit, jnp.exp(z - m), 0.0)
    denom = jnp.sum(e, axis=1, keepdims=True)
    p = e / denom                                   # exact divide (policy sums to 1)
    out = p + jnp.where(lane == NUM_ACTIONS, z, 0.0)
    o_ref[...] = out.astype(o_ref.dtype)


# ----------------------------------------------------------------------------
# Kernel wrappers
# ----------------------------------------------------------------------------
def _conv_relu(x, w_mat, b_mat, *, kh, kw, f, bt):
    """Valid conv + ReLU on NHWC bf16 input via space-to-depth(f) and the
    fused shifted-window matmul kernel.  Returns (B, OH, OW, Cout) bf16."""
    B, H, W, C = x.shape
    assert kh % f == 0 and kw % f == 0 and H % f == 0 and W % f == 0
    khe, kwe = kh // f, kw // f
    if f > 1:                                       # space-to-depth (layout glue)
        x = x.reshape(B, H // f, f, W // f, f, C)
        x = x.transpose(0, 1, 3, 2, 4, 5)
        x = x.reshape(B, H // f, W // f, f * f * C)
    hp, wp, cin = x.shape[1], x.shape[2], x.shape[3]
    oh, ow = hp - khe + 1, wp - kwe + 1
    lp = _round_up(oh * wp, 8)                      # wide output rows per image
    rows = _round_up((khe - 1) * wp + (kwe - 1) + lp, 8)
    x = x.reshape(B, hp * wp, cin)
    x = jnp.pad(x, ((0, 0), (0, rows - hp * wp), (0, 0)))
    cout = w_mat.shape[1]
    assert B % bt == 0

    y = pl.pallas_call(
        functools.partial(_conv_relu_kernel, khe=khe, kwe=kwe, wp=wp, lp=lp),
        out_shape=jax.ShapeDtypeStruct((B * lp, cout), jnp.bfloat16),
        grid=(B // bt,),
        in_specs=[
            pl.BlockSpec((bt, rows, cin), lambda i: (i, 0, 0)),
            pl.BlockSpec((khe * kwe * cin, cout), lambda i: (0, 0)),   # resident
            pl.BlockSpec((1, cout), lambda i: (0, 0)),
        ],
        out_specs=pl.BlockSpec((bt * lp, cout), lambda i: (i, 0)),
        compiler_params=_compiler_params(),
    )(x, w_mat, b_mat)

    # Drop the garbage columns (ow..wp-1) / padding rows; XLA fuses this slice
    # into the next layer's space-to-depth copy.
    y = y.reshape(B, lp, cout)[:, :oh * wp, :]
    y = y.reshape(B, oh, wp, cout)[:, :, :ow, :]
    return y


def pallas_fc_heads(x, w1, b1, w2, b2, *, bm):
    m, k = x.shape
    n1 = w1.shape[1]
    n2 = w2.shape[1]
    assert m % bm == 0
    return pl.pallas_call(
        _fc_heads_kernel,
        out_shape=jax.ShapeDtypeStruct((m, n2), jnp.float32),
        grid=(m // bm,),
        in_specs=[
            pl.BlockSpec((bm, k), lambda i: (i, 0)),
            pl.BlockSpec((k, n1), lambda i: (0, 0)),    # fc1 weight, resident
            pl.BlockSpec((1, n1), lambda i: (0, 0)),
            pl.BlockSpec((n1, n2), lambda i: (0, 0)),   # head weight, resident
            pl.BlockSpec((1, n2), lambda i: (0, 0)),
        ],
        out_specs=pl.BlockSpec((bm, n2), lambda i: (i, 0)),
        compiler_params=_compiler_params(),
    )(x, w1, b1, w2, b2)


# ----------------------------------------------------------------------------
# Parameters: PyTorch-layout synthetic init + one-time kernel-layout prep.
# ----------------------------------------------------------------------------
def init_params(key):
    ks = jax.random.split(key, 12)
    s = 0.05

    def nrm(k, shape):
        return s * jax.random.normal(k, shape, dtype=jnp.float32)

    return {
        "conv1_w": nrm(ks[0], (32, NUM_INPUTS, 8, 8)),
        "conv1_b": nrm(ks[1], (32,)),
        "conv2_w": nrm(ks[2], (64, 32, 4, 4)),
        "conv2_b": nrm(ks[3], (64,)),
        "conv3_w": nrm(ks[4], (64, 64, 3, 3)),
        "conv3_b": nrm(ks[5], (64,)),
        "fc1_w": nrm(ks[6], (7 * 7 * 64, 512)),     # stored (in, out), NCHW-flat rows
        "fc1_b": nrm(ks[7], (512,)),
        "actor_w": nrm(ks[8], (512, NUM_ACTIONS)),
        "actor_b": nrm(ks[9], (NUM_ACTIONS,)),
        "critic_w": nrm(ks[10], (512, 1)),
        "critic_b": nrm(ks[11], (1,)),
    }


def _prep_conv_weight(w, b, f):
    """(Cout,Cin,KH,KW) PyTorch weight -> (KH*KW*Cin, Cout) matrix whose rows
    are kernel-position-major ((bi,bj) after space-to-depth(f)), with per-
    position channel order (di, dj, cin) matching the s2d input layout."""
    cout, cin, kh, kw = w.shape
    w = jnp.transpose(w, (2, 3, 1, 0))                      # (kh, kw, cin, cout)
    if f > 1:
        w = w.reshape(kh // f, f, kw // f, f, cin, cout)
        w = jnp.transpose(w, (0, 2, 1, 3, 4, 5))            # (bi, bj, di, dj, cin, cout)
    w = w.reshape(kh * kw * cin, cout)
    return w.astype(jnp.bfloat16), b.astype(jnp.float32).reshape(1, cout)


def prepare_params(params):
    """One-time (outside the hot path) conversion: space-to-depth/NHWC weight
    matrices with real channel counts (no 128-padding), fc1 rows permuted to
    the NHWC flatten order, actor/critic concatenated into one lane-dense
    (512, 128) head, bf16 operand cast."""
    c1_w, c1_b = _prep_conv_weight(params["conv1_w"], params["conv1_b"], f=4)
    c2_w, c2_b = _prep_conv_weight(params["conv2_w"], params["conv2_b"], f=2)
    c3_w, c3_b = _prep_conv_weight(params["conv3_w"], params["conv3_b"], f=1)
    # fc1: PyTorch flattens NCHW (c,h,w); our conv3 output flattens NHWC.
    fw = params["fc1_w"].reshape(64, 7, 7, 512).transpose(1, 2, 0, 3)
    fw = fw.reshape(7 * 7 * 64, 512)
    head_w = jnp.concatenate([params["actor_w"], params["critic_w"]], axis=1)
    head_b = jnp.concatenate([params["actor_b"], params["critic_b"]], axis=0)
    head_w = jnp.pad(head_w, ((0, 0), (0, HEAD_WIDTH - head_w.shape[1])))
    head_b = jnp.pad(head_b, (0, HEAD_WIDTH - head_b.shape[0]))
    # Invariant: padded head lanes must stay exactly zero (they share the
    # lane-dense output block with the probs/value).
    assert float(jnp.max(jnp.abs(head_w[:, NUM_ACTIONS + 1:]))) == 0.0
    assert float(jnp.max(jnp.abs(head_b[NUM_ACTIONS + 1:]))) == 0.0
    return {
        "c1_w": c1_w, "c1_b": c1_b,
        "c2_w": c2_w, "c2_b": c2_b,
        "c3_w": c3_w, "c3_b": c3_b,
        "fc1_w": fw.astype(jnp.bfloat16),
        "fc1_b": params["fc1_b"].astype(jnp.float32).reshape(1, 512),
        "head_w": head_w.astype(jnp.bfloat16),
        "head_b": head_b.astype(jnp.float32).reshape(1, HEAD_WIDTH),
    }


# ----------------------------------------------------------------------------
# Forward pass
# ----------------------------------------------------------------------------
@jax.jit
def actor_critic_forward(prepped, x):
    """x: (B, 4, 84, 84) float32 NCHW (same interface as the PyTorch module)."""
    B = x.shape[0]
    conv_bt, head_bm, bp = _batch_tiling(B)
    x = jnp.transpose(x, (0, 2, 3, 1)).astype(jnp.bfloat16)          # NHWC, bf16
    if bp > B:                                                       # full tiles only
        x = jnp.pad(x, ((0, bp - B), (0, 0), (0, 0), (0, 0)))
    x = _conv_relu(x, prepped["c1_w"], prepped["c1_b"],
                   kh=8, kw=8, f=4, bt=conv_bt)                      # (Bp,20,20,32)
    x = _conv_relu(x, prepped["c2_w"], prepped["c2_b"],
                   kh=4, kw=4, f=2, bt=conv_bt)                      # (Bp, 9, 9,64)
    x = _conv_relu(x, prepped["c3_w"], prepped["c3_b"],
                   kh=3, kw=3, f=1, bt=conv_bt)                      # (Bp, 7, 7,64)
    x = x.reshape(bp, 7 * 7 * 64)                                    # NHWC flatten
    out = pallas_fc_heads(x, prepped["fc1_w"], prepped["fc1_b"],
                          prepped["head_w"], prepped["head_b"], bm=head_bm)
    policy = out[:B, :NUM_ACTIONS]
    value = out[:B, NUM_ACTIONS:NUM_ACTIONS + 1]
    return policy, value


def reference_forward(params, x):
    """Pure-JAX f32 replica of the PyTorch module (numerics cross-check)."""
    def conv(x, w, b, stride):
        y = jax.lax.conv_general_dilated(
            x, w, window_strides=(stride, stride), padding="VALID",
            dimension_numbers=("NCHW", "OIHW", "NCHW"))
        return jax.nn.relu(y + b[None, :, None, None])

    x = conv(x, params["conv1_w"], params["conv1_b"], 4)
    x = conv(x, params["conv2_w"], params["conv2_b"], 2)
    x = conv(x, params["conv3_w"], params["conv3_b"], 1)
    x = x.reshape(x.shape[0], -1)
    x = jax.nn.relu(x @ params["fc1_w"] + params["fc1_b"])
    policy = jax.nn.softmax(x @ params["actor_w"] + params["actor_b"], axis=1)
    value = x @ params["critic_w"] + params["critic_b"]
    return policy, value


if __name__ == "__main__":
    key = jax.random.PRNGKey(0)
    pkey, xkey = jax.random.split(key)
    params = init_params(pkey)
    prepped = prepare_params(params)    # one-time layout prep, outside jit

    # Input must be 84x84 so conv3 yields 7x7 (matches fc1), as the module implies.
    batch = 2
    x = jax.random.normal(xkey, (batch, NUM_INPUTS, 84, 84), dtype=jnp.float32)

    policy, value = actor_critic_forward(prepped, x)
    policy, value = jax.block_until_ready((policy, value))

    assert policy.shape == (batch, NUM_ACTIONS)
    assert value.shape == (batch, 1)
    assert bool(jnp.all(jnp.isfinite(policy)))
    assert bool(jnp.all(jnp.isfinite(value)))
    # exact-divide softmax: rows sum to 1 to f32 precision
    assert jnp.allclose(jnp.sum(policy, axis=1), 1.0, atol=1e-3)

    # Cross-check the bf16 Pallas pipeline against the pure-JAX f32 reference.
    ref_policy, ref_value = reference_forward(params, x)
    assert float(jnp.max(jnp.abs(policy - ref_policy))) < 5e-2
    assert float(jnp.max(jnp.abs(value - ref_value))) < 2e-1

    print("KERNEL_OK")
</pallas_src>

<mosaic_0001>
module attributes {stable_mosaic.version = 11 : i64} {
  func.func @_conv_relu_kernel(%arg0: i32, %arg1: memref<1x448x64xbf16, #tpu.memory_space<vmem>>, %arg2: memref<256x32xbf16, #tpu.memory_space<vmem>>, %arg3: memref<1x32xf32, #tpu.memory_space<vmem>>, %arg4: memref<424x32xbf16, #tpu.memory_space<vmem>>) attributes {dimension_semantics = [#tpu.dimension_semantics<parallel>], iteration_bounds = array<i64: 2>, scalar_prefetch = 0 : i64, scratch_operands = 0 : i64, tpu.core_type = #tpu.core_type<tc>, window_params = [{transform_indices = @transform_0, window_bounds = array<i64: 1, 448, 64>}, {pipeline_mode = #tpu.pipeline_mode<synchronous>, transform_indices = @transform_1, window_bounds = array<i64: 256, 32>}, {pipeline_mode = #tpu.pipeline_mode<synchronous>, transform_indices = @transform_2, window_bounds = array<i64: 1, 32>}, {transform_indices = @transform_3, window_bounds = array<i64: 424, 32>}]} {
    %c0 = arith.constant 0 : index
    %c0_0 = arith.constant 0 : index
    %c0_1 = arith.constant 0 : index
    %0 = vector.load %arg1[%c0, %c0_0, %c0_1] : memref<1x448x64xbf16, #tpu.memory_space<vmem>>, vector<1x424x64xbf16>
    %1 = vector.shape_cast %0 : vector<1x424x64xbf16> to vector<424x64xbf16>
    %c0_2 = arith.constant 0 : index
    %c0_3 = arith.constant 0 : index
    %2 = vector.load %arg2[%c0_2, %c0_3] : memref<256x32xbf16, #tpu.memory_space<vmem>>, vector<64x32xbf16>
    %cst = arith.constant dense<0.000000e+00> : vector<424x32xf32>
    %3 = tpu.matmul %1, %2, %cst {dimension_numbers = #tpu.dot_dimension_numbers<[1], [0], [0], [1], [0, 0, 1, 1], [], []>} : vector<424x64xbf16>, vector<64x32xbf16>, vector<424x32xf32> -> vector<424x32xf32>
    %c0_4 = arith.constant 0 : index
    %c1 = arith.constant 1 : index
    %c0_5 = arith.constant 0 : index
    %4 = vector.load %arg1[%c0_4, %c1, %c0_5] : memref<1x448x64xbf16, #tpu.memory_space<vmem>>, vector<1x424x64xbf16>
    %5 = vector.shape_cast %4 : vector<1x424x64xbf16> to vector<424x64xbf16>
    %c64 = arith.constant 64 : index
    %c0_6 = arith.constant 0 : index
    %6 = vector.load %arg2[%c64, %c0_6] : memref<256x32xbf16, #tpu.memory_space<vmem>>, vector<64x32xbf16>
    %cst_7 = arith.constant dense<0.000000e+00> : vector<424x32xf32>
    %7 = tpu.matmul %5, %6, %cst_7 {dimension_numbers = #tpu.dot_dimension_numbers<[1], [0], [0], [1], [0, 0, 1, 1], [], []>} : vector<424x64xbf16>, vector<64x32xbf16>, vector<424x32xf32> -> vector<424x32xf32>
    %8 = arith.addf %3, %7 : vector<424x32xf32>
    %c0_8 = arith.constant 0 : index
    %c21 = arith.constant 21 : index
    %c0_9 = arith.constant 0 : index
    %9 = vector.load %arg1[%c0_8, %c21, %c0_9] : memref<1x448x64xbf16, #tpu.memory_space<vmem>>, vector<1x424x64xbf16>
    %10 = vector.shape_cast %9 : vector<1x424x64xbf16> to vector<424x64xbf16>
    %c128 = arith.constant 128 : index
    %c0_10 = arith.constant 0 : index
    %11 = vector.load %arg2[%c128, %c0_10] : memref<256x32xbf16, #tpu.memory_space<vmem>>, vector<64x32xbf16>
    %cst_11 = arith.constant dense<0.000000e+00> : vector<424x32xf32>
    %12 = tpu.matmul %10, %11, %cst_11 {dimension_numbers = #tpu.dot_dimension_numbers<[1], [0], [0], [1], [0, 0, 1, 1], [], []>} : vector<424x64xbf16>, vector<64x32xbf16>, vector<424x32xf32> -> vector<424x32xf32>
    %13 = arith.addf %8, %12 : vector<424x32xf32>
    %c0_12 = arith.constant 0 : index
    %c22 = arith.constant 22 : index
    %c0_13 = arith.constant 0 : index
    %14 = vector.load %arg1[%c0_12, %c22, %c0_13] : memref<1x448x64xbf16, #tpu.memory_space<vmem>>, vector<1x424x64xbf16>
    %15 = vector.shape_cast %14 : vector<1x424x64xbf16> to vector<424x64xbf16>
    %c192 = arith.constant 192 : index
    %c0_14 = arith.constant 0 : index
    %16 = vector.load %arg2[%c192, %c0_14] : memref<256x32xbf16, #tpu.memory_space<vmem>>, vector<64x32xbf16>
    %cst_15 = arith.constant dense<0.000000e+00> : vector<424x32xf32>
    %17 = tpu.matmul %15, %16, %cst_15 {dimension_numbers = #tpu.dot_dimension_numbers<[1], [0], [0], [1], [0, 0, 1, 1], [], []>} : vector<424x64xbf16>, vector<64x32xbf16>, vector<424x32xf32> -> vector<424x32xf32>
    %18 = arith.addf %13, %17 : vector<424x32xf32>
    %c0_16 = arith.constant 0 : index
    %c0_17 = arith.constant 0 : index
    %19 = vector.load %arg3[%c0_16, %c0_17] : memref<1x32xf32, #tpu.memory_space<vmem>>, vector<1x32xf32>
    %20 = vector.broadcast %19 : vector<1x32xf32> to vector<424x32xf32>
    %21 = arith.addf %18, %20 : vector<424x32xf32>
    %cst_18 = arith.constant 0.000000e+00 : f32
    %22 = vector.broadcast %cst_18 : f32 to vector<424x32xf32>
    %23 = arith.maximumf %21, %22 : vector<424x32xf32>
    %24 = arith.truncf %23 : vector<424x32xf32> to vector<424x32xbf16>
    %c0_19 = arith.constant 0 : index
    %c0_20 = arith.constant 0 : index
    %25 = vector.load %arg4[%c0_19, %c0_20] : memref<424x32xbf16, #tpu.memory_space<vmem>>, vector<424x32xbf16>
    tpu.vector_store %arg4[%c0_19, %c0_20], %24 {strides = array<i32>} : memref<424x32xbf16, #tpu.memory_space<vmem>>, vector<424x32xbf16>,
    return
  }
  func.func @transform_0(%arg0: i32) -> (i32, i32, i32) {
    %c0_i32 = arith.constant 0 : i32
    %c0_i32_0 = arith.constant 0 : i32
    %c0_i32_1 = arith.constant 0 : i32
    return %arg0, %c0_i32, %c0_i32_0 : i32, i32, i32
  }
  func.func @transform_1(%arg0: i32) -> (i32, i32) {
    %c0_i32 = arith.constant 0 : i32
    %c0_i32_0 = arith.constant 0 : i32
    %c0_i32_1 = arith.constant 0 : i32
    return %c0_i32, %c0_i32_0 : i32, i32
  }
  func.func @transform_2(%arg0: i32) -> (i32, i32) {
    %c0_i32 = arith.constant 0 : i32
    %c0_i32_0 = arith.constant 0 : i32
    %c0_i32_1 = arith.constant 0 : i32
    return %c0_i32, %c0_i32_0 : i32, i32
  }
  func.func @transform_3(%arg0: i32) -> (i32, i32) {
    %c0_i32 = arith.constant 0 : i32
    %c0_i32_0 = arith.constant 0 : i32
    return %arg0, %c0_i32 : i32, i32
  }
}

module attributes {stable_mosaic.version = 11 : i64} {
  func.func @_conv_relu_kernel(%arg0: i32, %arg1: memref<1x112x128xbf16, #tpu.memory_space<vmem>>, %arg2: memref<512x64xbf16, #tpu.memory_space<vmem>>, %arg3: memref<1x64xf32, #tpu.memory_space<vmem>>, %arg4: memref<96x64xbf16, #tpu.memory_space<vmem>>) attributes {dimension_semantics = [#tpu.dimension_semantics<parallel>], iteration_bounds = array<i64: 2>, scalar_prefetch = 0 : i64, scratch_operands = 0 : i64, tpu.core_type = #tpu.core_type<tc>, window_params = [{transform_indices = @transform_0, window_bounds = array<i64: 1, 112, 128>}, {pipeline_mode = #tpu.pipeline_mode<synchronous>, transform_indices = @transform_1, window_bounds = array<i64: 512, 64>}, {pipeline_mode = #tpu.pipeline_mode<synchronous>, transform_indices = @transform_2, window_bounds = array<i64: 1, 64>}, {transform_indices = @transform_3, window_bounds = array<i64: 96, 64>}]} {
    %c0 = arith.constant 0 : index
    %c0_0 = arith.constant 0 : index
    %c0_1 = arith.constant 0 : index
    %0 = vector.load %arg1[%c0, %c0_0, %c0_1] : memref<1x112x128xbf16, #tpu.memory_space<vmem>>, vector<1x96x128xbf16>
    %1 = vector.shape_cast %0 : vector<1x96x128xbf16> to vector<96x128xbf16>
    %c0_2 = arith.constant 0 : index
    %c0_3 = arith.constant 0 : index
    %2 = vector.load %arg2[%c0_2, %c0_3] : memref<512x64xbf16, #tpu.memory_space<vmem>>, vector<128x64xbf16>
    %cst = arith.constant dense<0.000000e+00> : vector<96x64xf32>
    %3 = tpu.matmul %1, %2, %cst {dimension_numbers = #tpu.dot_dimension_numbers<[1], [0], [0], [1], [0, 0, 1, 1], [], []>} : vector<96x128xbf16>, vector<128x64xbf16>, vector<96x64xf32> -> vector<96x64xf32>
    %c0_4 = arith.constant 0 : index
    %c1 = arith.constant 1 : index
    %c0_5 = arith.constant 0 : index
    %4 = vector.load %arg1[%c0_4, %c1, %c0_5] : memref<1x112x128xbf16, #tpu.memory_space<vmem>>, vector<1x96x128xbf16>
    %5 = vector.shape_cast %4 : vector<1x96x128xbf16> to vector<96x128xbf16>
    %c128 = arith.constant 128 : index
    %c0_6 = arith.constant 0 : index
    %6 = vector.load %arg2[%c128, %c0_6] : memref<512x64xbf16, #tpu.memory_space<vmem>>, vector<128x64xbf16>
    %cst_7 = arith.constant dense<0.000000e+00> : vector<96x64xf32>
    %7 = tpu.matmul %5, %6, %cst_7 {dimension_numbers = #tpu.dot_dimension_numbers<[1], [0], [0], [1], [0, 0, 1, 1], [], []>} : vector<96x128xbf16>, vector<128x64xbf16>, vector<96x64xf32> -> vector<96x64xf32>
    %8 = arith.addf %3, %7 : vector<96x64xf32>
    %c0_8 = arith.constant 0 : index
    %c10 = arith.constant 10 : index
    %c0_9 = arith.constant 0 : index
    %9 = vector.load %arg1[%c0_8, %c10, %c0_9] : memref<1x112x128xbf16, #tpu.memory_space<vmem>>, vector<1x96x128xbf16>
    %10 = vector.shape_cast %9 : vector<1x96x128xbf16> to vector<96x128xbf16>
    %c256 = arith.constant 256 : index
    %c0_10 = arith.constant 0 : index
    %11 = vector.load %arg2[%c256, %c0_10] : memref<512x64xbf16, #tpu.memory_space<vmem>>, vector<128x64xbf16>
    %cst_11 = arith.constant dense<0.000000e+00> : vector<96x64xf32>
    %12 = tpu.matmul %10, %11, %cst_11 {dimension_numbers = #tpu.dot_dimension_numbers<[1], [0], [0], [1], [0, 0, 1, 1], [], []>} : vector<96x128xbf16>, vector<128x64xbf16>, vector<96x64xf32> -> vector<96x64xf32>
    %13 = arith.addf %8, %12 : vector<96x64xf32>
    %c0_12 = arith.constant 0 : index
    %c11 = arith.constant 11 : index
    %c0_13 = arith.constant 0 : index
    %14 = vector.load %arg1[%c0_12, %c11, %c0_13] : memref<1x112x128xbf16, #tpu.memory_space<vmem>>, vector<1x96x128xbf16>
    %15 = vector.shape_cast %14 : vector<1x96x128xbf16> to vector<96x128xbf16>
    %c384 = arith.constant 384 : index
    %c0_14 = arith.constant 0 : index
    %16 = vector.load %arg2[%c384, %c0_14] : memref<512x64xbf16, #tpu.memory_space<vmem>>, vector<128x64xbf16>
    %cst_15 = arith.constant dense<0.000000e+00> : vector<96x64xf32>
    %17 = tpu.matmul %15, %16, %cst_15 {dimension_numbers = #tpu.dot_dimension_numbers<[1], [0], [0], [1], [0, 0, 1, 1], [], []>} : vector<96x128xbf16>, vector<128x64xbf16>, vector<96x64xf32> -> vector<96x64xf32>
    %18 = arith.addf %13, %17 : vector<96x64xf32>
    %c0_16 = arith.constant 0 : index
    %c0_17 = arith.constant 0 : index
    %19 = vector.load %arg3[%c0_16, %c0_17] : memref<1x64xf32, #tpu.memory_space<vmem>>, vector<1x64xf32>
    %20 = vector.broadcast %19 : vector<1x64xf32> to vector<96x64xf32>
    %21 = arith.addf %18, %20 : vector<96x64xf32>
    %cst_18 = arith.constant 0.000000e+00 : f32
    %22 = vector.broadcast %cst_18 : f32 to vector<96x64xf32>
    %23 = arith.maximumf %21, %22 : vector<96x64xf32>
    %24 = arith.truncf %23 : vector<96x64xf32> to vector<96x64xbf16>
    %c0_19 = arith.constant 0 : index
    %c0_20 = arith.constant 0 : index
    %25 = vector.load %arg4[%c0_19, %c0_20] : memref<96x64xbf16, #tpu.memory_space<vmem>>, vector<96x64xbf16>
    tpu.vector_store %arg4[%c0_19, %c0_20], %24 {strides = array<i32>} : memref<96x64xbf16, #tpu.memory_space<vmem>>, vector<96x64xbf16>,
    return
  }
  func.func @transform_0(%arg0: i32) -> (i32, i32, i32) {
    %c0_i32 = arith.constant 0 : i32
    %c0_i32_0 = arith.constant 0 : i32
    %c0_i32_1 = arith.constant 0 : i32
    return %arg0, %c0_i32, %c0_i32_0 : i32, i32, i32
  }
  func.func @transform_1(%arg0: i32) -> (i32, i32) {
    %c0_i32 = arith.constant 0 : i32
    %c0_i32_0 = arith.constant 0 : i32
    %c0_i32_1 = arith.constant 0 : i32
    return %c0_i32, %c0_i32_0 : i32, i32
  }
  func.func @transform_2(%arg0: i32) -> (i32, i32) {
    %c0_i32 = arith.constant 0 : i32
    %c0_i32_0 = arith.constant 0 : i32
    %c0_i32_1 = arith.constant 0 : i32
    return %c0_i32, %c0_i32_0 : i32, i32
  }
  func.func @transform_3(%arg0: i32) -> (i32, i32) {
    %c0_i32 = arith.constant 0 : i32
    %c0_i32_0 = arith.constant 0 : i32
    return %arg0, %c0_i32 : i32, i32
  }
}

module attributes {stable_mosaic.version = 11 : i64} {
  func.func @_conv_relu_kernel(%arg0: i32, %arg1: memref<1x88x64xbf16, #tpu.memory_space<vmem>>, %arg2: memref<576x64xbf16, #tpu.memory_space<vmem>>, %arg3: memref<1x64xf32, #tpu.memory_space<vmem>>, %arg4: memref<64x64xbf16, #tpu.memory_space<vmem>>) attributes {dimension_semantics = [#tpu.dimension_semantics<parallel>], iteration_bounds = array<i64: 2>, scalar_prefetch = 0 : i64, scratch_operands = 0 : i64, tpu.core_type = #tpu.core_type<tc>, window_params = [{transform_indices = @transform_0, window_bounds = array<i64: 1, 88, 64>}, {pipeline_mode = #tpu.pipeline_mode<synchronous>, transform_indices = @transform_1, window_bounds = array<i64: 576, 64>}, {pipeline_mode = #tpu.pipeline_mode<synchronous>, transform_indices = @transform_2, window_bounds = array<i64: 1, 64>}, {transform_indices = @transform_3, window_bounds = array<i64: 64, 64>}]} {
    %c0 = arith.constant 0 : index
    %c0_0 = arith.constant 0 : index
    %c0_1 = arith.constant 0 : index
    %0 = vector.load %arg1[%c0, %c0_0, %c0_1] : memref<1x88x64xbf16, #tpu.memory_space<vmem>>, vector<1x64x64xbf16>
    %1 = vector.shape_cast %0 : vector<1x64x64xbf16> to vector<64x64xbf16>
    %c0_2 = arith.constant 0 : index
    %c0_3 = arith.constant 0 : index
    %2 = vector.load %arg2[%c0_2, %c0_3] : memref<576x64xbf16, #tpu.memory_space<vmem>>, vector<64x64xbf16>
    %cst = arith.constant dense<0.000000e+00> : vector<64x64xf32>
    %3 = tpu.matmul %1, %2, %cst {dimension_numbers = #tpu.dot_dimension_numbers<[1], [0], [0], [1], [0, 0, 1, 1], [], []>} : vector<64x64xbf16>, vector<64x64xbf16>, vector<64x64xf32> -> vector<64x64xf32>
    %c0_4 = arith.constant 0 : index
    %c1 = arith.constant 1 : index
    %c0_5 = arith.constant 0 : index
    %4 = vector.load %arg1[%c0_4, %c1, %c0_5] : memref<1x88x64xbf16, #tpu.memory_space<vmem>>, vector<1x64x64xbf16>
    %5 = vector.shape_cast %4 : vector<1x64x64xbf16> to vector<64x64xbf16>
    %c64 = arith.constant 64 : index
    %c0_6 = arith.constant 0 : index
    %6 = vector.load %arg2[%c64, %c0_6] : memref<576x64xbf16, #tpu.memory_space<vmem>>, vector<64x64xbf16>
    %cst_7 = arith.constant dense<0.000000e+00> : vector<64x64xf32>
    %7 = tpu.matmul %5, %6, %cst_7 {dimension_numbers = #tpu.dot_dimension_numbers<[1], [0], [0], [1], [0, 0, 1, 1], [], []>} : vector<64x64xbf16>, vector<64x64xbf16>, vector<64x64xf32> -> vector<64x64xf32>
    %8 = arith.addf %3, %7 : vector<64x64xf32>
    %c0_8 = arith.constant 0 : index
    %c2 = arith.constant 2 : index
    %c0_9 = arith.constant 0 : index
    %9 = vector.load %arg1[%c0_8, %c2, %c0_9] : memref<1x88x64xbf16, #tpu.memory_space<vmem>>, vector<1x64x64xbf16>
    %10 = vector.shape_cast %9 : vector<1x64x64xbf16> to vector<64x64xbf16>
    %c128 = arith.constant 128 : index
    %c0_10 = arith.constant 0 : index
    %11 = vector.load %arg2[%c128, %c0_10] : memref<576x64xbf16, #tpu.memory_space<vmem>>, vector<64x64xbf16>
    %cst_11 = arith.constant dense<0.000000e+00> : vector<64x64xf32>
    %12 = tpu.matmul %10, %11, %cst_11 {dimension_numbers = #tpu.dot_dimension_numbers<[1], [0], [0], [1], [0, 0, 1, 1], [], []>} : vector<64x64xbf16>, vector<64x64xbf16>, vector<64x64xf32> -> vector<64x64xf32>
    %13 = arith.addf %8, %12 : vector<64x64xf32>
    %c0_12 = arith.constant 0 : index
    %c9 = arith.constant 9 : index
    %c0_13 = arith.constant 0 : index
    %14 = vector.load %arg1[%c0_12, %c9, %c0_13] : memref<1x88x64xbf16, #tpu.memory_space<vmem>>, vector<1x64x64xbf16>
    %15 = vector.shape_cast %14 : vector<1x64x64xbf16> to vector<64x64xbf16>
    %c192 = arith.constant 192 : index
    %c0_14 = arith.constant 0 : index
    %16 = vector.load %arg2[%c192, %c0_14] : memref<576x64xbf16, #tpu.memory_space<vmem>>, vector<64x64xbf16>
    %cst_15 = arith.constant dense<0.000000e+00> : vector<64x64xf32>
    %17 = tpu.matmul %15, %16, %cst_15 {dimension_numbers = #tpu.dot_dimension_numbers<[1], [0], [0], [1], [0, 0, 1, 1], [], []>} : vector<64x64xbf16>, vector<64x64xbf16>, vector<64x64xf32> -> vector<64x64xf32>
    %18 = arith.addf %13, %17 : vector<64x64xf32>
    %c0_16 = arith.constant 0 : index
    %c10 = arith.constant 10 : index
    %c0_17 = arith.constant 0 : index
    %19 = vector.load %arg1[%c0_16, %c10, %c0_17] : memref<1x88x64xbf16, #tpu.memory_space<vmem>>, vector<1x64x64xbf16>
    %20 = vector.shape_cast %19 : vector<1x64x64xbf16> to vector<64x64xbf16>
    %c256 = arith.constant 256 : index
    %c0_18 = arith.constant 0 : index
    %21 = vector.load %arg2[%c256, %c0_18] : memref<576x64xbf16, #tpu.memory_space<vmem>>, vector<64x64xbf16>
    %cst_19 = arith.constant dense<0.000000e+00> : vector<64x64xf32>
    %22 = tpu.matmul %20, %21, %cst_19 {dimension_numbers = #tpu.dot_dimension_numbers<[1], [0], [0], [1], [0, 0, 1, 1], [], []>} : vector<64x64xbf16>, vector<64x64xbf16>, vector<64x64xf32> -> vector<64x64xf32>
    %23 = arith.addf %18, %22 : vector<64x64xf32>
    %c0_20 = arith.constant 0 : index
    %c11 = arith.constant 11 : index
    %c0_21 = arith.constant 0 : index
    %24 = vector.load %arg1[%c0_20, %c11, %c0_21] : memref<1x88x64xbf16, #tpu.memory_space<vmem>>, vector<1x64x64xbf16>
    %25 = vector.shape_cast %24 : vector<1x64x64xbf16> to vector<64x64xbf16>
    %c320 = arith.constant 320 : index
    %c0_22 = arith.constant 0 : index
    %26 = vector.load %arg2[%c320, %c0_22] : memref<576x64xbf16, #tpu.memory_space<vmem>>, vector<64x64xbf16>
    %cst_23 = arith.constant dense<0.000000e+00> : vector<64x64xf32>
    %27 = tpu.matmul %25, %26, %cst_23 {dimension_numbers = #tpu.dot_dimension_numbers<[1], [0], [0], [1], [0, 0, 1, 1], [], []>} : vector<64x64xbf16>, vector<64x64xbf16>, vector<64x64xf32> -> vector<64x64xf32>
    %28 = arith.addf %23, %27 : vector<64x64xf32>
    %c0_24 = arith.constant 0 : index
    %c18 = arith.constant 18 : index
    %c0_25 = arith.constant 0 : index
    %29 = vector.load %arg1[%c0_24, %c18, %c0_25] : memref<1x88x64xbf16, #tpu.memory_space<vmem>>, vector<1x64x64xbf16>
    %30 = vector.shape_cast %29 : vector<1x64x64xbf16> to vector<64x64xbf16>
    %c384 = arith.constant 384 : index
    %c0_26 = arith.constant 0 : index
    %31 = vector.load %arg2[%c384, %c0_26] : memref<576x64xbf16, #tpu.memory_space<vmem>>, vector<64x64xbf16>
    %cst_27 = arith.constant dense<0.000000e+00> : vector<64x64xf32>
    %32 = tpu.matmul %30, %31, %cst_27 {dimension_numbers = #tpu.dot_dimension_numbers<[1], [0], [0], [1], [0, 0, 1, 1], [], []>} : vector<64x64xbf16>, vector<64x64xbf16>, vector<64x64xf32> -> vector<64x64xf32>
    %33 = arith.addf %28, %32 : vector<64x64xf32>
    %c0_28 = arith.constant 0 : index
    %c19 = arith.constant 19 : index
    %c0_29 = arith.constant 0 : index
    %34 = vector.load %arg1[%c0_28, %c19, %c0_29] : memref<1x88x64xbf16, #tpu.memory_space<vmem>>, vector<1x64x64xbf16>
    %35 = vector.shape_cast %34 : vector<1x64x64xbf16> to vector<64x64xbf16>
    %c448 = arith.constant 448 : index
    %c0_30 = arith.constant 0 : index
    %36 = vector.load %arg2[%c448, %c0_30] : memref<576x64xbf16, #tpu.memory_space<vmem>>, vector<64x64xbf16>
    %cst_31 = arith.constant dense<0.000000e+00> : vector<64x64xf32>
    %37 = tpu.matmul %35, %36, %cst_31 {dimension_numbers = #tpu.dot_dimension_numbers<[1], [0], [0], [1], [0, 0, 1, 1], [], []>} : vector<64x64xbf16>, vector<64x64xbf16>, vector<64x64xf32> -> vector<64x64xf32>
    %38 = arith.addf %33, %37 : vector<64x64xf32>
    %c0_32 = arith.constant 0 : index
    %c20 = arith.constant 20 : index
    %c0_33 = arith.constant 0 : index
    %39 = vector.load %arg1[%c0_32, %c20, %c0_33] : memref<1x88x64xbf16, #tpu.memory_space<vmem>>, vector<1x64x64xbf16>
    %40 = vector.shape_cast %39 : vector<1x64x64xbf16> to vector<64x64xbf16>
    %c512 = arith.constant 512 : index
    %c0_34 = arith.constant 0 : index
    %41 = vector.load %arg2[%c512, %c0_34] : memref<576x64xbf16, #tpu.memory_space<vmem>>, vector<64x64xbf16>
    %cst_35 = arith.constant dense<0.000000e+00> : vector<64x64xf32>
    %42 = tpu.matmul %40, %41, %cst_35 {dimension_numbers = #tpu.dot_dimension_numbers<[1], [0], [0], [1], [0, 0, 1, 1], [], []>} : vector<64x64xbf16>, vector<64x64xbf16>, vector<64x64xf32> -> vector<64x64xf32>
    %43 = arith.addf %38, %42 : vector<64x64xf32>
    %c0_36 = arith.constant 0 : index
    %c0_37 = arith.constant 0 : index
    %44 = vector.load %arg3[%c0_36, %c0_37] : memref<1x64xf32, #tpu.memory_space<vmem>>, vector<1x64xf32>
    %45 = vector.broadcast %44 : vector<1x64xf32> to vector<64x64xf32>
    %46 = arith.addf %43, %45 : vector<64x64xf32>
    %cst_38 = arith.constant 0.000000e+00 : f32
    %47 = vector.broadcast %cst_38 : f32 to vector<64x64xf32>
    %48 = arith.maximumf %46, %47 : vector<64x64xf32>
    %49 = arith.truncf %48 : vector<64x64xf32> to vector<64x64xbf16>
    %c0_39 = arith.constant 0 : index
    %c0_40 = arith.constant 0 : index
    %50 = vector.load %arg4[%c0_39, %c0_40] : memref<64x64xbf16, #tpu.memory_space<vmem>>, vector<64x64xbf16>
    tpu.vector_store %arg4[%c0_39, %c0_40], %49 {strides = array<i32>} : memref<64x64xbf16, #tpu.memory_space<vmem>>, vector<64x64xbf16>,
    return
  }
  func.func @transform_0(%arg0: i32) -> (i32, i32, i32) {
    %c0_i32 = arith.constant 0 : i32
    %c0_i32_0 = arith.constant 0 : i32
    %c0_i32_1 = arith.constant 0 : i32
    return %arg0, %c0_i32, %c0_i32_0 : i32, i32, i32
  }
  func.func @transform_1(%arg0: i32) -> (i32, i32) {
    %c0_i32 = arith.constant 0 : i32
    %c0_i32_0 = arith.constant 0 : i32
    %c0_i32_1 = arith.constant 0 : i32
    return %c0_i32, %c0_i32_0 : i32, i32
  }
  func.func @transform_2(%arg0: i32) -> (i32, i32) {
    %c0_i32 = arith.constant 0 : i32
    %c0_i32_0 = arith.constant 0 : i32
    %c0_i32_1 = arith.constant 0 : i32
    return %c0_i32, %c0_i32_0 : i32, i32
  }
  func.func @transform_3(%arg0: i32) -> (i32, i32) {
    %c0_i32 = arith.constant 0 : i32
    %c0_i32_0 = arith.constant 0 : i32
    return %arg0, %c0_i32 : i32, i32
  }
}

module attributes {stable_mosaic.version = 11 : i64} {
  func.func @_fc_heads_kernel(%arg0: i32, %arg1: memref<2x3136xbf16, #tpu.memory_space<vmem>>, %arg2: memref<3136x512xbf16, #tpu.memory_space<vmem>>, %arg3: memref<1x512xf32, #tpu.memory_space<vmem>>, %arg4: memref<512x128xbf16, #tpu.memory_space<vmem>>, %arg5: memref<1x128xf32, #tpu.memory_space<vmem>>, %arg6: memref<2x128xf32, #tpu.memory_space<vmem>>) attributes {dimension_semantics = [#tpu.dimension_semantics<parallel>], iteration_bounds = array<i64: 1>, scalar_prefetch = 0 : i64, scratch_operands = 0 : i64, tpu.core_type = #tpu.core_type<tc>, window_params = [{transform_indices = @transform_0, window_bounds = array<i64: 2, 3136>}, {pipeline_mode = #tpu.pipeline_mode<synchronous>, transform_indices = @transform_1, window_bounds = array<i64: 3136, 512>}, {pipeline_mode = #tpu.pipeline_mode<synchronous>, transform_indices = @transform_2, window_bounds = array<i64: 1, 512>}, {pipeline_mode = #tpu.pipeline_mode<synchronous>, transform_indices = @transform_3, window_bounds = array<i64: 512, 128>}, {pipeline_mode = #tpu.pipeline_mode<synchronous>, transform_indices = @transform_4, window_bounds = array<i64: 1, 128>}, {transform_indices = @transform_5, window_bounds = array<i64: 2, 128>}]} {
    %c0 = arith.constant 0 : index
    %c0_0 = arith.constant 0 : index
    %0 = vector.load %arg1[%c0, %c0_0] : memref<2x3136xbf16, #tpu.memory_space<vmem>>, vector<2x3136xbf16>
    %c0_1 = arith.constant 0 : index
    %c0_2 = arith.constant 0 : index
    %1 = vector.load %arg2[%c0_1, %c0_2] : memref<3136x512xbf16, #tpu.memory_space<vmem>>, vector<3136x512xbf16>
    %cst = arith.constant dense<0.000000e+00> : vector<2x512xf32>
    %2 = tpu.matmul %0, %1, %cst {dimension_numbers = #tpu.dot_dimension_numbers<[1], [0], [0], [1], [0, 0, 1, 1], [], []>} : vector<2x3136xbf16>, vector<3136x512xbf16>, vector<2x512xf32> -> vector<2x512xf32>
    %c0_3 = arith.constant 0 : index
    %c0_4 = arith.constant 0 : index
    %3 = vector.load %arg3[%c0_3, %c0_4] : memref<1x512xf32, #tpu.memory_space<vmem>>, vector<1x512xf32>
    %4 = vector.broadcast %3 : vector<1x512xf32> to vector<2x512xf32>
    %5 = arith.addf %2, %4 : vector<2x512xf32>
    %cst_5 = arith.constant 0.000000e+00 : f32
    %6 = vector.broadcast %cst_5 : f32 to vector<2x512xf32>
    %7 = arith.maximumf %5, %6 : vector<2x512xf32>
    %8 = arith.truncf %7 : vector<2x512xf32> to vector<2x512xbf16>
    %c0_6 = arith.constant 0 : index
    %c0_7 = arith.constant 0 : index
    %9 = vector.load %arg4[%c0_6, %c0_7] : memref<512x128xbf16, #tpu.memory_space<vmem>>, vector<512x128xbf16>
    %cst_8 = arith.constant dense<0.000000e+00> : vector<2x128xf32>
    %10 = tpu.matmul %8, %9, %cst_8 {dimension_numbers = #tpu.dot_dimension_numbers<[1], [0], [0], [1], [0, 0, 1, 1], [], []>} : vector<2x512xbf16>, vector<512x128xbf16>, vector<2x128xf32> -> vector<2x128xf32>
    %c0_9 = arith.constant 0 : index
    %c0_10 = arith.constant 0 : index
    %11 = vector.load %arg5[%c0_9, %c0_10] : memref<1x128xf32, #tpu.memory_space<vmem>>, vector<1x128xf32>
    %12 = vector.broadcast %11 : vector<1x128xf32> to vector<2x128xf32>
    %13 = arith.addf %10, %12 : vector<2x128xf32>
    %14 = tpu.iota {dimensions = array<i32: 1>} : vector<2x128xi32>
    %c7_i32 = arith.constant 7 : i32
    %15 = vector.broadcast %c7_i32 : i32 to vector<2x128xi32>
    %16 = arith.cmpi slt, %14, %15 : vector<2x128xi32>
    %cst_11 = arith.constant -1.000000e+30 : f32
    %17 = vector.broadcast %cst_11 : f32 to vector<2x128xf32>
    %18 = arith.select %16, %13, %17 : vector<2x128xi1>, vector<2x128xf32>
    %cst_12 = arith.constant dense<0xFF800000> : vector<2xf32>
    %19 = vector.multi_reduction <maximumf>, %18, %cst_12 [1] : vector<2x128xf32> to vector<2xf32>
    %20 = vector.shape_cast %19 : vector<2xf32> to vector<2x1xf32>
    %21 = vector.broadcast %20 : vector<2x1xf32> to vector<2x128xf32>
    %22 = arith.subf %13, %21 : vector<2x128xf32>
    %23 = math.exp %22 : vector<2x128xf32>
    %cst_13 = arith.constant 0.000000e+00 : f32
    %24 = vector.broadcast %cst_13 : f32 to vector<2x128xf32>
    %25 = arith.select %16, %23, %24 : vector<2x128xi1>, vector<2x128xf32>
    %cst_14 = arith.constant dense<0.000000e+00> : vector<2xf32>
    %26 = vector.multi_reduction <add>, %25, %cst_14 [1] : vector<2x128xf32> to vector<2xf32>
    %27 = vector.shape_cast %26 : vector<2xf32> to vector<2x1xf32>
    %28 = vector.broadcast %27 : vector<2x1xf32> to vector<2x128xf32>
    %29 = arith.divf %25, %28 : vector<2x128xf32>
    %c7_i32_15 = arith.constant 7 : i32
    %30 = vector.broadcast %c7_i32_15 : i32 to vector<2x128xi32>
    %31 = arith.cmpi eq, %14, %30 : vector<2x128xi32>
    %cst_16 = arith.constant 0.000000e+00 : f32
    %32 = vector.broadcast %cst_16 : f32 to vector<2x128xf32>
    %33 = arith.select %31, %13, %32 : vector<2x128xi1>, vector<2x128xf32>
    %34 = arith.addf %29, %33 : vector<2x128xf32>
    %c0_17 = arith.constant 0 : index
    %c0_18 = arith.constant 0 : index
    %35 = vector.load %arg6[%c0_17, %c0_18] : memref<2x128xf32, #tpu.memory_space<vmem>>, vector<2x128xf32>
    tpu.vector_store %arg6[%c0_17, %c0_18], %34 {strides = array<i32>} : memref<2x128xf32, #tpu.memory_space<vmem>>, vector<2x128xf32>,
    return
  }
  func.func @transform_0(%arg0: i32) -> (i32, i32) {
    %c0_i32 = arith.constant 0 : i32
    %c0_i32_0 = arith.constant 0 : i32
    return %arg0, %c0_i32 : i32, i32
  }
  func.func @transform_1(%arg0: i32) -> (i32, i32) {
    %c0_i32 = arith.constant 0 : i32
    %c0_i32_0 = arith.constant 0 : i32
    %c0_i32_1 = arith.constant 0 : i32
    return %c0_i32, %c0_i32_0 : i32, i32
  }
  func.func @transform_2(%arg0: i32) -> (i32, i32) {
    %c0_i32 = arith.constant 0 : i32
    %c0_i32_0 = arith.constant 0 : i32
    %c0_i32_1 = arith.constant 0 : i32
    return %c0_i32, %c0_i32_0 : i32, i32
  }
  func.func @transform_3(%arg0: i32) -> (i32, i32) {
    %c0_i32 = arith.constant 0 : i32
    %c0_i32_0 = arith.constant 0 : i32
    %c0_i32_1 = arith.constant 0 : i32
    return %c0_i32, %c0_i32_0 : i32, i32
  }
  func.func @transform_4(%arg0: i32) -> (i32, i32) {
    %c0_i32 = arith.constant 0 : i32
    %c0_i32_0 = arith.constant 0 : i32
    %c0_i32_1 = arith.constant 0 : i32
    return %c0_i32, %c0_i32_0 : i32, i32
  }
  func.func @transform_5(%arg0: i32) -> (i32, i32) {
    %c0_i32 = arith.constant 0 : i32
    %c0_i32_0 = arith.constant 0 : i32
    return %arg0, %c0_i32 : i32, i32
  }
}

</mosaic_0001>

<llo_original>
// kernel: actor_critic_forward.4
$region0: #{actor_critic_forward.4}
  #allocation0 [shape = 'u32[]', space=smem, size = 0x4, offset = 0x4, fixed_abs, tag = 'smem constant byte address 0x4 - core index']
  #allocation1 [shape = 'u32[144,128]{1,0:T(1,128)}', space=vmem, size = 0x12000, scoped, tag = 'internal scratch']
  %s0 = inlined_call_operand.hbm [shape: bf16[2,448,64], index: 0, kind: input, shape index: {}]
  %s1 = inlined_call_operand.hbm [shape: bf16[256,32], index: 1, kind: input, shape index: {}]
  %s2 = inlined_call_operand.hbm [shape: f32[1,32], index: 2, kind: input, shape index: {}]
  %s3 = inlined_call_operand.hbm [shape: bf16[848,32], index: 3, kind: output, shape index: {}]
  %s4 = sld [smem:[#allocation0]]
  $region57: #{actor_critic_forward.4} parent=0
    _
  %s6 = ssub.s32 1, %s4
  %s7 = scalar_select 0, %s6, %s4
  $region1: #{actor_critic_forward.4} parent=0
    #allocation2 [shape = 'u8[229376]{0}', space=vmem, size = 0x38000, scoped, tag = 'input window, operand 0']
    #allocation3 [shape = 's32[2]{0}', space=sflag, size = 0x8, scoped, tag = 'scoped memory for actor_critic_forward.4']
    #allocation4 [shape = 's32[2]{0}', space=sflag, size = 0x8, scoped, tag = 'scoped memory for actor_critic_forward.4']
    #allocation5 [shape = 'u8[65536]{0}', space=vmem, size = 0x10000, scoped, tag = 'input window, operand 1, single buffered']
    #allocation6 [shape = 's32[1]{0}', space=sflag, size = 0x4, scoped, tag = 'scoped memory for actor_critic_forward.4']
    #allocation7 [shape = 'u8[512]{0}', space=vmem, size = 0x400, scoped, tag = 'input window, operand 2, single buffered']
    #allocation8 [shape = 'u8[217088]{0}', space=vmem, size = 0x35000, scoped, tag = 'output window, operand 0']
    %8 = vsyncpa [#allocation3], 0
    %s9 = scalar_lea.sflag [#allocation3], 1
    %10 = vsyncpa %s9, 0
    %11 = vsyncpa [#allocation6], 0
    %12 = vsyncpa [#allocation4], 0
    %s13 = scalar_lea.sflag [#allocation4], 1
    %14 = vsyncpa %s13, 0
    loop: start=0, step=1, limit=4
    $region2: #{actor_critic_forward.4} parent=1 // loop_pre_header
      _
    $region3: #{actor_critic_forward.4} parent=1 // loop_header
      %s16 = sphi 0, %s20
      %p17 = scmp.ge.s32.totalorder %s16, 4
      %s26 = sphi 0, %s28
      %s29 = sphi 0, %s26
      %s30 = sphi 0, %s29
      %s46 = sphi 0, %s30
      %s50 = sphi 0, %s50
      %s52 = sphi 0, %s50
      %s53 = sphi 0, %s52
      %s67 = sphi 0, %s53
      %s71 = sphi 0, %s71
      %s73 = sphi 0, %s71
      %s74 = sphi 0, %s73
      %s88 = sphi 0, %s74
      %s94 = sphi 0, %s96
      %s97 = sphi 0, %s94
      %s98 = sphi 0, %s97
      %s114 = sphi 0, %s98
    $region4: #{actor_critic_forward.4} parent=1 // loop_header_branch
      %19 = sbr.rel (%p17) target = $region8
    $region5: #{actor_critic_forward.4} parent=1 // loop_body
      %s21 = ssub.s32 %s16, 1
      %s22 = ssub.s32 %s16, 2
      %s23 = sadd.s32 %s16, 1
      %s24 = ssub.s32 %s16, %s23
      %p25 = scmp.eq.s32.totalorder %s24, 0
      %s27 = sadd.s32 %s26, 1
      %s28 = scalar_select %p25, %s26, %s27
      %p31 = pneg %p25
      %p32 = scmp.eq.s32.totalorder %s16, 1
      %p33 = por %p31, %p32
      %p34 = scmp.ne.s32.totalorder %s26, %s29
      %p35 = scmp.eq.s32.totalorder %s16, 0
      %p36 = por %p34, %p35
      %p37 = scmp.ne.s32.totalorder %s26, %s29
      %p38 = scmp.eq.s32.totalorder %s21, 1
      %p39 = por %p37, %p38
      %p40 = scmp.ne.s32.totalorder %s29, %s30
      %p41 = scmp.eq.s32.totalorder %s21, 0
      %p42 = por %p40, %p41
      %p43 = scmp.ne.s32.totalorder %s29, %s30
      %p44 = scmp.eq.s32.totalorder %s22, 1
      %p45 = por %p43, %p44
      %p47 = scmp.ne.s32.totalorder %s30, %s46
      %p48 = scmp.eq.s32.totalorder %s22, 0
      %p49 = por %p47, %p48
      %s51 = sadd.s32 %s50, 1
      %p54 = scmp.eq.s32.totalorder %s16, 1
      %p55 = scmp.ne.s32.totalorder %s50, %s52
      %p56 = scmp.eq.s32.totalorder %s16, 0
      %p57 = por %p55, %p56
      %p58 = scmp.ne.s32.totalorder %s50, %s52
      %p59 = scmp.eq.s32.totalorder %s21, 1
      %p60 = por %p58, %p59
      %p61 = scmp.ne.s32.totalorder %s52, %s53
      %p62 = scmp.eq.s32.totalorder %s21, 0
      %p63 = por %p61, %p62
      %p64 = scmp.ne.s32.totalorder %s52, %s53
      %p65 = scmp.eq.s32.totalorder %s22, 1
      %p66 = por %p64, %p65
      %p68 = scmp.ne.s32.totalorder %s53, %s67
      %p69 = scmp.eq.s32.totalorder %s22, 0
      %p70 = por %p68, %p69
      %s72 = sadd.s32 %s71, 1
      %p75 = scmp.eq.s32.totalorder %s16, 1
      %p76 = scmp.ne.s32.totalorder %s71, %s73
      %p77 = scmp.eq.s32.totalorder %s16, 0
      %p78 = por %p76, %p77
      %p79 = scmp.ne.s32.totalorder %s71, %s73
      %p80 = scmp.eq.s32.totalorder %s21, 1
      %p81 = por %p79, %p80
      %p82 = scmp.ne.s32.totalorder %s73, %s74
      %p83 = scmp.eq.s32.totalorder %s21, 0
      %p84 = por %p82, %p83
      %p85 = scmp.ne.s32.totalorder %s73, %s74
      %p86 = scmp.eq.s32.totalorder %s22, 1
      %p87 = por %p85, %p86
      %p89 = scmp.ne.s32.totalorder %s74, %s88
      %p90 = scmp.eq.s32.totalorder %s22, 0
      %p91 = por %p89, %p90
      %s92 = ssub.s32 %s16, %s23
      %p93 = scmp.eq.s32.totalorder %s92, 0
      %s95 = sadd.s32 %s94, 1
      %s96 = scalar_select %p93, %s94, %s95
      %p99 = pneg %p93
      %p100 = scmp.eq.s32.totalorder %s16, 1
      %p101 = por %p99, %p100
      %p102 = scmp.ne.s32.totalorder %s94, %s97
      %p103 = scmp.eq.s32.totalorder %s16, 0
      %p104 = por %p102, %p103
      %p105 = scmp.ne.s32.totalorder %s94, %s97
      %p106 = scmp.eq.s32.totalorder %s21, 1
      %p107 = por %p105, %p106
      %p108 = scmp.ne.s32.totalorder %s97, %s98
      %p109 = scmp.eq.s32.totalorder %s21, 0
      %p110 = por %p108, %p109
      %p111 = scmp.ne.s32.totalorder %s97, %s98
      %p112 = scmp.eq.s32.totalorder %s22, 1
      %p113 = por %p111, %p112
      %p115 = scmp.ne.s32.totalorder %s98, %s114
      %p116 = scmp.eq.s32.totalorder %s22, 0
      %p117 = por %p115, %p116
      %p118 = scmp.le.s32.totalorder 1, %s16
      %p119 = scmp.lt.s32.totalorder %s16, 3
      %p120 = pnand %p118, %p119
      %p121 = pneg %p120
      // Predicated region
      $region9: #{actor_critic_forward.4} parent=5 // pred_check
        _
      $region10: #{actor_critic_forward.4} parent=5 // pred_check_branch
        %123 = sbr.rel (%p120) target = $region12
      $region11: #{actor_critic_forward.4} parent=5 // pred_region
        %s124 = ssub.s32 %s16, 1
        // Predicated region
        $region13: #{actor_critic_forward.4} parent=11 // pred_check
          %p125 = pneg %p63
        $region14: #{actor_critic_forward.4} parent=11 // pred_check_branch
          %127 = sbr.rel (%p125) target = $region16
        $region15: #{actor_critic_forward.4} parent=11 // pred_region
          %s129 = ssub.s32 2048, 2048
          %130 = vsyncadd [#allocation6], %s129
          %s131 = sshll.u32 [#allocation5], 4
          %s132 = int_to_ptr.vmem [resolvable:$true] %s131
          %137 = dma.hbm_to_vmem [thread:$0]  %s1, 2048, %s132, [#allocation6], 64, 64, 4
        $region16: #{actor_critic_forward.4} parent=11 // pred_fallthru
          _
        // Predicated region
        $region17: #{actor_critic_forward.4} parent=11 // pred_check
          %p138 = pneg %p84
        $region18: #{actor_critic_forward.4} parent=11 // pred_check_branch
          %140 = sbr.rel (%p138) target = $region20
        $region19: #{actor_critic_forward.4} parent=11 // pred_region
          %s142 = ssub.s32 16, 16
          %143 = vsyncadd [#allocation6], %s142
          %s145 = sshll.u32 [#allocation7], 4
          %s146 = int_to_ptr.vmem [resolvable:$true] %s145
          %148 = dma.hbm_to_vmem [thread:$0]  %s2, 16, %s146, [#allocation6]
        $region20: #{actor_critic_forward.4} parent=11 // pred_fallthru
          _
      $region12: #{actor_critic_forward.4} parent=5 // pred_fallthru
        _
      %p149 = scmp.lt.s32.totalorder %s16, 2
      // Predicated region
      $region21: #{actor_critic_forward.4} parent=5 // pred_check
        %p150 = pneg %p149
      $region22: #{actor_critic_forward.4} parent=5 // pred_check_branch
        %152 = sbr.rel (%p150) target = $region24
      $region23: #{actor_critic_forward.4} parent=5 // pred_region
        // Predicated region
        $region25: #{actor_critic_forward.4} parent=23 // pred_check
          %p153 = pneg %p36
        $region26: #{actor_critic_forward.4} parent=23 // pred_check_branch
          %155 = sbr.rel (%p153) target = $region28
        $region27: #{actor_critic_forward.4} parent=23 // pred_region
          %s156 = sand.u32 %s26, 1
          %s157 = scalar_lea.sflag [#allocation3], %s156
          %s158 = sand.u32 %s26, 1
          %s159 = smul.addr %s158, 224
          %s160 = scalar_lea.vmem [#allocation2], %s159
          %s162 = ssub.s32 3584, 3584
          %163 = vsyncadd %s157, %s162
          %s164 = smul.addr %s16, 56
          %s165 = smul.addr %s164, 64
          %s166 = scalar_lea.hbm %s0, %s165
          %s167 = sshll.u32 %s160, 4
          %s168 = int_to_ptr.vmem [resolvable:$true] %s167
          %173 = dma.hbm_to_vmem [thread:$0]  %s166, 3584, %s168, %s157, 64, 64, 4
        $region28: #{actor_critic_forward.4} parent=23 // pred_fallthru
          _
      $region24: #{actor_critic_forward.4} parent=5 // pred_fallthru
        _
      %p174 = scmp.le.s32.totalorder 1, %s16
      %p175 = scmp.lt.s32.totalorder %s16, 3
      %p176 = pnand %p174, %p175
      %p177 = pneg %p176
      // Predicated region
      $region29: #{actor_critic_forward.4} parent=5 // pred_check
        _
      $region30: #{actor_critic_forward.4} parent=5 // pred_check_branch
        %179 = sbr.rel (%p176) target = $region32
      $region31: #{actor_critic_forward.4} parent=5 // pred_region
        %s180 = ssub.s32 %s16, 1
        %s181 = sand.u32 %s29, 1
        %s182 = scalar_lea.sflag [#allocation3], %s181
        %s183 = sand.u32 %s29, 1
        %s184 = smul.addr %s183, 224
        %s185 = scalar_lea.vmem [#allocation2], %s184
        // Predicated region
        $region33: #{actor_critic_forward.4} parent=31 // pred_check
          %p186 = pneg %p42
        $region34: #{actor_critic_forward.4} parent=31 // pred_check_branch
          %188 = sbr.rel (%p186) target = $region36
        $region35: #{actor_critic_forward.4} parent=31 // pred_region
          %189 = dma.done %s182, 3584
        $region36: #{actor_critic_forward.4} parent=31 // pred_fallthru
          _
        // Predicated region
        $region37: #{actor_critic_forward.4} parent=31 // pred_check
          %p190 = pneg %p63
        $region38: #{actor_critic_forward.4} parent=31 // pred_check_branch
          %192 = sbr.rel (%p190) target = $region40
        $region39: #{actor_critic_forward.4} parent=31 // pred_region
          %193 = dma.done [#allocation6], 2048
        $region40: #{actor_critic_forward.4} parent=31 // pred_fallthru
          _
        // Predicated region
        $region41: #{actor_critic_forward.4} parent=31 // pred_check
          %p194 = pneg %p84
        $region42: #{actor_critic_forward.4} parent=31 // pred_check_branch
          %196 = sbr.rel (%p194) target = $region44
        $region43: #{actor_critic_forward.4} parent=31 // pred_region
          %197 = dma.done [#allocation6], 16
        $region44: #{actor_critic_forward.4} parent=31 // pred_fallthru
          _
        %s198 = sand.u32 %s29, 1
        %s199 = scalar_lea.sflag [#allocation3], %s198
        %s200 = sand.u32 %s29, 1
        %s201 = smul.addr %s200, 224
        %s202 = scalar_lea.vmem [#allocation2], %s201
        %p203 = pneg %p42
        %p204 = pneg %p39
        %p205 = pneg %p63
        %p206 = pneg %p60
        %p207 = pneg %p84
        %p208 = pneg %p81
        %p209 = pneg %p110
        %p210 = pneg %p107
        %s211 = sand.u32 %s97, 1
        %s212 = scalar_lea.sflag [#allocation4], %s211
        %s213 = sand.u32 %s97, 1
        %s214 = smul.addr %s213, 212
        %s215 = scalar_lea.vmem [#allocation8], %s214
        %s216 = smul.u32 53, %s21
        %v218 = vld [vmem:[%s185] sm:$0xf]
        %v219 = vld [vmem:[%s185 + $0x4] sm:$0xf]
        %v220 = vld [vmem:[%s185 + $0x8] sm:$0xf]
        %v221 = vld [vmem:[%s185 + $0xc] sm:$0xf]
        %v222 = vld [vmem:[%s185 + $0x10] sm:$0xf]
        %v223 = vld [vmem:[%s185 + $0x14] sm:$0xf]
        %v224 = vld [vmem:[%s185 + $0x18] sm:$0xf]
        %v225 = vld [vmem:[%s185 + $0x1c] sm:$0xf]
        %v226 = vld [vmem:[%s185 + $0x20] sm:$0xf]
        %v227 = vld [vmem:[%s185 + $0x24] sm:$0xf]
        %v228 = vld [vmem:[%s185 + $0x28] sm:$0xf]
        %v229 = vld [vmem:[%s185 + $0x2c] sm:$0xf]
        %v230 = vld [vmem:[%s185 + $0x30] sm:$0xf]
        %v231 = vld [vmem:[%s185 + $0x34] sm:$0xf]
        %v232 = vld [vmem:[%s185 + $0x38] sm:$0xf]
        %v233 = vld [vmem:[%s185 + $0x3c] sm:$0xf]
        %v234 = vld [vmem:[%s185 + $0x40] sm:$0xf]
        %v235 = vld [vmem:[%s185 + $0x44] sm:$0xf]
        %v236 = vld [vmem:[%s185 + $0x48] sm:$0xf]
        %v237 = vld [vmem:[%s185 + $0x4c] sm:$0xf]
        %v238 = vld [vmem:[%s185 + $0x50] sm:$0xf]
        %v239 = vld [vmem:[%s185 + $0x54] sm:$0xf]
        %v240 = vld [vmem:[%s185 + $0x58] sm:$0xf]
        %v241 = vld [vmem:[%s185 + $0x5c] sm:$0xf]
        %v242 = vld [vmem:[%s185 + $0x60] sm:$0xf]
        %v243 = vld [vmem:[%s185 + $0x64] sm:$0xf]
        %v244 = vld [vmem:[%s185 + $0x68] sm:$0xf]
        %v245 = vld [vmem:[%s185 + $0x6c] sm:$0xf]
        %v246 = vld [vmem:[%s185 + $0x70] sm:$0xf]
        %v247 = vld [vmem:[%s185 + $0x74] sm:$0xf]
        %v248 = vld [vmem:[%s185 + $0x78] sm:$0xf]
        %v249 = vld [vmem:[%s185 + $0x7c] sm:$0xf]
        %v250 = vld [vmem:[%s185 + $0x80] sm:$0xf]
        %v251 = vld [vmem:[%s185 + $0x84] sm:$0xf]
        %v252 = vld [vmem:[%s185 + $0x88] sm:$0xf]
        %v253 = vld [vmem:[%s185 + $0x8c] sm:$0xf]
        %v254 = vld [vmem:[%s185 + $0x90] sm:$0xf]
        %v255 = vld [vmem:[%s185 + $0x94] sm:$0xf]
        %v256 = vld [vmem:[%s185 + $0x98] sm:$0xf]
        %v257 = vld [vmem:[%s185 + $0x9c] sm:$0xf]
        %v258 = vld [vmem:[%s185 + $0xa0] sm:$0xf]
        %v259 = vld [vmem:[%s185 + $0xa4] sm:$0xf]
        %v260 = vld [vmem:[%s185 + $0xa8] sm:$0xf]
        %v261 = vld [vmem:[%s185 + $0xac] sm:$0xf]
        %v262 = vld [vmem:[%s185 + $0xb0] sm:$0xf]
        %v263 = vld [vmem:[%s185 + $0xb4] sm:$0xf]
        %v264 = vld [vmem:[%s185 + $0xb8] sm:$0xf]
        %v265 = vld [vmem:[%s185 + $0xbc] sm:$0xf]
        %v266 = vld [vmem:[%s185 + $0xc0] sm:$0xf]
        %v267 = vld [vmem:[%s185 + $0xc4] sm:$0xf]
        %v268 = vld [vmem:[%s185 + $0xc8] sm:$0xf]
        %v269 = vld [vmem:[%s185 + $0xcc] sm:$0xf]
        %v270 = vld [vmem:[%s185 + $0xd0] sm:$0xf]
        %v271 = vld [vmem:[#allocation5] sm:$0xf]
        %v272 = vld [vmem:[#allocation5 + $0x4] sm:$0xf]
        %v273 = vld [vmem:[#allocation5 + $0x8] sm:$0xf]
        %v274 = vld [vmem:[#allocation5 + $0xc] sm:$0xf]
        %v275 = vld [vmem:[#allocation5 + $0x10] sm:$0xf]
        %v276 = vld [vmem:[#allocation5 + $0x14] sm:$0xf]
        %v277 = vld [vmem:[#allocation5 + $0x18] sm:$0xf]
        %v278 = vld [vmem:[#allocation5 + $0x1c] sm:$0xf]
        %v279 = vld [vmem:[%s185 + $0xd4] sm:$0x1]
        %v280 = vld [vmem:[#allocation5 + $0x20] sm:$0xf]
        %v281 = vld [vmem:[#allocation5 + $0x24] sm:$0xf]
        %v282 = vld [vmem:[#allocation5 + $0x28] sm:$0xf]
        %v283 = vld [vmem:[#allocation5 + $0x2c] sm:$0xf]
        %v284 = vld [vmem:[#allocation5 + $0x30] sm:$0xf]
        %v285 = vld [vmem:[#allocation5 + $0x34] sm:$0xf]
        %v286 = vld [vmem:[#allocation5 + $0x38] sm:$0xf]
        %v287 = vld [vmem:[#allocation5 + $0x3c] sm:$0xf]
        %v342 = vunpack.c.l.b16 %v218
        %v343 = vunpack.c.l.b16 %v219
        %v344 = vunpack.c.l.b16 %v220
        %v345 = vunpack.c.l.b16 %v221
        %v346 = vunpack.c.l.b16 %v222
        %v347 = vunpack.c.l.b16 %v223
        %v348 = vunpack.c.l.b16 %v224
        %v349 = vunpack.c.l.b16 %v225
        %v350 = vunpack.c.l.b16 %v226
        %v351 = vunpack.c.l.b16 %v227
        %v352 = vunpack.c.l.b16 %v228
        %v353 = vunpack.c.l.b16 %v229
        %v354 = vunpack.c.l.b16 %v230
        %v355 = vunpack.c.l.b16 %v231
        %v356 = vunpack.c.l.b16 %v232
        %v357 = vunpack.c.l.b16 %v233
        %v358 = vunpack.c.l.b16 %v234
        %v359 = vunpack.c.l.b16 %v235
        %v360 = vunpack.c.l.b16 %v236
        %v361 = vunpack.c.l.b16 %v237
        %v362 = vunpack.c.l.b16 %v238
        %v363 = vunpack.c.l.b16 %v239
        %v364 = vunpack.c.l.b16 %v240
        %v365 = vunpack.c.l.b16 %v241
        %v366 = vunpack.c.l.b16 %v242
        %v367 = vunpack.c.l.b16 %v243
        %v368 = vunpack.c.l.b16 %v244
        %v369 = vunpack.c.l.b16 %v245
        %v370 = vunpack.c.l.b16 %v246
        %v371 = vunpack.c.l.b16 %v247
        %v372 = vunpack.c.l.b16 %v248
        %v373 = vunpack.c.l.b16 %v249
        %v374 = vunpack.c.l.b16 %v250
        %v375 = vunpack.c.l.b16 %v251
        %v376 = vunpack.c.l.b16 %v252
        %v377 = vunpack.c.l.b16 %v253
        %v378 = vunpack.c.l.b16 %v254
        %v379 = vunpack.c.l.b16 %v255
        %v380 = vunpack.c.l.b16 %v256
        %v381 = vunpack.c.l.b16 %v257
        %v382 = vunpack.c.l.b16 %v258
        %v383 = vunpack.c.l.b16 %v259
        %v384 = vunpack.c.l.b16 %v260
        %v385 = vunpack.c.l.b16 %v261
        %v386 = vunpack.c.l.b16 %v262
        %v387 = vunpack.c.l.b16 %v263
        %v388 = vunpack.c.l.b16 %v264
        %v389 = vunpack.c.l.b16 %v265
        %v390 = vunpack.c.l.b16 %v266
        %v391 = vunpack.c.l.b16 %v267
        %v392 = vunpack.c.l.b16 %v268
        %v393 = vunpack.c.l.b16 %v269
        %v394 = vunpack.c.l.b16 %v270
        %v395 = vunpack.c.l.b16 %v279
        %v396 = vpack.c.b16 %v343, %v342
        %v397 = vpack.c.b16 %v345, %v344
        %v398 = vpack.c.b16 %v347, %v346
        %v399 = vpack.c.b16 %v349, %v348
        %v400 = vpack.c.b16 %v351, %v350
        %v401 = vpack.c.b16 %v353, %v352
        %v402 = vpack.c.b16 %v355, %v354
        %v403 = vpack.c.b16 %v357, %v356
        %v404 = vpack.c.b16 %v359, %v358
        %v405 = vpack.c.b16 %v361, %v360
        %v406 = vpack.c.b16 %v363, %v362
        %v407 = vpack.c.b16 %v365, %v364
        %v408 = vpack.c.b16 %v367, %v366
        %v409 = vpack.c.b16 %v369, %v368
        %v410 = vpack.c.b16 %v371, %v370
        %v411 = vpack.c.b16 %v373, %v372
        %v412 = vpack.c.b16 %v375, %v374
        %v413 = vpack.c.b16 %v377, %v376
        %v414 = vpack.c.b16 %v379, %v378
        %v415 = vpack.c.b16 %v381, %v380
        %v416 = vpack.c.b16 %v383, %v382
        %v417 = vpack.c.b16 %v385, %v384
        %v418 = vpack.c.b16 %v387, %v386
        %v419 = vpack.c.b16 %v389, %v388
        %v420 = vpack.c.b16 %v391, %v390
        %v421 = vpack.c.b16 %v393, %v392
        %v422 = vpack.c.b16 %v395, %v394
        %vm423 = vsmask.f32 7424
        %v425 = vshrl.u32 %v396, 16
        %v427 = vshll.u32 %v396, 16
        %v429 = vrot.slane %v427, 1
        %v430 = vor.u32 %v425, %v429
        %v432 = vshll.u32 %v397, 16
        %v434 = vrot.slane %v432, 1
        %v435 = vsel %vm423, %v430, %v434
        %v436 = vshrl.u32 %v397, 16
        %v438 = vor.u32 %v436, %v434
        %v440 = vshll.u32 %v398, 16
        %v442 = vrot.slane %v440, 1
        %v443 = vsel %vm423, %v438, %v442
        %v444 = vshrl.u32 %v398, 16
        %v446 = vor.u32 %v444, %v442
        %v448 = vshll.u32 %v399, 16
        %v450 = vrot.slane %v448, 1
        %v451 = vsel %vm423, %v446, %v450
        %v452 = vshrl.u32 %v399, 16
        %v454 = vor.u32 %v452, %v450
        %v456 = vshll.u32 %v400, 16
        %v458 = vrot.slane %v456, 1
        %v459 = vsel %vm423, %v454, %v458
        %v460 = vshrl.u32 %v400, 16
        %v462 = vor.u32 %v460, %v458
        %v464 = vshll.u32 %v401, 16
        %v466 = vrot.slane %v464, 1
        %v467 = vsel %vm423, %v462, %v466
        %v468 = vshrl.u32 %v401, 16
        %v470 = vor.u32 %v468, %v466
        %v472 = vshll.u32 %v402, 16
        %v474 = vrot.slane %v472, 1
        %v475 = vsel %vm423, %v470, %v474
        %v476 = vshrl.u32 %v402, 16
        %v478 = vor.u32 %v476, %v474
        %v480 = vshll.u32 %v403, 16
        %v482 = vrot.slane %v480, 1
        %v483 = vsel %vm423, %v478, %v482
        %v484 = vshrl.u32 %v403, 16
        %v486 = vor.u32 %v484, %v482
        %v488 = vshll.u32 %v404, 16
        %v490 = vrot.slane %v488, 1
        %v491 = vsel %vm423, %v486, %v490
        %v492 = vshrl.u32 %v404, 16
        %v494 = vor.u32 %v492, %v490
        %v496 = vshll.u32 %v405, 16
        %v498 = vrot.slane %v496, 1
        %v499 = vsel %vm423, %v494, %v498
        %v500 = vshrl.u32 %v405, 16
        %v502 = vor.u32 %v500, %v498
        %v504 = vshll.u32 %v406, 16
        %v506 = vrot.slane %v504, 1
        %v507 = vsel %vm423, %v502, %v506
        %v508 = vshrl.u32 %v406, 16
        %v510 = vor.u32 %v508, %v506
        %v512 = vshll.u32 %v407, 16
        %v514 = vrot.slane %v512, 1
        %v515 = vsel %vm423, %v510, %v514
        %v516 = vshrl.u32 %v407, 16
        %v518 = vor.u32 %v516, %v514
        %v520 = vshll.u32 %v408, 16
        %v522 = vrot.slane %v520, 1
        %v523 = vsel %vm423, %v518, %v522
        %v524 = vshrl.u32 %v408, 16
        %v526 = vor.u32 %v524, %v522
        %v528 = vshll.u32 %v409, 16
        %v530 = vrot.slane %v528, 1
        %v531 = vsel %vm423, %v526, %v530
        %v532 = vshrl.u32 %v409, 16
        %v534 = vor.u32 %v532, %v530
        %v536 = vshll.u32 %v410, 16
        %v538 = vrot.slane %v536, 1
        %v539 = vsel %vm423, %v534, %v538
        %v540 = vshrl.u32 %v410, 16
        %v542 = vor.u32 %v540, %v538
        %v544 = vshll.u32 %v411, 16
        %v546 = vrot.slane %v544, 1
        %v547 = vsel %vm423, %v542, %v546
        %v548 = vshrl.u32 %v411, 16
        %v550 = vor.u32 %v548, %v546
        %v552 = vshll.u32 %v412, 16
        %v554 = vrot.slane %v552, 1
        %v555 = vsel %vm423, %v550, %v554
        %v556 = vshrl.u32 %v412, 16
        %v558 = vor.u32 %v556, %v554
        %v560 = vshll.u32 %v413, 16
        %v562 = vrot.slane %v560, 1
        %v563 = vsel %vm423, %v558, %v562
        %v564 = vshrl.u32 %v413, 16
        %v566 = vor.u32 %v564, %v562
        %v568 = vshll.u32 %v414, 16
        %v570 = vrot.slane %v568, 1
        %v571 = vsel %vm423, %v566, %v570
        %v572 = vshrl.u32 %v414, 16
        %v574 = vor.u32 %v572, %v570
        %v576 = vshll.u32 %v415, 16
        %v578 = vrot.slane %v576, 1
        %v579 = vsel %vm423, %v574, %v578
        %v580 = vshrl.u32 %v415, 16
        %v582 = vor.u32 %v580, %v578
        %v584 = vshll.u32 %v416, 16
        %v586 = vrot.slane %v584, 1
        %v587 = vsel %vm423, %v582, %v586
        %v588 = vshrl.u32 %v416, 16
        %v590 = vor.u32 %v588, %v586
        %v592 = vshll.u32 %v417, 16
        %v594 = vrot.slane %v592, 1
        %v595 = vsel %vm423, %v590, %v594
        %v596 = vshrl.u32 %v417, 16
        %v598 = vor.u32 %v596, %v594
        %v600 = vshll.u32 %v418, 16
        %v602 = vrot.slane %v600, 1
        %v603 = vsel %vm423, %v598, %v602
        %v604 = vshrl.u32 %v418, 16
        %v606 = vor.u32 %v604, %v602
        %v608 = vshll.u32 %v419, 16
        %v610 = vrot.slane %v608, 1
        %v611 = vsel %vm423, %v606, %v610
        %v612 = vshrl.u32 %v419, 16
        %v614 = vor.u32 %v612, %v610
        %v616 = vshll.u32 %v420, 16
        %v618 = vrot.slane %v616, 1
        %v619 = vsel %vm423, %v614, %v618
        %v620 = vshrl.u32 %v420, 16
        %v622 = vor.u32 %v620, %v618
        %v624 = vshll.u32 %v421, 16
        %v626 = vrot.slane %v624, 1
        %v627 = vsel %vm423, %v622, %v626
        %v628 = vshrl.u32 %v421, 16
        %v630 = vor.u32 %v628, %v626
        %v632 = vshll.u32 %v422, 16
        %v634 = vrot.slane %v632, 1
        %v635 = vsel %vm423, %v630, %v634
        %v636 = vshrl.u32 %v422, 16
        %v638 = vor.u32 %v636, %v634
        %v647 = vunpack.c.l.b16 %v280
        %v648 = vunpack.c.l.b16 %v281
        %v649 = vunpack.c.l.b16 %v282
        %v650 = vunpack.c.l.b16 %v283
        %v651 = vunpack.c.l.b16 %v284
        %v652 = vunpack.c.l.b16 %v285
        %v653 = vunpack.c.l.b16 %v286
        %v654 = vunpack.c.l.b16 %v287
        %v655 = vpack.c.b16 %v648, %v647
        %v656 = vpack.c.b16 %v650, %v649
        %v657 = vpack.c.b16 %v652, %v651
        %v658 = vpack.c.b16 %v654, %v653
        %vm663 = vcmask 523264
        %v665 = vsel %vm663, %v435, 0
        %v668 = vsel %vm663, %v443, 0
        %v671 = vsel %vm663, %v451, 0
        %v674 = vsel %vm663, %v459, 0
        %v677 = vsel %vm663, %v467, 0
        %v680 = vsel %vm663, %v475, 0
        %v683 = vsel %vm663, %v483, 0
        %v686 = vsel %vm663, %v491, 0
        %v689 = vsel %vm663, %v499, 0
        %v692 = vsel %vm663, %v507, 0
        %v695 = vsel %vm663, %v515, 0
        %v698 = vsel %vm663, %v523, 0
        %v701 = vsel %vm663, %v531, 0
        %v704 = vsel %vm663, %v539, 0
        %v707 = vsel %vm663, %v547, 0
        %v710 = vsel %vm663, %v555, 0
        %v713 = vsel %vm663, %v563, 0
        %v716 = vsel %vm663, %v571, 0
        %v719 = vsel %vm663, %v579, 0
        %v722 = vsel %vm663, %v587, 0
        %v725 = vsel %vm663, %v595, 0
        %v728 = vsel %vm663, %v603, 0
        %v731 = vsel %vm663, %v611, 0
        %v734 = vsel %vm663, %v619, 0
        %v737 = vsel %vm663, %v627, 0
        %v740 = vsel %vm663, %v635, 0
        %v743 = vsel %vm663, %v638, 0
        %745 = vmatprep.subr.bf16.mxu0 0
        %746 = vmatpush1.bf16.msra.mxu0 %v655
        %747 = vmatprep.subr.bf16.mxu0 0
        %748 = vmatpush1.bf16.msra.mxu0 %v656
        %749 = vmatprep.subr.bf16.mxu0 0
        %750 = vmatpush1.bf16.msra.mxu0 %v657
        %751 = vmatprep.subr.bf16.mxu0 0
        %752 = vmatpush1.bf16.msra.mxu0 %v658
        %753 = vmatprep.subr.bf16.mxu0 0
        %754 = vmatpush1.bf16.msra.mxu0 0
        %755 = vmatprep.subr.bf16.mxu0 0
        %756 = vmatpush1.bf16.msra.mxu0 0
        %757 = vmatprep.subr.bf16.mxu0 0
        %758 = vmatpush1.bf16.msra.mxu0 0
        %759 = vmatprep.subr.bf16.mxu0 0
        %760 = vmatpush1.bf16.msra.mxu0 0
        %761 = vmatprep.subr.bf16.mxu0 0
        %762 = vmatpush1.bf16.msra.mxu0 0
        %763 = vmatprep.subr.bf16.mxu0 0
        %764 = vmatpush1.bf16.msra.mxu0 0
        %765 = vmatprep.subr.bf16.mxu0 0
        %766 = vmatpush1.bf16.msra.mxu0 0
        %767 = vmatprep.subr.bf16.mxu0 0
        %768 = vmatpush1.bf16.msra.mxu0 0
        %769 = vmatprep.subr.bf16.mxu0 0
        %770 = vmatpush1.bf16.msra.mxu0 0
        %771 = vmatprep.subr.bf16.mxu0 0
        %772 = vmatpush1.bf16.msra.mxu0 0
        %773 = vmatprep.subr.bf16.mxu0 0
        %774 = vmatpush1.bf16.msra.mxu0 0
        %775 = vmatprep.subr.bf16.mxu0 0
        %776 = vmatpush1.bf16.msra.mxu0 0
        %777 = vmatprep.mubr.bf16.mxu0 0
        %778 = vmatmul.mubr.bf16.gmra.mrb[0].mxu0 %v665
        %v779 = vpop.f32.mrb[0].mxu0
        %v780 = vadd.f32 0.0, %v779
        %v781 = vpop.f32.mrb[0].mxu0
        %v782 = vpop.f32.mrb[0].mxu0
        %v783 = vadd.f32 0.0, %v782
        %v784 = vpop.f32.mrb[0].mxu0
        %785 = vmatprep.mubr.bf16.mxu0 0
        %786 = vmatmul.mubr.bf16.gmra.mrb[0].mxu0 %v668
        %v787 = vpop.f32.mrb[0].mxu0
        %v788 = vadd.f32 0.0, %v787
        %v789 = vpop.f32.mrb[0].mxu0
        %v790 = vpop.f32.mrb[0].mxu0
        %v791 = vadd.f32 0.0, %v790
        %v792 = vpop.f32.mrb[0].mxu0
        %793 = vmatprep.mubr.bf16.mxu0 0
        %794 = vmatmul.mubr.bf16.gmra.mrb[0].mxu0 %v671
        %v795 = vpop.f32.mrb[0].mxu0
        %v796 = vadd.f32 0.0, %v795
        %v797 = vpop.f32.mrb[0].mxu0
        %v798 = vpop.f32.mrb[0].mxu0
        %v799 = vadd.f32 0.0, %v798
        %v800 = vpop.f32.mrb[0].mxu0
        %801 = vmatprep.mubr.bf16.mxu0 0
        %802 = vmatmul.mubr.bf16.gmra.mrb[0].mxu0 %v674
        %v803 = vpop.f32.mrb[0].mxu0
        %v804 = vadd.f32 0.0, %v803
        %v805 = vpop.f32.mrb[0].mxu0
        %v806 = vpop.f32.mrb[0].mxu0
        %v807 = vadd.f32 0.0, %v806
        %v808 = vpop.f32.mrb[0].mxu0
        %809 = vmatprep.mubr.bf16.mxu0 0
        %810 = vmatmul.mubr.bf16.gmra.mrb[0].mxu0 %v677
        %v811 = vpop.f32.mrb[0].mxu0
        %v812 = vadd.f32 0.0, %v811
        %v813 = vpop.f32.mrb[0].mxu0
        %v814 = vpop.f32.mrb[0].mxu0
        %v815 = vadd.f32 0.0, %v814
        %v816 = vpop.f32.mrb[0].mxu0
        %817 = vmatprep.mubr.bf16.mxu0 0
        %818 = vmatmul.mubr.bf16.gmra.mrb[0].mxu0 %v680
        %v819 = vpop.f32.mrb[0].mxu0
        %v820 = vadd.f32 0.0, %v819
        %v821 = vpop.f32.mrb[0].mxu0
        %v822 = vpop.f32.mrb[0].mxu0
        %v823 = vadd.f32 0.0, %v822
        %v824 = vpop.f32.mrb[0].mxu0
        %825 = vmatprep.mubr.bf16.mxu0 0
        %826 = vmatmul.mubr.bf16.gmra.mrb[0].mxu0 %v683
        %v827 = vpop.f32.mrb[0].mxu0
        %v828 = vadd.f32 0.0, %v827
        %v829 = vpop.f32.mrb[0].mxu0
        %v830 = vpop.f32.mrb[0].mxu0
        %v831 = vadd.f32 0.0, %v830
        %v832 = vpop.f32.mrb[0].mxu0
        %833 = vmatprep.mubr.bf16.mxu0 0
        %834 = vmatmul.mubr.bf16.gmra.mrb[0].mxu0 %v686
        %v835 = vpop.f32.mrb[0].mxu0
        %v836 = vadd.f32 0.0, %v835
        %v837 = vpop.f32.mrb[0].mxu0
        %v838 = vpop.f32.mrb[0].mxu0
        %v839 = vadd.f32 0.0, %v838
        %v840 = vpop.f32.mrb[0].mxu0
        %841 = vmatprep.mubr.bf16.mxu0 0
        %842 = vmatmul.mubr.bf16.gmra.mrb[0].mxu0 %v689
        %v843 = vpop.f32.mrb[0].mxu0
        %v844 = vadd.f32 0.0, %v843
        %v845 = vpop.f32.mrb[0].mxu0
        %v846 = vpop.f32.mrb[0].mxu0
        %v847 = vadd.f32 0.0, %v846
        %v848 = vpop.f32.mrb[0].mxu0
        %849 = vmatprep.mubr.bf16.mxu0 0
        %850 = vmatmul.mubr.bf16.gmra.mrb[0].mxu0 %v692
        %v851 = vpop.f32.mrb[0].mxu0
        %v852 = vadd.f32 0.0, %v851
        %v853 = vpop.f32.mrb[0].mxu0
        %v854 = vpop.f32.mrb[0].mxu0
        %v855 = vadd.f32 0.0, %v854
        %v856 = vpop.f32.mrb[0].mxu0
        %857 = vmatprep.mubr.bf16.mxu0 0
        %858 = vmatmul.mubr.bf16.gmra.mrb[0].mxu0 %v695
        %v859 = vpop.f32.mrb[0].mxu0
        %v860 = vadd.f32 0.0, %v859
        %v861 = vpop.f32.mrb[0].mxu0
        %v862 = vpop.f32.mrb[0].mxu0
        %v863 = vadd.f32 0.0, %v862
        %v864 = vpop.f32.mrb[0].mxu0
        %865 = vmatprep.mubr.bf16.mxu0 0
        %866 = vmatmul.mubr.bf16.gmra.mrb[0].mxu0 %v698
        %v867 = vpop.f32.mrb[0].mxu0
        %v868 = vadd.f32 0.0, %v867
        %v869 = vpop.f32.mrb[0].mxu0
        %v870 = vpop.f32.mrb[0].mxu0
        %v871 = vadd.f32 0.0, %v870
        %v872 = vpop.f32.mrb[0].mxu0
        %873 = vmatprep.mubr.bf16.mxu0 0
        %874 = vmatmul.mubr.bf16.gmra.mrb[0].mxu0 %v701
        %v875 = vpop.f32.mrb[0].mxu0
        %v876 = vadd.f32 0.0, %v875
        %v877 = vpop.f32.mrb[0].mxu0
        %v878 = vpop.f32.mrb[0].mxu0
        %v879 = vadd.f32 0.0, %v878
        %v880 = vpop.f32.mrb[0].mxu0
        %881 = vmatprep.mubr.bf16.mxu0 0
        %882 = vmatmul.mubr.bf16.gmra.mrb[0].mxu0 %v704
        %v883 = vpop.f32.mrb[0].mxu0
        %v884 = vadd.f32 0.0, %v883
        %v885 = vpop.f32.mrb[0].mxu0
        %v886 = vpop.f32.mrb[0].mxu0
        %v887 = vadd.f32 0.0, %v886
        %v888 = vpop.f32.mrb[0].mxu0
        %889 = vmatprep.mubr.bf16.mxu0 0
        %890 = vmatmul.mubr.bf16.gmra.mrb[0].mxu0 %v707
        %v891 = vpop.f32.mrb[0].mxu0
        %v892 = vadd.f32 0.0, %v891
        %v893 = vpop.f32.mrb[0].mxu0
        %v894 = vpop.f32.mrb[0].mxu0
        %v895 = vadd.f32 0.0, %v894
        %v896 = vpop.f32.mrb[0].mxu0
        %897 = vmatprep.mubr.bf16.mxu0 0
        %898 = vmatmul.mubr.bf16.gmra.mrb[0].mxu0 %v710
        %v899 = vpop.f32.mrb[0].mxu0
        %v900 = vadd.f32 0.0, %v899
        %v901 = vpop.f32.mrb[0].mxu0
        %v902 = vpop.f32.mrb[0].mxu0
        %v903 = vadd.f32 0.0, %v902
        %v904 = vpop.f32.mrb[0].mxu0
        %905 = vmatprep.mubr.bf16.mxu0 0
        %906 = vmatmul.mubr.bf16.gmra.mrb[0].mxu0 %v713
        %v907 = vpop.f32.mrb[0].mxu0
        %v908 = vadd.f32 0.0, %v907
        %v909 = vpop.f32.mrb[0].mxu0
        %v910 = vpop.f32.mrb[0].mxu0
        %v911 = vadd.f32 0.0, %v910
        %v912 = vpop.f32.mrb[0].mxu0
        %913 = vmatprep.mubr.bf16.mxu0 0
        %914 = vmatmul.mubr.bf16.gmra.mrb[0].mxu0 %v716
        %v915 = vpop.f32.mrb[0].mxu0
        %v916 = vadd.f32 0.0, %v915
        %v917 = vpop.f32.mrb[0].mxu0
        %v918 = vpop.f32.mrb[0].mxu0
        %v919 = vadd.f32 0.0, %v918
        %v920 = vpop.f32.mrb[0].mxu0
        %921 = vmatprep.mubr.bf16.mxu0 0
        %922 = vmatmul.mubr.bf16.gmra.mrb[0].mxu0 %v719
        %v923 = vpop.f32.mrb[0].mxu0
        %v924 = vadd.f32 0.0, %v923
        %v925 = vpop.f32.mrb[0].mxu0
        %v926 = vpop.f32.mrb[0].mxu0
        %v927 = vadd.f32 0.0, %v926
        %v928 = vpop.f32.mrb[0].mxu0
        %929 = vmatprep.mubr.bf16.mxu0 0
        %930 = vmatmul.mubr.bf16.gmra.mrb[0].mxu0 %v722
        %v931 = vpop.f32.mrb[0].mxu0
        %v932 = vadd.f32 0.0, %v931
        %v933 = vpop.f32.mrb[0].mxu0
        %v934 = vpop.f32.mrb[0].mxu0
        %v935 = vadd.f32 0.0, %v934
        %v936 = vpop.f32.mrb[0].mxu0
        %937 = vmatprep.mubr.bf16.mxu0 0
        %938 = vmatmul.mubr.bf16.gmra.mrb[0].mxu0 %v725
        %v939 = vpop.f32.mrb[0].mxu0
        %v940 = vadd.f32 0.0, %v939
        %v941 = vpop.f32.mrb[0].mxu0
        %v942 = vpop.f32.mrb[0].mxu0
        %v943 = vadd.f32 0.0, %v942
        %v944 = vpop.f32.mrb[0].mxu0
        %945 = vmatprep.mubr.bf16.mxu0 0
        %946 = vmatmul.mubr.bf16.gmra.mrb[0].mxu0 %v728
        %v947 = vpop.f32.mrb[0].mxu0
        %v948 = vadd.f32 0.0, %v947
        %v949 = vpop.f32.mrb[0].mxu0
        %v950 = vpop.f32.mrb[0].mxu0
        %v951 = vadd.f32 0.0, %v950
        %v952 = vpop.f32.mrb[0].mxu0
        %953 = vmatprep.mubr.bf16.mxu0 0
        %954 = vmatmul.mubr.bf16.gmra.mrb[0].mxu0 %v731
        %v955 = vpop.f32.mrb[0].mxu0
        %v956 = vadd.f32 0.0, %v955
        %v957 = vpop.f32.mrb[0].mxu0
        %v958 = vpop.f32.mrb[0].mxu0
        %v959 = vadd.f32 0.0, %v958
        %v960 = vpop.f32.mrb[0].mxu0
        %961 = vmatprep.mubr.bf16.mxu0 0
        %962 = vmatmul.mubr.bf16.gmra.mrb[0].mxu0 %v734
        %v963 = vpop.f32.mrb[0].mxu0
        %v964 = vadd.f32 0.0, %v963
        %v965 = vpop.f32.mrb[0].mxu0
        %v966 = vpop.f32.mrb[0].mxu0
        %v967 = vadd.f32 0.0, %v966
        %v968 = vpop.f32.mrb[0].mxu0
        %969 = vmatprep.mubr.bf16.mxu0 0
        %970 = vmatmul.mubr.bf16.gmra.mrb[0].mxu0 %v737
        %v971 = vpop.f32.mrb[0].mxu0
        %v972 = vadd.f32 0.0, %v971
        %v973 = vpop.f32.mrb[0].mxu0
        %v974 = vpop.f32.mrb[0].mxu0
        %v975 = vadd.f32 0.0, %v974
        %v976 = vpop.f32.mrb[0].mxu0
        %977 = vmatprep.mubr.bf16.mxu0 0
        %978 = vmatmul.mubr.bf16.gmra.mrb[0].mxu0 %v740
        %v979 = vpop.f32.mrb[0].mxu0
        %v980 = vadd.f32 0.0, %v979
        %v981 = vpop.f32.mrb[0].mxu0
        %v982 = vpop.f32.mrb[0].mxu0
        %v983 = vadd.f32 0.0, %v982
        %v984 = vpop.f32.mrb[0].mxu0
        %985 = vmatprep.mubr.bf16.mxu0 0
        %986 = vmatmul.mubr.bf16.gmra.mrb[0].mxu0 %v743
        %v987 = vpop.f32.mrb[0].mxu0
        %v988 = vadd.f32 0.0, %v987
        %v989 = vpop.f32.mrb[0].mxu0
        %v990 = vpop.f32.mrb[0].mxu0
        %v991 = vpop.f32.mrb[0].mxu0
        %992 = vdwg.mxu0
        %v993 = vpack.c.b16 %v394, %v394
        %v1002 = vunpack.c.l.b16 %v271
        %v1003 = vunpack.c.l.b16 %v272
        %v1004 = vunpack.c.l.b16 %v273
        %v1005 = vunpack.c.l.b16 %v274
        %v1006 = vunpack.c.l.b16 %v275
        %v1007 = vunpack.c.l.b16 %v276
        %v1008 = vunpack.c.l.b16 %v277
        %v1009 = vunpack.c.l.b16 %v278
        %v1010 = vpack.c.b16 %v1003, %v1002
        %v1011 = vpack.c.b16 %v1005, %v1004
        %v1012 = vpack.c.b16 %v1007, %v1006
        %v1013 = vpack.c.b16 %v1009, %v1008
        %v1018 = vsel %vm663, %v396, 0
        %v1020 = vsel %vm663, %v397, 0
        %v1022 = vsel %vm663, %v398, 0
        %v1024 = vsel %vm663, %v399, 0
        %v1026 = vsel %vm663, %v400, 0
        %v1028 = vsel %vm663, %v401, 0
        %v1030 = vsel %vm663, %v402, 0
        %v1032 = vsel %vm663, %v403, 0
        %v1034 = vsel %vm663, %v404, 0
        %v1036 = vsel %vm663, %v405, 0
        %v1038 = vsel %vm663, %v406, 0
        %v1040 = vsel %vm663, %v407, 0
        %v1042 = vsel %vm663, %v408, 0
        %v1044 = vsel %vm663, %v409, 0
        %v1046 = vsel %vm663, %v410, 0
        %v1048 = vsel %vm663, %v411, 0
        %v1050 = vsel %vm663, %v412, 0
        %v1052 = vsel %vm663, %v413, 0
        %v1054 = vsel %vm663, %v414, 0
        %v1056 = vsel %vm663, %v415, 0
        %v1058 = vsel %vm663, %v416, 0
        %v1060 = vsel %vm663, %v417, 0
        %v1062 = vsel %vm663, %v418, 0
        %v1064 = vsel %vm663, %v419, 0
        %v1066 = vsel %vm663, %v420, 0
        %v1068 = vsel %vm663, %v421, 0
        %v1071 = vsel %vm663, %v993, 0
        %1073 = vmatprep.subr.bf16.mxu0 0
        %1074 = vmatpush1.bf16.msra.mxu0 %v1010
        %1075 = vmatprep.subr.bf16.mxu0 0
        %1076 = vmatpush1.bf16.msra.mxu0 %v1011
        %1077 = vmatprep.subr.bf16.mxu0 0
        %1078 = vmatpush1.bf16.msra.mxu0 %v1012
        %1079 = vmatprep.subr.bf16.mxu0 0
        %1080 = vmatpush1.bf16.msra.mxu0 %v1013
        %1081 = vmatprep.subr.bf16.mxu0 0
        %1082 = vmatpush1.bf16.msra.mxu0 0
        %1083 = vmatprep.subr.bf16.mxu0 0
        %1084 = vmatpush1.bf16.msra.mxu0 0
        %1085 = vmatprep.subr.bf16.mxu0 0
        %1086 = vmatpush1.bf16.msra.mxu0 0
        %1087 = vmatprep.subr.bf16.mxu0 0
        %1088 = vmatpush1.bf16.msra.mxu0 0
        %1089 = vmatprep.subr.bf16.mxu0 0
        %1090 = vmatpush1.bf16.msra.mxu0 0
        %1091 = vmatprep.subr.bf16.mxu0 0
        %1092 = vmatpush1.bf16.msra.mxu0 0
        %1093 = vmatprep.subr.bf16.mxu0 0
        %1094 = vmatpush1.bf16.msra.mxu0 0
        %1095 = vmatprep.subr.bf16.mxu0 0
        %1096 = vmatpush1.bf16.msra.mxu0 0
        %1097 = vmatprep.subr.bf16.mxu0 0
        %1098 = vmatpush1.bf16.msra.mxu0 0
        %1099 = vmatprep.subr.bf16.mxu0 0
        %1100 = vmatpush1.bf16.msra.mxu0 0
        %1101 = vmatprep.subr.bf16.mxu0 0
        %1102 = vmatpush1.bf16.msra.mxu0 0
        %1103 = vmatprep.subr.bf16.mxu0 0
        %1104 = vmatpush1.bf16.msra.mxu0 0
        %1105 = vmatprep.mubr.bf16.mxu0 0
        %1106 = vmatmul.mubr.bf16.gmra.mrb[0].mxu0 %v1018
        %v1107 = vpop.f32.mrb[0].mxu0
        %v1108 = vadd.f32 %v780, %v1107
        %v1109 = vpop.f32.mrb[0].mxu0
        %v1110 = vpop.f32.mrb[0].mxu0
        %v1111 = vadd.f32 %v783, %v1110
        %v1112 = vpop.f32.mrb[0].mxu0
        %1113 = vmatprep.mubr.bf16.mxu0 0
        %1114 = vmatmul.mubr.bf16.gmra.mrb[0].mxu0 %v1020
        %v1115 = vpop.f32.mrb[0].mxu0
        %v1116 = vadd.f32 %v788, %v1115
        %v1117 = vpop.f32.mrb[0].mxu0
        %v1118 = vpop.f32.mrb[0].mxu0
        %v1119 = vadd.f32 %v791, %v1118
        %v1120 = vpop.f32.mrb[0].mxu0
        %1121 = vmatprep.mubr.bf16.mxu0 0
        %1122 = vmatmul.mubr.bf16.gmra.mrb[0].mxu0 %v1022
        %v1123 = vpop.f32.mrb[0].mxu0
        %v1124 = vadd.f32 %v796, %v1123
        %v1125 = vpop.f32.mrb[0].mxu0
        %v1126 = vpop.f32.mrb[0].mxu0
        %v1127 = vadd.f32 %v799, %v1126
        %v1128 = vpop.f32.mrb[0].mxu0
        %1129 = vmatprep.mubr.bf16.mxu0 0
        %1130 = vmatmul.mubr.bf16.gmra.mrb[0].mxu0 %v1024
        %v1131 = vpop.f32.mrb[0].mxu0
        %v1132 = vadd.f32 %v804, %v1131
        %v1133 = vpop.f32.mrb[0].mxu0
        %v1134 = vpop.f32.mrb[0].mxu0
        %v1135 = vadd.f32 %v807, %v1134
        %v1136 = vpop.f32.mrb[0].mxu0
        %1137 = vmatprep.mubr.bf16.mxu0 0
        %1138 = vmatmul.mubr.bf16.gmra.mrb[0].mxu0 %v1026
        %v1139 = vpop.f32.mrb[0].mxu0
        %v1140 = vadd.f32 %v812, %v1139
        %v1141 = vpop.f32.mrb[0].mxu0
        %v1142 = vpop.f32.mrb[0].mxu0
        %v1143 = vadd.f32 %v815, %v1142
        %v1144 = vpop.f32.mrb[0].mxu0
        %1145 = vmatprep.mubr.bf16.mxu0 0
        %1146 = vmatmul.mubr.bf16.gmra.mrb[0].mxu0 %v1028
        %v1147 = vpop.f32.mrb[0].mxu0
        %v1148 = vadd.f32 %v820, %v1147
        %v1149 = vpop.f32.mrb[0].mxu0
        %v1150 = vpop.f32.mrb[0].mxu0
        %v1151 = vadd.f32 %v823, %v1150
        %v1152 = vpop.f32.mrb[0].mxu0
        %1153 = vmatprep.mubr.bf16.mxu0 0
        %1154 = vmatmul.mubr.bf16.gmra.mrb[0].mxu0 %v1030
        %v1155 = vpop.f32.mrb[0].mxu0
        %v1156 = vadd.f32 %v828, %v1155
        %v1157 = vpop.f32.mrb[0].mxu0
        %v1158 = vpop.f32.mrb[0].mxu0
        %v1159 = vadd.f32 %v831, %v1158
        %v1160 = vpop.f32.mrb[0].mxu0
        %1161 = vmatprep.mubr.bf16.mxu0 0
        %1162 = vmatmul.mubr.bf16.gmra.mrb[0].mxu0 %v1032
        %v1163 = vpop.f32.mrb[0].mxu0
        %v1164 = vadd.f32 %v836, %v1163
        %v1165 = vpop.f32.mrb[0].mxu0
        %v1166 = vpop.f32.mrb[0].mxu0
        %v1167 = vadd.f32 %v839, %v1166
        %v1168 = vpop.f32.mrb[0].mxu0
        %1169 = vmatprep.mubr.bf16.mxu0 0
        %1170 = vmatmul.mubr.bf16.gmra.mrb[0].mxu0 %v1034
        %v1171 = vpop.f32.mrb[0].mxu0
        %v1172 = vadd.f32 %v844, %v1171
        %v1173 = vpop.f32.mrb[0].mxu0
        %v1174 = vpop.f32.mrb[0].mxu0
        %v1175 = vadd.f32 %v847, %v1174
        %v1176 = vpop.f32.mrb[0].mxu0
        %1177 = vmatprep.mubr.bf16.mxu0 0
        %1178 = vmatmul.mubr.bf16.gmra.mrb[0].mxu0 %v1036
        %v1179 = vpop.f32.mrb[0].mxu0
        %v1180 = vadd.f32 %v852, %v1179
        %v1181 = vpop.f32.mrb[0].mxu0
        %v1182 = vpop.f32.mrb[0].mxu0
        %v1183 = vadd.f32 %v855, %v1182
        %v1184 = vpop.f32.mrb[0].mxu0
        %1185 = vmatprep.mubr.bf16.mxu0 0
        %1186 = vmatmul.mubr.bf16.gmra.mrb[0].mxu0 %v1038
        %v1187 = vpop.f32.mrb[0].mxu0
        %v1188 = vadd.f32 %v860, %v1187
        %v1189 = vpop.f32.mrb[0].mxu0
        %v1190 = vpop.f32.mrb[0].mxu0
        %v1191 = vadd.f32 %v863, %v1190
        %v1192 = vpop.f32.mrb[0].mxu0
        %1193 = vmatprep.mubr.bf16.mxu0 0
        %1194 = vmatmul.mubr.bf16.gmra.mrb[0].mxu0 %v1040
        %v1195 = vpop.f32.mrb[0].mxu0
        %v1196 = vadd.f32 %v868, %v1195
        %v1197 = vpop.f32.mrb[0].mxu0
        %v1198 = vpop.f32.mrb[0].mxu0
        %v1199 = vadd.f32 %v871, %v1198
        %v1200 = vpop.f32.mrb[0].mxu0
        %1201 = vmatprep.mubr.bf16.mxu0 0
        %1202 = vmatmul.mubr.bf16.gmra.mrb[0].mxu0 %v1042
        %v1203 = vpop.f32.mrb[0].mxu0
        %v1204 = vadd.f32 %v876, %v1203
        %v1205 = vpop.f32.mrb[0].mxu0
        %v1206 = vpop.f32.mrb[0].mxu0
        %v1207 = vadd.f32 %v879, %v1206
        %v1208 = vpop.f32.mrb[0].mxu0
        %1209 = vmatprep.mubr.bf16.mxu0 0
        %1210 = vmatmul.mubr.bf16.gmra.mrb[0].mxu0 %v1044
        %v1211 = vpop.f32.mrb[0].mxu0
        %v1212 = vadd.f32 %v884, %v1211
        %v1213 = vpop.f32.mrb[0].mxu0
        %v1214 = vpop.f32.mrb[0].mxu0
        %v1215 = vadd.f32 %v887, %v1214
        %v1216 = vpop.f32.mrb[0].mxu0
        %1217 = vmatprep.mubr.bf16.mxu0 0
        %1218 = vmatmul.mubr.bf16.gmra.mrb[0].mxu0 %v1046
        %v1219 = vpop.f32.mrb[0].mxu0
        %v1220 = vadd.f32 %v892, %v1219
        %v1221 = vpop.f32.mrb[0].mxu0
        %v1222 = vpop.f32.mrb[0].mxu0
        %v1223 = vadd.f32 %v895, %v1222
        %v1224 = vpop.f32.mrb[0].mxu0
        %1225 = vmatprep.mubr.bf16.mxu0 0
        %1226 = vmatmul.mubr.bf16.gmra.mrb[0].mxu0 %v1048
        %v1227 = vpop.f32.mrb[0].mxu0
        %v1228 = vadd.f32 %v900, %v1227
        %v1229 = vpop.f32.mrb[0].mxu0
        %v1230 = vpop.f32.mrb[0].mxu0
        %v1231 = vadd.f32 %v903, %v1230
        %v1232 = vpop.f32.mrb[0].mxu0
        %1233 = vmatprep.mubr.bf16.mxu0 0
        %1234 = vmatmul.mubr.bf16.gmra.mrb[0].mxu0 %v1050
        %v1235 = vpop.f32.mrb[0].mxu0
        %v1236 = vadd.f32 %v908, %v1235
        %v1237 = vpop.f32.mrb[0].mxu0
        %v1238 = vpop.f32.mrb[0].mxu0
        %v1239 = vadd.f32 %v911, %v1238
        %v1240 = vpop.f32.mrb[0].mxu0
        %1241 = vmatprep.mubr.bf16.mxu0 0
        %1242 = vmatmul.mubr.bf16.gmra.mrb[0].mxu0 %v1052
        %v1243 = vpop.f32.mrb[0].mxu0
        %v1244 = vadd.f32 %v916, %v1243
        %v1245 = vpop.f32.mrb[0].mxu0
        %v1246 = vpop.f32.mrb[0].mxu0
        %v1247 = vadd.f32 %v919, %v1246
        %v1248 = vpop.f32.mrb[0].mxu0
        %1249 = vmatprep.mubr.bf16.mxu0 0
        %1250 = vmatmul.mubr.bf16.gmra.mrb[0].mxu0 %v1054
        %v1251 = vpop.f32.mrb[0].mxu0
        %v1252 = vadd.f32 %v924, %v1251
        %v1253 = vpop.f32.mrb[0].mxu0
        %v1254 = vpop.f32.mrb[0].mxu0
        %v1255 = vadd.f32 %v927, %v1254
        %v1256 = vpop.f32.mrb[0].mxu0
        %1257 = vmatprep.mubr.bf16.mxu0 0
        %1258 = vmatmul.mubr.bf16.gmra.mrb[0].mxu0 %v1056
        %v1259 = vpop.f32.mrb[0].mxu0
        %v1260 = vadd.f32 %v932, %v1259
        %v1261 = vpop.f32.mrb[0].mxu0
        %v1262 = vpop.f32.mrb[0].mxu0
        %v1263 = vadd.f32 %v935, %v1262
        %v1264 = vpop.f32.mrb[0].mxu0
        %1265 = vmatprep.mubr.bf16.mxu0 0
        %1266 = vmatmul.mubr.bf16.gmra.mrb[0].mxu0 %v1058
        %v1267 = vpop.f32.mrb[0].mxu0
        %v1268 = vadd.f32 %v940, %v1267
        %v1269 = vpop.f32.mrb[0].mxu0
        %v1270 = vpop.f32.mrb[0].mxu0
        %v1271 = vadd.f32 %v943, %v1270
        %v1272 = vpop.f32.mrb[0].mxu0
        %1273 = vmatprep.mubr.bf16.mxu0 0
        %1274 = vmatmul.mubr.bf16.gmra.mrb[0].mxu0 %v1060
        %v1275 = vpop.f32.mrb[0].mxu0
        %v1276 = vadd.f32 %v948, %v1275
        %v1277 = vpop.f32.mrb[0].mxu0
        %v1278 = vpop.f32.mrb[0].mxu0
        %v1279 = vadd.f32 %v951, %v1278
        %v1280 = vpop.f32.mrb[0].mxu0
        %1281 = vmatprep.mubr.bf16.mxu0 0
        %1282 = vmatmul.mubr.bf16.gmra.mrb[0].mxu0 %v1062
        %v1283 = vpop.f32.mrb[0].mxu0
        %v1284 = vadd.f32 %v956, %v1283
        %v1285 = vpop.f32.mrb[0].mxu0
        %v1286 = vpop.f32.mrb[0].mxu0
        %v1287 = vadd.f32 %v959, %v1286
        %v1288 = vpop.f32.mrb[0].mxu0
        %1289 = vmatprep.mubr.bf16.mxu0 0
        %1290 = vmatmul.mubr.bf16.gmra.mrb[0].mxu0 %v1064
        %v1291 = vpop.f32.mrb[0].mxu0
        %v1292 = vadd.f32 %v964, %v1291
        %v1293 = vpop.f32.mrb[0].mxu0
        %v1294 = vpop.f32.mrb[0].mxu0
        %v1295 = vadd.f32 %v967, %v1294
        %v1296 = vpop.f32.mrb[0].mxu0
        %1297 = vmatprep.mubr.bf16.mxu0 0
        %1298 = vmatmul.mubr.bf16.gmra.mrb[0].mxu0 %v1066
        %v1299 = vpop.f32.mrb[0].mxu0
        %v1300 = vadd.f32 %v972, %v1299
        %v1301 = vpop.f32.mrb[0].mxu0
        %v1302 = vpop.f32.mrb[0].mxu0
        %v1303 = vadd.f32 %v975, %v1302
        %v1304 = vpop.f32.mrb[0].mxu0
        %1305 = vmatprep.mubr.bf16.mxu0 0
        %1306 = vmatmul.mubr.bf16.gmra.mrb[0].mxu0 %v1068
        %v1307 = vpop.f32.mrb[0].mxu0
        %v1308 = vadd.f32 %v980, %v1307
        %v1309 = vpop.f32.mrb[0].mxu0
        %v1310 = vpop.f32.mrb[0].mxu0
        %v1311 = vadd.f32 %v983, %v1310
        %v1312 = vpop.f32.mrb[0].mxu0
        %1313 = vmatprep.mubr.bf16.mxu0 0
        %1314 = vmatmul.mubr.bf16.gmra.mrb[0].mxu0 %v1071
        %v1315 = vpop.f32.mrb[0].mxu0
        %v1316 = vadd.f32 %v988, %v1315
        %v1317 = vpop.f32.mrb[0].mxu0
        %v1318 = vpop.f32.mrb[0].mxu0
        %v1319 = vpop.f32.mrb[0].mxu0
        %1320 = vdwg.mxu0
        %v1321 = vld [vmem:[%s185 + $0x8] sm:$0xc]
        %v1322 = vld [vmem:[%s185 + $0xc] sm:$0xf]
        %v1323 = vld [vmem:[%s185 + $0x10] sm:$0xf]
        %v1324 = vld [vmem:[%s185 + $0x14] sm:$0xf]
        %v1325 = vld [vmem:[%s185 + $0x18] sm:$0xf]
        %v1326 = vld [vmem:[%s185 + $0x1c] sm:$0xf]
        %v1327 = vld [vmem:[%s185 + $0x20] sm:$0xf]
        %v1328 = vld [vmem:[%s185 + $0x24] sm:$0xf]
        %v1329 = vld [vmem:[%s185 + $0x28] sm:$0xf]
        %v1330 = vld [vmem:[%s185 + $0x2c] sm:$0xf]
        %v1331 = vld [vmem:[%s185 + $0x30] sm:$0xf]
        %v1332 = vld [vmem:[%s185 + $0x34] sm:$0xf]
        %v1333 = vld [vmem:[%s185 + $0x38] sm:$0xf]
        %v1334 = vld [vmem:[%s185 + $0x3c] sm:$0xf]
        %v1335 = vld [vmem:[%s185 + $0x40] sm:$0xf]
        %v1336 = vld [vmem:[%s185 + $0x44] sm:$0xf]
        %v1337 = vld [vmem:[%s185 + $0x48] sm:$0xf]
        %v1338 = vld [vmem:[%s185 + $0x4c] sm:$0xf]
        %v1339 = vld [vmem:[%s185 + $0x50] sm:$0xf]
        %v1340 = vld [vmem:[%s185 + $0x54] sm:$0xf]
        %v1341 = vld [vmem:[%s185 + $0x58] sm:$0xf]
        %v1342 = vld [vmem:[%s185 + $0x5c] sm:$0xf]
        %v1343 = vld [vmem:[%s185 + $0x60] sm:$0xf]
        %v1344 = vld [vmem:[%s185 + $0x64] sm:$0xf]
        %v1345 = vld [vmem:[%s185 + $0x68] sm:$0xf]
        %v1346 = vld [vmem:[%s185 + $0x6c] sm:$0xf]
        %v1347 = vld [vmem:[%s185 + $0x70] sm:$0xf]
        %v1348 = vld [vmem:[%s185 + $0x74] sm:$0xf]
        %v1349 = vld [vmem:[%s185 + $0x78] sm:$0xf]
        %v1350 = vld [vmem:[%s185 + $0x7c] sm:$0xf]
        %v1351 = vld [vmem:[%s185 + $0x80] sm:$0xf]
        %v1352 = vld [vmem:[%s185 + $0x84] sm:$0xf]
        %v1353 = vld [vmem:[%s185 + $0x88] sm:$0xf]
        %v1354 = vld [vmem:[%s185 + $0x8c] sm:$0xf]
        %v1355 = vld [vmem:[%s185 + $0x90] sm:$0xf]
        %v1356 = vld [vmem:[%s185 + $0x94] sm:$0xf]
        %v1357 = vld [vmem:[%s185 + $0x98] sm:$0xf]
        %v1358 = vld [vmem:[%s185 + $0x9c] sm:$0xf]
        %v1359 = vld [vmem:[%s185 + $0xa0] sm:$0xf]
        %v1360 = vld [vmem:[%s185 + $0xa4] sm:$0xf]
        %v1361 = vld [vmem:[%s185 + $0xa8] sm:$0xf]
        %v1362 = vld [vmem:[%s185 + $0xac] sm:$0xf]
        %v1363 = vld [vmem:[%s185 + $0xb0] sm:$0xf]
        %v1364 = vld [vmem:[%s185 + $0xb4] sm:$0xf]
        %v1365 = vld [vmem:[%s185 + $0xb8] sm:$0xf]
        %v1366 = vld [vmem:[%s185 + $0xbc] sm:$0xf]
        %v1367 = vld [vmem:[%s185 + $0xc0] sm:$0xf]
        %v1368 = vld [vmem:[%s185 + $0xc4] sm:$0xf]
        %v1369 = vld [vmem:[%s185 + $0xc8] sm:$0xf]
        %v1370 = vld [vmem:[%s185 + $0xcc] sm:$0xf]
        %v1371 = vld [vmem:[%s185 + $0xd0] sm:$0xf]
        %v1372 = vld [vmem:[%s185 + $0xd4] sm:$0xf]
        %v1373 = vld [vmem:[%s185 + $0xd8] sm:$0xf]
        %v1374 = vld [vmem:[%s185 + $0xdc] sm:$0x7]
        %v1375 = vld [vmem:[#allocation5 + $0x40] sm:$0xf]
        %v1376 = vld [vmem:[#allocation5 + $0x44] sm:$0xf]
        %v1377 = vld [vmem:[#allocation5 + $0x48] sm:$0xf]
        %v1378 = vld [vmem:[#allocation5 + $0x4c] sm:$0xf]
        %v1379 = vld [vmem:[#allocation5 + $0x50] sm:$0xf]
        %v1380 = vld [vmem:[#allocation5 + $0x54] sm:$0xf]
        %v1381 = vld [vmem:[#allocation5 + $0x58] sm:$0xf]
        %v1382 = vld [vmem:[#allocation5 + $0x5c] sm:$0xf]
        %v1437 = vunpack.c.l.b16 %v1321
        %v1438 = vunpack.c.l.b16 %v1322
        %v1439 = vunpack.c.l.b16 %v1323
        %v1440 = vunpack.c.l.b16 %v1324
        %v1441 = vunpack.c.l.b16 %v1325
        %v1442 = vunpack.c.l.b16 %v1326
        %v1443 = vunpack.c.l.b16 %v1327
        %v1444 = vunpack.c.l.b16 %v1328
        %v1445 = vunpack.c.l.b16 %v1329
        %v1446 = vunpack.c.l.b16 %v1330
        %v1447 = vunpack.c.l.b16 %v1331
        %v1448 = vunpack.c.l.b16 %v1332
        %v1449 = vunpack.c.l.b16 %v1333
        %v1450 = vunpack.c.l.b16 %v1334
        %v1451 = vunpack.c.l.b16 %v1335
        %v1452 = vunpack.c.l.b16 %v1336
        %v1453 = vunpack.c.l.b16 %v1337
        %v1454 = vunpack.c.l.b16 %v1338
        %v1455 = vunpack.c.l.b16 %v1339
        %v1456 = vunpack.c.l.b16 %v1340
        %v1457 = vunpack.c.l.b16 %v1341
        %v1458 = vunpack.c.l.b16 %v1342
        %v1459 = vunpack.c.l.b16 %v1343
        %v1460 = vunpack.c.l.b16 %v1344
        %v1461 = vunpack.c.l.b16 %v1345
        %v1462 = vunpack.c.l.b16 %v1346
        %v1463 = vunpack.c.l.b16 %v1347
        %v1464 = vunpack.c.l.b16 %v1348
        %v1465 = vunpack.c.l.b16 %v1349
        %v1466 = vunpack.c.l.b16 %v1350
        %v1467 = vunpack.c.l.b16 %v1351
        %v1468 = vunpack.c.l.b16 %v1352
        %v1469 = vunpack.c.l.b16 %v1353
        %v1470 = vunpack.c.l.b16 %v1354
        %v1471 = vunpack.c.l.b16 %v1355
        %v1472 = vunpack.c.l.b16 %v1356
        %v1473 = vunpack.c.l.b16 %v1357
        %v1474 = vunpack.c.l.b16 %v1358
        %v1475 = vunpack.c.l.b16 %v1359
        %v1476 = vunpack.c.l.b16 %v1360
        %v1477 = vunpack.c.l.b16 %v1361
        %v1478 = vunpack.c.l.b16 %v1362
        %v1479 = vunpack.c.l.b16 %v1363
        %v1480 = vunpack.c.l.b16 %v1364
        %v1481 = vunpack.c.l.b16 %v1365
        %v1482 = vunpack.c.l.b16 %v1366
        %v1483 = vunpack.c.l.b16 %v1367
        %v1484 = vunpack.c.l.b16 %v1368
        %v1485 = vunpack.c.l.b16 %v1369
        %v1486 = vunpack.c.l.b16 %v1370
        %v1487 = vunpack.c.l.b16 %v1371
        %v1488 = vunpack.c.l.b16 %v1372
        %v1489 = vunpack.c.l.b16 %v1373
        %v1490 = vunpack.c.l.b16 %v1374
        %v1491 = vpack.c.b16 %v1438, %v1437
        %v1492 = vpack.c.b16 %v1440, %v1439
        %v1493 = vpack.c.b16 %v1442, %v1441
        %v1494 = vpack.c.b16 %v1444, %v1443
        %v1495 = vpack.c.b16 %v1446, %v1445
        %v1496 = vpack.c.b16 %v1448, %v1447
        %v1497 = vpack.c.b16 %v1450, %v1449
        %v1498 = vpack.c.b16 %v1452, %v1451
        %v1499 = vpack.c.b16 %v1454, %v1453
        %v1500 = vpack.c.b16 %v1456, %v1455
        %v1501 = vpack.c.b16 %v1458, %v1457
        %v1502 = vpack.c.b16 %v1460, %v1459
        %v1503 = vpack.c.b16 %v1462, %v1461
        %v1504 = vpack.c.b16 %v1464, %v1463
        %v1505 = vpack.c.b16 %v1466, %v1465
        %v1506 = vpack.c.b16 %v1468, %v1467
        %v1507 = vpack.c.b16 %v1470, %v1469
        %v1508 = vpack.c.b16 %v1472, %v1471
        %v1509 = vpack.c.b16 %v1474, %v1473
        %v1510 = vpack.c.b16 %v1476, %v1475
        %v1511 = vpack.c.b16 %v1478, %v1477
        %v1512 = vpack.c.b16 %v1480, %v1479
        %v1513 = vpack.c.b16 %v1482, %v1481
        %v1514 = vpack.c.b16 %v1484, %v1483
        %v1515 = vpack.c.b16 %v1486, %v1485
        %v1516 = vpack.c.b16 %v1488, %v1487
        %v1517 = vpack.c.b16 %v1490, %v1489
        %vm1518 = vsmask.f32 5376
        %v1520 = vshrl.u32 %v1491, 16
        %v1522 = vrot.slane %v1520, 2
        %v1523 = vshll.u32 %v1491, 16
        %v1525 = vrot.slane %v1523, 3
        %v1526 = vor.u32 %v1522, %v1525
        %v1528 = vshrl.u32 %v1492, 16
        %v1530 = vrot.slane %v1528, 2
        %v1531 = vshll.u32 %v1492, 16
        %v1533 = vrot.slane %v1531, 3
        %v1534 = vor.u32 %v1530, %v1533
        %v1535 = vsel %vm1518, %v1526, %v1534
        %v1537 = vshrl.u32 %v1493, 16
        %v1539 = vrot.slane %v1537, 2
        %v1540 = vshll.u32 %v1493, 16
        %v1542 = vrot.slane %v1540, 3
        %v1543 = vor.u32 %v1539, %v1542
        %v1544 = vsel %vm1518, %v1534, %v1543
        %v1546 = vshrl.u32 %v1494, 16
        %v1548 = vrot.slane %v1546, 2
        %v1549 = vshll.u32 %v1494, 16
        %v1551 = vrot.slane %v1549, 3
        %v1552 = vor.u32 %v1548, %v1551
        %v1553 = vsel %vm1518, %v1543, %v1552
        %v1555 = vshrl.u32 %v1495, 16
        %v1557 = vrot.slane %v1555, 2
        %v1558 = vshll.u32 %v1495, 16
        %v1560 = vrot.slane %v1558, 3
        %v1561 = vor.u32 %v1557, %v1560
        %v1562 = vsel %vm1518, %v1552, %v1561
        %v1564 = vshrl.u32 %v1496, 16
        %v1566 = vrot.slane %v1564, 2
        %v1567 = vshll.u32 %v1496, 16
        %v1569 = vrot.slane %v1567, 3
        %v1570 = vor.u32 %v1566, %v1569
        %v1571 = vsel %vm1518, %v1561, %v1570
        %v1573 = vshrl.u32 %v1497, 16
        %v1575 = vrot.slane %v1573, 2
        %v1576 = vshll.u32 %v1497, 16
        %v1578 = vrot.slane %v1576, 3
        %v1579 = vor.u32 %v1575, %v1578
        %v1580 = vsel %vm1518, %v1570, %v1579
        %v1582 = vshrl.u32 %v1498, 16
        %v1584 = vrot.slane %v1582, 2
        %v1585 = vshll.u32 %v1498, 16
        %v1587 = vrot.slane %v1585, 3
        %v1588 = vor.u32 %v1584, %v1587
        %v1589 = vsel %vm1518, %v1579, %v1588
        %v1591 = vshrl.u32 %v1499, 16
        %v1593 = vrot.slane %v1591, 2
        %v1594 = vshll.u32 %v1499, 16
        %v1596 = vrot.slane %v1594, 3
        %v1597 = vor.u32 %v1593, %v1596
        %v1598 = vsel %vm1518, %v1588, %v1597
        %v1600 = vshrl.u32 %v1500, 16
        %v1602 = vrot.slane %v1600, 2
        %v1603 = vshll.u32 %v1500, 16
        %v1605 = vrot.slane %v1603, 3
        %v1606 = vor.u32 %v1602, %v1605
        %v1607 = vsel %vm1518, %v1597, %v1606
        %v1609 = vshrl.u32 %v1501, 16
        %v1611 = vrot.slane %v1609, 2
        %v1612 = vshll.u32 %v1501, 16
        %v1614 = vrot.slane %v1612, 3
        %v1615 = vor.u32 %v1611, %v1614
        %v1616 = vsel %vm1518, %v1606, %v1615
        %v1618 = vshrl.u32 %v1502, 16
        %v1620 = vrot.slane %v1618, 2
        %v1621 = vshll.u32 %v1502, 16
        %v1623 = vrot.slane %v1621, 3
        %v1624 = vor.u32 %v1620, %v1623
        %v1625 = vsel %vm1518, %v1615, %v1624
        %v1627 = vshrl.u32 %v1503, 16
        %v1629 = vrot.slane %v1627, 2
        %v1630 = vshll.u32 %v1503, 16
        %v1632 = vrot.slane %v1630, 3
        %v1633 = vor.u32 %v1629, %v1632
        %v1634 = vsel %vm1518, %v1624, %v1633
        %v1636 = vshrl.u32 %v1504, 16
        %v1638 = vrot.slane %v1636, 2
        %v1639 = vshll.u32 %v1504, 16
        %v1641 = vrot.slane %v1639, 3
        %v1642 = vor.u32 %v1638, %v1641
        %v1643 = vsel %vm1518, %v1633, %v1642
        %v1645 = vshrl.u32 %v1505, 16
        %v1647 = vrot.slane %v1645, 2
        %v1648 = vshll.u32 %v1505, 16
        %v1650 = vrot.slane %v1648, 3
        %v1651 = vor.u32 %v1647, %v1650
        %v1652 = vsel %vm1518, %v1642, %v1651
        %v1654 = vshrl.u32 %v1506, 16
        %v1656 = vrot.slane %v1654, 2
        %v1657 = vshll.u32 %v1506, 16
        %v1659 = vrot.slane %v1657, 3
        %v1660 = vor.u32 %v1656, %v1659
        %v1661 = vsel %vm1518, %v1651, %v1660
        %v1663 = vshrl.u32 %v1507, 16
        %v1665 = vrot.slane %v1663, 2
        %v1666 = vshll.u32 %v1507, 16
        %v1668 = vrot.slane %v1666, 3
        %v1669 = vor.u32 %v1665, %v1668
        %v1670 = vsel %vm1518, %v1660, %v1669
        %v1672 = vshrl.u32 %v1508, 16
        %v1674 = vrot.slane %v1672, 2
        %v1675 = vshll.u32 %v1508, 16
        %v1677 = vrot.slane %v1675, 3
        %v1678 = vor.u32 %v1674, %v1677
        %v1679 = vsel %vm1518, %v1669, %v1678
        %v1681 = vshrl.u32 %v1509, 16
        %v1683 = vrot.slane %v1681, 2
        %v1684 = vshll.u32 %v1509, 16
        %v1686 = vrot.slane %v1684, 3
        %v1687 = vor.u32 %v1683, %v1686
        %v1688 = vsel %vm1518, %v1678, %v1687
        %v1690 = vshrl.u32 %v1510, 16
        %v1692 = vrot.slane %v1690, 2
        %v1693 = vshll.u32 %v1510, 16
        %v1695 = vrot.slane %v1693, 3
        %v1696 = vor.u32 %v1692, %v1695
        %v1697 = vsel %vm1518, %v1687, %v1696
        %v1699 = vshrl.u32 %v1511, 16
        %v1701 = vrot.slane %v1699, 2
        %v1702 = vshll.u32 %v1511, 16
        %v1704 = vrot.slane %v1702, 3
        %v1705 = vor.u32 %v1701, %v1704
        %v1706 = vsel %vm1518, %v1696, %v1705
        %v1708 = vshrl.u32 %v1512, 16
        %v1710 = vrot.slane %v1708, 2
        %v1711 = vshll.u32 %v1512, 16
        %v1713 = vrot.slane %v1711, 3
        %v1714 = vor.u32 %v1710, %v1713
        %v1715 = vsel %vm1518, %v1705, %v1714
        %v1717 = vshrl.u32 %v1513, 16
        %v1719 = vrot.slane %v1717, 2
        %v1720 = vshll.u32 %v1513, 16
        %v1722 = vrot.slane %v1720, 3
        %v1723 = vor.u32 %v1719, %v1722
        %v1724 = vsel %vm1518, %v1714, %v1723
        %v1726 = vshrl.u32 %v1514, 16
        %v1728 = vrot.slane %v1726, 2
        %v1729 = vshll.u32 %v1514, 16
        %v1731 = vrot.slane %v1729, 3
        %v1732 = vor.u32 %v1728, %v1731
        %v1733 = vsel %vm1518, %v1723, %v1732
        %v1735 = vshrl.u32 %v1515, 16
        %v1737 = vrot.slane %v1735, 2
        %v1738 = vshll.u32 %v1515, 16
        %v1740 = vrot.slane %v1738, 3
        %v1741 = vor.u32 %v1737, %v1740
        %v1742 = vsel %vm1518, %v1732, %v1741
        %v1744 = vshrl.u32 %v1516, 16
        %v1746 = vrot.slane %v1744, 2
        %v1747 = vshll.u32 %v1516, 16
        %v1749 = vrot.slane %v1747, 3
        %v1750 = vor.u32 %v1746, %v1749
        %v1751 = vsel %vm1518, %v1741, %v1750
        %v1753 = vshrl.u32 %v1517, 16
        %v1755 = vrot.slane %v1753, 2
        %v1756 = vshll.u32 %v1517, 16
        %v1758 = vrot.slane %v1756, 3
        %v1759 = vor.u32 %v1755, %v1758
        %v1760 = vsel %vm1518, %v1750, %v1759
        %v1769 = vunpack.c.l.b16 %v1375
        %v1770 = vunpack.c.l.b16 %v1376
        %v1771 = vunpack.c.l.b16 %v1377
        %v1772 = vunpack.c.l.b16 %v1378
        %v1773 = vunpack.c.l.b16 %v1379
        %v1774 = vunpack.c.l.b16 %v1380
        %v1775 = vunpack.c.l.b16 %v1381
        %v1776 = vunpack.c.l.b16 %v1382
        %v1777 = vpack.c.b16 %v1770, %v1769
        %v1778 = vpack.c.b16 %v1772, %v1771
        %v1779 = vpack.c.b16 %v1774, %v1773
        %v1780 = vpack.c.b16 %v1776, %v1775
        %v1786 = vsel %vm663, %v1535, 0
        %v1789 = vsel %vm663, %v1544, 0
        %v1792 = vsel %vm663, %v1553, 0
        %v1795 = vsel %vm663, %v1562, 0
        %v1798 = vsel %vm663, %v1571, 0
        %v1801 = vsel %vm663, %v1580, 0
        %v1804 = vsel %vm663, %v1589, 0
        %v1807 = vsel %vm663, %v1598, 0
        %v1810 = vsel %vm663, %v1607, 0
        %v1813 = vsel %vm663, %v1616, 0
        %v1816 = vsel %vm663, %v1625, 0
        %v1819 = vsel %vm663, %v1634, 0
        %v1822 = vsel %vm663, %v1643, 0
        %v1825 = vsel %vm663, %v1652, 0
        %v1828 = vsel %vm663, %v1661, 0
        %v1831 = vsel %vm663, %v1670, 0
        %v1834 = vsel %vm663, %v1679, 0
        %v1837 = vsel %vm663, %v1688, 0
        %v1840 = vsel %vm663, %v1697, 0
        %v1843 = vsel %vm663, %v1706, 0
        %v1846 = vsel %vm663, %v1715, 0
        %v1849 = vsel %vm663, %v1724, 0
        %v1852 = vsel %vm663, %v1733, 0
        %v1855 = vsel %vm663, %v1742, 0
        %v1858 = vsel %vm663, %v1751, 0
        %v1861 = vsel %vm663, %v1760, 0
        %v1864 = vsel %vm663, %v1759, 0
        %1866 = vmatprep.subr.bf16.mxu0 0
        %1867 = vmatpush1.bf16.msra.mxu0 %v1777
        %1868 = vmatprep.subr.bf16.mxu0 0
        %1869 = vmatpush1.bf16.msra.mxu0 %v1778
        %1870 = vmatprep.subr.bf16.mxu0 0
        %1871 = vmatpush1.bf16.msra.mxu0 %v1779
        %1872 = vmatprep.subr.bf16.mxu0 0
        %1873 = vmatpush1.bf16.msra.mxu0 %v1780
        %1874 = vmatprep.subr.bf16.mxu0 0
        %1875 = vmatpush1.bf16.msra.mxu0 0
        %1876 = vmatprep.subr.bf16.mxu0 0
        %1877 = vmatpush1.bf16.msra.mxu0 0
        %1878 = vmatprep.subr.bf16.mxu0 0
        %1879 = vmatpush1.bf16.msra.mxu0 0
        %1880 = vmatprep.subr.bf16.mxu0 0
        %1881 = vmatpush1.bf16.msra.mxu0 0
        %1882 = vmatprep.subr.bf16.mxu0 0
        %1883 = vmatpush1.bf16.msra.mxu0 0
        %1884 = vmatprep.subr.bf16.mxu0 0
        %1885 = vmatpush1.bf16.msra.mxu0 0
        %1886 = vmatprep.subr.bf16.mxu0 0
        %1887 = vmatpush1.bf16.msra.mxu0 0
        %1888 = vmatprep.subr.bf16.mxu0 0
        %1889 = vmatpush1.bf16.msra.mxu0 0
        %1890 = vmatprep.subr.bf16.mxu0 0
        %1891 = vmatpush1.bf16.msra.mxu0 0
        %1892 = vmatprep.subr.bf16.mxu0 0
        %1893 = vmatpush1.bf16.msra.mxu0 0
        %1894 = vmatprep.subr.bf16.mxu0 0
        %1895 = vmatpush1.bf16.msra.mxu0 0
        %1896 = vmatprep.subr.bf16.mxu0 0
        %1897 = vmatpush1.bf16.msra.mxu0 0
        %1898 = vmatprep.mubr.bf16.mxu0 0
        %1899 = vmatmul.mubr.bf16.gmra.mrb[0].mxu0 %v1786
        %v1900 = vpop.f32.mrb[0].mxu0
        %v1901 = vadd.f32 0.0, %v1900
        %v1902 = vpop.f32.mrb[0].mxu0
        %v1903 = vpop.f32.mrb[0].mxu0
        %v1904 = vadd.f32 0.0, %v1903
        %v1905 = vpop.f32.mrb[0].mxu0
        %1906 = vmatprep.mubr.bf16.mxu0 0
        %1907 = vmatmul.mubr.bf16.gmra.mrb[0].mxu0 %v1789
        %v1908 = vpop.f32.mrb[0].mxu0
        %v1909 = vadd.f32 0.0, %v1908
        %v1910 = vpop.f32.mrb[0].mxu0
        %v1911 = vpop.f32.mrb[0].mxu0
        %v1912 = vadd.f32 0.0, %v1911
        %v1913 = vpop.f32.mrb[0].mxu0
        %1914 = vmatprep.mubr.bf16.mxu0 0
        %1915 = vmatmul.mubr.bf16.gmra.mrb[0].mxu0 %v1792
        %v1916 = vpop.f32.mrb[0].mxu0
        %v1917 = vadd.f32 0.0, %v1916
        %v1918 = vpop.f32.mrb[0].mxu0
        %v1919 = vpop.f32.mrb[0].mxu0
        %v1920 = vadd.f32 0.0, %v1919
        %v1921 = vpop.f32.mrb[0].mxu0
        %1922 = vmatprep.mubr.bf16.mxu0 0
        %1923 = vmatmul.mubr.bf16.gmra.mrb[0].mxu0 %v1795
        %v1924 = vpop.f32.mrb[0].mxu0
        %v1925 = vadd.f32 0.0, %v1924
        %v1926 = vpop.f32.mrb[0].mxu0
        %v1927 = vpop.f32.mrb[0].mxu0
        %v1928 = vadd.f32 0.0, %v1927
        %v1929 = vpop.f32.mrb[0].mxu0
        %1930 = vmatprep.mubr.bf16.mxu0 0
        %1931 = vmatmul.mubr.bf16.gmra.mrb[0].mxu0 %v1798
        %v1932 = vpop.f32.mrb[0].mxu0
        %v1933 = vadd.f32 0.0, %v1932
        %v1934 = vpop.f32.mrb[0].mxu0
        %v1935 = vpop.f32.mrb[0].mxu0
        %v1936 = vadd.f32 0.0, %v1935
        %v1937 = vpop.f32.mrb[0].mxu0
        %1938 = vmatprep.mubr.bf16.mxu0 0
        %1939 = vmatmul.mubr.bf16.gmra.mrb[0].mxu0 %v1801
        %v1940 = vpop.f32.mrb[0].mxu0
        %v1941 = vadd.f32 0.0, %v1940
        %v1942 = vpop.f32.mrb[0].mxu0
        %v1943 = vpop.f32.mrb[0].mxu0
        %v1944 = vadd.f32 0.0, %v1943
        %v1945 = vpop.f32.mrb[0].mxu0
        %1946 = vmatprep.mubr.bf16.mxu0 0
        %1947 = vmatmul.mubr.bf16.gmra.mrb[0].mxu0 %v1804
        %v1948 = vpop.f32.mrb[0].mxu0
        %v1949 = vadd.f32 0.0, %v1948
        %v1950 = vpop.f32.mrb[0].mxu0
        %v1951 = vpop.f32.mrb[0].mxu0
        %v1952 = vadd.f32 0.0, %v1951
        %v1953 = vpop.f32.mrb[0].mxu0
        %1954 = vmatprep.mubr.bf16.mxu0 0
        %1955 = vmatmul.mubr.bf16.gmra.mrb[0].mxu0 %v1807
        %v1956 = vpop.f32.mrb[0].mxu0
        %v1957 = vadd.f32 0.0, %v1956
        %v1958 = vpop.f32.mrb[0].mxu0
        %v1959 = vpop.f32.mrb[0].mxu0
        %v1960 = vadd.f32 0.0, %v1959
        %v1961 = vpop.f32.mrb[0].mxu0
        %1962 = vmatprep.mubr.bf16.mxu0 0
        %1963 = vmatmul.mubr.bf16.gmra.mrb[0].mxu0 %v1810
        %v1964 = vpop.f32.mrb[0].mxu0
        %v1965 = vadd.f32 0.0, %v1964
        %v1966 = vpop.f32.mrb[0].mxu0
        %v1967 = vpop.f32.mrb[0].mxu0
        %v1968 = vadd.f32 0.0, %v1967
        %v1969 = vpop.f32.mrb[0].mxu0
        %1970 = vmatprep.mubr.bf16.mxu0 0
        %1971 = vmatmul.mubr.bf16.gmra.mrb[0].mxu0 %v1813
        %v1972 = vpop.f32.mrb[0].mxu0
        %v1973 = vadd.f32 0.0, %v1972
        %v1974 = vpop.f32.mrb[0].mxu0
        %v1975 = vpop.f32.mrb[0].mxu0
        %v1976 = vadd.f32 0.0, %v1975
        %v1977 = vpop.f32.mrb[0].mxu0
        %1978 = vmatprep.mubr.bf16.mxu0 0
        %1979 = vmatmul.mubr.bf16.gmra.mrb[0].mxu0 %v1816
        %v1980 = vpop.f32.mrb[0].mxu0
        %v1981 = vadd.f32 0.0, %v1980
        %v1982 = vpop.f32.mrb[0].mxu0
        %v1983 = vpop.f32.mrb[0].mxu0
        %v1984 = vadd.f32 0.0, %v1983
        %v1985 = vpop.f32.mrb[0].mxu0
        %1986 = vmatprep.mubr.bf16.mxu0 0
        %1987 = vmatmul.mubr.bf16.gmra.mrb[0].mxu0 %v1819
        %v1988 = vpop.f32.mrb[0].mxu0
        %v1989 = vadd.f32 0.0, %v1988
        %v1990 = vpop.f32.mrb[0].mxu0
        %v1991 = vpop.f32.mrb[0].mxu0
        %v1992 = vadd.f32 0.0, %v1991
        %v1993 = vpop.f32.mrb[0].mxu0
        %1994 = vmatprep.mubr.bf16.mxu0 0
        %1995 = vmatmul.mubr.bf16.gmra.mrb[0].mxu0 %v1822
        %v1996 = vpop.f32.mrb[0].mxu0
        %v1997 = vadd.f32 0.0, %v1996
        %v1998 = vpop.f32.mrb[0].mxu0
        %v1999 = vpop.f32.mrb[0].mxu0
        %v2000 = vadd.f32 0.0, %v1999
        %v2001 = vpop.f32.mrb[0].mxu0
        %2002 = vmatprep.mubr.bf16.mxu0 0
        %2003 = vmatmul.mubr.bf16.gmra.mrb[0].mxu0 %v1825
        %v2004 = vpop.f32.mrb[0].mxu0
        %v2005 = vadd.f32 0.0, %v2004
        %v2006 = vpop.f32.mrb[0].mxu0
        %v2007 = vpop.f32.mrb[0].mxu0
        %v2008 = vadd.f32 0.0, %v2007
        %v2009 = vpop.f32.mrb[0].mxu0
        %2010 = vmatprep.mubr.bf16.mxu0 0
        %2011 = vmatmul.mubr.bf16.gmra.mrb[0].mxu0 %v1828
        %v2012 = vpop.f32.mrb[0].mxu0
        %v2013 = vadd.f32 0.0, %v2012
        %v2014 = vpop.f32.mrb[0].mxu0
        %v2015 = vpop.f32.mrb[0].mxu0
        %v2016 = vadd.f32 0.0, %v2015
        %v2017 = vpop.f32.mrb[0].mxu0
        %2018 = vmatprep.mubr.bf16.mxu0 0
        %2019 = vmatmul.mubr.bf16.gmra.mrb[0].mxu0 %v1831
        %v2020 = vpop.f32.mrb[0].mxu0
        %v2021 = vadd.f32 0.0, %v2020
        %v2022 = vpop.f32.mrb[0].mxu0
        %v2023 = vpop.f32.mrb[0].mxu0
        %v2024 = vadd.f32 0.0, %v2023
        %v2025 = vpop.f32.mrb[0].mxu0
        %2026 = vmatprep.mubr.bf16.mxu0 0
        %2027 = vmatmul.mubr.bf16.gmra.mrb[0].mxu0 %v1834
        %v2028 = vpop.f32.mrb[0].mxu0
        %v2029 = vadd.f32 0.0, %v2028
        %v2030 = vpop.f32.mrb[0].mxu0
        %v2031 = vpop.f32.mrb[0].mxu0
        %v2032 = vadd.f32 0.0, %v2031
        %v2033 = vpop.f32.mrb[0].mxu0
        %2034 = vmatprep.mubr.bf16.mxu0 0
        %2035 = vmatmul.mubr.bf16.gmra.mrb[0].mxu0 %v1837
        %v2036 = vpop.f32.mrb[0].mxu0
        %v2037 = vadd.f32 0.0, %v2036
        %v2038 = vpop.f32.mrb[0].mxu0
        %v2039 = vpop.f32.mrb[0].mxu0
        %v2040 = vadd.f32 0.0, %v2039
        %v2041 = vpop.f32.mrb[0].mxu0
        %2042 = vmatprep.mubr.bf16.mxu0 0
        %2043 = vmatmul.mubr.bf16.gmra.mrb[0].mxu0 %v1840
        %v2044 = vpop.f32.mrb[0].mxu0
        %v2045 = vadd.f32 0.0, %v2044
        %v2046 = vpop.f32.mrb[0].mxu0
        %v2047 = vpop.f32.mrb[0].mxu0
        %v2048 = vadd.f32 0.0, %v2047
        %v2049 = vpop.f32.mrb[0].mxu0
        %2050 = vmatprep.mubr.bf16.mxu0 0
        %2051 = vmatmul.mubr.bf16.gmra.mrb[0].mxu0 %v1843
        %v2052 = vpop.f32.mrb[0].mxu0
        %v2053 = vadd.f32 0.0, %v2052
        %v2054 = vpop.f32.mrb[0].mxu0
        %v2055 = vpop.f32.mrb[0].mxu0
        %v2056 = vadd.f32 0.0, %v2055
        %v2057 = vpop.f32.mrb[0].mxu0
        %2058 = vmatprep.mubr.bf16.mxu0 0
        %2059 = vmatmul.mubr.bf16.gmra.mrb[0].mxu0 %v1846
        %v2060 = vpop.f32.mrb[0].mxu0
        %v2061 = vadd.f32 0.0, %v2060
        %v2062 = vpop.f32.mrb[0].mxu0
        %v2063 = vpop.f32.mrb[0].mxu0
        %v2064 = vadd.f32 0.0, %v2063
        %v2065 = vpop.f32.mrb[0].mxu0
        %2066 = vmatprep.mubr.bf16.mxu0 0
        %2067 = vmatmul.mubr.bf16.gmra.mrb[0].mxu0 %v1849
        %v2068 = vpop.f32.mrb[0].mxu0
        %v2069 = vadd.f32 0.0, %v2068
        %v2070 = vpop.f32.mrb[0].mxu0
        %v2071 = vpop.f32.mrb[0].mxu0
        %v2072 = vadd.f32 0.0, %v2071
        %v2073 = vpop.f32.mrb[0].mxu0
        %2074 = vmatprep.mubr.bf16.mxu0 0
        %2075 = vmatmul.mubr.bf16.gmra.mrb[0].mxu0 %v1852
        %v2076 = vpop.f32.mrb[0].mxu0
        %v2077 = vadd.f32 0.0, %v2076
        %v2078 = vpop.f32.mrb[0].mxu0
        %v2079 = vpop.f32.mrb[0].mxu0
        %v2080 = vadd.f32 0.0, %v2079
        %v2081 = vpop.f32.mrb[0].mxu0
        %2082 = vmatprep.mubr.bf16.mxu0 0
        %2083 = vmatmul.mubr.bf16.gmra.mrb[0].mxu0 %v1855
        %v2084 = vpop.f32.mrb[0].mxu0
        %v2085 = vadd.f32 0.0, %v2084
        %v2086 = vpop.f32.mrb[0].mxu0
        %v2087 = vpop.f32.mrb[0].mxu0
        %v2088 = vadd.f32 0.0, %v2087
        %v2089 = vpop.f32.mrb[0].mxu0
        %2090 = vmatprep.mubr.bf16.mxu0 0
        %2091 = vmatmul.mubr.bf16.gmra.mrb[0].mxu0 %v1858
        %v2092 = vpop.f32.mrb[0].mxu0
        %v2093 = vadd.f32 0.0, %v2092
        %v2094 = vpop.f32.mrb[0].mxu0
        %v2095 = vpop.f32.mrb[0].mxu0
        %v2096 = vadd.f32 0.0, %v2095
        %v2097 = vpop.f32.mrb[0].mxu0
        %2098 = vmatprep.mubr.bf16.mxu0 0
        %2099 = vmatmul.mubr.bf16.gmra.mrb[0].mxu0 %v1861
        %v2100 = vpop.f32.mrb[0].mxu0
        %v2101 = vadd.f32 0.0, %v2100
        %v2102 = vpop.f32.mrb[0].mxu0
        %v2103 = vpop.f32.mrb[0].mxu0
        %v2104 = vadd.f32 0.0, %v2103
        %v2105 = vpop.f32.mrb[0].mxu0
        %2106 = vmatprep.mubr.bf16.mxu0 0
        %2107 = vmatmul.mubr.bf16.gmra.mrb[0].mxu0 %v1864
        %v2108 = vpop.f32.mrb[0].mxu0
        %v2109 = vadd.f32 0.0, %v2108
        %v2110 = vpop.f32.mrb[0].mxu0
        %v2111 = vpop.f32.mrb[0].mxu0
        %v2112 = vpop.f32.mrb[0].mxu0
        %2113 = vdwg.mxu0
        %v2114 = vadd.f32 %v1108, %v1901
        %v2115 = vadd.f32 %v1111, %v1904
        %v2116 = vadd.f32 %v1116, %v1909
        %v2117 = vadd.f32 %v1119, %v1912
        %v2118 = vadd.f32 %v1124, %v1917
        %v2119 = vadd.f32 %v1127, %v1920
        %v2120 = vadd.f32 %v1132, %v1925
        %v2121 = vadd.f32 %v1135, %v1928
        %v2122 = vadd.f32 %v1140, %v1933
        %v2123 = vadd.f32 %v1143, %v1936
        %v2124 = vadd.f32 %v1148, %v1941
        %v2125 = vadd.f32 %v1151, %v1944
        %v2126 = vadd.f32 %v1156, %v1949
        %v2127 = vadd.f32 %v1159, %v1952
        %v2128 = vadd.f32 %v1164, %v1957
        %v2129 = vadd.f32 %v1167, %v1960
        %v2130 = vadd.f32 %v1172, %v1965
        %v2131 = vadd.f32 %v1175, %v1968
        %v2132 = vadd.f32 %v1180, %v1973
        %v2133 = vadd.f32 %v1183, %v1976
        %v2134 = vadd.f32 %v1188, %v1981
        %v2135 = vadd.f32 %v1191, %v1984
        %v2136 = vadd.f32 %v1196, %v1989
        %v2137 = vadd.f32 %v1199, %v1992
        %v2138 = vadd.f32 %v1204, %v1997
        %v2139 = vadd.f32 %v1207, %v2000
        %v2140 = vadd.f32 %v1212, %v2005
        %v2141 = vadd.f32 %v1215, %v2008
        %v2142 = vadd.f32 %v1220, %v2013
        %v2143 = vadd.f32 %v1223, %v2016
        %v2144 = vadd.f32 %v1228, %v2021
        %v2145 = vadd.f32 %v1231, %v2024
        %v2146 = vadd.f32 %v1236, %v2029
        %v2147 = vadd.f32 %v1239, %v2032
        %v2148 = vadd.f32 %v1244, %v2037
        %v2149 = vadd.f32 %v1247, %v2040
        %v2150 = vadd.f32 %v1252, %v2045
        %v2151 = vadd.f32 %v1255, %v2048
        %v2152 = vadd.f32 %v1260, %v2053
        %v2153 = vadd.f32 %v1263, %v2056
        %v2154 = vadd.f32 %v1268, %v2061
        %v2155 = vadd.f32 %v1271, %v2064
        %v2156 = vadd.f32 %v1276, %v2069
        %v2157 = vadd.f32 %v1279, %v2072
        %v2158 = vadd.f32 %v1284, %v2077
        %v2159 = vadd.f32 %v1287, %v2080
        %v2160 = vadd.f32 %v1292, %v2085
        %v2161 = vadd.f32 %v1295, %v2088
        %v2162 = vadd.f32 %v1300, %v2093
        %v2163 = vadd.f32 %v1303, %v2096
        %v2164 = vadd.f32 %v1308, %v2101
        %v2165 = vadd.f32 %v1311, %v2104
        %v2166 = vadd.f32 %v1316, %v2109
        %v2167 = vld [vmem:[%s185 + $0x8] sm:$0x8]
        %v2168 = vld [vmem:[#allocation5 + $0x60] sm:$0xf]
        %v2169 = vld [vmem:[#allocation5 + $0x64] sm:$0xf]
        %v2170 = vld [vmem:[#allocation5 + $0x68] sm:$0xf]
        %v2171 = vld [vmem:[#allocation5 + $0x6c] sm:$0xf]
        %v2172 = vld [vmem:[#allocation5 + $0x70] sm:$0xf]
        %v2173 = vld [vmem:[#allocation5 + $0x74] sm:$0xf]
        %v2174 = vld [vmem:[#allocation5 + $0x78] sm:$0xf]
        %v2175 = vld [vmem:[#allocation5 + $0x7c] sm:$0xf]
        %v2177 = vunpack.c.l.b16 %v2167
        %v2178 = vpack.c.b16 %v1438, %v2177
        %vm2179 = vcmask 1044480
        %v2180 = vrot.slane %v2178, 3
        %v2181 = vrot.slane %v1492, 3
        %v2182 = vsel %vm2179, %v2180, %v2181
        %v2183 = vrot.slane %v1493, 3
        %v2184 = vsel %vm2179, %v2181, %v2183
        %v2185 = vrot.slane %v1494, 3
        %v2186 = vsel %vm2179, %v2183, %v2185
        %v2187 = vrot.slane %v1495, 3
        %v2188 = vsel %vm2179, %v2185, %v2187
        %v2189 = vrot.slane %v1496, 3
        %v2190 = vsel %vm2179, %v2187, %v2189
        %v2191 = vrot.slane %v1497, 3
        %v2192 = vsel %vm2179, %v2189, %v2191
        %v2193 = vrot.slane %v1498, 3
        %v2194 = vsel %vm2179, %v2191, %v2193
        %v2195 = vrot.slane %v1499, 3
        %v2196 = vsel %vm2179, %v2193, %v2195
        %v2197 = vrot.slane %v1500, 3
        %v2198 = vsel %vm2179, %v2195, %v2197
        %v2199 = vrot.slane %v1501, 3
        %v2200 = vsel %vm2179, %v2197, %v2199
        %v2201 = vrot.slane %v1502, 3
        %v2202 = vsel %vm2179, %v2199, %v2201
        %v2203 = vrot.slane %v1503, 3
        %v2204 = vsel %vm2179, %v2201, %v2203
        %v2205 = vrot.slane %v1504, 3
        %v2206 = vsel %vm2179, %v2203, %v2205
        %v2207 = vrot.slane %v1505, 3
        %v2208 = vsel %vm2179, %v2205, %v2207
        %v2209 = vrot.slane %v1506, 3
        %v2210 = vsel %vm2179, %v2207, %v2209
        %v2211 = vrot.slane %v1507, 3
        %v2212 = vsel %vm2179, %v2209, %v2211
        %v2213 = vrot.slane %v1508, 3
        %v2214 = vsel %vm2179, %v2211, %v2213
        %v2215 = vrot.slane %v1509, 3
        %v2216 = vsel %vm2179, %v2213, %v2215
        %v2217 = vrot.slane %v1510, 3
        %v2218 = vsel %vm2179, %v2215, %v2217
        %v2219 = vrot.slane %v1511, 3
        %v2220 = vsel %vm2179, %v2217, %v2219
        %v2221 = vrot.slane %v1512, 3
        %v2222 = vsel %vm2179, %v2219, %v2221
        %v2223 = vrot.slane %v1513, 3
        %v2224 = vsel %vm2179, %v2221, %v2223
        %v2225 = vrot.slane %v1514, 3
        %v2226 = vsel %vm2179, %v2223, %v2225
        %v2227 = vrot.slane %v1515, 3
        %v2228 = vsel %vm2179, %v2225, %v2227
        %v2229 = vrot.slane %v1516, 3
        %v2230 = vsel %vm2179, %v2227, %v2229
        %v2231 = vrot.slane %v1517, 3
        %v2232 = vsel %vm2179, %v2229, %v2231
        %v2241 = vunpack.c.l.b16 %v2168
        %v2242 = vunpack.c.l.b16 %v2169
        %v2243 = vunpack.c.l.b16 %v2170
        %v2244 = vunpack.c.l.b16 %v2171
        %v2245 = vunpack.c.l.b16 %v2172
        %v2246 = vunpack.c.l.b16 %v2173
        %v2247 = vunpack.c.l.b16 %v2174
        %v2248 = vunpack.c.l.b16 %v2175
        %v2249 = vpack.c.b16 %v2242, %v2241
        %v2250 = vpack.c.b16 %v2244, %v2243
        %v2251 = vpack.c.b16 %v2246, %v2245
        %v2252 = vpack.c.b16 %v2248, %v2247
        %v2258 = vsel %vm663, %v2182, 0
        %v2261 = vsel %vm663, %v2184, 0
        %v2264 = vsel %vm663, %v2186, 0
        %v2267 = vsel %vm663, %v2188, 0
        %v2270 = vsel %vm663, %v2190, 0
        %v2273 = vsel %vm663, %v2192, 0
        %v2276 = vsel %vm663, %v2194, 0
        %v2279 = vsel %vm663, %v2196, 0
        %v2282 = vsel %vm663, %v2198, 0
        %v2285 = vsel %vm663, %v2200, 0
        %v2288 = vsel %vm663, %v2202, 0
        %v2291 = vsel %vm663, %v2204, 0
        %v2294 = vsel %vm663, %v2206, 0
        %v2297 = vsel %vm663, %v2208, 0
        %v2300 = vsel %vm663, %v2210, 0
        %v2303 = vsel %vm663, %v2212, 0
        %v2306 = vsel %vm663, %v2214, 0
        %v2309 = vsel %vm663, %v2216, 0
        %v2312 = vsel %vm663, %v2218, 0
        %v2315 = vsel %vm663, %v2220, 0
        %v2318 = vsel %vm663, %v2222, 0
        %v2321 = vsel %vm663, %v2224, 0
        %v2324 = vsel %vm663, %v2226, 0
        %v2327 = vsel %vm663, %v2228, 0
        %v2330 = vsel %vm663, %v2230, 0
        %v2333 = vsel %vm663, %v2232, 0
        %v2336 = vsel %vm663, %v2231, 0
        %2338 = vmatprep.subr.bf16.mxu0 0
        %2339 = vmatpush1.bf16.msra.mxu0 %v2249
        %2340 = vmatprep.subr.bf16.mxu0 0
        %2341 = vmatpush1.bf16.msra.mxu0 %v2250
        %2342 = vmatprep.subr.bf16.mxu0 0
        %2343 = vmatpush1.bf16.msra.mxu0 %v2251
        %2344 = vmatprep.subr.bf16.mxu0 0
        %2345 = vmatpush1.bf16.msra.mxu0 %v2252
        %2346 = vmatprep.subr.bf16.mxu0 0
        %2347 = vmatpush1.bf16.msra.mxu0 0
        %2348 = vmatprep.subr.bf16.mxu0 0
        %2349 = vmatpush1.bf16.msra.mxu0 0
        %2350 = vmatprep.subr.bf16.mxu0 0
        %2351 = vmatpush1.bf16.msra.mxu0 0
        %2352 = vmatprep.subr.bf16.mxu0 0
        %2353 = vmatpush1.bf16.msra.mxu0 0
        %2354 = vmatprep.subr.bf16.mxu0 0
        %2355 = vmatpush1.bf16.msra.mxu0 0
        %2356 = vmatprep.subr.bf16.mxu0 0
        %2357 = vmatpush1.bf16.msra.mxu0 0
        %2358 = vmatprep.subr.bf16.mxu0 0
        %2359 = vmatpush1.bf16.msra.mxu0 0
        %2360 = vmatprep.subr.bf16.mxu0 0
        %2361 = vmatpush1.bf16.msra.mxu0 0
        %2362 = vmatprep.subr.bf16.mxu0 0
        %2363 = vmatpush1.bf16.msra.mxu0 0
        %2364 = vmatprep.subr.bf16.mxu0 0
        %2365 = vmatpush1.bf16.msra.mxu0 0
        %2366 = vmatprep.subr.bf16.mxu0 0
        %2367 = vmatpush1.bf16.msra.mxu0 0
        %2368 = vmatprep.subr.bf16.mxu0 0
        %2369 = vmatpush1.bf16.msra.mxu0 0
        %2370 = vmatprep.mubr.bf16.mxu0 0
        %2371 = vmatmul.mubr.bf16.gmra.mrb[0].mxu0 %v2258
        %v2372 = vpop.f32.mrb[0].mxu0
        %v2373 = vadd.f32 0.0, %v2372
        %v2374 = vpop.f32.mrb[0].mxu0
        %v2375 = vpop.f32.mrb[0].mxu0
        %v2376 = vadd.f32 0.0, %v2375
        %v2377 = vpop.f32.mrb[0].mxu0
        %2378 = vmatprep.mubr.bf16.mxu0 0
        %2379 = vmatmul.mubr.bf16.gmra.mrb[0].mxu0 %v2261
        %v2380 = vpop.f32.mrb[0].mxu0
        %v2381 = vadd.f32 0.0, %v2380
        %v2382 = vpop.f32.mrb[0].mxu0
        %v2383 = vpop.f32.mrb[0].mxu0
        %v2384 = vadd.f32 0.0, %v2383
        %v2385 = vpop.f32.mrb[0].mxu0
        %2386 = vmatprep.mubr.bf16.mxu0 0
        %2387 = vmatmul.mubr.bf16.gmra.mrb[0].mxu0 %v2264
        %v2388 = vpop.f32.mrb[0].mxu0
        %v2389 = vadd.f32 0.0, %v2388
        %v2390 = vpop.f32.mrb[0].mxu0
        %v2391 = vpop.f32.mrb[0].mxu0
        %v2392 = vadd.f32 0.0, %v2391
        %v2393 = vpop.f32.mrb[0].mxu0
        %2394 = vmatprep.mubr.bf16.mxu0 0
        %2395 = vmatmul.mubr.bf16.gmra.mrb[0].mxu0 %v2267
        %v2396 = vpop.f32.mrb[0].mxu0
        %v2397 = vadd.f32 0.0, %v2396
        %v2398 = vpop.f32.mrb[0].mxu0
        %v2399 = vpop.f32.mrb[0].mxu0
        %v2400 = vadd.f32 0.0, %v2399
        %v2401 = vpop.f32.mrb[0].mxu0
        %2402 = vmatprep.mubr.bf16.mxu0 0
        %2403 = vmatmul.mubr.bf16.gmra.mrb[0].mxu0 %v2270
        %v2404 = vpop.f32.mrb[0].mxu0
        %v2405 = vadd.f32 0.0, %v2404
        %v2406 = vpop.f32.mrb[0].mxu0
        %v2407 = vpop.f32.mrb[0].mxu0
        %v2408 = vadd.f32 0.0, %v2407
        %v2409 = vpop.f32.mrb[0].mxu0
        %2410 = vmatprep.mubr.bf16.mxu0 0
        %2411 = vmatmul.mubr.bf16.gmra.mrb[0].mxu0 %v2273
        %v2412 = vpop.f32.mrb[0].mxu0
        %v2413 = vadd.f32 0.0, %v2412
        %v2414 = vpop.f32.mrb[0].mxu0
        %v2415 = vpop.f32.mrb[0].mxu0
        %v2416 = vadd.f32 0.0, %v2415
        %v2417 = vpop.f32.mrb[0].mxu0
        %2418 = vmatprep.mubr.bf16.mxu0 0
        %2419 = vmatmul.mubr.bf16.gmra.mrb[0].mxu0 %v2276
        %v2420 = vpop.f32.mrb[0].mxu0
        %v2421 = vadd.f32 0.0, %v2420
        %v2422 = vpop.f32.mrb[0].mxu0
        %v2423 = vpop.f32.mrb[0].mxu0
        %v2424 = vadd.f32 0.0, %v2423
        %v2425 = vpop.f32.mrb[0].mxu0
        %2426 = vmatprep.mubr.bf16.mxu0 0
        %2427 = vmatmul.mubr.bf16.gmra.mrb[0].mxu0 %v2279
        %v2428 = vpop.f32.mrb[0].mxu0
        %v2429 = vadd.f32 0.0, %v2428
        %v2430 = vpop.f32.mrb[0].mxu0
        %v2431 = vpop.f32.mrb[0].mxu0
        %v2432 = vadd.f32 0.0, %v2431
        %v2433 = vpop.f32.mrb[0].mxu0
        %2434 = vmatprep.mubr.bf16.mxu0 0
        %2435 = vmatmul.mubr.bf16.gmra.mrb[0].mxu0 %v2282
        %v2436 = vpop.f32.mrb[0].mxu0
        %v2437 = vadd.f32 0.0, %v2436
        %v2438 = vpop.f32.mrb[0].mxu0
        %v2439 = vpop.f32.mrb[0].mxu0
        %v2440 = vadd.f32 0.0, %v2439
        %v2441 = vpop.f32.mrb[0].mxu0
        %2442 = vmatprep.mubr.bf16.mxu0 0
        %2443 = vmatmul.mubr.bf16.gmra.mrb[0].mxu0 %v2285
        %v2444 = vpop.f32.mrb[0].mxu0
        %v2445 = vadd.f32 0.0, %v2444
        %v2446 = vpop.f32.mrb[0].mxu0
        %v2447 = vpop.f32.mrb[0].mxu0
        %v2448 = vadd.f32 0.0, %v2447
        %v2449 = vpop.f32.mrb[0].mxu0
        %2450 = vmatprep.mubr.bf16.mxu0 0
        %2451 = vmatmul.mubr.bf16.gmra.mrb[0].mxu0 %v2288
        %v2452 = vpop.f32.mrb[0].mxu0
        %v2453 = vadd.f32 0.0, %v2452
        %v2454 = vpop.f32.mrb[0].mxu0
        %v2455 = vpop.f32.mrb[0].mxu0
        %v2456 = vadd.f32 0.0, %v2455
        %v2457 = vpop.f32.mrb[0].mxu0
        %2458 = vmatprep.mubr.bf16.mxu0 0
        %2459 = vmatmul.mubr.bf16.gmra.mrb[0].mxu0 %v2291
        %v2460 = vpop.f32.mrb[0].mxu0
        %v2461 = vadd.f32 0.0, %v2460
        %v2462 = vpop.f32.mrb[0].mxu0
        %v2463 = vpop.f32.mrb[0].mxu0
        %v2464 = vadd.f32 0.0, %v2463
        %v2465 = vpop.f32.mrb[0].mxu0
        %2466 = vmatprep.mubr.bf16.mxu0 0
        %2467 = vmatmul.mubr.bf16.gmra.mrb[0].mxu0 %v2294
        %v2468 = vpop.f32.mrb[0].mxu0
        %v2469 = vadd.f32 0.0, %v2468
        %v2470 = vpop.f32.mrb[0].mxu0
        %v2471 = vpop.f32.mrb[0].mxu0
        %v2472 = vadd.f32 0.0, %v2471
        %v2473 = vpop.f32.mrb[0].mxu0
        %2474 = vmatprep.mubr.bf16.mxu0 0
        %2475 = vmatmul.mubr.bf16.gmra.mrb[0].mxu0 %v2297
        %v2476 = vpop.f32.mrb[0].mxu0
        %v2477 = vadd.f32 0.0, %v2476
        %v2478 = vpop.f32.mrb[0].mxu0
        %v2479 = vpop.f32.mrb[0].mxu0
        %v2480 = vadd.f32 0.0, %v2479
        %v2481 = vpop.f32.mrb[0].mxu0
        %2482 = vmatprep.mubr.bf16.mxu0 0
        %2483 = vmatmul.mubr.bf16.gmra.mrb[0].mxu0 %v2300
        %v2484 = vpop.f32.mrb[0].mxu0
        %v2485 = vadd.f32 0.0, %v2484
        %v2486 = vpop.f32.mrb[0].mxu0
        %v2487 = vpop.f32.mrb[0].mxu0
        %v2488 = vadd.f32 0.0, %v2487
        %v2489 = vpop.f32.mrb[0].mxu0
        %2490 = vmatprep.mubr.bf16.mxu0 0
        %2491 = vmatmul.mubr.bf16.gmra.mrb[0].mxu0 %v2303
        %v2492 = vpop.f32.mrb[0].mxu0
        %v2493 = vadd.f32 0.0, %v2492
        %v2494 = vpop.f32.mrb[0].mxu0
        %v2495 = vpop.f32.mrb[0].mxu0
        %v2496 = vadd.f32 0.0, %v2495
        %v2497 = vpop.f32.mrb[0].mxu0
        %2498 = vmatprep.mubr.bf16.mxu0 0
        %2499 = vmatmul.mubr.bf16.gmra.mrb[0].mxu0 %v2306
        %v2500 = vpop.f32.mrb[0].mxu0
        %v2501 = vadd.f32 0.0, %v2500
        %v2502 = vpop.f32.mrb[0].mxu0
        %v2503 = vpop.f32.mrb[0].mxu0
        %v2504 = vadd.f32 0.0, %v2503
        %v2505 = vpop.f32.mrb[0].mxu0
        %2506 = vmatprep.mubr.bf16.mxu0 0
        %2507 = vmatmul.mubr.bf16.gmra.mrb[0].mxu0 %v2309
        %v2508 = vpop.f32.mrb[0].mxu0
        %v2509 = vadd.f32 0.0, %v2508
        %v2510 = vpop.f32.mrb[0].mxu0
        %v2511 = vpop.f32.mrb[0].mxu0
        %v2512 = vadd.f32 0.0, %v2511
        %v2513 = vpop.f32.mrb[0].mxu0
        %2514 = vmatprep.mubr.bf16.mxu0 0
        %2515 = vmatmul.mubr.bf16.gmra.mrb[0].mxu0 %v2312
        %v2516 = vpop.f32.mrb[0].mxu0
        %v2517 = vadd.f32 0.0, %v2516
        %v2518 = vpop.f32.mrb[0].mxu0
        %v2519 = vpop.f32.mrb[0].mxu0
        %v2520 = vadd.f32 0.0, %v2519
        %v2521 = vpop.f32.mrb[0].mxu0
        %2522 = vmatprep.mubr.bf16.mxu0 0
        %2523 = vmatmul.mubr.bf16.gmra.mrb[0].mxu0 %v2315
        %v2524 = vpop.f32.mrb[0].mxu0
        %v2525 = vadd.f32 0.0, %v2524
        %v2526 = vpop.f32.mrb[0].mxu0
        %v2527 = vpop.f32.mrb[0].mxu0
        %v2528 = vadd.f32 0.0, %v2527
        %v2529 = vpop.f32.mrb[0].mxu0
        %2530 = vmatprep.mubr.bf16.mxu0 0
        %2531 = vmatmul.mubr.bf16.gmra.mrb[0].mxu0 %v2318
        %v2532 = vpop.f32.mrb[0].mxu0
        %v2533 = vadd.f32 0.0, %v2532
        %v2534 = vpop.f32.mrb[0].mxu0
        %v2535 = vpop.f32.mrb[0].mxu0
        %v2536 = vadd.f32 0.0, %v2535
        %v2537 = vpop.f32.mrb[0].mxu0
        %2538 = vmatprep.mubr.bf16.mxu0 0
        %2539 = vmatmul.mubr.bf16.gmra.mrb[0].mxu0 %v2321
        %v2540 = vpop.f32.mrb[0].mxu0
        %v2541 = vadd.f32 0.0, %v2540
        %v2542 = vpop.f32.mrb[0].mxu0
        %v2543 = vpop.f32.mrb[0].mxu0
        %v2544 = vadd.f32 0.0, %v2543
        %v2545 = vpop.f32.mrb[0].mxu0
        %2546 = vmatprep.mubr.bf16.mxu0 0
        %2547 = vmatmul.mubr.bf16.gmra.mrb[0].mxu0 %v2324
        %v2548 = vpop.f32.mrb[0].mxu0
        %v2549 = vadd.f32 0.0, %v2548
        %v2550 = vpop.f32.mrb[0].mxu0
        %v2551 = vpop.f32.mrb[0].mxu0
        %v2552 = vadd.f32 0.0, %v2551
        %v2553 = vpop.f32.mrb[0].mxu0
        %2554 = vmatprep.mubr.bf16.mxu0 0
        %2555 = vmatmul.mubr.bf16.gmra.mrb[0].mxu0 %v2327
        %v2556 = vpop.f32.mrb[0].mxu0
        %v2557 = vadd.f32 0.0, %v2556
        %v2558 = vpop.f32.mrb[0].mxu0
        %v2559 = vpop.f32.mrb[0].mxu0
        %v2560 = vadd.f32 0.0, %v2559
        %v2561 = vpop.f32.mrb[0].mxu0
        %2562 = vmatprep.mubr.bf16.mxu0 0
        %2563 = vmatmul.mubr.bf16.gmra.mrb[0].mxu0 %v2330
        %v2564 = vpop.f32.mrb[0].mxu0
        %v2565 = vadd.f32 0.0, %v2564
        %v2566 = vpop.f32.mrb[0].mxu0
        %v2567 = vpop.f32.mrb[0].mxu0
        %v2568 = vadd.f32 0.0, %v2567
        %v2569 = vpop.f32.mrb[0].mxu0
        %2570 = vmatprep.mubr.bf16.mxu0 0
        %2571 = vmatmul.mubr.bf16.gmra.mrb[0].mxu0 %v2333
        %v2572 = vpop.f32.mrb[0].mxu0
        %v2573 = vadd.f32 0.0, %v2572
        %v2574 = vpop.f32.mrb[0].mxu0
        %v2575 = vpop.f32.mrb[0].mxu0
        %v2576 = vadd.f32 0.0, %v2575
        %v2577 = vpop.f32.mrb[0].mxu0
        %2578 = vmatprep.mubr.bf16.mxu0 0
        %2579 = vmatmul.mubr.bf16.gmra.mrb[0].mxu0 %v2336
        %v2580 = vpop.f32.mrb[0].mxu0
        %v2581 = vadd.f32 0.0, %v2580
        %v2582 = vpop.f32.mrb[0].mxu0
        %v2583 = vpop.f32.mrb[0].mxu0
        %v2584 = vpop.f32.mrb[0].mxu0
        %2585 = vdwg.mxu0
        %v2586 = vadd.f32 %v2114, %v2373
        %v2587 = vadd.f32 %v2115, %v2376
        %v2588 = vadd.f32 %v2116, %v2381
        %v2589 = vadd.f32 %v2117, %v2384
        %v2590 = vadd.f32 %v2118, %v2389
        %v2591 = vadd.f32 %v2119, %v2392
        %v2592 = vadd.f32 %v2120, %v2397
        %v2593 = vadd.f32 %v2121, %v2400
        %v2594 = vadd.f32 %v2122, %v2405
        %v2595 = vadd.f32 %v2123, %v2408
        %v2596 = vadd.f32 %v2124, %v2413
        %v2597 = vadd.f32 %v2125, %v2416
        %v2598 = vadd.f32 %v2126, %v2421
        %v2599 = vadd.f32 %v2127, %v2424
        %v2600 = vadd.f32 %v2128, %v2429
        %v2601 = vadd.f32 %v2129, %v2432
        %v2602 = vadd.f32 %v2130, %v2437
        %v2603 = vadd.f32 %v2131, %v2440
        %v2604 = vadd.f32 %v2132, %v2445
        %v2605 = vadd.f32 %v2133, %v2448
        %v2606 = vadd.f32 %v2134, %v2453
        %v2607 = vadd.f32 %v2135, %v2456
        %v2608 = vadd.f32 %v2136, %v2461
        %v2609 = vadd.f32 %v2137, %v2464
        %v2610 = vadd.f32 %v2138, %v2469
        %v2611 = vadd.f32 %v2139, %v2472
        %v2612 = vadd.f32 %v2140, %v2477
        %v2613 = vadd.f32 %v2141, %v2480
        %v2614 = vadd.f32 %v2142, %v2485
        %v2615 = vadd.f32 %v2143, %v2488
        %v2616 = vadd.f32 %v2144, %v2493
        %v2617 = vadd.f32 %v2145, %v2496
        %v2618 = vadd.f32 %v2146, %v2501
        %v2619 = vadd.f32 %v2147, %v2504
        %v2620 = vadd.f32 %v2148, %v2509
        %v2621 = vadd.f32 %v2149, %v2512
        %v2622 = vadd.f32 %v2150, %v2517
        %v2623 = vadd.f32 %v2151, %v2520
        %v2624 = vadd.f32 %v2152, %v2525
        %v2625 = vadd.f32 %v2153, %v2528
        %v2626 = vadd.f32 %v2154, %v2533
        %v2627 = vadd.f32 %v2155, %v2536
        %v2628 = vadd.f32 %v2156, %v2541
        %v2629 = vadd.f32 %v2157, %v2544
        %v2630 = vadd.f32 %v2158, %v2549
        %v2631 = vadd.f32 %v2159, %v2552
        %v2632 = vadd.f32 %v2160, %v2557
        %v2633 = vadd.f32 %v2161, %v2560
        %v2634 = vadd.f32 %v2162, %v2565
        %v2635 = vadd.f32 %v2163, %v2568
        %v2636 = vadd.f32 %v2164, %v2573
        %v2637 = vadd.f32 %v2165, %v2576
        %v2638 = vadd.f32 %v2166, %v2581
        %v2639 = vld [vmem:[#allocation7] sm:$0x1]
        %v2641 = vlaneseq
        %v2642 = vshrl.u32 %v2641, 7
        %v2643 = vsub.s32 0, %v2642
        %v2644 = vrot.slane %v2639, %v2643
        %v2646 = vadd.f32 %v2586, %v2644
        %v2647 = vadd.f32 %v2587, %v2644
        %v2648 = vadd.f32 %v2588, %v2644
        %v2649 = vadd.f32 %v2589, %v2644
        %v2650 = vadd.f32 %v2590, %v2644
        %v2651 = vadd.f32 %v2591, %v2644
        %v2652 = vadd.f32 %v2592, %v2644
        %v2653 = vadd.f32 %v2593, %v2644
        %v2654 = vadd.f32 %v2594, %v2644
        %v2655 = vadd.f32 %v2595, %v2644
        %v2656 = vadd.f32 %v2596, %v2644
        %v2657 = vadd.f32 %v2597, %v2644
        %v2658 = vadd.f32 %v2598, %v2644
        %v2659 = vadd.f32 %v2599, %v2644
        %v2660 = vadd.f32 %v2600, %v2644
        %v2661 = vadd.f32 %v2601, %v2644
        %v2662 = vadd.f32 %v2602, %v2644
        %v2663 = vadd.f32 %v2603, %v2644
        %v2664 = vadd.f32 %v2604, %v2644
        %v2665 = vadd.f32 %v2605, %v2644
        %v2666 = vadd.f32 %v2606, %v2644
        %v2667 = vadd.f32 %v2607, %v2644
        %v2668 = vadd.f32 %v2608, %v2644
        %v2669 = vadd.f32 %v2609, %v2644
        %v2670 = vadd.f32 %v2610, %v2644
        %v2671 = vadd.f32 %v2611, %v2644
        %v2672 = vadd.f32 %v2612, %v2644
        %v2673 = vadd.f32 %v2613, %v2644
        %v2674 = vadd.f32 %v2614, %v2644
        %v2675 = vadd.f32 %v2615, %v2644
        %v2676 = vadd.f32 %v2616, %v2644
        %v2677 = vadd.f32 %v2617, %v2644
        %v2678 = vadd.f32 %v2618, %v2644
        %v2679 = vadd.f32 %v2619, %v2644
        %v2680 = vadd.f32 %v2620, %v2644
        %v2681 = vadd.f32 %v2621, %v2644
        %v2682 = vadd.f32 %v2622, %v2644
        %v2683 = vadd.f32 %v2623, %v2644
        %v2684 = vadd.f32 %v2624, %v2644
        %v2685 = vadd.f32 %v2625, %v2644
        %v2686 = vadd.f32 %v2626, %v2644
        %v2687 = vadd.f32 %v2627, %v2644
        %v2688 = vadd.f32 %v2628, %v2644
        %v2689 = vadd.f32 %v2629, %v2644
        %v2690 = vadd.f32 %v2630, %v2644
        %v2691 = vadd.f32 %v2631, %v2644
        %v2692 = vadd.f32 %v2632, %v2644
        %v2693 = vadd.f32 %v2633, %v2644
        %v2694 = vadd.f32 %v2634, %v2644
        %v2695 = vadd.f32 %v2635, %v2644
        %v2696 = vadd.f32 %v2636, %v2644
        %v2697 = vadd.f32 %v2637, %v2644
        %v2698 = vadd.f32 %v2638, %v2644
        %v2699 = vmax.f32 %v2646, 0.0
        %v2700 = vmax.f32 %v2647, 0.0
        %v2701 = vmax.f32 %v2648, 0.0
        %v2702 = vmax.f32 %v2649, 0.0
        %v2703 = vmax.f32 %v2650, 0.0
        %v2704 = vmax.f32 %v2651, 0.0
        %v2705 = vmax.f32 %v2652, 0.0
        %v2706 = vmax.f32 %v2653, 0.0
        %v2707 = vmax.f32 %v2654, 0.0
        %v2708 = vmax.f32 %v2655, 0.0
        %v2709 = vmax.f32 %v2656, 0.0
        %v2710 = vmax.f32 %v2657, 0.0
        %v2711 = vmax.f32 %v2658, 0.0
        %v2712 = vmax.f32 %v2659, 0.0
        %v2713 = vmax.f32 %v2660, 0.0
        %v2714 = vmax.f32 %v2661, 0.0
        %v2715 = vmax.f32 %v2662, 0.0
        %v2716 = vmax.f32 %v2663, 0.0
        %v2717 = vmax.f32 %v2664, 0.0
        %v2718 = vmax.f32 %v2665, 0.0
        %v2719 = vmax.f32 %v2666, 0.0
        %v2720 = vmax.f32 %v2667, 0.0
        %v2721 = vmax.f32 %v2668, 0.0
        %v2722 = vmax.f32 %v2669, 0.0
        %v2723 = vmax.f32 %v2670, 0.0
        %v2724 = vmax.f32 %v2671, 0.0
        %v2725 = vmax.f32 %v2672, 0.0
        %v2726 = vmax.f32 %v2673, 0.0
        %v2727 = vmax.f32 %v2674, 0.0
        %v2728 = vmax.f32 %v2675, 0.0
        %v2729 = vmax.f32 %v2676, 0.0
        %v2730 = vmax.f32 %v2677, 0.0
        %v2731 = vmax.f32 %v2678, 0.0
        %v2732 = vmax.f32 %v2679, 0.0
        %v2733 = vmax.f32 %v2680, 0.0
        %v2734 = vmax.f32 %v2681, 0.0
        %v2735 = vmax.f32 %v2682, 0.0
        %v2736 = vmax.f32 %v2683, 0.0
        %v2737 = vmax.f32 %v2684, 0.0
        %v2738 = vmax.f32 %v2685, 0.0
        %v2739 = vmax.f32 %v2686, 0.0
        %v2740 = vmax.f32 %v2687, 0.0
        %v2741 = vmax.f32 %v2688, 0.0
        %v2742 = vmax.f32 %v2689, 0.0
        %v2743 = vmax.f32 %v2690, 0.0
        %v2744 = vmax.f32 %v2691, 0.0
        %v2745 = vmax.f32 %v2692, 0.0
        %v2746 = vmax.f32 %v2693, 0.0
        %v2747 = vmax.f32 %v2694, 0.0
        %v2748 = vmax.f32 %v2695, 0.0
        %v2749 = vmax.f32 %v2696, 0.0
        %v2750 = vmax.f32 %v2697, 0.0
        %v2751 = vmax.f32 %v2698, 0.0
        %v2752 = vpack.c.bf16 %v2700, %v2699
        %v2753 = vpack.c.bf16 %v2702, %v2701
        %v2754 = vpack.c.bf16 %v2704, %v2703
        %v2755 = vpack.c.bf16 %v2706, %v2705
        %v2756 = vpack.c.bf16 %v2708, %v2707
        %v2757 = vpack.c.bf16 %v2710, %v2709
        %v2758 = vpack.c.bf16 %v2712, %v2711
        %v2759 = vpack.c.bf16 %v2714, %v2713
        %v2760 = vpack.c.bf16 %v2716, %v2715
        %v2761 = vpack.c.bf16 %v2718, %v2717
        %v2762 = vpack.c.bf16 %v2720, %v2719
        %v2763 = vpack.c.bf16 %v2722, %v2721
        %v2764 = vpack.c.bf16 %v2724, %v2723
        %v2765 = vpack.c.bf16 %v2726, %v2725
        %v2766 = vpack.c.bf16 %v2728, %v2727
        %v2767 = vpack.c.bf16 %v2730, %v2729
        %v2768 = vpack.c.bf16 %v2732, %v2731
        %v2769 = vpack.c.bf16 %v2734, %v2733
        %v2770 = vpack.c.bf16 %v2736, %v2735
        %v2771 = vpack.c.bf16 %v2738, %v2737
        %v2772 = vpack.c.bf16 %v2740, %v2739
        %v2773 = vpack.c.bf16 %v2742, %v2741
        %v2774 = vpack.c.bf16 %v2744, %v2743
        %v2775 = vpack.c.bf16 %v2746, %v2745
        %v2776 = vpack.c.bf16 %v2748, %v2747
        %v2777 = vpack.c.bf16 %v2750, %v2749
        %v2778 = vpack.c.bf16 %v2751, %v2751
        %v2806 = vunpack.c.l.b16 %v2752
        %v2807 = vunpack.c.h.b16 %v2752
        %v2808 = vunpack.c.l.b16 %v2753
        %v2809 = vunpack.c.h.b16 %v2753
        %v2810 = vunpack.c.l.b16 %v2754
        %v2811 = vunpack.c.h.b16 %v2754
        %v2812 = vunpack.c.l.b16 %v2755
        %v2813 = vunpack.c.h.b16 %v2755
        %v2814 = vunpack.c.l.b16 %v2756
        %v2815 = vunpack.c.h.b16 %v2756
        %v2816 = vunpack.c.l.b16 %v2757
        %v2817 = vunpack.c.h.b16 %v2757
        %v2818 = vunpack.c.l.b16 %v2758
        %v2819 = vunpack.c.h.b16 %v2758
        %v2820 = vunpack.c.l.b16 %v2759
        %v2821 = vunpack.c.h.b16 %v2759
        %v2822 = vunpack.c.l.b16 %v2760
        %v2823 = vunpack.c.h.b16 %v2760
        %v2824 = vunpack.c.l.b16 %v2761
        %v2825 = vunpack.c.h.b16 %v2761
        %v2826 = vunpack.c.l.b16 %v2762
        %v2827 = vunpack.c.h.b16 %v2762
        %v2828 = vunpack.c.l.b16 %v2763
        %v2829 = vunpack.c.h.b16 %v2763
        %v2830 = vunpack.c.l.b16 %v2764
        %v2831 = vunpack.c.h.b16 %v2764
        %v2832 = vunpack.c.l.b16 %v2765
        %v2833 = vunpack.c.h.b16 %v2765
        %v2834 = vunpack.c.l.b16 %v2766
        %v2835 = vunpack.c.h.b16 %v2766
        %v2836 = vunpack.c.l.b16 %v2767
        %v2837 = vunpack.c.h.b16 %v2767
        %v2838 = vunpack.c.l.b16 %v2768
        %v2839 = vunpack.c.h.b16 %v2768
        %v2840 = vunpack.c.l.b16 %v2769
        %v2841 = vunpack.c.h.b16 %v2769
        %v2842 = vunpack.c.l.b16 %v2770
        %v2843 = vunpack.c.h.b16 %v2770
        %v2844 = vunpack.c.l.b16 %v2771
        %v2845 = vunpack.c.h.b16 %v2771
        %v2846 = vunpack.c.l.b16 %v2772
        %v2847 = vunpack.c.h.b16 %v2772
        %v2848 = vunpack.c.l.b16 %v2773
        %v2849 = vunpack.c.h.b16 %v2773
        %v2850 = vunpack.c.l.b16 %v2774
        %v2851 = vunpack.c.h.b16 %v2774
        %v2852 = vunpack.c.l.b16 %v2775
        %v2853 = vunpack.c.h.b16 %v2775
        %v2854 = vunpack.c.l.b16 %v2776
        %v2855 = vunpack.c.h.b16 %v2776
        %v2856 = vunpack.c.l.b16 %v2777
        %v2857 = vunpack.c.h.b16 %v2777
        %v2858 = vunpack.c.l.b16 %v2778
        %v2859 = vpack.c.b16 %v2806, %v2806
        %v2860 = vpack.c.b16 %v2807, %v2807
        %v2861 = vpack.c.b16 %v2808, %v2808
        %v2862 = vpack.c.b16 %v2809, %v2809
        %v2863 = vpack.c.b16 %v2810, %v2810
        %v2864 = vpack.c.b16 %v2811, %v2811
        %v2865 = vpack.c.b16 %v2812, %v2812
        %v2866 = vpack.c.b16 %v2813, %v2813
        %v2867 = vpack.c.b16 %v2814, %v2814
        %v2868 = vpack.c.b16 %v2815, %v2815
        %v2869 = vpack.c.b16 %v2816, %v2816
        %v2870 = vpack.c.b16 %v2817, %v2817
        %v2871 = vpack.c.b16 %v2818, %v2818
        %v2872 = vpack.c.b16 %v2819, %v2819
        %v2873 = vpack.c.b16 %v2820, %v2820
        %v2874 = vpack.c.b16 %v2821, %v2821
        %v2875 = vpack.c.b16 %v2822, %v2822
        %v2876 = vpack.c.b16 %v2823, %v2823
        %v2877 = vpack.c.b16 %v2824, %v2824
        %v2878 = vpack.c.b16 %v2825, %v2825
        %v2879 = vpack.c.b16 %v2826, %v2826
        %v2880 = vpack.c.b16 %v2827, %v2827
        %v2881 = vpack.c.b16 %v2828, %v2828
        %v2882 = vpack.c.b16 %v2829, %v2829
        %v2883 = vpack.c.b16 %v2830, %v2830
        %v2884 = vpack.c.b16 %v2831, %v2831
        %v2885 = vpack.c.b16 %v2832, %v2832
        %v2886 = vpack.c.b16 %v2833, %v2833
        %v2887 = vpack.c.b16 %v2834, %v2834
        %v2888 = vpack.c.b16 %v2835, %v2835
        %v2889 = vpack.c.b16 %v2836, %v2836
        %v2890 = vpack.c.b16 %v2837, %v2837
        %v2891 = vpack.c.b16 %v2838, %v2838
        %v2892 = vpack.c.b16 %v2839, %v2839
        %v2893 = vpack.c.b16 %v2840, %v2840
        %v2894 = vpack.c.b16 %v2841, %v2841
        %v2895 = vpack.c.b16 %v2842, %v2842
        %v2896 = vpack.c.b16 %v2843, %v2843
        %v2897 = vpack.c.b16 %v2844, %v2844
        %v2898 = vpack.c.b16 %v2845, %v2845
        %v2899 = vpack.c.b16 %v2846, %v2846
        %v2900 = vpack.c.b16 %v2847, %v2847
        %v2901 = vpack.c.b16 %v2848, %v2848
        %v2902 = vpack.c.b16 %v2849, %v2849
        %v2903 = vpack.c.b16 %v2850, %v2850
        %v2904 = vpack.c.b16 %v2851, %v2851
        %v2905 = vpack.c.b16 %v2852, %v2852
        %v2906 = vpack.c.b16 %v2853, %v2853
        %v2907 = vpack.c.b16 %v2854, %v2854
        %v2908 = vpack.c.b16 %v2855, %v2855
        %v2909 = vpack.c.b16 %v2856, %v2856
        %v2910 = vpack.c.b16 %v2857, %v2857
        %v2911 = vpack.c.b16 %v2858, %v2858
        %vm2965 = vcmask 257024
        %2966 = vst.msk [vmem:[%s215] sm:$0xf] %vm2965, %v2859
        %2967 = vst.msk [vmem:[%s215 + $0x4] sm:$0xf] %vm2965, %v2860
        %2968 = vst.msk [vmem:[%s215 + $0x8] sm:$0xf] %vm2965, %v2861
        %2969 = vst.msk [vmem:[%s215 + $0xc] sm:$0xf] %vm2965, %v2862
        %2970 = vst.msk [vmem:[%s215 + $0x10] sm:$0xf] %vm2965, %v2863
        %2971 = vst.msk [vmem:[%s215 + $0x14] sm:$0xf] %vm2965, %v2864
        %2972 = vst.msk [vmem:[%s215 + $0x18] sm:$0xf] %vm2965, %v2865
        %2973 = vst.msk [vmem:[%s215 + $0x1c] sm:$0xf] %vm2965, %v2866
        %2974 = vst.msk [vmem:[%s215 + $0x20] sm:$0xf] %vm2965, %v2867
        %2975 = vst.msk [vmem:[%s215 + $0x24] sm:$0xf] %vm2965, %v2868
        %2976 = vst.msk [vmem:[%s215 + $0x28] sm:$0xf] %vm2965, %v2869
        %2977 = vst.msk [vmem:[%s215 + $0x2c] sm:$0xf] %vm2965, %v2870
        %2978 = vst.msk [vmem:[%s215 + $0x30] sm:$0xf] %vm2965, %v2871
        %2979 = vst.msk [vmem:[%s215 + $0x34] sm:$0xf] %vm2965, %v2872
        %2980 = vst.msk [vmem:[%s215 + $0x38] sm:$0xf] %vm2965, %v2873
        %2981 = vst.msk [vmem:[%s215 + $0x3c] sm:$0xf] %vm2965, %v2874
        %2982 = vst.msk [vmem:[%s215 + $0x40] sm:$0xf] %vm2965, %v2875
        %2983 = vst.msk [vmem:[%s215 + $0x44] sm:$0xf] %vm2965, %v2876
        %2984 = vst.msk [vmem:[%s215 + $0x48] sm:$0xf] %vm2965, %v2877
        %2985 = vst.msk [vmem:[%s215 + $0x4c] sm:$0xf] %vm2965, %v2878
        %2986 = vst.msk [vmem:[%s215 + $0x50] sm:$0xf] %vm2965, %v2879
        %2987 = vst.msk [vmem:[%s215 + $0x54] sm:$0xf] %vm2965, %v2880
        %2988 = vst.msk [vmem:[%s215 + $0x58] sm:$0xf] %vm2965, %v2881
        %2989 = vst.msk [vmem:[%s215 + $0x5c] sm:$0xf] %vm2965, %v2882
        %2990 = vst.msk [vmem:[%s215 + $0x60] sm:$0xf] %vm2965, %v2883
        %2991 = vst.msk [vmem:[%s215 + $0x64] sm:$0xf] %vm2965, %v2884
        %2992 = vst.msk [vmem:[%s215 + $0x68] sm:$0xf] %vm2965, %v2885
        %2993 = vst.msk [vmem:[%s215 + $0x6c] sm:$0xf] %vm2965, %v2886
        %2994 = vst.msk [vmem:[%s215 + $0x70] sm:$0xf] %vm2965, %v2887
        %2995 = vst.msk [vmem:[%s215 + $0x74] sm:$0xf] %vm2965, %v2888
        %2996 = vst.msk [vmem:[%s215 + $0x78] sm:$0xf] %vm2965, %v2889
        %2997 = vst.msk [vmem:[%s215 + $0x7c] sm:$0xf] %vm2965, %v2890
        %2998 = vst.msk [vmem:[%s215 + $0x80] sm:$0xf] %vm2965, %v2891
        %2999 = vst.msk [vmem:[%s215 + $0x84] sm:$0xf] %vm2965, %v2892
        %3000 = vst.msk [vmem:[%s215 + $0x88] sm:$0xf] %vm2965, %v2893
        %3001 = vst.msk [vmem:[%s215 + $0x8c] sm:$0xf] %vm2965, %v2894
        %3002 = vst.msk [vmem:[%s215 + $0x90] sm:$0xf] %vm2965, %v2895
        %3003 = vst.msk [vmem:[%s215 + $0x94] sm:$0xf] %vm2965, %v2896
        %3004 = vst.msk [vmem:[%s215 + $0x98] sm:$0xf] %vm2965, %v2897
        %3005 = vst.msk [vmem:[%s215 + $0x9c] sm:$0xf] %vm2965, %v2898
        %3006 = vst.msk [vmem:[%s215 + $0xa0] sm:$0xf] %vm2965, %v2899
        %3007 = vst.msk [vmem:[%s215 + $0xa4] sm:$0xf] %vm2965, %v2900
        %3008 = vst.msk [vmem:[%s215 + $0xa8] sm:$0xf] %vm2965, %v2901
        %3009 = vst.msk [vmem:[%s215 + $0xac] sm:$0xf] %vm2965, %v2902
        %3010 = vst.msk [vmem:[%s215 + $0xb0] sm:$0xf] %vm2965, %v2903
        %3011 = vst.msk [vmem:[%s215 + $0xb4] sm:$0xf] %vm2965, %v2904
        %3012 = vst.msk [vmem:[%s215 + $0xb8] sm:$0xf] %vm2965, %v2905
        %3013 = vst.msk [vmem:[%s215 + $0xbc] sm:$0xf] %vm2965, %v2906
        %3014 = vst.msk [vmem:[%s215 + $0xc0] sm:$0xf] %vm2965, %v2907
        %3015 = vst.msk [vmem:[%s215 + $0xc4] sm:$0xf] %vm2965, %v2908
        %3016 = vst.msk [vmem:[%s215 + $0xc8] sm:$0xf] %vm2965, %v2909
        %3017 = vst.msk [vmem:[%s215 + $0xcc] sm:$0xf] %vm2965, %v2910
        %3018 = vst.msk [vmem:[%s215 + $0xd0] sm:$0xf] %vm2965, %v2911
        %s3019 = sand.u32 %s97, 1
        %s3020 = scalar_lea.sflag [#allocation4], %s3019
        %s3021 = sand.u32 %s97, 1
        %s3022 = smul.addr %s3021, 212
        %s3023 = scalar_lea.vmem [#allocation8], %s3022
        // Predicated region
        $region45: #{actor_critic_forward.4} parent=31 // pred_check
          %p3024 = pneg %p107
        $region46: #{actor_critic_forward.4} parent=31 // pred_check_branch
          %3026 = sbr.rel (%p3024) target = $region48
        $region47: #{actor_critic_forward.4} parent=31 // pred_region
          %s3027 = smul.u32 53, %s21
          %s3029 = ssub.s32 3392, 3392
          %3030 = vsyncadd %s3020, %s3029
          %s3031 = smul.addr %s3027, 64
          %s3032 = scalar_lea.hbm %s3, %s3031
          %s3033 = sshll.u32 %s3023, 4
          %s3034 = int_to_ptr.vmem [resolvable:$true] %s3033
          %3039 = dma.vmem_to_hbm [thread:$0]  %s3034, 3392, %s3032, %s3020, 64, 64, 4
        $region48: #{actor_critic_forward.4} parent=31 // pred_fallthru
          _
      $region32: #{actor_critic_forward.4} parent=5 // pred_fallthru
        _
      %p3040 = scmp.le.s32.totalorder 2, %s16
      // Predicated region
      $region49: #{actor_critic_forward.4} parent=5 // pred_check
        %p3041 = pneg %p3040
      $region50: #{actor_critic_forward.4} parent=5 // pred_check_branch
        %3043 = sbr.rel (%p3041) target = $region52
      $region51: #{actor_critic_forward.4} parent=5 // pred_region
        %s3044 = ssub.s32 %s16, 2
        // Predicated region
        $region53: #{actor_critic_forward.4} parent=51 // pred_check
          %p3045 = pneg %p113
        $region54: #{actor_critic_forward.4} parent=51 // pred_check_branch
          %3047 = sbr.rel (%p3045) target = $region56
        $region55: #{actor_critic_forward.4} parent=51 // pred_region
          %s3048 = sand.u32 %s98, 1
          %s3049 = scalar_lea.sflag [#allocation4], %s3048
          %s3050 = sand.u32 %s98, 1
          %s3051 = smul.addr %s3050, 212
          %s3052 = scalar_lea.vmem [#allocation8], %s3051
          %3053 = dma.done %s3049, 3392
        $region56: #{actor_critic_forward.4} parent=51 // pred_fallthru
          _
      $region52: #{actor_critic_forward.4} parent=5 // pred_fallthru
        _
    $region6: #{actor_critic_forward.4} parent=1 // loop_footer
      %s20 = sadd.s32 1, %s16
    $region7: #{actor_critic_forward.4} parent=1 // loop_footer_branch
      %15 = sbr.rel target = $region3
    $region8: #{actor_critic_forward.4} parent=1 // loop_exit
      _
    %3054 = vsyncpa [#allocation3], 1
    %s3055 = scalar_lea.sflag [#allocation3], 1
    %3056 = vsyncpa %s3055, 1
    %3057 = vsyncpa [#allocation6], 1
    %3058 = vsyncpa [#allocation4], 1
    %s3059 = scalar_lea.sflag [#allocation4], 1
    %3060 = vsyncpa %s3059, 1

// kernel: actor_critic_forward.5
$region0: #{actor_critic_forward.5}
  #allocation0 [shape = 'u32[]', space=smem, size = 0x4, offset = 0x4, fixed_abs, tag = 'smem constant byte address 0x4 - core index']
  #allocation1 [shape = 'u32[144,128]{1,0:T(1,128)}', space=vmem, size = 0x12000, scoped, tag = 'internal scratch']
  %s0 = inlined_call_operand.hbm [shape: bf16[2,112,128], index: 0, kind: input, shape index: {}]
  %s1 = inlined_call_operand.hbm [shape: bf16[512,64], index: 1, kind: input, shape index: {}]
  %s2 = inlined_call_operand.hbm [shape: f32[1,64], index: 2, kind: input, shape index: {}]
  %s3 = inlined_call_operand.hbm [shape: bf16[192,64], index: 3, kind: output, shape index: {}]
  %s4 = sld [smem:[#allocation0]]
  $region57: #{actor_critic_forward.5} parent=0
    _
  %s6 = ssub.s32 1, %s4
  %s7 = scalar_select 0, %s6, %s4
  $region1: #{actor_critic_forward.5} parent=0
    #allocation2 [shape = 'u8[57344]{0}', space=vmem, size = 0xe000, scoped, tag = 'input window, operand 0']
    #allocation3 [shape = 's32[2]{0}', space=sflag, size = 0x8, scoped, tag = 'scoped memory for actor_critic_forward.5']
    #allocation4 [shape = 's32[2]{0}', space=sflag, size = 0x8, scoped, tag = 'scoped memory for actor_critic_forward.5']
    #allocation5 [shape = 'u8[131072]{0}', space=vmem, size = 0x20000, scoped, tag = 'input window, operand 1, single buffered']
    #allocation6 [shape = 's32[1]{0}', space=sflag, size = 0x4, scoped, tag = 'scoped memory for actor_critic_forward.5']
    #allocation7 [shape = 'u8[512]{0}', space=vmem, size = 0x400, scoped, tag = 'input window, operand 2, single buffered']
    #allocation8 [shape = 'u8[49152]{0}', space=vmem, size = 0xc000, scoped, tag = 'output window, operand 0']
    %8 = vsyncpa [#allocation3], 0
    %s9 = scalar_lea.sflag [#allocation3], 1
    %10 = vsyncpa %s9, 0
    %11 = vsyncpa [#allocation6], 0
    %12 = vsyncpa [#allocation4], 0
    %s13 = scalar_lea.sflag [#allocation4], 1
    %14 = vsyncpa %s13, 0
    loop: start=0, step=1, limit=4
    $region2: #{actor_critic_forward.5} parent=1 // loop_pre_header
      _
    $region3: #{actor_critic_forward.5} parent=1 // loop_header
      %s16 = sphi 0, %s20
      %p17 = scmp.ge.s32.totalorder %s16, 4
      %s26 = sphi 0, %s28
      %s29 = sphi 0, %s26
      %s30 = sphi 0, %s29
      %s46 = sphi 0, %s30
      %s50 = sphi 0, %s50
      %s52 = sphi 0, %s50
      %s53 = sphi 0, %s52
      %s67 = sphi 0, %s53
      %s71 = sphi 0, %s71
      %s73 = sphi 0, %s71
      %s74 = sphi 0, %s73
      %s88 = sphi 0, %s74
      %s94 = sphi 0, %s96
      %s97 = sphi 0, %s94
      %s98 = sphi 0, %s97
      %s114 = sphi 0, %s98
    $region4: #{actor_critic_forward.5} parent=1 // loop_header_branch
      %19 = sbr.rel (%p17) target = $region8
    $region5: #{actor_critic_forward.5} parent=1 // loop_body
      %s21 = ssub.s32 %s16, 1
      %s22 = ssub.s32 %s16, 2
      %s23 = sadd.s32 %s16, 1
      %s24 = ssub.s32 %s16, %s23
      %p25 = scmp.eq.s32.totalorder %s24, 0
      %s27 = sadd.s32 %s26, 1
      %s28 = scalar_select %p25, %s26, %s27
      %p31 = pneg %p25
      %p32 = scmp.eq.s32.totalorder %s16, 1
      %p33 = por %p31, %p32
      %p34 = scmp.ne.s32.totalorder %s26, %s29
      %p35 = scmp.eq.s32.totalorder %s16, 0
      %p36 = por %p34, %p35
      %p37 = scmp.ne.s32.totalorder %s26, %s29
      %p38 = scmp.eq.s32.totalorder %s21, 1
      %p39 = por %p37, %p38
      %p40 = scmp.ne.s32.totalorder %s29, %s30
      %p41 = scmp.eq.s32.totalorder %s21, 0
      %p42 = por %p40, %p41
      %p43 = scmp.ne.s32.totalorder %s29, %s30
      %p44 = scmp.eq.s32.totalorder %s22, 1
      %p45 = por %p43, %p44
      %p47 = scmp.ne.s32.totalorder %s30, %s46
      %p48 = scmp.eq.s32.totalorder %s22, 0
      %p49 = por %p47, %p48
      %s51 = sadd.s32 %s50, 1
      %p54 = scmp.eq.s32.totalorder %s16, 1
      %p55 = scmp.ne.s32.totalorder %s50, %s52
      %p56 = scmp.eq.s32.totalorder %s16, 0
      %p57 = por %p55, %p56
      %p58 = scmp.ne.s32.totalorder %s50, %s52
      %p59 = scmp.eq.s32.totalorder %s21, 1
      %p60 = por %p58, %p59
      %p61 = scmp.ne.s32.totalorder %s52, %s53
      %p62 = scmp.eq.s32.totalorder %s21, 0
      %p63 = por %p61, %p62
      %p64 = scmp.ne.s32.totalorder %s52, %s53
      %p65 = scmp.eq.s32.totalorder %s22, 1
      %p66 = por %p64, %p65
      %p68 = scmp.ne.s32.totalorder %s53, %s67
      %p69 = scmp.eq.s32.totalorder %s22, 0
      %p70 = por %p68, %p69
      %s72 = sadd.s32 %s71, 1
      %p75 = scmp.eq.s32.totalorder %s16, 1
      %p76 = scmp.ne.s32.totalorder %s71, %s73
      %p77 = scmp.eq.s32.totalorder %s16, 0
      %p78 = por %p76, %p77
      %p79 = scmp.ne.s32.totalorder %s71, %s73
      %p80 = scmp.eq.s32.totalorder %s21, 1
      %p81 = por %p79, %p80
      %p82 = scmp.ne.s32.totalorder %s73, %s74
      %p83 = scmp.eq.s32.totalorder %s21, 0
      %p84 = por %p82, %p83
      %p85 = scmp.ne.s32.totalorder %s73, %s74
      %p86 = scmp.eq.s32.totalorder %s22, 1
      %p87 = por %p85, %p86
      %p89 = scmp.ne.s32.totalorder %s74, %s88
      %p90 = scmp.eq.s32.totalorder %s22, 0
      %p91 = por %p89, %p90
      %s92 = ssub.s32 %s16, %s23
      %p93 = scmp.eq.s32.totalorder %s92, 0
      %s95 = sadd.s32 %s94, 1
      %s96 = scalar_select %p93, %s94, %s95
      %p99 = pneg %p93
      %p100 = scmp.eq.s32.totalorder %s16, 1
      %p101 = por %p99, %p100
      %p102 = scmp.ne.s32.totalorder %s94, %s97
      %p103 = scmp.eq.s32.totalorder %s16, 0
      %p104 = por %p102, %p103
      %p105 = scmp.ne.s32.totalorder %s94, %s97
      %p106 = scmp.eq.s32.totalorder %s21, 1
      %p107 = por %p105, %p106
      %p108 = scmp.ne.s32.totalorder %s97, %s98
      %p109 = scmp.eq.s32.totalorder %s21, 0
      %p110 = por %p108, %p109
      %p111 = scmp.ne.s32.totalorder %s97, %s98
      %p112 = scmp.eq.s32.totalorder %s22, 1
      %p113 = por %p111, %p112
      %p115 = scmp.ne.s32.totalorder %s98, %s114
      %p116 = scmp.eq.s32.totalorder %s22, 0
      %p117 = por %p115, %p116
      %p118 = scmp.le.s32.totalorder 1, %s16
      %p119 = scmp.lt.s32.totalorder %s16, 3
      %p120 = pnand %p118, %p119
      %p121 = pneg %p120
      // Predicated region
      $region9: #{actor_critic_forward.5} parent=5 // pred_check
        _
      $region10: #{actor_critic_forward.5} parent=5 // pred_check_branch
        %123 = sbr.rel (%p120) target = $region12
      $region11: #{actor_critic_forward.5} parent=5 // pred_region
        %s124 = ssub.s32 %s16, 1
        // Predicated region
        $region13: #{actor_critic_forward.5} parent=11 // pred_check
          %p125 = pneg %p63
        $region14: #{actor_critic_forward.5} parent=11 // pred_check_branch
          %127 = sbr.rel (%p125) target = $region16
        $region15: #{actor_critic_forward.5} parent=11 // pred_region
          %s129 = ssub.s32 4096, 4096
          %130 = vsyncadd [#allocation6], %s129
          %s131 = sshll.u32 [#allocation5], 4
          %s132 = int_to_ptr.vmem [resolvable:$true] %s131
          %137 = dma.hbm_to_vmem [thread:$0]  %s1, 4096, %s132, [#allocation6], 64, 64, 4
        $region16: #{actor_critic_forward.5} parent=11 // pred_fallthru
          _
        // Predicated region
        $region17: #{actor_critic_forward.5} parent=11 // pred_check
          %p138 = pneg %p84
        $region18: #{actor_critic_forward.5} parent=11 // pred_check_branch
          %140 = sbr.rel (%p138) target = $region20
        $region19: #{actor_critic_forward.5} parent=11 // pred_region
          %s142 = ssub.s32 16, 16
          %143 = vsyncadd [#allocation6], %s142
          %s145 = sshll.u32 [#allocation7], 4
          %s146 = int_to_ptr.vmem [resolvable:$true] %s145
          %148 = dma.hbm_to_vmem [thread:$0]  %s2, 16, %s146, [#allocation6]
        $region20: #{actor_critic_forward.5} parent=11 // pred_fallthru
          _
      $region12: #{actor_critic_forward.5} parent=5 // pred_fallthru
        _
      %p149 = scmp.lt.s32.totalorder %s16, 2
      // Predicated region
      $region21: #{actor_critic_forward.5} parent=5 // pred_check
        %p150 = pneg %p149
      $region22: #{actor_critic_forward.5} parent=5 // pred_check_branch
        %152 = sbr.rel (%p150) target = $region24
      $region23: #{actor_critic_forward.5} parent=5 // pred_region
        // Predicated region
        $region25: #{actor_critic_forward.5} parent=23 // pred_check
          %p153 = pneg %p36
        $region26: #{actor_critic_forward.5} parent=23 // pred_check_branch
          %155 = sbr.rel (%p153) target = $region28
        $region27: #{actor_critic_forward.5} parent=23 // pred_region
          %s156 = sand.u32 %s26, 1
          %s157 = scalar_lea.sflag [#allocation3], %s156
          %s158 = sand.u32 %s26, 1
          %s159 = smul.addr %s158, 56
          %s160 = scalar_lea.vmem [#allocation2], %s159
          %s162 = ssub.s32 896, 896
          %163 = vsyncadd %s157, %s162
          %s164 = smul.addr %s16, 14
          %s165 = smul.addr %s164, 64
          %s166 = scalar_lea.hbm %s0, %s165
          %s167 = sshll.u32 %s160, 4
          %s168 = int_to_ptr.vmem [resolvable:$true] %s167
          %173 = dma.hbm_to_vmem [thread:$0]  %s166, 896, %s168, %s157, 64, 64, 4
        $region28: #{actor_critic_forward.5} parent=23 // pred_fallthru
          _
      $region24: #{actor_critic_forward.5} parent=5 // pred_fallthru
        _
      %p174 = scmp.le.s32.totalorder 1, %s16
      %p175 = scmp.lt.s32.totalorder %s16, 3
      %p176 = pnand %p174, %p175
      %p177 = pneg %p176
      // Predicated region
      $region29: #{actor_critic_forward.5} parent=5 // pred_check
        _
      $region30: #{actor_critic_forward.5} parent=5 // pred_check_branch
        %179 = sbr.rel (%p176) target = $region32
      $region31: #{actor_critic_forward.5} parent=5 // pred_region
        %s180 = ssub.s32 %s16, 1
        %s181 = sand.u32 %s29, 1
        %s182 = scalar_lea.sflag [#allocation3], %s181
        %s183 = sand.u32 %s29, 1
        %s184 = smul.addr %s183, 56
        %s185 = scalar_lea.vmem [#allocation2], %s184
        // Predicated region
        $region33: #{actor_critic_forward.5} parent=31 // pred_check
          %p186 = pneg %p42
        $region34: #{actor_critic_forward.5} parent=31 // pred_check_branch
          %188 = sbr.rel (%p186) target = $region36
        $region35: #{actor_critic_forward.5} parent=31 // pred_region
          %189 = dma.done %s182, 896
        $region36: #{actor_critic_forward.5} parent=31 // pred_fallthru
          _
        // Predicated region
        $region37: #{actor_critic_forward.5} parent=31 // pred_check
          %p190 = pneg %p63
        $region38: #{actor_critic_forward.5} parent=31 // pred_check_branch
          %192 = sbr.rel (%p190) target = $region40
        $region39: #{actor_critic_forward.5} parent=31 // pred_region
          %193 = dma.done [#allocation6], 4096
        $region40: #{actor_critic_forward.5} parent=31 // pred_fallthru
          _
        // Predicated region
        $region41: #{actor_critic_forward.5} parent=31 // pred_check
          %p194 = pneg %p84
        $region42: #{actor_critic_forward.5} parent=31 // pred_check_branch
          %196 = sbr.rel (%p194) target = $region44
        $region43: #{actor_critic_forward.5} parent=31 // pred_region
          %197 = dma.done [#allocation6], 16
        $region44: #{actor_critic_forward.5} parent=31 // pred_fallthru
          _
        %s198 = sand.u32 %s29, 1
        %s199 = scalar_lea.sflag [#allocation3], %s198
        %s200 = sand.u32 %s29, 1
        %s201 = smul.addr %s200, 56
        %s202 = scalar_lea.vmem [#allocation2], %s201
        %p203 = pneg %p42
        %p204 = pneg %p39
        %p205 = pneg %p63
        %p206 = pneg %p60
        %p207 = pneg %p84
        %p208 = pneg %p81
        %p209 = pneg %p110
        %p210 = pneg %p107
        %s211 = sand.u32 %s97, 1
        %s212 = scalar_lea.sflag [#allocation4], %s211
        %s213 = sand.u32 %s97, 1
        %s214 = smul.addr %s213, 48
        %s215 = scalar_lea.vmem [#allocation8], %s214
        %s216 = smul.u32 12, %s21
        %v218 = vld [vmem:[%s185] sm:$0xf]
        %v219 = vld [vmem:[%s185 + $0x4] sm:$0xf]
        %v220 = vld [vmem:[%s185 + $0x8] sm:$0xf]
        %v221 = vld [vmem:[%s185 + $0xc] sm:$0xf]
        %v222 = vld [vmem:[%s185 + $0x10] sm:$0xf]
        %v223 = vld [vmem:[%s185 + $0x14] sm:$0xf]
        %v224 = vld [vmem:[%s185 + $0x18] sm:$0xf]
        %v225 = vld [vmem:[%s185 + $0x1c] sm:$0xf]
        %v226 = vld [vmem:[%s185 + $0x20] sm:$0xf]
        %v227 = vld [vmem:[%s185 + $0x24] sm:$0xf]
        %v228 = vld [vmem:[%s185 + $0x28] sm:$0xf]
        %v229 = vld [vmem:[%s185 + $0x2c] sm:$0xf]
        %v230 = vld [vmem:[#allocation5] sm:$0xf]
        %v231 = vld [vmem:[#allocation5 + $0x4] sm:$0xf]
        %v232 = vld [vmem:[#allocation5 + $0x8] sm:$0xf]
        %v233 = vld [vmem:[#allocation5 + $0xc] sm:$0xf]
        %v234 = vld [vmem:[#allocation5 + $0x10] sm:$0xf]
        %v235 = vld [vmem:[#allocation5 + $0x14] sm:$0xf]
        %v236 = vld [vmem:[#allocation5 + $0x18] sm:$0xf]
        %v237 = vld [vmem:[#allocation5 + $0x1c] sm:$0xf]
        %v238 = vld [vmem:[#allocation5 + $0x20] sm:$0xf]
        %v239 = vld [vmem:[#allocation5 + $0x24] sm:$0xf]
        %v240 = vld [vmem:[#allocation5 + $0x28] sm:$0xf]
        %v241 = vld [vmem:[#allocation5 + $0x2c] sm:$0xf]
        %v242 = vld [vmem:[#allocation5 + $0x30] sm:$0xf]
        %v243 = vld [vmem:[#allocation5 + $0x34] sm:$0xf]
        %v244 = vld [vmem:[#allocation5 + $0x38] sm:$0xf]
        %v245 = vld [vmem:[#allocation5 + $0x3c] sm:$0xf]
        %v246 = vld [vmem:[%s185 + $0x30] sm:$0x1]
        %v247 = vld [vmem:[#allocation5 + $0x40] sm:$0xf]
        %v248 = vld [vmem:[#allocation5 + $0x44] sm:$0xf]
        %v249 = vld [vmem:[#allocation5 + $0x48] sm:$0xf]
        %v250 = vld [vmem:[#allocation5 + $0x4c] sm:$0xf]
        %v251 = vld [vmem:[#allocation5 + $0x50] sm:$0xf]
        %v252 = vld [vmem:[#allocation5 + $0x54] sm:$0xf]
        %v253 = vld [vmem:[#allocation5 + $0x58] sm:$0xf]
        %v254 = vld [vmem:[#allocation5 + $0x5c] sm:$0xf]
        %v255 = vld [vmem:[#allocation5 + $0x60] sm:$0xf]
        %v256 = vld [vmem:[#allocation5 + $0x64] sm:$0xf]
        %v257 = vld [vmem:[#allocation5 + $0x68] sm:$0xf]
        %v258 = vld [vmem:[#allocation5 + $0x6c] sm:$0xf]
        %v259 = vld [vmem:[#allocation5 + $0x70] sm:$0xf]
        %v260 = vld [vmem:[#allocation5 + $0x74] sm:$0xf]
        %v261 = vld [vmem:[#allocation5 + $0x78] sm:$0xf]
        %v262 = vld [vmem:[#allocation5 + $0x7c] sm:$0xf]
        %v276 = vunpack.c.l.b16 %v218
        %v277 = vunpack.c.l.b16 %v219
        %v278 = vunpack.c.l.b16 %v220
        %v279 = vunpack.c.l.b16 %v221
        %v280 = vunpack.c.l.b16 %v222
        %v281 = vunpack.c.l.b16 %v223
        %v282 = vunpack.c.l.b16 %v224
        %v283 = vunpack.c.l.b16 %v225
        %v284 = vunpack.c.l.b16 %v226
        %v285 = vunpack.c.l.b16 %v227
        %v286 = vunpack.c.l.b16 %v228
        %v287 = vunpack.c.l.b16 %v229
        %v288 = vunpack.c.l.b16 %v246
        %v289 = vpack.c.b16 %v277, %v276
        %v290 = vpack.c.b16 %v279, %v278
        %v291 = vpack.c.b16 %v281, %v280
        %v292 = vpack.c.b16 %v283, %v282
        %v293 = vpack.c.b16 %v285, %v284
        %v294 = vpack.c.b16 %v287, %v286
        %v295 = vpack.c.b16 %v288, %v288
        %vm296 = vsmask.f32 7424
        %v298 = vshrl.u32 %v289, 16
        %v300 = vshll.u32 %v289, 16
        %v302 = vrot.slane %v300, 1
        %v303 = vor.u32 %v298, %v302
        %v305 = vshll.u32 %v290, 16
        %v307 = vrot.slane %v305, 1
        %v308 = vsel %vm296, %v303, %v307
        %v309 = vshrl.u32 %v290, 16
        %v311 = vor.u32 %v309, %v307
        %v313 = vshll.u32 %v291, 16
        %v315 = vrot.slane %v313, 1
        %v316 = vsel %vm296, %v311, %v315
        %v317 = vshrl.u32 %v291, 16
        %v319 = vor.u32 %v317, %v315
        %v321 = vshll.u32 %v292, 16
        %v323 = vrot.slane %v321, 1
        %v324 = vsel %vm296, %v319, %v323
        %v325 = vshrl.u32 %v292, 16
        %v327 = vor.u32 %v325, %v323
        %v329 = vshll.u32 %v293, 16
        %v331 = vrot.slane %v329, 1
        %v332 = vsel %vm296, %v327, %v331
        %v333 = vshrl.u32 %v293, 16
        %v335 = vor.u32 %v333, %v331
        %v337 = vshll.u32 %v294, 16
        %v339 = vrot.slane %v337, 1
        %v340 = vsel %vm296, %v335, %v339
        %v341 = vshrl.u32 %v294, 16
        %v343 = vor.u32 %v341, %v339
        %v345 = vshll.u32 %v295, 16
        %v347 = vrot.slane %v345, 1
        %v348 = vsel %vm296, %v343, %v347
        %v371 = vunpack.c.l.b16 %v247
        %v372 = vunpack.c.l.b16 %v248
        %v373 = vunpack.c.l.b16 %v249
        %v374 = vunpack.c.l.b16 %v250
        %v375 = vunpack.c.l.b16 %v251
        %v376 = vunpack.c.l.b16 %v252
        %v377 = vunpack.c.l.b16 %v253
        %v378 = vunpack.c.l.b16 %v254
        %v379 = vunpack.c.l.b16 %v255
        %v380 = vunpack.c.l.b16 %v256
        %v381 = vunpack.c.l.b16 %v257
        %v382 = vunpack.c.l.b16 %v258
        %v383 = vunpack.c.l.b16 %v259
        %v384 = vunpack.c.l.b16 %v260
        %v385 = vunpack.c.l.b16 %v261
        %v386 = vunpack.c.l.b16 %v262
        %v387 = vpack.c.b16 %v372, %v371
        %v388 = vpack.c.b16 %v374, %v373
        %v389 = vpack.c.b16 %v376, %v375
        %v390 = vpack.c.b16 %v378, %v377
        %v391 = vpack.c.b16 %v380, %v379
        %v392 = vpack.c.b16 %v382, %v381
        %v393 = vpack.c.b16 %v384, %v383
        %v394 = vpack.c.b16 %v386, %v385
        %403 = vmatprep.subr.bf16.mxu0 0
        %404 = vmatpush1.bf16.msra.mxu0 %v387
        %405 = vmatprep.subr.bf16.mxu0 0
        %406 = vmatpush1.bf16.msra.mxu0 %v388
        %407 = vmatprep.subr.bf16.mxu0 0
        %408 = vmatpush1.bf16.msra.mxu0 %v389
        %409 = vmatprep.subr.bf16.mxu0 0
        %410 = vmatpush1.bf16.msra.mxu0 %v390
        %411 = vmatprep.subr.bf16.mxu0 0
        %412 = vmatpush1.bf16.msra.mxu0 %v391
        %413 = vmatprep.subr.bf16.mxu0 0
        %414 = vmatpush1.bf16.msra.mxu0 %v392
        %415 = vmatprep.subr.bf16.mxu0 0
        %416 = vmatpush1.bf16.msra.mxu0 %v393
        %417 = vmatprep.subr.bf16.mxu0 0
        %418 = vmatpush1.bf16.msra.mxu0 %v394
        %419 = vmatprep.subr.bf16.mxu0 0
        %420 = vmatpush1.bf16.msra.mxu0 0
        %421 = vmatprep.subr.bf16.mxu0 0
        %422 = vmatpush1.bf16.msra.mxu0 0
        %423 = vmatprep.subr.bf16.mxu0 0
        %424 = vmatpush1.bf16.msra.mxu0 0
        %425 = vmatprep.subr.bf16.mxu0 0
        %426 = vmatpush1.bf16.msra.mxu0 0
        %427 = vmatprep.subr.bf16.mxu0 0
        %428 = vmatpush1.bf16.msra.mxu0 0
        %429 = vmatprep.subr.bf16.mxu0 0
        %430 = vmatpush1.bf16.msra.mxu0 0
        %431 = vmatprep.subr.bf16.mxu0 0
        %432 = vmatpush1.bf16.msra.mxu0 0
        %433 = vmatprep.subr.bf16.mxu0 0
        %434 = vmatpush1.bf16.msra.mxu0 0
        %435 = vmatprep.mubr.bf16.mxu0 0
        %436 = vmatmul.mubr.bf16.gmra.mrb[0].mxu0 %v308
        %v437 = vpop.f32.mrb[0].mxu0
        %v438 = vadd.f32 0.0, %v437
        %v439 = vpop.f32.mrb[0].mxu0
        %v440 = vpop.f32.mrb[0].mxu0
        %v441 = vadd.f32 0.0, %v440
        %v442 = vpop.f32.mrb[0].mxu0
        %443 = vmatprep.mubr.bf16.mxu0 0
        %444 = vmatmul.mubr.bf16.gmra.mrb[0].mxu0 %v316
        %v445 = vpop.f32.mrb[0].mxu0
        %v446 = vadd.f32 0.0, %v445
        %v447 = vpop.f32.mrb[0].mxu0
        %v448 = vpop.f32.mrb[0].mxu0
        %v449 = vadd.f32 0.0, %v448
        %v450 = vpop.f32.mrb[0].mxu0
        %451 = vmatprep.mubr.bf16.mxu0 0
        %452 = vmatmul.mubr.bf16.gmra.mrb[0].mxu0 %v324
        %v453 = vpop.f32.mrb[0].mxu0
        %v454 = vadd.f32 0.0, %v453
        %v455 = vpop.f32.mrb[0].mxu0
        %v456 = vpop.f32.mrb[0].mxu0
        %v457 = vadd.f32 0.0, %v456
        %v458 = vpop.f32.mrb[0].mxu0
        %459 = vmatprep.mubr.bf16.mxu0 0
        %460 = vmatmul.mubr.bf16.gmra.mrb[0].mxu0 %v332
        %v461 = vpop.f32.mrb[0].mxu0
        %v462 = vadd.f32 0.0, %v461
        %v463 = vpop.f32.mrb[0].mxu0
        %v464 = vpop.f32.mrb[0].mxu0
        %v465 = vadd.f32 0.0, %v464
        %v466 = vpop.f32.mrb[0].mxu0
        %467 = vmatprep.mubr.bf16.mxu0 0
        %468 = vmatmul.mubr.bf16.gmra.mrb[0].mxu0 %v340
        %v469 = vpop.f32.mrb[0].mxu0
        %v470 = vadd.f32 0.0, %v469
        %v471 = vpop.f32.mrb[0].mxu0
        %v472 = vpop.f32.mrb[0].mxu0
        %v473 = vadd.f32 0.0, %v472
        %v474 = vpop.f32.mrb[0].mxu0
        %475 = vmatprep.mubr.bf16.mxu0 0
        %476 = vmatmul.mubr.bf16.gmra.mrb[0].mxu0 %v348
        %v477 = vpop.f32.mrb[0].mxu0
        %v478 = vadd.f32 0.0, %v477
        %v479 = vpop.f32.mrb[0].mxu0
        %v480 = vpop.f32.mrb[0].mxu0
        %v481 = vadd.f32 0.0, %v480
        %v482 = vpop.f32.mrb[0].mxu0
        %483 = vdwg.mxu0
        %v506 = vunpack.c.l.b16 %v230
        %v507 = vunpack.c.l.b16 %v231
        %v508 = vunpack.c.l.b16 %v232
        %v509 = vunpack.c.l.b16 %v233
        %v510 = vunpack.c.l.b16 %v234
        %v511 = vunpack.c.l.b16 %v235
        %v512 = vunpack.c.l.b16 %v236
        %v513 = vunpack.c.l.b16 %v237
        %v514 = vunpack.c.l.b16 %v238
        %v515 = vunpack.c.l.b16 %v239
        %v516 = vunpack.c.l.b16 %v240
        %v517 = vunpack.c.l.b16 %v241
        %v518 = vunpack.c.l.b16 %v242
        %v519 = vunpack.c.l.b16 %v243
        %v520 = vunpack.c.l.b16 %v244
        %v521 = vunpack.c.l.b16 %v245
        %v522 = vpack.c.b16 %v507, %v506
        %v523 = vpack.c.b16 %v509, %v508
        %v524 = vpack.c.b16 %v511, %v510
        %v525 = vpack.c.b16 %v513, %v512
        %v526 = vpack.c.b16 %v515, %v514
        %v527 = vpack.c.b16 %v517, %v516
        %v528 = vpack.c.b16 %v519, %v518
        %v529 = vpack.c.b16 %v521, %v520
        %538 = vmatprep.subr.bf16.mxu0 0
        %539 = vmatpush1.bf16.msra.mxu0 %v522
        %540 = vmatprep.subr.bf16.mxu0 0
        %541 = vmatpush1.bf16.msra.mxu0 %v523
        %542 = vmatprep.subr.bf16.mxu0 0
        %543 = vmatpush1.bf16.msra.mxu0 %v524
        %544 = vmatprep.subr.bf16.mxu0 0
        %545 = vmatpush1.bf16.msra.mxu0 %v525
        %546 = vmatprep.subr.bf16.mxu0 0
        %547 = vmatpush1.bf16.msra.mxu0 %v526
        %548 = vmatprep.subr.bf16.mxu0 0
        %549 = vmatpush1.bf16.msra.mxu0 %v527
        %550 = vmatprep.subr.bf16.mxu0 0
        %551 = vmatpush1.bf16.msra.mxu0 %v528
        %552 = vmatprep.subr.bf16.mxu0 0
        %553 = vmatpush1.bf16.msra.mxu0 %v529
        %554 = vmatprep.subr.bf16.mxu0 0
        %555 = vmatpush1.bf16.msra.mxu0 0
        %556 = vmatprep.subr.bf16.mxu0 0
        %557 = vmatpush1.bf16.msra.mxu0 0
        %558 = vmatprep.subr.bf16.mxu0 0
        %559 = vmatpush1.bf16.msra.mxu0 0
        %560 = vmatprep.subr.bf16.mxu0 0
        %561 = vmatpush1.bf16.msra.mxu0 0
        %562 = vmatprep.subr.bf16.mxu0 0
        %563 = vmatpush1.bf16.msra.mxu0 0
        %564 = vmatprep.subr.bf16.mxu0 0
        %565 = vmatpush1.bf16.msra.mxu0 0
        %566 = vmatprep.subr.bf16.mxu0 0
        %567 = vmatpush1.bf16.msra.mxu0 0
        %568 = vmatprep.subr.bf16.mxu0 0
        %569 = vmatpush1.bf16.msra.mxu0 0
        %570 = vmatprep.mubr.bf16.mxu0 0
        %571 = vmatmul.mubr.bf16.gmra.mrb[0].mxu0 %v289
        %v572 = vpop.f32.mrb[0].mxu0
        %v573 = vadd.f32 %v438, %v572
        %v574 = vpop.f32.mrb[0].mxu0
        %v575 = vpop.f32.mrb[0].mxu0
        %v576 = vadd.f32 %v441, %v575
        %v577 = vpop.f32.mrb[0].mxu0
        %578 = vmatprep.mubr.bf16.mxu0 0
        %579 = vmatmul.mubr.bf16.gmra.mrb[0].mxu0 %v290
        %v580 = vpop.f32.mrb[0].mxu0
        %v581 = vadd.f32 %v446, %v580
        %v582 = vpop.f32.mrb[0].mxu0
        %v583 = vpop.f32.mrb[0].mxu0
        %v584 = vadd.f32 %v449, %v583
        %v585 = vpop.f32.mrb[0].mxu0
        %586 = vmatprep.mubr.bf16.mxu0 0
        %587 = vmatmul.mubr.bf16.gmra.mrb[0].mxu0 %v291
        %v588 = vpop.f32.mrb[0].mxu0
        %v589 = vadd.f32 %v454, %v588
        %v590 = vpop.f32.mrb[0].mxu0
        %v591 = vpop.f32.mrb[0].mxu0
        %v592 = vadd.f32 %v457, %v591
        %v593 = vpop.f32.mrb[0].mxu0
        %594 = vmatprep.mubr.bf16.mxu0 0
        %595 = vmatmul.mubr.bf16.gmra.mrb[0].mxu0 %v292
        %v596 = vpop.f32.mrb[0].mxu0
        %v597 = vadd.f32 %v462, %v596
        %v598 = vpop.f32.mrb[0].mxu0
        %v599 = vpop.f32.mrb[0].mxu0
        %v600 = vadd.f32 %v465, %v599
        %v601 = vpop.f32.mrb[0].mxu0
        %602 = vmatprep.mubr.bf16.mxu0 0
        %603 = vmatmul.mubr.bf16.gmra.mrb[0].mxu0 %v293
        %v604 = vpop.f32.mrb[0].mxu0
        %v605 = vadd.f32 %v470, %v604
        %v606 = vpop.f32.mrb[0].mxu0
        %v607 = vpop.f32.mrb[0].mxu0
        %v608 = vadd.f32 %v473, %v607
        %v609 = vpop.f32.mrb[0].mxu0
        %610 = vmatprep.mubr.bf16.mxu0 0
        %611 = vmatmul.mubr.bf16.gmra.mrb[0].mxu0 %v294
        %v612 = vpop.f32.mrb[0].mxu0
        %v613 = vadd.f32 %v478, %v612
        %v614 = vpop.f32.mrb[0].mxu0
        %v615 = vpop.f32.mrb[0].mxu0
        %v616 = vadd.f32 %v481, %v615
        %v617 = vpop.f32.mrb[0].mxu0
        %618 = vdwg.mxu0
        %v619 = vld [vmem:[%s185 + $0x4] sm:$0xe]
        %v620 = vld [vmem:[%s185 + $0x8] sm:$0xf]
        %v621 = vld [vmem:[%s185 + $0xc] sm:$0xf]
        %v622 = vld [vmem:[%s185 + $0x10] sm:$0xf]
        %v623 = vld [vmem:[%s185 + $0x14] sm:$0xf]
        %v624 = vld [vmem:[%s185 + $0x18] sm:$0xf]
        %v625 = vld [vmem:[%s185 + $0x1c] sm:$0xf]
        %v626 = vld [vmem:[%s185 + $0x20] sm:$0xf]
        %v627 = vld [vmem:[%s185 + $0x24] sm:$0xf]
        %v628 = vld [vmem:[%s185 + $0x28] sm:$0xf]
        %v629 = vld [vmem:[%s185 + $0x2c] sm:$0xf]
        %v630 = vld [vmem:[%s185 + $0x30] sm:$0xf]
        %v631 = vld [vmem:[%s185 + $0x34] sm:$0x1]
        %v632 = vld [vmem:[#allocation5 + $0x80] sm:$0xf]
        %v633 = vld [vmem:[#allocation5 + $0x84] sm:$0xf]
        %v634 = vld [vmem:[#allocation5 + $0x88] sm:$0xf]
        %v635 = vld [vmem:[#allocation5 + $0x8c] sm:$0xf]
        %v636 = vld [vmem:[#allocation5 + $0x90] sm:$0xf]
        %v637 = vld [vmem:[#allocation5 + $0x94] sm:$0xf]
        %v638 = vld [vmem:[#allocation5 + $0x98] sm:$0xf]
        %v639 = vld [vmem:[#allocation5 + $0x9c] sm:$0xf]
        %v640 = vld [vmem:[#allocation5 + $0xa0] sm:$0xf]
        %v641 = vld [vmem:[#allocation5 + $0xa4] sm:$0xf]
        %v642 = vld [vmem:[#allocation5 + $0xa8] sm:$0xf]
        %v643 = vld [vmem:[#allocation5 + $0xac] sm:$0xf]
        %v644 = vld [vmem:[#allocation5 + $0xb0] sm:$0xf]
        %v645 = vld [vmem:[#allocation5 + $0xb4] sm:$0xf]
        %v646 = vld [vmem:[#allocation5 + $0xb8] sm:$0xf]
        %v647 = vld [vmem:[#allocation5 + $0xbc] sm:$0xf]
        %v661 = vunpack.c.l.b16 %v619
        %v662 = vunpack.c.l.b16 %v620
        %v663 = vunpack.c.l.b16 %v621
        %v664 = vunpack.c.l.b16 %v622
        %v665 = vunpack.c.l.b16 %v623
        %v666 = vunpack.c.l.b16 %v624
        %v667 = vunpack.c.l.b16 %v625
        %v668 = vunpack.c.l.b16 %v626
        %v669 = vunpack.c.l.b16 %v627
        %v670 = vunpack.c.l.b16 %v628
        %v671 = vunpack.c.l.b16 %v629
        %v672 = vunpack.c.l.b16 %v630
        %v673 = vunpack.c.l.b16 %v631
        %v674 = vpack.c.b16 %v662, %v661
        %v675 = vpack.c.b16 %v664, %v663
        %v676 = vpack.c.b16 %v666, %v665
        %v677 = vpack.c.b16 %v668, %v667
        %v678 = vpack.c.b16 %v670, %v669
        %v679 = vpack.c.b16 %v672, %v671
        %v680 = vpack.c.b16 %v673, %v673
        %vm681 = vcmask 1046528
        %v682 = vrot.slane %v674, 1
        %v683 = vrot.slane %v675, 1
        %v684 = vsel %vm681, %v682, %v683
        %v685 = vrot.slane %v676, 1
        %v686 = vsel %vm681, %v683, %v685
        %v687 = vrot.slane %v677, 1
        %v688 = vsel %vm681, %v685, %v687
        %v689 = vrot.slane %v678, 1
        %v690 = vsel %vm681, %v687, %v689
        %v691 = vrot.slane %v679, 1
        %v692 = vsel %vm681, %v689, %v691
        %v693 = vrot.slane %v680, 1
        %v694 = vsel %vm681, %v691, %v693
        %v717 = vunpack.c.l.b16 %v632
        %v718 = vunpack.c.l.b16 %v633
        %v719 = vunpack.c.l.b16 %v634
        %v720 = vunpack.c.l.b16 %v635
        %v721 = vunpack.c.l.b16 %v636
        %v722 = vunpack.c.l.b16 %v637
        %v723 = vunpack.c.l.b16 %v638
        %v724 = vunpack.c.l.b16 %v639
        %v725 = vunpack.c.l.b16 %v640
        %v726 = vunpack.c.l.b16 %v641
        %v727 = vunpack.c.l.b16 %v642
        %v728 = vunpack.c.l.b16 %v643
        %v729 = vunpack.c.l.b16 %v644
        %v730 = vunpack.c.l.b16 %v645
        %v731 = vunpack.c.l.b16 %v646
        %v732 = vunpack.c.l.b16 %v647
        %v733 = vpack.c.b16 %v718, %v717
        %v734 = vpack.c.b16 %v720, %v719
        %v735 = vpack.c.b16 %v722, %v721
        %v736 = vpack.c.b16 %v724, %v723
        %v737 = vpack.c.b16 %v726, %v725
        %v738 = vpack.c.b16 %v728, %v727
        %v739 = vpack.c.b16 %v730, %v729
        %v740 = vpack.c.b16 %v732, %v731
        %749 = vmatprep.subr.bf16.mxu0 0
        %750 = vmatpush1.bf16.msra.mxu0 %v733
        %751 = vmatprep.subr.bf16.mxu0 0
        %752 = vmatpush1.bf16.msra.mxu0 %v734
        %753 = vmatprep.subr.bf16.mxu0 0
        %754 = vmatpush1.bf16.msra.mxu0 %v735
        %755 = vmatprep.subr.bf16.mxu0 0
        %756 = vmatpush1.bf16.msra.mxu0 %v736
        %757 = vmatprep.subr.bf16.mxu0 0
        %758 = vmatpush1.bf16.msra.mxu0 %v737
        %759 = vmatprep.subr.bf16.mxu0 0
        %760 = vmatpush1.bf16.msra.mxu0 %v738
        %761 = vmatprep.subr.bf16.mxu0 0
        %762 = vmatpush1.bf16.msra.mxu0 %v739
        %763 = vmatprep.subr.bf16.mxu0 0
        %764 = vmatpush1.bf16.msra.mxu0 %v740
        %765 = vmatprep.subr.bf16.mxu0 0
        %766 = vmatpush1.bf16.msra.mxu0 0
        %767 = vmatprep.subr.bf16.mxu0 0
        %768 = vmatpush1.bf16.msra.mxu0 0
        %769 = vmatprep.subr.bf16.mxu0 0
        %770 = vmatpush1.bf16.msra.mxu0 0
        %771 = vmatprep.subr.bf16.mxu0 0
        %772 = vmatpush1.bf16.msra.mxu0 0
        %773 = vmatprep.subr.bf16.mxu0 0
        %774 = vmatpush1.bf16.msra.mxu0 0
        %775 = vmatprep.subr.bf16.mxu0 0
        %776 = vmatpush1.bf16.msra.mxu0 0
        %777 = vmatprep.subr.bf16.mxu0 0
        %778 = vmatpush1.bf16.msra.mxu0 0
        %779 = vmatprep.subr.bf16.mxu0 0
        %780 = vmatpush1.bf16.msra.mxu0 0
        %781 = vmatprep.mubr.bf16.mxu0 0
        %782 = vmatmul.mubr.bf16.gmra.mrb[0].mxu0 %v684
        %v783 = vpop.f32.mrb[0].mxu0
        %v784 = vadd.f32 0.0, %v783
        %v785 = vpop.f32.mrb[0].mxu0
        %v786 = vpop.f32.mrb[0].mxu0
        %v787 = vadd.f32 0.0, %v786
        %v788 = vpop.f32.mrb[0].mxu0
        %789 = vmatprep.mubr.bf16.mxu0 0
        %790 = vmatmul.mubr.bf16.gmra.mrb[0].mxu0 %v686
        %v791 = vpop.f32.mrb[0].mxu0
        %v792 = vadd.f32 0.0, %v791
        %v793 = vpop.f32.mrb[0].mxu0
        %v794 = vpop.f32.mrb[0].mxu0
        %v795 = vadd.f32 0.0, %v794
        %v796 = vpop.f32.mrb[0].mxu0
        %797 = vmatprep.mubr.bf16.mxu0 0
        %798 = vmatmul.mubr.bf16.gmra.mrb[0].mxu0 %v688
        %v799 = vpop.f32.mrb[0].mxu0
        %v800 = vadd.f32 0.0, %v799
        %v801 = vpop.f32.mrb[0].mxu0
        %v802 = vpop.f32.mrb[0].mxu0
        %v803 = vadd.f32 0.0, %v802
        %v804 = vpop.f32.mrb[0].mxu0
        %805 = vmatprep.mubr.bf16.mxu0 0
        %806 = vmatmul.mubr.bf16.gmra.mrb[0].mxu0 %v690
        %v807 = vpop.f32.mrb[0].mxu0
        %v808 = vadd.f32 0.0, %v807
        %v809 = vpop.f32.mrb[0].mxu0
        %v810 = vpop.f32.mrb[0].mxu0
        %v811 = vadd.f32 0.0, %v810
        %v812 = vpop.f32.mrb[0].mxu0
        %813 = vmatprep.mubr.bf16.mxu0 0
        %814 = vmatmul.mubr.bf16.gmra.mrb[0].mxu0 %v692
        %v815 = vpop.f32.mrb[0].mxu0
        %v816 = vadd.f32 0.0, %v815
        %v817 = vpop.f32.mrb[0].mxu0
        %v818 = vpop.f32.mrb[0].mxu0
        %v819 = vadd.f32 0.0, %v818
        %v820 = vpop.f32.mrb[0].mxu0
        %821 = vmatprep.mubr.bf16.mxu0 0
        %822 = vmatmul.mubr.bf16.gmra.mrb[0].mxu0 %v694
        %v823 = vpop.f32.mrb[0].mxu0
        %v824 = vadd.f32 0.0, %v823
        %v825 = vpop.f32.mrb[0].mxu0
        %v826 = vpop.f32.mrb[0].mxu0
        %v827 = vadd.f32 0.0, %v826
        %v828 = vpop.f32.mrb[0].mxu0
        %829 = vdwg.mxu0
        %v830 = vadd.f32 %v573, %v784
        %v831 = vadd.f32 %v576, %v787
        %v832 = vadd.f32 %v581, %v792
        %v833 = vadd.f32 %v584, %v795
        %v834 = vadd.f32 %v589, %v800
        %v835 = vadd.f32 %v592, %v803
        %v836 = vadd.f32 %v597, %v808
        %v837 = vadd.f32 %v600, %v811
        %v838 = vadd.f32 %v605, %v816
        %v839 = vadd.f32 %v608, %v819
        %v840 = vadd.f32 %v613, %v824
        %v841 = vadd.f32 %v616, %v827
        %v842 = vld [vmem:[%s185 + $0x34] sm:$0x3]
        %v843 = vld [vmem:[#allocation5 + $0xc0] sm:$0xf]
        %v844 = vld [vmem:[#allocation5 + $0xc4] sm:$0xf]
        %v845 = vld [vmem:[#allocation5 + $0xc8] sm:$0xf]
        %v846 = vld [vmem:[#allocation5 + $0xcc] sm:$0xf]
        %v847 = vld [vmem:[#allocation5 + $0xd0] sm:$0xf]
        %v848 = vld [vmem:[#allocation5 + $0xd4] sm:$0xf]
        %v849 = vld [vmem:[#allocation5 + $0xd8] sm:$0xf]
        %v850 = vld [vmem:[#allocation5 + $0xdc] sm:$0xf]
        %v851 = vld [vmem:[#allocation5 + $0xe0] sm:$0xf]
        %v852 = vld [vmem:[#allocation5 + $0xe4] sm:$0xf]
        %v853 = vld [vmem:[#allocation5 + $0xe8] sm:$0xf]
        %v854 = vld [vmem:[#allocation5 + $0xec] sm:$0xf]
        %v855 = vld [vmem:[#allocation5 + $0xf0] sm:$0xf]
        %v856 = vld [vmem:[#allocation5 + $0xf4] sm:$0xf]
        %v857 = vld [vmem:[#allocation5 + $0xf8] sm:$0xf]
        %v858 = vld [vmem:[#allocation5 + $0xfc] sm:$0xf]
        %v860 = vunpack.c.l.b16 %v842
        %v861 = vpack.c.b16 %v860, %v860
        %vm862 = vsmask.f32 6400
        %v864 = vshrl.u32 %v674, 16
        %v866 = vrot.slane %v864, 1
        %v867 = vshll.u32 %v674, 16
        %v869 = vrot.slane %v867, 2
        %v870 = vor.u32 %v866, %v869
        %v872 = vshrl.u32 %v675, 16
        %v874 = vrot.slane %v872, 1
        %v875 = vshll.u32 %v675, 16
        %v877 = vrot.slane %v875, 2
        %v878 = vor.u32 %v874, %v877
        %v879 = vsel %vm862, %v870, %v878
        %v881 = vshrl.u32 %v676, 16
        %v883 = vrot.slane %v881, 1
        %v884 = vshll.u32 %v676, 16
        %v886 = vrot.slane %v884, 2
        %v887 = vor.u32 %v883, %v886
        %v888 = vsel %vm862, %v878, %v887
        %v890 = vshrl.u32 %v677, 16
        %v892 = vrot.slane %v890, 1
        %v893 = vshll.u32 %v677, 16
        %v895 = vrot.slane %v893, 2
        %v896 = vor.u32 %v892, %v895
        %v897 = vsel %vm862, %v887, %v896
        %v899 = vshrl.u32 %v678, 16
        %v901 = vrot.slane %v899, 1
        %v902 = vshll.u32 %v678, 16
        %v904 = vrot.slane %v902, 2
        %v905 = vor.u32 %v901, %v904
        %v906 = vsel %vm862, %v896, %v905
        %v908 = vshrl.u32 %v679, 16
        %v910 = vrot.slane %v908, 1
        %v911 = vshll.u32 %v679, 16
        %v913 = vrot.slane %v911, 2
        %v914 = vor.u32 %v910, %v913
        %v915 = vsel %vm862, %v905, %v914
        %v917 = vshrl.u32 %v861, 16
        %v919 = vrot.slane %v917, 1
        %v920 = vshll.u32 %v861, 16
        %v922 = vrot.slane %v920, 2
        %v923 = vor.u32 %v919, %v922
        %v924 = vsel %vm862, %v914, %v923
        %v947 = vunpack.c.l.b16 %v843
        %v948 = vunpack.c.l.b16 %v844
        %v949 = vunpack.c.l.b16 %v845
        %v950 = vunpack.c.l.b16 %v846
        %v951 = vunpack.c.l.b16 %v847
        %v952 = vunpack.c.l.b16 %v848
        %v953 = vunpack.c.l.b16 %v849
        %v954 = vunpack.c.l.b16 %v850
        %v955 = vunpack.c.l.b16 %v851
        %v956 = vunpack.c.l.b16 %v852
        %v957 = vunpack.c.l.b16 %v853
        %v958 = vunpack.c.l.b16 %v854
        %v959 = vunpack.c.l.b16 %v855
        %v960 = vunpack.c.l.b16 %v856
        %v961 = vunpack.c.l.b16 %v857
        %v962 = vunpack.c.l.b16 %v858
        %v963 = vpack.c.b16 %v948, %v947
        %v964 = vpack.c.b16 %v950, %v949
        %v965 = vpack.c.b16 %v952, %v951
        %v966 = vpack.c.b16 %v954, %v953
        %v967 = vpack.c.b16 %v956, %v955
        %v968 = vpack.c.b16 %v958, %v957
        %v969 = vpack.c.b16 %v960, %v959
        %v970 = vpack.c.b16 %v962, %v961
        %979 = vmatprep.subr.bf16.mxu0 0
        %980 = vmatpush1.bf16.msra.mxu0 %v963
        %981 = vmatprep.subr.bf16.mxu0 0
        %982 = vmatpush1.bf16.msra.mxu0 %v964
        %983 = vmatprep.subr.bf16.mxu0 0
        %984 = vmatpush1.bf16.msra.mxu0 %v965
        %985 = vmatprep.subr.bf16.mxu0 0
        %986 = vmatpush1.bf16.msra.mxu0 %v966
        %987 = vmatprep.subr.bf16.mxu0 0
        %988 = vmatpush1.bf16.msra.mxu0 %v967
        %989 = vmatprep.subr.bf16.mxu0 0
        %990 = vmatpush1.bf16.msra.mxu0 %v968
        %991 = vmatprep.subr.bf16.mxu0 0
        %992 = vmatpush1.bf16.msra.mxu0 %v969
        %993 = vmatprep.subr.bf16.mxu0 0
        %994 = vmatpush1.bf16.msra.mxu0 %v970
        %995 = vmatprep.subr.bf16.mxu0 0
        %996 = vmatpush1.bf16.msra.mxu0 0
        %997 = vmatprep.subr.bf16.mxu0 0
        %998 = vmatpush1.bf16.msra.mxu0 0
        %999 = vmatprep.subr.bf16.mxu0 0
        %1000 = vmatpush1.bf16.msra.mxu0 0
        %1001 = vmatprep.subr.bf16.mxu0 0
        %1002 = vmatpush1.bf16.msra.mxu0 0
        %1003 = vmatprep.subr.bf16.mxu0 0
        %1004 = vmatpush1.bf16.msra.mxu0 0
        %1005 = vmatprep.subr.bf16.mxu0 0
        %1006 = vmatpush1.bf16.msra.mxu0 0
        %1007 = vmatprep.subr.bf16.mxu0 0
        %1008 = vmatpush1.bf16.msra.mxu0 0
        %1009 = vmatprep.subr.bf16.mxu0 0
        %1010 = vmatpush1.bf16.msra.mxu0 0
        %1011 = vmatprep.mubr.bf16.mxu0 0
        %1012 = vmatmul.mubr.bf16.gmra.mrb[0].mxu0 %v879
        %v1013 = vpop.f32.mrb[0].mxu0
        %v1014 = vadd.f32 0.0, %v1013
        %v1015 = vpop.f32.mrb[0].mxu0
        %v1016 = vpop.f32.mrb[0].mxu0
        %v1017 = vadd.f32 0.0, %v1016
        %v1018 = vpop.f32.mrb[0].mxu0
        %1019 = vmatprep.mubr.bf16.mxu0 0
        %1020 = vmatmul.mubr.bf16.gmra.mrb[0].mxu0 %v888
        %v1021 = vpop.f32.mrb[0].mxu0
        %v1022 = vadd.f32 0.0, %v1021
        %v1023 = vpop.f32.mrb[0].mxu0
        %v1024 = vpop.f32.mrb[0].mxu0
        %v1025 = vadd.f32 0.0, %v1024
        %v1026 = vpop.f32.mrb[0].mxu0
        %1027 = vmatprep.mubr.bf16.mxu0 0
        %1028 = vmatmul.mubr.bf16.gmra.mrb[0].mxu0 %v897
        %v1029 = vpop.f32.mrb[0].mxu0
        %v1030 = vadd.f32 0.0, %v1029
        %v1031 = vpop.f32.mrb[0].mxu0
        %v1032 = vpop.f32.mrb[0].mxu0
        %v1033 = vadd.f32 0.0, %v1032
        %v1034 = vpop.f32.mrb[0].mxu0
        %1035 = vmatprep.mubr.bf16.mxu0 0
        %1036 = vmatmul.mubr.bf16.gmra.mrb[0].mxu0 %v906
        %v1037 = vpop.f32.mrb[0].mxu0
        %v1038 = vadd.f32 0.0, %v1037
        %v1039 = vpop.f32.mrb[0].mxu0
        %v1040 = vpop.f32.mrb[0].mxu0
        %v1041 = vadd.f32 0.0, %v1040
        %v1042 = vpop.f32.mrb[0].mxu0
        %1043 = vmatprep.mubr.bf16.mxu0 0
        %1044 = vmatmul.mubr.bf16.gmra.mrb[0].mxu0 %v915
        %v1045 = vpop.f32.mrb[0].mxu0
        %v1046 = vadd.f32 0.0, %v1045
        %v1047 = vpop.f32.mrb[0].mxu0
        %v1048 = vpop.f32.mrb[0].mxu0
        %v1049 = vadd.f32 0.0, %v1048
        %v1050 = vpop.f32.mrb[0].mxu0
        %1051 = vmatprep.mubr.bf16.mxu0 0
        %1052 = vmatmul.mubr.bf16.gmra.mrb[0].mxu0 %v924
        %v1053 = vpop.f32.mrb[0].mxu0
        %v1054 = vadd.f32 0.0, %v1053
        %v1055 = vpop.f32.mrb[0].mxu0
        %v1056 = vpop.f32.mrb[0].mxu0
        %v1057 = vadd.f32 0.0, %v1056
        %v1058 = vpop.f32.mrb[0].mxu0
        %1059 = vdwg.mxu0
        %v1060 = vadd.f32 %v830, %v1014
        %v1061 = vadd.f32 %v831, %v1017
        %v1062 = vadd.f32 %v832, %v1022
        %v1063 = vadd.f32 %v833, %v1025
        %v1064 = vadd.f32 %v834, %v1030
        %v1065 = vadd.f32 %v835, %v1033
        %v1066 = vadd.f32 %v836, %v1038
        %v1067 = vadd.f32 %v837, %v1041
        %v1068 = vadd.f32 %v838, %v1046
        %v1069 = vadd.f32 %v839, %v1049
        %v1070 = vadd.f32 %v840, %v1054
        %v1071 = vadd.f32 %v841, %v1057
        %v1072 = vld [vmem:[#allocation7] sm:$0x1]
        %v1074 = vlaneseq
        %v1075 = vshrl.u32 %v1074, 7
        %v1076 = vsub.s32 0, %v1075
        %v1077 = vrot.slane %v1072, %v1076
        %v1079 = vadd.f32 %v1060, %v1077
        %v1080 = vadd.f32 %v1061, %v1077
        %v1081 = vadd.f32 %v1062, %v1077
        %v1082 = vadd.f32 %v1063, %v1077
        %v1083 = vadd.f32 %v1064, %v1077
        %v1084 = vadd.f32 %v1065, %v1077
        %v1085 = vadd.f32 %v1066, %v1077
        %v1086 = vadd.f32 %v1067, %v1077
        %v1087 = vadd.f32 %v1068, %v1077
        %v1088 = vadd.f32 %v1069, %v1077
        %v1089 = vadd.f32 %v1070, %v1077
        %v1090 = vadd.f32 %v1071, %v1077
        %v1091 = vmax.f32 %v1079, 0.0
        %v1092 = vmax.f32 %v1080, 0.0
        %v1093 = vmax.f32 %v1081, 0.0
        %v1094 = vmax.f32 %v1082, 0.0
        %v1095 = vmax.f32 %v1083, 0.0
        %v1096 = vmax.f32 %v1084, 0.0
        %v1097 = vmax.f32 %v1085, 0.0
        %v1098 = vmax.f32 %v1086, 0.0
        %v1099 = vmax.f32 %v1087, 0.0
        %v1100 = vmax.f32 %v1088, 0.0
        %v1101 = vmax.f32 %v1089, 0.0
        %v1102 = vmax.f32 %v1090, 0.0
        %v1103 = vpack.c.bf16 %v1092, %v1091
        %v1104 = vpack.c.bf16 %v1094, %v1093
        %v1105 = vpack.c.bf16 %v1096, %v1095
        %v1106 = vpack.c.bf16 %v1098, %v1097
        %v1107 = vpack.c.bf16 %v1100, %v1099
        %v1108 = vpack.c.bf16 %v1102, %v1101
        %v1115 = vunpack.c.l.b16 %v1103
        %v1116 = vunpack.c.h.b16 %v1103
        %v1117 = vunpack.c.l.b16 %v1104
        %v1118 = vunpack.c.h.b16 %v1104
        %v1119 = vunpack.c.l.b16 %v1105
        %v1120 = vunpack.c.h.b16 %v1105
        %v1121 = vunpack.c.l.b16 %v1106
        %v1122 = vunpack.c.h.b16 %v1106
        %v1123 = vunpack.c.l.b16 %v1107
        %v1124 = vunpack.c.h.b16 %v1107
        %v1125 = vunpack.c.l.b16 %v1108
        %v1126 = vunpack.c.h.b16 %v1108
        %v1127 = vpack.c.b16 %v1115, %v1115
        %v1128 = vpack.c.b16 %v1116, %v1116
        %v1129 = vpack.c.b16 %v1117, %v1117
        %v1130 = vpack.c.b16 %v1118, %v1118
        %v1131 = vpack.c.b16 %v1119, %v1119
        %v1132 = vpack.c.b16 %v1120, %v1120
        %v1133 = vpack.c.b16 %v1121, %v1121
        %v1134 = vpack.c.b16 %v1122, %v1122
        %v1135 = vpack.c.b16 %v1123, %v1123
        %v1136 = vpack.c.b16 %v1124, %v1124
        %v1137 = vpack.c.b16 %v1125, %v1125
        %v1138 = vpack.c.b16 %v1126, %v1126
        %vm1151 = vcmask 519168
        %1152 = vst.msk [vmem:[%s215] sm:$0xf] %vm1151, %v1127
        %1153 = vst.msk [vmem:[%s215 + $0x4] sm:$0xf] %vm1151, %v1128
        %1154 = vst.msk [vmem:[%s215 + $0x8] sm:$0xf] %vm1151, %v1129
        %1155 = vst.msk [vmem:[%s215 + $0xc] sm:$0xf] %vm1151, %v1130
        %1156 = vst.msk [vmem:[%s215 + $0x10] sm:$0xf] %vm1151, %v1131
        %1157 = vst.msk [vmem:[%s215 + $0x14] sm:$0xf] %vm1151, %v1132
        %1158 = vst.msk [vmem:[%s215 + $0x18] sm:$0xf] %vm1151, %v1133
        %1159 = vst.msk [vmem:[%s215 + $0x1c] sm:$0xf] %vm1151, %v1134
        %1160 = vst.msk [vmem:[%s215 + $0x20] sm:$0xf] %vm1151, %v1135
        %1161 = vst.msk [vmem:[%s215 + $0x24] sm:$0xf] %vm1151, %v1136
        %1162 = vst.msk [vmem:[%s215 + $0x28] sm:$0xf] %vm1151, %v1137
        %1163 = vst.msk [vmem:[%s215 + $0x2c] sm:$0xf] %vm1151, %v1138
        %s1164 = sand.u32 %s97, 1
        %s1165 = scalar_lea.sflag [#allocation4], %s1164
        %s1166 = sand.u32 %s97, 1
        %s1167 = smul.addr %s1166, 48
        %s1168 = scalar_lea.vmem [#allocation8], %s1167
        // Predicated region
        $region45: #{actor_critic_forward.5} parent=31 // pred_check
          %p1169 = pneg %p107
        $region46: #{actor_critic_forward.5} parent=31 // pred_check_branch
          %1171 = sbr.rel (%p1169) target = $region48
        $region47: #{actor_critic_forward.5} parent=31 // pred_region
          %s1172 = smul.u32 12, %s21
          %s1174 = ssub.s32 768, 768
          %1175 = vsyncadd %s1165, %s1174
          %s1176 = smul.addr %s1172, 64
          %s1177 = scalar_lea.hbm %s3, %s1176
          %s1178 = sshll.u32 %s1168, 4
          %s1179 = int_to_ptr.vmem [resolvable:$true] %s1178
          %1184 = dma.vmem_to_hbm [thread:$0]  %s1179, 768, %s1177, %s1165, 64, 64, 4
        $region48: #{actor_critic_forward.5} parent=31 // pred_fallthru
          _
      $region32: #{actor_critic_forward.5} parent=5 // pred_fallthru
        _
      %p1185 = scmp.le.s32.totalorder 2, %s16
      // Predicated region
      $region49: #{actor_critic_forward.5} parent=5 // pred_check
        %p1186 = pneg %p1185
      $region50: #{actor_critic_forward.5} parent=5 // pred_check_branch
        %1188 = sbr.rel (%p1186) target = $region52
      $region51: #{actor_critic_forward.5} parent=5 // pred_region
        %s1189 = ssub.s32 %s16, 2
        // Predicated region
        $region53: #{actor_critic_forward.5} parent=51 // pred_check
          %p1190 = pneg %p113
        $region54: #{actor_critic_forward.5} parent=51 // pred_check_branch
          %1192 = sbr.rel (%p1190) target = $region56
        $region55: #{actor_critic_forward.5} parent=51 // pred_region
          %s1193 = sand.u32 %s98, 1
          %s1194 = scalar_lea.sflag [#allocation4], %s1193
          %s1195 = sand.u32 %s98, 1
          %s1196 = smul.addr %s1195, 48
          %s1197 = scalar_lea.vmem [#allocation8], %s1196
          %1198 = dma.done %s1194, 768
        $region56: #{actor_critic_forward.5} parent=51 // pred_fallthru
          _
      $region52: #{actor_critic_forward.5} parent=5 // pred_fallthru
        _
    $region6: #{actor_critic_forward.5} parent=1 // loop_footer
      %s20 = sadd.s32 1, %s16
    $region7: #{actor_critic_forward.5} parent=1 // loop_footer_branch
      %15 = sbr.rel target = $region3
    $region8: #{actor_critic_forward.5} parent=1 // loop_exit
      _
    %1199 = vsyncpa [#allocation3], 1
    %s1200 = scalar_lea.sflag [#allocation3], 1
    %1201 = vsyncpa %s1200, 1
    %1202 = vsyncpa [#allocation6], 1
    %1203 = vsyncpa [#allocation4], 1
    %s1204 = scalar_lea.sflag [#allocation4], 1
    %1205 = vsyncpa %s1204, 1

// kernel: actor_critic_forward.6
$region0: #{actor_critic_forward.6}
  #allocation0 [shape = 'u32[]', space=smem, size = 0x4, offset = 0x4, fixed_abs, tag = 'smem constant byte address 0x4 - core index']
  #allocation1 [shape = 'u32[144,128]{1,0:T(1,128)}', space=vmem, size = 0x12000, scoped, tag = 'internal scratch']
  %s0 = inlined_call_operand.hbm [shape: bf16[2,88,64], index: 0, kind: input, shape index: {}]
  %s1 = inlined_call_operand.hbm [shape: bf16[576,64], index: 1, kind: input, shape index: {}]
  %s2 = inlined_call_operand.hbm [shape: f32[1,64], index: 2, kind: input, shape index: {}]
  %s3 = inlined_call_operand.hbm [shape: bf16[128,64], index: 3, kind: output, shape index: {}]
  %s4 = sld [smem:[#allocation0]]
  $region57: #{actor_critic_forward.6} parent=0
    _
  %s6 = ssub.s32 1, %s4
  %s7 = scalar_select 0, %s6, %s4
  $region1: #{actor_critic_forward.6} parent=0
    #allocation2 [shape = 'u8[45056]{0}', space=vmem, size = 0xb000, scoped, tag = 'input window, operand 0']
    #allocation3 [shape = 's32[2]{0}', space=sflag, size = 0x8, scoped, tag = 'scoped memory for actor_critic_forward.6']
    #allocation4 [shape = 's32[2]{0}', space=sflag, size = 0x8, scoped, tag = 'scoped memory for actor_critic_forward.6']
    #allocation5 [shape = 'u8[147456]{0}', space=vmem, size = 0x24000, scoped, tag = 'input window, operand 1, single buffered']
    #allocation6 [shape = 's32[1]{0}', space=sflag, size = 0x4, scoped, tag = 'scoped memory for actor_critic_forward.6']
    #allocation7 [shape = 'u8[512]{0}', space=vmem, size = 0x400, scoped, tag = 'input window, operand 2, single buffered']
    #allocation8 [shape = 'u8[32768]{0}', space=vmem, size = 0x8000, scoped, tag = 'output window, operand 0']
    %8 = vsyncpa [#allocation3], 0
    %s9 = scalar_lea.sflag [#allocation3], 1
    %10 = vsyncpa %s9, 0
    %11 = vsyncpa [#allocation6], 0
    %12 = vsyncpa [#allocation4], 0
    %s13 = scalar_lea.sflag [#allocation4], 1
    %14 = vsyncpa %s13, 0
    loop: start=0, step=1, limit=4
    $region2: #{actor_critic_forward.6} parent=1 // loop_pre_header
      _
    $region3: #{actor_critic_forward.6} parent=1 // loop_header
      %s16 = sphi 0, %s20
      %p17 = scmp.ge.s32.totalorder %s16, 4
      %s26 = sphi 0, %s28
      %s29 = sphi 0, %s26
      %s30 = sphi 0, %s29
      %s46 = sphi 0, %s30
      %s50 = sphi 0, %s50
      %s52 = sphi 0, %s50
      %s53 = sphi 0, %s52
      %s67 = sphi 0, %s53
      %s71 = sphi 0, %s71
      %s73 = sphi 0, %s71
      %s74 = sphi 0, %s73
      %s88 = sphi 0, %s74
      %s94 = sphi 0, %s96
      %s97 = sphi 0, %s94
      %s98 = sphi 0, %s97
      %s114 = sphi 0, %s98
    $region4: #{actor_critic_forward.6} parent=1 // loop_header_branch
      %19 = sbr.rel (%p17) target = $region8
    $region5: #{actor_critic_forward.6} parent=1 // loop_body
      %s21 = ssub.s32 %s16, 1
      %s22 = ssub.s32 %s16, 2
      %s23 = sadd.s32 %s16, 1
      %s24 = ssub.s32 %s16, %s23
      %p25 = scmp.eq.s32.totalorder %s24, 0
      %s27 = sadd.s32 %s26, 1
      %s28 = scalar_select %p25, %s26, %s27
      %p31 = pneg %p25
      %p32 = scmp.eq.s32.totalorder %s16, 1
      %p33 = por %p31, %p32
      %p34 = scmp.ne.s32.totalorder %s26, %s29
      %p35 = scmp.eq.s32.totalorder %s16, 0
      %p36 = por %p34, %p35
      %p37 = scmp.ne.s32.totalorder %s26, %s29
      %p38 = scmp.eq.s32.totalorder %s21, 1
      %p39 = por %p37, %p38
      %p40 = scmp.ne.s32.totalorder %s29, %s30
      %p41 = scmp.eq.s32.totalorder %s21, 0
      %p42 = por %p40, %p41
      %p43 = scmp.ne.s32.totalorder %s29, %s30
      %p44 = scmp.eq.s32.totalorder %s22, 1
      %p45 = por %p43, %p44
      %p47 = scmp.ne.s32.totalorder %s30, %s46
      %p48 = scmp.eq.s32.totalorder %s22, 0
      %p49 = por %p47, %p48
      %s51 = sadd.s32 %s50, 1
      %p54 = scmp.eq.s32.totalorder %s16, 1
      %p55 = scmp.ne.s32.totalorder %s50, %s52
      %p56 = scmp.eq.s32.totalorder %s16, 0
      %p57 = por %p55, %p56
      %p58 = scmp.ne.s32.totalorder %s50, %s52
      %p59 = scmp.eq.s32.totalorder %s21, 1
      %p60 = por %p58, %p59
      %p61 = scmp.ne.s32.totalorder %s52, %s53
      %p62 = scmp.eq.s32.totalorder %s21, 0
      %p63 = por %p61, %p62
      %p64 = scmp.ne.s32.totalorder %s52, %s53
      %p65 = scmp.eq.s32.totalorder %s22, 1
      %p66 = por %p64, %p65
      %p68 = scmp.ne.s32.totalorder %s53, %s67
      %p69 = scmp.eq.s32.totalorder %s22, 0
      %p70 = por %p68, %p69
      %s72 = sadd.s32 %s71, 1
      %p75 = scmp.eq.s32.totalorder %s16, 1
      %p76 = scmp.ne.s32.totalorder %s71, %s73
      %p77 = scmp.eq.s32.totalorder %s16, 0
      %p78 = por %p76, %p77
      %p79 = scmp.ne.s32.totalorder %s71, %s73
      %p80 = scmp.eq.s32.totalorder %s21, 1
      %p81 = por %p79, %p80
      %p82 = scmp.ne.s32.totalorder %s73, %s74
      %p83 = scmp.eq.s32.totalorder %s21, 0
      %p84 = por %p82, %p83
      %p85 = scmp.ne.s32.totalorder %s73, %s74
      %p86 = scmp.eq.s32.totalorder %s22, 1
      %p87 = por %p85, %p86
      %p89 = scmp.ne.s32.totalorder %s74, %s88
      %p90 = scmp.eq.s32.totalorder %s22, 0
      %p91 = por %p89, %p90
      %s92 = ssub.s32 %s16, %s23
      %p93 = scmp.eq.s32.totalorder %s92, 0
      %s95 = sadd.s32 %s94, 1
      %s96 = scalar_select %p93, %s94, %s95
      %p99 = pneg %p93
      %p100 = scmp.eq.s32.totalorder %s16, 1
      %p101 = por %p99, %p100
      %p102 = scmp.ne.s32.totalorder %s94, %s97
      %p103 = scmp.eq.s32.totalorder %s16, 0
      %p104 = por %p102, %p103
      %p105 = scmp.ne.s32.totalorder %s94, %s97
      %p106 = scmp.eq.s32.totalorder %s21, 1
      %p107 = por %p105, %p106
      %p108 = scmp.ne.s32.totalorder %s97, %s98
      %p109 = scmp.eq.s32.totalorder %s21, 0
      %p110 = por %p108, %p109
      %p111 = scmp.ne.s32.totalorder %s97, %s98
      %p112 = scmp.eq.s32.totalorder %s22, 1
      %p113 = por %p111, %p112
      %p115 = scmp.ne.s32.totalorder %s98, %s114
      %p116 = scmp.eq.s32.totalorder %s22, 0
      %p117 = por %p115, %p116
      %p118 = scmp.le.s32.totalorder 1, %s16
      %p119 = scmp.lt.s32.totalorder %s16, 3
      %p120 = pnand %p118, %p119
      %p121 = pneg %p120
      // Predicated region
      $region9: #{actor_critic_forward.6} parent=5 // pred_check
        _
      $region10: #{actor_critic_forward.6} parent=5 // pred_check_branch
        %123 = sbr.rel (%p120) target = $region12
      $region11: #{actor_critic_forward.6} parent=5 // pred_region
        %s124 = ssub.s32 %s16, 1
        // Predicated region
        $region13: #{actor_critic_forward.6} parent=11 // pred_check
          %p125 = pneg %p63
        $region14: #{actor_critic_forward.6} parent=11 // pred_check_branch
          %127 = sbr.rel (%p125) target = $region16
        $region15: #{actor_critic_forward.6} parent=11 // pred_region
          %s129 = ssub.s32 4608, 4608
          %130 = vsyncadd [#allocation6], %s129
          %s131 = sshll.u32 [#allocation5], 4
          %s132 = int_to_ptr.vmem [resolvable:$true] %s131
          %137 = dma.hbm_to_vmem [thread:$0]  %s1, 4608, %s132, [#allocation6], 64, 64, 4
        $region16: #{actor_critic_forward.6} parent=11 // pred_fallthru
          _
        // Predicated region
        $region17: #{actor_critic_forward.6} parent=11 // pred_check
          %p138 = pneg %p84
        $region18: #{actor_critic_forward.6} parent=11 // pred_check_branch
          %140 = sbr.rel (%p138) target = $region20
        $region19: #{actor_critic_forward.6} parent=11 // pred_region
          %s142 = ssub.s32 16, 16
          %143 = vsyncadd [#allocation6], %s142
          %s145 = sshll.u32 [#allocation7], 4
          %s146 = int_to_ptr.vmem [resolvable:$true] %s145
          %148 = dma.hbm_to_vmem [thread:$0]  %s2, 16, %s146, [#allocation6]
        $region20: #{actor_critic_forward.6} parent=11 // pred_fallthru
          _
      $region12: #{actor_critic_forward.6} parent=5 // pred_fallthru
        _
      %p149 = scmp.lt.s32.totalorder %s16, 2
      // Predicated region
      $region21: #{actor_critic_forward.6} parent=5 // pred_check
        %p150 = pneg %p149
      $region22: #{actor_critic_forward.6} parent=5 // pred_check_branch
        %152 = sbr.rel (%p150) target = $region24
      $region23: #{actor_critic_forward.6} parent=5 // pred_region
        // Predicated region
        $region25: #{actor_critic_forward.6} parent=23 // pred_check
          %p153 = pneg %p36
        $region26: #{actor_critic_forward.6} parent=23 // pred_check_branch
          %155 = sbr.rel (%p153) target = $region28
        $region27: #{actor_critic_forward.6} parent=23 // pred_region
          %s156 = sand.u32 %s26, 1
          %s157 = scalar_lea.sflag [#allocation3], %s156
          %s158 = sand.u32 %s26, 1
          %s159 = smul.addr %s158, 44
          %s160 = scalar_lea.vmem [#allocation2], %s159
          %s162 = ssub.s32 704, 704
          %163 = vsyncadd %s157, %s162
          %s164 = smul.addr %s16, 11
          %s165 = smul.addr %s164, 64
          %s166 = scalar_lea.hbm %s0, %s165
          %s167 = sshll.u32 %s160, 4
          %s168 = int_to_ptr.vmem [resolvable:$true] %s167
          %173 = dma.hbm_to_vmem [thread:$0]  %s166, 704, %s168, %s157, 64, 64, 4
        $region28: #{actor_critic_forward.6} parent=23 // pred_fallthru
          _
      $region24: #{actor_critic_forward.6} parent=5 // pred_fallthru
        _
      %p174 = scmp.le.s32.totalorder 1, %s16
      %p175 = scmp.lt.s32.totalorder %s16, 3
      %p176 = pnand %p174, %p175
      %p177 = pneg %p176
      // Predicated region
      $region29: #{actor_critic_forward.6} parent=5 // pred_check
        _
      $region30: #{actor_critic_forward.6} parent=5 // pred_check_branch
        %179 = sbr.rel (%p176) target = $region32
      $region31: #{actor_critic_forward.6} parent=5 // pred_region
        %s180 = ssub.s32 %s16, 1
        %s181 = sand.u32 %s29, 1
        %s182 = scalar_lea.sflag [#allocation3], %s181
        %s183 = sand.u32 %s29, 1
        %s184 = smul.addr %s183, 44
        %s185 = scalar_lea.vmem [#allocation2], %s184
        // Predicated region
        $region33: #{actor_critic_forward.6} parent=31 // pred_check
          %p186 = pneg %p42
        $region34: #{actor_critic_forward.6} parent=31 // pred_check_branch
          %188 = sbr.rel (%p186) target = $region36
        $region35: #{actor_critic_forward.6} parent=31 // pred_region
          %189 = dma.done %s182, 704
        $region36: #{actor_critic_forward.6} parent=31 // pred_fallthru
          _
        // Predicated region
        $region37: #{actor_critic_forward.6} parent=31 // pred_check
          %p190 = pneg %p63
        $region38: #{actor_critic_forward.6} parent=31 // pred_check_branch
          %192 = sbr.rel (%p190) target = $region40
        $region39: #{actor_critic_forward.6} parent=31 // pred_region
          %193 = dma.done [#allocation6], 4608
        $region40: #{actor_critic_forward.6} parent=31 // pred_fallthru
          _
        // Predicated region
        $region41: #{actor_critic_forward.6} parent=31 // pred_check
          %p194 = pneg %p84
        $region42: #{actor_critic_forward.6} parent=31 // pred_check_branch
          %196 = sbr.rel (%p194) target = $region44
        $region43: #{actor_critic_forward.6} parent=31 // pred_region
          %197 = dma.done [#allocation6], 16
        $region44: #{actor_critic_forward.6} parent=31 // pred_fallthru
          _
        %s198 = sand.u32 %s29, 1
        %s199 = scalar_lea.sflag [#allocation3], %s198
        %s200 = sand.u32 %s29, 1
        %s201 = smul.addr %s200, 44
        %s202 = scalar_lea.vmem [#allocation2], %s201
        %p203 = pneg %p42
        %p204 = pneg %p39
        %p205 = pneg %p63
        %p206 = pneg %p60
        %p207 = pneg %p84
        %p208 = pneg %p81
        %p209 = pneg %p110
        %p210 = pneg %p107
        %s211 = sand.u32 %s97, 1
        %s212 = scalar_lea.sflag [#allocation4], %s211
        %s213 = sand.u32 %s97, 1
        %s214 = smul.addr %s213, 32
        %s215 = scalar_lea.vmem [#allocation8], %s214
        %s216 = smul.u32 8, %s21
        %v218 = vld [vmem:[%s185] sm:$0xf]
        %v219 = vld [vmem:[%s185 + $0x4] sm:$0xf]
        %v220 = vld [vmem:[%s185 + $0x8] sm:$0xf]
        %v221 = vld [vmem:[%s185 + $0xc] sm:$0xf]
        %v222 = vld [vmem:[%s185 + $0x10] sm:$0xf]
        %v223 = vld [vmem:[%s185 + $0x14] sm:$0xf]
        %v224 = vld [vmem:[%s185 + $0x18] sm:$0xf]
        %v225 = vld [vmem:[%s185 + $0x1c] sm:$0xf]
        %v226 = vld [vmem:[#allocation5] sm:$0xf]
        %v227 = vld [vmem:[#allocation5 + $0x4] sm:$0xf]
        %v228 = vld [vmem:[#allocation5 + $0x8] sm:$0xf]
        %v229 = vld [vmem:[#allocation5 + $0xc] sm:$0xf]
        %v230 = vld [vmem:[#allocation5 + $0x10] sm:$0xf]
        %v231 = vld [vmem:[#allocation5 + $0x14] sm:$0xf]
        %v232 = vld [vmem:[#allocation5 + $0x18] sm:$0xf]
        %v233 = vld [vmem:[#allocation5 + $0x1c] sm:$0xf]
        %v234 = vld [vmem:[%s185 + $0x20] sm:$0x1]
        %v235 = vld [vmem:[#allocation5 + $0x20] sm:$0xf]
        %v236 = vld [vmem:[#allocation5 + $0x24] sm:$0xf]
        %v237 = vld [vmem:[#allocation5 + $0x28] sm:$0xf]
        %v238 = vld [vmem:[#allocation5 + $0x2c] sm:$0xf]
        %v239 = vld [vmem:[#allocation5 + $0x30] sm:$0xf]
        %v240 = vld [vmem:[#allocation5 + $0x34] sm:$0xf]
        %v241 = vld [vmem:[#allocation5 + $0x38] sm:$0xf]
        %v242 = vld [vmem:[#allocation5 + $0x3c] sm:$0xf]
        %v252 = vunpack.c.l.b16 %v218
        %v253 = vunpack.c.l.b16 %v219
        %v254 = vunpack.c.l.b16 %v220
        %v255 = vunpack.c.l.b16 %v221
        %v256 = vunpack.c.l.b16 %v222
        %v257 = vunpack.c.l.b16 %v223
        %v258 = vunpack.c.l.b16 %v224
        %v259 = vunpack.c.l.b16 %v225
        %v260 = vunpack.c.l.b16 %v234
        %v261 = vpack.c.b16 %v253, %v252
        %v262 = vpack.c.b16 %v255, %v254
        %v263 = vpack.c.b16 %v257, %v256
        %v264 = vpack.c.b16 %v259, %v258
        %v265 = vpack.c.b16 %v260, %v260
        %vm266 = vsmask.f32 7424
        %v268 = vshrl.u32 %v261, 16
        %v270 = vshll.u32 %v261, 16
        %v272 = vrot.slane %v270, 1
        %v273 = vor.u32 %v268, %v272
        %v275 = vshll.u32 %v262, 16
        %v277 = vrot.slane %v275, 1
        %v278 = vsel %vm266, %v273, %v277
        %v279 = vshrl.u32 %v262, 16
        %v281 = vor.u32 %v279, %v277
        %v283 = vshll.u32 %v263, 16
        %v285 = vrot.slane %v283, 1
        %v286 = vsel %vm266, %v281, %v285
        %v287 = vshrl.u32 %v263, 16
        %v289 = vor.u32 %v287, %v285
        %v291 = vshll.u32 %v264, 16
        %v293 = vrot.slane %v291, 1
        %v294 = vsel %vm266, %v289, %v293
        %v295 = vshrl.u32 %v264, 16
        %v297 = vor.u32 %v295, %v293
        %v299 = vshll.u32 %v265, 16
        %v301 = vrot.slane %v299, 1
        %v302 = vsel %vm266, %v297, %v301
        %v311 = vunpack.c.l.b16 %v235
        %v312 = vunpack.c.l.b16 %v236
        %v313 = vunpack.c.l.b16 %v237
        %v314 = vunpack.c.l.b16 %v238
        %v315 = vunpack.c.l.b16 %v239
        %v316 = vunpack.c.l.b16 %v240
        %v317 = vunpack.c.l.b16 %v241
        %v318 = vunpack.c.l.b16 %v242
        %v319 = vpack.c.b16 %v312, %v311
        %v320 = vpack.c.b16 %v314, %v313
        %v321 = vpack.c.b16 %v316, %v315
        %v322 = vpack.c.b16 %v318, %v317
        %vm327 = vcmask 523264
        %v329 = vsel %vm327, %v278, 0
        %v332 = vsel %vm327, %v286, 0
        %v335 = vsel %vm327, %v294, 0
        %v338 = vsel %vm327, %v302, 0
        %340 = vmatprep.subr.bf16.mxu0 0
        %341 = vmatpush1.bf16.msra.mxu0 %v319
        %342 = vmatprep.subr.bf16.mxu0 0
        %343 = vmatpush1.bf16.msra.mxu0 %v320
        %344 = vmatprep.subr.bf16.mxu0 0
        %345 = vmatpush1.bf16.msra.mxu0 %v321
        %346 = vmatprep.subr.bf16.mxu0 0
        %347 = vmatpush1.bf16.msra.mxu0 %v322
        %348 = vmatprep.subr.bf16.mxu0 0
        %349 = vmatpush1.bf16.msra.mxu0 0
        %350 = vmatprep.subr.bf16.mxu0 0
        %351 = vmatpush1.bf16.msra.mxu0 0
        %352 = vmatprep.subr.bf16.mxu0 0
        %353 = vmatpush1.bf16.msra.mxu0 0
        %354 = vmatprep.subr.bf16.mxu0 0
        %355 = vmatpush1.bf16.msra.mxu0 0
        %356 = vmatprep.subr.bf16.mxu0 0
        %357 = vmatpush1.bf16.msra.mxu0 0
        %358 = vmatprep.subr.bf16.mxu0 0
        %359 = vmatpush1.bf16.msra.mxu0 0
        %360 = vmatprep.subr.bf16.mxu0 0
        %361 = vmatpush1.bf16.msra.mxu0 0
        %362 = vmatprep.subr.bf16.mxu0 0
        %363 = vmatpush1.bf16.msra.mxu0 0
        %364 = vmatprep.subr.bf16.mxu0 0
        %365 = vmatpush1.bf16.msra.mxu0 0
        %366 = vmatprep.subr.bf16.mxu0 0
        %367 = vmatpush1.bf16.msra.mxu0 0
        %368 = vmatprep.subr.bf16.mxu0 0
        %369 = vmatpush1.bf16.msra.mxu0 0
        %370 = vmatprep.subr.bf16.mxu0 0
        %371 = vmatpush1.bf16.msra.mxu0 0
        %372 = vmatprep.mubr.bf16.mxu0 0
        %373 = vmatmul.mubr.bf16.gmra.mrb[0].mxu0 %v329
        %v374 = vpop.f32.mrb[0].mxu0
        %v375 = vadd.f32 0.0, %v374
        %v376 = vpop.f32.mrb[0].mxu0
        %v377 = vpop.f32.mrb[0].mxu0
        %v378 = vadd.f32 0.0, %v377
        %v379 = vpop.f32.mrb[0].mxu0
        %380 = vmatprep.mubr.bf16.mxu0 0
        %381 = vmatmul.mubr.bf16.gmra.mrb[0].mxu0 %v332
        %v382 = vpop.f32.mrb[0].mxu0
        %v383 = vadd.f32 0.0, %v382
        %v384 = vpop.f32.mrb[0].mxu0
        %v385 = vpop.f32.mrb[0].mxu0
        %v386 = vadd.f32 0.0, %v385
        %v387 = vpop.f32.mrb[0].mxu0
        %388 = vmatprep.mubr.bf16.mxu0 0
        %389 = vmatmul.mubr.bf16.gmra.mrb[0].mxu0 %v335
        %v390 = vpop.f32.mrb[0].mxu0
        %v391 = vadd.f32 0.0, %v390
        %v392 = vpop.f32.mrb[0].mxu0
        %v393 = vpop.f32.mrb[0].mxu0
        %v394 = vadd.f32 0.0, %v393
        %v395 = vpop.f32.mrb[0].mxu0
        %396 = vmatprep.mubr.bf16.mxu0 0
        %397 = vmatmul.mubr.bf16.gmra.mrb[0].mxu0 %v338
        %v398 = vpop.f32.mrb[0].mxu0
        %v399 = vadd.f32 0.0, %v398
        %v400 = vpop.f32.mrb[0].mxu0
        %v401 = vpop.f32.mrb[0].mxu0
        %v402 = vadd.f32 0.0, %v401
        %v403 = vpop.f32.mrb[0].mxu0
        %404 = vdwg.mxu0
        %v413 = vunpack.c.l.b16 %v226
        %v414 = vunpack.c.l.b16 %v227
        %v415 = vunpack.c.l.b16 %v228
        %v416 = vunpack.c.l.b16 %v229
        %v417 = vunpack.c.l.b16 %v230
        %v418 = vunpack.c.l.b16 %v231
        %v419 = vunpack.c.l.b16 %v232
        %v420 = vunpack.c.l.b16 %v233
        %v421 = vpack.c.b16 %v414, %v413
        %v422 = vpack.c.b16 %v416, %v415
        %v423 = vpack.c.b16 %v418, %v417
        %v424 = vpack.c.b16 %v420, %v419
        %v429 = vsel %vm327, %v261, 0
        %v431 = vsel %vm327, %v262, 0
        %v433 = vsel %vm327, %v263, 0
        %v435 = vsel %vm327, %v264, 0
        %437 = vmatprep.subr.bf16.mxu0 0
        %438 = vmatpush1.bf16.msra.mxu0 %v421
        %439 = vmatprep.subr.bf16.mxu0 0
        %440 = vmatpush1.bf16.msra.mxu0 %v422
        %441 = vmatprep.subr.bf16.mxu0 0
        %442 = vmatpush1.bf16.msra.mxu0 %v423
        %443 = vmatprep.subr.bf16.mxu0 0
        %444 = vmatpush1.bf16.msra.mxu0 %v424
        %445 = vmatprep.subr.bf16.mxu0 0
        %446 = vmatpush1.bf16.msra.mxu0 0
        %447 = vmatprep.subr.bf16.mxu0 0
        %448 = vmatpush1.bf16.msra.mxu0 0
        %449 = vmatprep.subr.bf16.mxu0 0
        %450 = vmatpush1.bf16.msra.mxu0 0
        %451 = vmatprep.subr.bf16.mxu0 0
        %452 = vmatpush1.bf16.msra.mxu0 0
        %453 = vmatprep.subr.bf16.mxu0 0
        %454 = vmatpush1.bf16.msra.mxu0 0
        %455 = vmatprep.subr.bf16.mxu0 0
        %456 = vmatpush1.bf16.msra.mxu0 0
        %457 = vmatprep.subr.bf16.mxu0 0
        %458 = vmatpush1.bf16.msra.mxu0 0
        %459 = vmatprep.subr.bf16.mxu0 0
        %460 = vmatpush1.bf16.msra.mxu0 0
        %461 = vmatprep.subr.bf16.mxu0 0
        %462 = vmatpush1.bf16.msra.mxu0 0
        %463 = vmatprep.subr.bf16.mxu0 0
        %464 = vmatpush1.bf16.msra.mxu0 0
        %465 = vmatprep.subr.bf16.mxu0 0
        %466 = vmatpush1.bf16.msra.mxu0 0
        %467 = vmatprep.subr.bf16.mxu0 0
        %468 = vmatpush1.bf16.msra.mxu0 0
        %469 = vmatprep.mubr.bf16.mxu0 0
        %470 = vmatmul.mubr.bf16.gmra.mrb[0].mxu0 %v429
        %v471 = vpop.f32.mrb[0].mxu0
        %v472 = vadd.f32 %v375, %v471
        %v473 = vpop.f32.mrb[0].mxu0
        %v474 = vpop.f32.mrb[0].mxu0
        %v475 = vadd.f32 %v378, %v474
        %v476 = vpop.f32.mrb[0].mxu0
        %477 = vmatprep.mubr.bf16.mxu0 0
        %478 = vmatmul.mubr.bf16.gmra.mrb[0].mxu0 %v431
        %v479 = vpop.f32.mrb[0].mxu0
        %v480 = vadd.f32 %v383, %v479
        %v481 = vpop.f32.mrb[0].mxu0
        %v482 = vpop.f32.mrb[0].mxu0
        %v483 = vadd.f32 %v386, %v482
        %v484 = vpop.f32.mrb[0].mxu0
        %485 = vmatprep.mubr.bf16.mxu0 0
        %486 = vmatmul.mubr.bf16.gmra.mrb[0].mxu0 %v433
        %v487 = vpop.f32.mrb[0].mxu0
        %v488 = vadd.f32 %v391, %v487
        %v489 = vpop.f32.mrb[0].mxu0
        %v490 = vpop.f32.mrb[0].mxu0
        %v491 = vadd.f32 %v394, %v490
        %v492 = vpop.f32.mrb[0].mxu0
        %493 = vmatprep.mubr.bf16.mxu0 0
        %494 = vmatmul.mubr.bf16.gmra.mrb[0].mxu0 %v435
        %v495 = vpop.f32.mrb[0].mxu0
        %v496 = vadd.f32 %v399, %v495
        %v497 = vpop.f32.mrb[0].mxu0
        %v498 = vpop.f32.mrb[0].mxu0
        %v499 = vadd.f32 %v402, %v498
        %v500 = vpop.f32.mrb[0].mxu0
        %501 = vdwg.mxu0
        %v502 = vld [vmem:[%s185] sm:$0xe]
        %v503 = vld [vmem:[#allocation5 + $0x40] sm:$0xf]
        %v504 = vld [vmem:[#allocation5 + $0x44] sm:$0xf]
        %v505 = vld [vmem:[#allocation5 + $0x48] sm:$0xf]
        %v506 = vld [vmem:[#allocation5 + $0x4c] sm:$0xf]
        %v507 = vld [vmem:[#allocation5 + $0x50] sm:$0xf]
        %v508 = vld [vmem:[#allocation5 + $0x54] sm:$0xf]
        %v509 = vld [vmem:[#allocation5 + $0x58] sm:$0xf]
        %v510 = vld [vmem:[#allocation5 + $0x5c] sm:$0xf]
        %v512 = vunpack.c.l.b16 %v502
        %v513 = vpack.c.b16 %v253, %v512
        %vm514 = vcmask 1046528
        %v515 = vrot.slane %v513, 1
        %v516 = vrot.slane %v262, 1
        %v517 = vsel %vm514, %v515, %v516
        %v518 = vrot.slane %v263, 1
        %v519 = vsel %vm514, %v516, %v518
        %v520 = vrot.slane %v264, 1
        %v521 = vsel %vm514, %v518, %v520
        %v522 = vrot.slane %v265, 1
        %v523 = vsel %vm514, %v520, %v522
        %v532 = vunpack.c.l.b16 %v503
        %v533 = vunpack.c.l.b16 %v504
        %v534 = vunpack.c.l.b16 %v505
        %v535 = vunpack.c.l.b16 %v506
        %v536 = vunpack.c.l.b16 %v507
        %v537 = vunpack.c.l.b16 %v508
        %v538 = vunpack.c.l.b16 %v509
        %v539 = vunpack.c.l.b16 %v510
        %v540 = vpack.c.b16 %v533, %v532
        %v541 = vpack.c.b16 %v535, %v534
        %v542 = vpack.c.b16 %v537, %v536
        %v543 = vpack.c.b16 %v539, %v538
        %v549 = vsel %vm327, %v517, 0
        %v552 = vsel %vm327, %v519, 0
        %v555 = vsel %vm327, %v521, 0
        %v558 = vsel %vm327, %v523, 0
        %560 = vmatprep.subr.bf16.mxu0 0
        %561 = vmatpush1.bf16.msra.mxu0 %v540
        %562 = vmatprep.subr.bf16.mxu0 0
        %563 = vmatpush1.bf16.msra.mxu0 %v541
        %564 = vmatprep.subr.bf16.mxu0 0
        %565 = vmatpush1.bf16.msra.mxu0 %v542
        %566 = vmatprep.subr.bf16.mxu0 0
        %567 = vmatpush1.bf16.msra.mxu0 %v543
        %568 = vmatprep.subr.bf16.mxu0 0
        %569 = vmatpush1.bf16.msra.mxu0 0
        %570 = vmatprep.subr.bf16.mxu0 0
        %571 = vmatpush1.bf16.msra.mxu0 0
        %572 = vmatprep.subr.bf16.mxu0 0
        %573 = vmatpush1.bf16.msra.mxu0 0
        %574 = vmatprep.subr.bf16.mxu0 0
        %575 = vmatpush1.bf16.msra.mxu0 0
        %576 = vmatprep.subr.bf16.mxu0 0
        %577 = vmatpush1.bf16.msra.mxu0 0
        %578 = vmatprep.subr.bf16.mxu0 0
        %579 = vmatpush1.bf16.msra.mxu0 0
        %580 = vmatprep.subr.bf16.mxu0 0
        %581 = vmatpush1.bf16.msra.mxu0 0
        %582 = vmatprep.subr.bf16.mxu0 0
        %583 = vmatpush1.bf16.msra.mxu0 0
        %584 = vmatprep.subr.bf16.mxu0 0
        %585 = vmatpush1.bf16.msra.mxu0 0
        %586 = vmatprep.subr.bf16.mxu0 0
        %587 = vmatpush1.bf16.msra.mxu0 0
        %588 = vmatprep.subr.bf16.mxu0 0
        %589 = vmatpush1.bf16.msra.mxu0 0
        %590 = vmatprep.subr.bf16.mxu0 0
        %591 = vmatpush1.bf16.msra.mxu0 0
        %592 = vmatprep.mubr.bf16.mxu0 0
        %593 = vmatmul.mubr.bf16.gmra.mrb[0].mxu0 %v549
        %v594 = vpop.f32.mrb[0].mxu0
        %v595 = vadd.f32 0.0, %v594
        %v596 = vpop.f32.mrb[0].mxu0
        %v597 = vpop.f32.mrb[0].mxu0
        %v598 = vadd.f32 0.0, %v597
        %v599 = vpop.f32.mrb[0].mxu0
        %600 = vmatprep.mubr.bf16.mxu0 0
        %601 = vmatmul.mubr.bf16.gmra.mrb[0].mxu0 %v552
        %v602 = vpop.f32.mrb[0].mxu0
        %v603 = vadd.f32 0.0, %v602
        %v604 = vpop.f32.mrb[0].mxu0
        %v605 = vpop.f32.mrb[0].mxu0
        %v606 = vadd.f32 0.0, %v605
        %v607 = vpop.f32.mrb[0].mxu0
        %608 = vmatprep.mubr.bf16.mxu0 0
        %609 = vmatmul.mubr.bf16.gmra.mrb[0].mxu0 %v555
        %v610 = vpop.f32.mrb[0].mxu0
        %v611 = vadd.f32 0.0, %v610
        %v612 = vpop.f32.mrb[0].mxu0
        %v613 = vpop.f32.mrb[0].mxu0
        %v614 = vadd.f32 0.0, %v613
        %v615 = vpop.f32.mrb[0].mxu0
        %616 = vmatprep.mubr.bf16.mxu0 0
        %617 = vmatmul.mubr.bf16.gmra.mrb[0].mxu0 %v558
        %v618 = vpop.f32.mrb[0].mxu0
        %v619 = vadd.f32 0.0, %v618
        %v620 = vpop.f32.mrb[0].mxu0
        %v621 = vpop.f32.mrb[0].mxu0
        %v622 = vadd.f32 0.0, %v621
        %v623 = vpop.f32.mrb[0].mxu0
        %624 = vdwg.mxu0
        %v625 = vadd.f32 %v472, %v595
        %v626 = vadd.f32 %v475, %v598
        %v627 = vadd.f32 %v480, %v603
        %v628 = vadd.f32 %v483, %v606
        %v629 = vadd.f32 %v488, %v611
        %v630 = vadd.f32 %v491, %v614
        %v631 = vadd.f32 %v496, %v619
        %v632 = vadd.f32 %v499, %v622
        %v633 = vld [vmem:[%s185 + $0x4] sm:$0xf]
        %v634 = vld [vmem:[%s185 + $0x8] sm:$0xf]
        %v635 = vld [vmem:[%s185 + $0xc] sm:$0xf]
        %v636 = vld [vmem:[%s185 + $0x10] sm:$0xf]
        %v637 = vld [vmem:[%s185 + $0x14] sm:$0xf]
        %v638 = vld [vmem:[%s185 + $0x18] sm:$0xf]
        %v639 = vld [vmem:[%s185 + $0x1c] sm:$0xf]
        %v640 = vld [vmem:[%s185 + $0x20] sm:$0xf]
        %v641 = vld [vmem:[%s185 + $0x24] sm:$0x1]
        %v642 = vld [vmem:[#allocation5 + $0x60] sm:$0xf]
        %v643 = vld [vmem:[#allocation5 + $0x64] sm:$0xf]
        %v644 = vld [vmem:[#allocation5 + $0x68] sm:$0xf]
        %v645 = vld [vmem:[#allocation5 + $0x6c] sm:$0xf]
        %v646 = vld [vmem:[#allocation5 + $0x70] sm:$0xf]
        %v647 = vld [vmem:[#allocation5 + $0x74] sm:$0xf]
        %v648 = vld [vmem:[#allocation5 + $0x78] sm:$0xf]
        %v649 = vld [vmem:[#allocation5 + $0x7c] sm:$0xf]
        %v659 = vunpack.c.l.b16 %v633
        %v660 = vunpack.c.l.b16 %v634
        %v661 = vunpack.c.l.b16 %v635
        %v662 = vunpack.c.l.b16 %v636
        %v663 = vunpack.c.l.b16 %v637
        %v664 = vunpack.c.l.b16 %v638
        %v665 = vunpack.c.l.b16 %v639
        %v666 = vunpack.c.l.b16 %v640
        %v667 = vunpack.c.l.b16 %v641
        %v668 = vpack.c.b16 %v660, %v659
        %v669 = vpack.c.b16 %v662, %v661
        %v670 = vpack.c.b16 %v664, %v663
        %v671 = vpack.c.b16 %v666, %v665
        %v672 = vpack.c.b16 %v667, %v667
        %v674 = vshrl.u32 %v668, 16
        %v676 = vshll.u32 %v668, 16
        %v678 = vrot.slane %v676, 1
        %v679 = vor.u32 %v674, %v678
        %v681 = vshll.u32 %v669, 16
        %v683 = vrot.slane %v681, 1
        %v684 = vsel %vm266, %v679, %v683
        %v685 = vshrl.u32 %v669, 16
        %v687 = vor.u32 %v685, %v683
        %v689 = vshll.u32 %v670, 16
        %v691 = vrot.slane %v689, 1
        %v692 = vsel %vm266, %v687, %v691
        %v693 = vshrl.u32 %v670, 16
        %v695 = vor.u32 %v693, %v691
        %v697 = vshll.u32 %v671, 16
        %v699 = vrot.slane %v697, 1
        %v700 = vsel %vm266, %v695, %v699
        %v701 = vshrl.u32 %v671, 16
        %v703 = vor.u32 %v701, %v699
        %v705 = vshll.u32 %v672, 16
        %v707 = vrot.slane %v705, 1
        %v708 = vsel %vm266, %v703, %v707
        %v717 = vunpack.c.l.b16 %v642
        %v718 = vunpack.c.l.b16 %v643
        %v719 = vunpack.c.l.b16 %v644
        %v720 = vunpack.c.l.b16 %v645
        %v721 = vunpack.c.l.b16 %v646
        %v722 = vunpack.c.l.b16 %v647
        %v723 = vunpack.c.l.b16 %v648
        %v724 = vunpack.c.l.b16 %v649
        %v725 = vpack.c.b16 %v718, %v717
        %v726 = vpack.c.b16 %v720, %v719
        %v727 = vpack.c.b16 %v722, %v721
        %v728 = vpack.c.b16 %v724, %v723
        %v734 = vsel %vm327, %v684, 0
        %v737 = vsel %vm327, %v692, 0
        %v740 = vsel %vm327, %v700, 0
        %v743 = vsel %vm327, %v708, 0
        %745 = vmatprep.subr.bf16.mxu0 0
        %746 = vmatpush1.bf16.msra.mxu0 %v725
        %747 = vmatprep.subr.bf16.mxu0 0
        %748 = vmatpush1.bf16.msra.mxu0 %v726
        %749 = vmatprep.subr.bf16.mxu0 0
        %750 = vmatpush1.bf16.msra.mxu0 %v727
        %751 = vmatprep.subr.bf16.mxu0 0
        %752 = vmatpush1.bf16.msra.mxu0 %v728
        %753 = vmatprep.subr.bf16.mxu0 0
        %754 = vmatpush1.bf16.msra.mxu0 0
        %755 = vmatprep.subr.bf16.mxu0 0
        %756 = vmatpush1.bf16.msra.mxu0 0
        %757 = vmatprep.subr.bf16.mxu0 0
        %758 = vmatpush1.bf16.msra.mxu0 0
        %759 = vmatprep.subr.bf16.mxu0 0
        %760 = vmatpush1.bf16.msra.mxu0 0
        %761 = vmatprep.subr.bf16.mxu0 0
        %762 = vmatpush1.bf16.msra.mxu0 0
        %763 = vmatprep.subr.bf16.mxu0 0
        %764 = vmatpush1.bf16.msra.mxu0 0
        %765 = vmatprep.subr.bf16.mxu0 0
        %766 = vmatpush1.bf16.msra.mxu0 0
        %767 = vmatprep.subr.bf16.mxu0 0
        %768 = vmatpush1.bf16.msra.mxu0 0
        %769 = vmatprep.subr.bf16.mxu0 0
        %770 = vmatpush1.bf16.msra.mxu0 0
        %771 = vmatprep.subr.bf16.mxu0 0
        %772 = vmatpush1.bf16.msra.mxu0 0
        %773 = vmatprep.subr.bf16.mxu0 0
        %774 = vmatpush1.bf16.msra.mxu0 0
        %775 = vmatprep.subr.bf16.mxu0 0
        %776 = vmatpush1.bf16.msra.mxu0 0
        %777 = vmatprep.mubr.bf16.mxu0 0
        %778 = vmatmul.mubr.bf16.gmra.mrb[0].mxu0 %v734
        %v779 = vpop.f32.mrb[0].mxu0
        %v780 = vadd.f32 0.0, %v779
        %v781 = vpop.f32.mrb[0].mxu0
        %v782 = vpop.f32.mrb[0].mxu0
        %v783 = vadd.f32 0.0, %v782
        %v784 = vpop.f32.mrb[0].mxu0
        %785 = vmatprep.mubr.bf16.mxu0 0
        %786 = vmatmul.mubr.bf16.gmra.mrb[0].mxu0 %v737
        %v787 = vpop.f32.mrb[0].mxu0
        %v788 = vadd.f32 0.0, %v787
        %v789 = vpop.f32.mrb[0].mxu0
        %v790 = vpop.f32.mrb[0].mxu0
        %v791 = vadd.f32 0.0, %v790
        %v792 = vpop.f32.mrb[0].mxu0
        %793 = vmatprep.mubr.bf16.mxu0 0
        %794 = vmatmul.mubr.bf16.gmra.mrb[0].mxu0 %v740
        %v795 = vpop.f32.mrb[0].mxu0
        %v796 = vadd.f32 0.0, %v795
        %v797 = vpop.f32.mrb[0].mxu0
        %v798 = vpop.f32.mrb[0].mxu0
        %v799 = vadd.f32 0.0, %v798
        %v800 = vpop.f32.mrb[0].mxu0
        %801 = vmatprep.mubr.bf16.mxu0 0
        %802 = vmatmul.mubr.bf16.gmra.mrb[0].mxu0 %v743
        %v803 = vpop.f32.mrb[0].mxu0
        %v804 = vadd.f32 0.0, %v803
        %v805 = vpop.f32.mrb[0].mxu0
        %v806 = vpop.f32.mrb[0].mxu0
        %v807 = vadd.f32 0.0, %v806
        %v808 = vpop.f32.mrb[0].mxu0
        %809 = vdwg.mxu0
        %v810 = vadd.f32 %v625, %v780
        %v811 = vadd.f32 %v626, %v783
        %v812 = vadd.f32 %v627, %v788
        %v813 = vadd.f32 %v628, %v791
        %v814 = vadd.f32 %v629, %v796
        %v815 = vadd.f32 %v630, %v799
        %v816 = vadd.f32 %v631, %v804
        %v817 = vadd.f32 %v632, %v807
        %v818 = vld [vmem:[%s185 + $0x4] sm:$0xe]
        %v819 = vld [vmem:[#allocation5 + $0x80] sm:$0xf]
        %v820 = vld [vmem:[#allocation5 + $0x84] sm:$0xf]
        %v821 = vld [vmem:[#allocation5 + $0x88] sm:$0xf]
        %v822 = vld [vmem:[#allocation5 + $0x8c] sm:$0xf]
        %v823 = vld [vmem:[#allocation5 + $0x90] sm:$0xf]
        %v824 = vld [vmem:[#allocation5 + $0x94] sm:$0xf]
        %v825 = vld [vmem:[#allocation5 + $0x98] sm:$0xf]
        %v826 = vld [vmem:[#allocation5 + $0x9c] sm:$0xf]
        %v828 = vunpack.c.l.b16 %v818
        %v829 = vpack.c.b16 %v660, %v828
        %v830 = vrot.slane %v829, 1
        %v831 = vrot.slane %v669, 1
        %v832 = vsel %vm514, %v830, %v831
        %v833 = vrot.slane %v670, 1
        %v834 = vsel %vm514, %v831, %v833
        %v835 = vrot.slane %v671, 1
        %v836 = vsel %vm514, %v833, %v835
        %v837 = vrot.slane %v672, 1
        %v838 = vsel %vm514, %v835, %v837
        %v847 = vunpack.c.l.b16 %v819
        %v848 = vunpack.c.l.b16 %v820
        %v849 = vunpack.c.l.b16 %v821
        %v850 = vunpack.c.l.b16 %v822
        %v851 = vunpack.c.l.b16 %v823
        %v852 = vunpack.c.l.b16 %v824
        %v853 = vunpack.c.l.b16 %v825
        %v854 = vunpack.c.l.b16 %v826
        %v855 = vpack.c.b16 %v848, %v847
        %v856 = vpack.c.b16 %v850, %v849
        %v857 = vpack.c.b16 %v852, %v851
        %v858 = vpack.c.b16 %v854, %v853
        %v864 = vsel %vm327, %v832, 0
        %v867 = vsel %vm327, %v834, 0
        %v870 = vsel %vm327, %v836, 0
        %v873 = vsel %vm327, %v838, 0
        %875 = vmatprep.subr.bf16.mxu0 0
        %876 = vmatpush1.bf16.msra.mxu0 %v855
        %877 = vmatprep.subr.bf16.mxu0 0
        %878 = vmatpush1.bf16.msra.mxu0 %v856
        %879 = vmatprep.subr.bf16.mxu0 0
        %880 = vmatpush1.bf16.msra.mxu0 %v857
        %881 = vmatprep.subr.bf16.mxu0 0
        %882 = vmatpush1.bf16.msra.mxu0 %v858
        %883 = vmatprep.subr.bf16.mxu0 0
        %884 = vmatpush1.bf16.msra.mxu0 0
        %885 = vmatprep.subr.bf16.mxu0 0
        %886 = vmatpush1.bf16.msra.mxu0 0
        %887 = vmatprep.subr.bf16.mxu0 0
        %888 = vmatpush1.bf16.msra.mxu0 0
        %889 = vmatprep.subr.bf16.mxu0 0
        %890 = vmatpush1.bf16.msra.mxu0 0
        %891 = vmatprep.subr.bf16.mxu0 0
        %892 = vmatpush1.bf16.msra.mxu0 0
        %893 = vmatprep.subr.bf16.mxu0 0
        %894 = vmatpush1.bf16.msra.mxu0 0
        %895 = vmatprep.subr.bf16.mxu0 0
        %896 = vmatpush1.bf16.msra.mxu0 0
        %897 = vmatprep.subr.bf16.mxu0 0
        %898 = vmatpush1.bf16.msra.mxu0 0
        %899 = vmatprep.subr.bf16.mxu0 0
        %900 = vmatpush1.bf16.msra.mxu0 0
        %901 = vmatprep.subr.bf16.mxu0 0
        %902 = vmatpush1.bf16.msra.mxu0 0
        %903 = vmatprep.subr.bf16.mxu0 0
        %904 = vmatpush1.bf16.msra.mxu0 0
        %905 = vmatprep.subr.bf16.mxu0 0
        %906 = vmatpush1.bf16.msra.mxu0 0
        %907 = vmatprep.mubr.bf16.mxu0 0
        %908 = vmatmul.mubr.bf16.gmra.mrb[0].mxu0 %v864
        %v909 = vpop.f32.mrb[0].mxu0
        %v910 = vadd.f32 0.0, %v909
        %v911 = vpop.f32.mrb[0].mxu0
        %v912 = vpop.f32.mrb[0].mxu0
        %v913 = vadd.f32 0.0, %v912
        %v914 = vpop.f32.mrb[0].mxu0
        %915 = vmatprep.mubr.bf16.mxu0 0
        %916 = vmatmul.mubr.bf16.gmra.mrb[0].mxu0 %v867
        %v917 = vpop.f32.mrb[0].mxu0
        %v918 = vadd.f32 0.0, %v917
        %v919 = vpop.f32.mrb[0].mxu0
        %v920 = vpop.f32.mrb[0].mxu0
        %v921 = vadd.f32 0.0, %v920
        %v922 = vpop.f32.mrb[0].mxu0
        %923 = vmatprep.mubr.bf16.mxu0 0
        %924 = vmatmul.mubr.bf16.gmra.mrb[0].mxu0 %v870
        %v925 = vpop.f32.mrb[0].mxu0
        %v926 = vadd.f32 0.0, %v925
        %v927 = vpop.f32.mrb[0].mxu0
        %v928 = vpop.f32.mrb[0].mxu0
        %v929 = vadd.f32 0.0, %v928
        %v930 = vpop.f32.mrb[0].mxu0
        %931 = vmatprep.mubr.bf16.mxu0 0
        %932 = vmatmul.mubr.bf16.gmra.mrb[0].mxu0 %v873
        %v933 = vpop.f32.mrb[0].mxu0
        %v934 = vadd.f32 0.0, %v933
        %v935 = vpop.f32.mrb[0].mxu0
        %v936 = vpop.f32.mrb[0].mxu0
        %v937 = vadd.f32 0.0, %v936
        %v938 = vpop.f32.mrb[0].mxu0
        %939 = vdwg.mxu0
        %v940 = vadd.f32 %v810, %v910
        %v941 = vadd.f32 %v811, %v913
        %v942 = vadd.f32 %v812, %v918
        %v943 = vadd.f32 %v813, %v921
        %v944 = vadd.f32 %v814, %v926
        %v945 = vadd.f32 %v815, %v929
        %v946 = vadd.f32 %v816, %v934
        %v947 = vadd.f32 %v817, %v937
        %v948 = vld [vmem:[%s185 + $0x24] sm:$0x3]
        %v949 = vld [vmem:[#allocation5 + $0xa0] sm:$0xf]
        %v950 = vld [vmem:[#allocation5 + $0xa4] sm:$0xf]
        %v951 = vld [vmem:[#allocation5 + $0xa8] sm:$0xf]
        %v952 = vld [vmem:[#allocation5 + $0xac] sm:$0xf]
        %v953 = vld [vmem:[#allocation5 + $0xb0] sm:$0xf]
        %v954 = vld [vmem:[#allocation5 + $0xb4] sm:$0xf]
        %v955 = vld [vmem:[#allocation5 + $0xb8] sm:$0xf]
        %v956 = vld [vmem:[#allocation5 + $0xbc] sm:$0xf]
        %v958 = vunpack.c.l.b16 %v948
        %v959 = vpack.c.b16 %v958, %v958
        %vm960 = vsmask.f32 6400
        %v962 = vshrl.u32 %v829, 16
        %v964 = vrot.slane %v962, 1
        %v965 = vshll.u32 %v829, 16
        %v967 = vrot.slane %v965, 2
        %v968 = vor.u32 %v964, %v967
        %v969 = vrot.slane %v685, 1
        %v970 = vrot.slane %v681, 2
        %v971 = vor.u32 %v969, %v970
        %v972 = vsel %vm960, %v968, %v971
        %v973 = vrot.slane %v693, 1
        %v974 = vrot.slane %v689, 2
        %v975 = vor.u32 %v973, %v974
        %v976 = vsel %vm960, %v971, %v975
        %v977 = vrot.slane %v701, 1
        %v978 = vrot.slane %v697, 2
        %v979 = vor.u32 %v977, %v978
        %v980 = vsel %vm960, %v975, %v979
        %v982 = vshrl.u32 %v959, 16
        %v984 = vrot.slane %v982, 1
        %v985 = vshll.u32 %v959, 16
        %v987 = vrot.slane %v985, 2
        %v988 = vor.u32 %v984, %v987
        %v989 = vsel %vm960, %v979, %v988
        %v998 = vunpack.c.l.b16 %v949
        %v999 = vunpack.c.l.b16 %v950
        %v1000 = vunpack.c.l.b16 %v951
        %v1001 = vunpack.c.l.b16 %v952
        %v1002 = vunpack.c.l.b16 %v953
        %v1003 = vunpack.c.l.b16 %v954
        %v1004 = vunpack.c.l.b16 %v955
        %v1005 = vunpack.c.l.b16 %v956
        %v1006 = vpack.c.b16 %v999, %v998
        %v1007 = vpack.c.b16 %v1001, %v1000
        %v1008 = vpack.c.b16 %v1003, %v1002
        %v1009 = vpack.c.b16 %v1005, %v1004
        %v1015 = vsel %vm327, %v972, 0
        %v1018 = vsel %vm327, %v976, 0
        %v1021 = vsel %vm327, %v980, 0
        %v1024 = vsel %vm327, %v989, 0
        %1026 = vmatprep.subr.bf16.mxu0 0
        %1027 = vmatpush1.bf16.msra.mxu0 %v1006
        %1028 = vmatprep.subr.bf16.mxu0 0
        %1029 = vmatpush1.bf16.msra.mxu0 %v1007
        %1030 = vmatprep.subr.bf16.mxu0 0
        %1031 = vmatpush1.bf16.msra.mxu0 %v1008
        %1032 = vmatprep.subr.bf16.mxu0 0
        %1033 = vmatpush1.bf16.msra.mxu0 %v1009
        %1034 = vmatprep.subr.bf16.mxu0 0
        %1035 = vmatpush1.bf16.msra.mxu0 0
        %1036 = vmatprep.subr.bf16.mxu0 0
        %1037 = vmatpush1.bf16.msra.mxu0 0
        %1038 = vmatprep.subr.bf16.mxu0 0
        %1039 = vmatpush1.bf16.msra.mxu0 0
        %1040 = vmatprep.subr.bf16.mxu0 0
        %1041 = vmatpush1.bf16.msra.mxu0 0
        %1042 = vmatprep.subr.bf16.mxu0 0
        %1043 = vmatpush1.bf16.msra.mxu0 0
        %1044 = vmatprep.subr.bf16.mxu0 0
        %1045 = vmatpush1.bf16.msra.mxu0 0
        %1046 = vmatprep.subr.bf16.mxu0 0
        %1047 = vmatpush1.bf16.msra.mxu0 0
        %1048 = vmatprep.subr.bf16.mxu0 0
        %1049 = vmatpush1.bf16.msra.mxu0 0
        %1050 = vmatprep.subr.bf16.mxu0 0
        %1051 = vmatpush1.bf16.msra.mxu0 0
        %1052 = vmatprep.subr.bf16.mxu0 0
        %1053 = vmatpush1.bf16.msra.mxu0 0
        %1054 = vmatprep.subr.bf16.mxu0 0
        %1055 = vmatpush1.bf16.msra.mxu0 0
        %1056 = vmatprep.subr.bf16.mxu0 0
        %1057 = vmatpush1.bf16.msra.mxu0 0
        %1058 = vmatprep.mubr.bf16.mxu0 0
        %1059 = vmatmul.mubr.bf16.gmra.mrb[0].mxu0 %v1015
        %v1060 = vpop.f32.mrb[0].mxu0
        %v1061 = vadd.f32 0.0, %v1060
        %v1062 = vpop.f32.mrb[0].mxu0
        %v1063 = vpop.f32.mrb[0].mxu0
        %v1064 = vadd.f32 0.0, %v1063
        %v1065 = vpop.f32.mrb[0].mxu0
        %1066 = vmatprep.mubr.bf16.mxu0 0
        %1067 = vmatmul.mubr.bf16.gmra.mrb[0].mxu0 %v1018
        %v1068 = vpop.f32.mrb[0].mxu0
        %v1069 = vadd.f32 0.0, %v1068
        %v1070 = vpop.f32.mrb[0].mxu0
        %v1071 = vpop.f32.mrb[0].mxu0
        %v1072 = vadd.f32 0.0, %v1071
        %v1073 = vpop.f32.mrb[0].mxu0
        %1074 = vmatprep.mubr.bf16.mxu0 0
        %1075 = vmatmul.mubr.bf16.gmra.mrb[0].mxu0 %v1021
        %v1076 = vpop.f32.mrb[0].mxu0
        %v1077 = vadd.f32 0.0, %v1076
        %v1078 = vpop.f32.mrb[0].mxu0
        %v1079 = vpop.f32.mrb[0].mxu0
        %v1080 = vadd.f32 0.0, %v1079
        %v1081 = vpop.f32.mrb[0].mxu0
        %1082 = vmatprep.mubr.bf16.mxu0 0
        %1083 = vmatmul.mubr.bf16.gmra.mrb[0].mxu0 %v1024
        %v1084 = vpop.f32.mrb[0].mxu0
        %v1085 = vadd.f32 0.0, %v1084
        %v1086 = vpop.f32.mrb[0].mxu0
        %v1087 = vpop.f32.mrb[0].mxu0
        %v1088 = vadd.f32 0.0, %v1087
        %v1089 = vpop.f32.mrb[0].mxu0
        %1090 = vdwg.mxu0
        %v1091 = vadd.f32 %v940, %v1061
        %v1092 = vadd.f32 %v941, %v1064
        %v1093 = vadd.f32 %v942, %v1069
        %v1094 = vadd.f32 %v943, %v1072
        %v1095 = vadd.f32 %v944, %v1077
        %v1096 = vadd.f32 %v945, %v1080
        %v1097 = vadd.f32 %v946, %v1085
        %v1098 = vadd.f32 %v947, %v1088
        %v1099 = vld [vmem:[%s185 + $0x8] sm:$0xe]
        %v1100 = vld [vmem:[%s185 + $0xc] sm:$0xf]
        %v1101 = vld [vmem:[%s185 + $0x10] sm:$0xf]
        %v1102 = vld [vmem:[%s185 + $0x14] sm:$0xf]
        %v1103 = vld [vmem:[%s185 + $0x18] sm:$0xf]
        %v1104 = vld [vmem:[%s185 + $0x1c] sm:$0xf]
        %v1105 = vld [vmem:[%s185 + $0x20] sm:$0xf]
        %v1106 = vld [vmem:[%s185 + $0x24] sm:$0xf]
        %v1107 = vld [vmem:[%s185 + $0x28] sm:$0x1]
        %v1108 = vld [vmem:[#allocation5 + $0xc0] sm:$0xf]
        %v1109 = vld [vmem:[#allocation5 + $0xc4] sm:$0xf]
        %v1110 = vld [vmem:[#allocation5 + $0xc8] sm:$0xf]
        %v1111 = vld [vmem:[#allocation5 + $0xcc] sm:$0xf]
        %v1112 = vld [vmem:[#allocation5 + $0xd0] sm:$0xf]
        %v1113 = vld [vmem:[#allocation5 + $0xd4] sm:$0xf]
        %v1114 = vld [vmem:[#allocation5 + $0xd8] sm:$0xf]
        %v1115 = vld [vmem:[#allocation5 + $0xdc] sm:$0xf]
        %v1125 = vunpack.c.l.b16 %v1099
        %v1126 = vunpack.c.l.b16 %v1100
        %v1127 = vunpack.c.l.b16 %v1101
        %v1128 = vunpack.c.l.b16 %v1102
        %v1129 = vunpack.c.l.b16 %v1103
        %v1130 = vunpack.c.l.b16 %v1104
        %v1131 = vunpack.c.l.b16 %v1105
        %v1132 = vunpack.c.l.b16 %v1106
        %v1133 = vunpack.c.l.b16 %v1107
        %v1134 = vpack.c.b16 %v1126, %v1125
        %v1135 = vpack.c.b16 %v1128, %v1127
        %v1136 = vpack.c.b16 %v1130, %v1129
        %v1137 = vpack.c.b16 %v1132, %v1131
        %v1138 = vpack.c.b16 %v1133, %v1133
        %v1139 = vrot.slane %v1134, 1
        %v1140 = vrot.slane %v1135, 1
        %v1141 = vsel %vm514, %v1139, %v1140
        %v1142 = vrot.slane %v1136, 1
        %v1143 = vsel %vm514, %v1140, %v1142
        %v1144 = vrot.slane %v1137, 1
        %v1145 = vsel %vm514, %v1142, %v1144
        %v1146 = vrot.slane %v1138, 1
        %v1147 = vsel %vm514, %v1144, %v1146
        %v1156 = vunpack.c.l.b16 %v1108
        %v1157 = vunpack.c.l.b16 %v1109
        %v1158 = vunpack.c.l.b16 %v1110
        %v1159 = vunpack.c.l.b16 %v1111
        %v1160 = vunpack.c.l.b16 %v1112
        %v1161 = vunpack.c.l.b16 %v1113
        %v1162 = vunpack.c.l.b16 %v1114
        %v1163 = vunpack.c.l.b16 %v1115
        %v1164 = vpack.c.b16 %v1157, %v1156
        %v1165 = vpack.c.b16 %v1159, %v1158
        %v1166 = vpack.c.b16 %v1161, %v1160
        %v1167 = vpack.c.b16 %v1163, %v1162
        %v1173 = vsel %vm327, %v1141, 0
        %v1176 = vsel %vm327, %v1143, 0
        %v1179 = vsel %vm327, %v1145, 0
        %v1182 = vsel %vm327, %v1147, 0
        %1184 = vmatprep.subr.bf16.mxu0 0
        %1185 = vmatpush1.bf16.msra.mxu0 %v1164
        %1186 = vmatprep.subr.bf16.mxu0 0
        %1187 = vmatpush1.bf16.msra.mxu0 %v1165
        %1188 = vmatprep.subr.bf16.mxu0 0
        %1189 = vmatpush1.bf16.msra.mxu0 %v1166
        %1190 = vmatprep.subr.bf16.mxu0 0
        %1191 = vmatpush1.bf16.msra.mxu0 %v1167
        %1192 = vmatprep.subr.bf16.mxu0 0
        %1193 = vmatpush1.bf16.msra.mxu0 0
        %1194 = vmatprep.subr.bf16.mxu0 0
        %1195 = vmatpush1.bf16.msra.mxu0 0
        %1196 = vmatprep.subr.bf16.mxu0 0
        %1197 = vmatpush1.bf16.msra.mxu0 0
        %1198 = vmatprep.subr.bf16.mxu0 0
        %1199 = vmatpush1.bf16.msra.mxu0 0
        %1200 = vmatprep.subr.bf16.mxu0 0
        %1201 = vmatpush1.bf16.msra.mxu0 0
        %1202 = vmatprep.subr.bf16.mxu0 0
        %1203 = vmatpush1.bf16.msra.mxu0 0
        %1204 = vmatprep.subr.bf16.mxu0 0
        %1205 = vmatpush1.bf16.msra.mxu0 0
        %1206 = vmatprep.subr.bf16.mxu0 0
        %1207 = vmatpush1.bf16.msra.mxu0 0
        %1208 = vmatprep.subr.bf16.mxu0 0
        %1209 = vmatpush1.bf16.msra.mxu0 0
        %1210 = vmatprep.subr.bf16.mxu0 0
        %1211 = vmatpush1.bf16.msra.mxu0 0
        %1212 = vmatprep.subr.bf16.mxu0 0
        %1213 = vmatpush1.bf16.msra.mxu0 0
        %1214 = vmatprep.subr.bf16.mxu0 0
        %1215 = vmatpush1.bf16.msra.mxu0 0
        %1216 = vmatprep.mubr.bf16.mxu0 0
        %1217 = vmatmul.mubr.bf16.gmra.mrb[0].mxu0 %v1173
        %v1218 = vpop.f32.mrb[0].mxu0
        %v1219 = vadd.f32 0.0, %v1218
        %v1220 = vpop.f32.mrb[0].mxu0
        %v1221 = vpop.f32.mrb[0].mxu0
        %v1222 = vadd.f32 0.0, %v1221
        %v1223 = vpop.f32.mrb[0].mxu0
        %1224 = vmatprep.mubr.bf16.mxu0 0
        %1225 = vmatmul.mubr.bf16.gmra.mrb[0].mxu0 %v1176
        %v1226 = vpop.f32.mrb[0].mxu0
        %v1227 = vadd.f32 0.0, %v1226
        %v1228 = vpop.f32.mrb[0].mxu0
        %v1229 = vpop.f32.mrb[0].mxu0
        %v1230 = vadd.f32 0.0, %v1229
        %v1231 = vpop.f32.mrb[0].mxu0
        %1232 = vmatprep.mubr.bf16.mxu0 0
        %1233 = vmatmul.mubr.bf16.gmra.mrb[0].mxu0 %v1179
        %v1234 = vpop.f32.mrb[0].mxu0
        %v1235 = vadd.f32 0.0, %v1234
        %v1236 = vpop.f32.mrb[0].mxu0
        %v1237 = vpop.f32.mrb[0].mxu0
        %v1238 = vadd.f32 0.0, %v1237
        %v1239 = vpop.f32.mrb[0].mxu0
        %1240 = vmatprep.mubr.bf16.mxu0 0
        %1241 = vmatmul.mubr.bf16.gmra.mrb[0].mxu0 %v1182
        %v1242 = vpop.f32.mrb[0].mxu0
        %v1243 = vadd.f32 0.0, %v1242
        %v1244 = vpop.f32.mrb[0].mxu0
        %v1245 = vpop.f32.mrb[0].mxu0
        %v1246 = vadd.f32 0.0, %v1245
        %v1247 = vpop.f32.mrb[0].mxu0
        %1248 = vdwg.mxu0
        %v1249 = vadd.f32 %v1091, %v1219
        %v1250 = vadd.f32 %v1092, %v1222
        %v1251 = vadd.f32 %v1093, %v1227
        %v1252 = vadd.f32 %v1094, %v1230
        %v1253 = vadd.f32 %v1095, %v1235
        %v1254 = vadd.f32 %v1096, %v1238
        %v1255 = vadd.f32 %v1097, %v1243
        %v1256 = vadd.f32 %v1098, %v1246
        %v1257 = vld [vmem:[%s185 + $0x28] sm:$0x3]
        %v1258 = vld [vmem:[#allocation5 + $0xe0] sm:$0xf]
        %v1259 = vld [vmem:[#allocation5 + $0xe4] sm:$0xf]
        %v1260 = vld [vmem:[#allocation5 + $0xe8] sm:$0xf]
        %v1261 = vld [vmem:[#allocation5 + $0xec] sm:$0xf]
        %v1262 = vld [vmem:[#allocation5 + $0xf0] sm:$0xf]
        %v1263 = vld [vmem:[#allocation5 + $0xf4] sm:$0xf]
        %v1264 = vld [vmem:[#allocation5 + $0xf8] sm:$0xf]
        %v1265 = vld [vmem:[#allocation5 + $0xfc] sm:$0xf]
        %v1267 = vunpack.c.l.b16 %v1257
        %v1268 = vpack.c.b16 %v1267, %v1267
        %v1270 = vshrl.u32 %v1134, 16
        %v1272 = vrot.slane %v1270, 1
        %v1273 = vshll.u32 %v1134, 16
        %v1275 = vrot.slane %v1273, 2
        %v1276 = vor.u32 %v1272, %v1275
        %v1278 = vshrl.u32 %v1135, 16
        %v1280 = vrot.slane %v1278, 1
        %v1281 = vshll.u32 %v1135, 16
        %v1283 = vrot.slane %v1281, 2
        %v1284 = vor.u32 %v1280, %v1283
        %v1285 = vsel %vm960, %v1276, %v1284
        %v1287 = vshrl.u32 %v1136, 16
        %v1289 = vrot.slane %v1287, 1
        %v1290 = vshll.u32 %v1136, 16
        %v1292 = vrot.slane %v1290, 2
        %v1293 = vor.u32 %v1289, %v1292
        %v1294 = vsel %vm960, %v1284, %v1293
        %v1296 = vshrl.u32 %v1137, 16
        %v1298 = vrot.slane %v1296, 1
        %v1299 = vshll.u32 %v1137, 16
        %v1301 = vrot.slane %v1299, 2
        %v1302 = vor.u32 %v1298, %v1301
        %v1303 = vsel %vm960, %v1293, %v1302
        %v1305 = vshrl.u32 %v1268, 16
        %v1307 = vrot.slane %v1305, 1
        %v1308 = vshll.u32 %v1268, 16
        %v1310 = vrot.slane %v1308, 2
        %v1311 = vor.u32 %v1307, %v1310
        %v1312 = vsel %vm960, %v1302, %v1311
        %v1321 = vunpack.c.l.b16 %v1258
        %v1322 = vunpack.c.l.b16 %v1259
        %v1323 = vunpack.c.l.b16 %v1260
        %v1324 = vunpack.c.l.b16 %v1261
        %v1325 = vunpack.c.l.b16 %v1262
        %v1326 = vunpack.c.l.b16 %v1263
        %v1327 = vunpack.c.l.b16 %v1264
        %v1328 = vunpack.c.l.b16 %v1265
        %v1329 = vpack.c.b16 %v1322, %v1321
        %v1330 = vpack.c.b16 %v1324, %v1323
        %v1331 = vpack.c.b16 %v1326, %v1325
        %v1332 = vpack.c.b16 %v1328, %v1327
        %v1338 = vsel %vm327, %v1285, 0
        %v1341 = vsel %vm327, %v1294, 0
        %v1344 = vsel %vm327, %v1303, 0
        %v1347 = vsel %vm327, %v1312, 0
        %1349 = vmatprep.subr.bf16.mxu0 0
        %1350 = vmatpush1.bf16.msra.mxu0 %v1329
        %1351 = vmatprep.subr.bf16.mxu0 0
        %1352 = vmatpush1.bf16.msra.mxu0 %v1330
        %1353 = vmatprep.subr.bf16.mxu0 0
        %1354 = vmatpush1.bf16.msra.mxu0 %v1331
        %1355 = vmatprep.subr.bf16.mxu0 0
        %1356 = vmatpush1.bf16.msra.mxu0 %v1332
        %1357 = vmatprep.subr.bf16.mxu0 0
        %1358 = vmatpush1.bf16.msra.mxu0 0
        %1359 = vmatprep.subr.bf16.mxu0 0
        %1360 = vmatpush1.bf16.msra.mxu0 0
        %1361 = vmatprep.subr.bf16.mxu0 0
        %1362 = vmatpush1.bf16.msra.mxu0 0
        %1363 = vmatprep.subr.bf16.mxu0 0
        %1364 = vmatpush1.bf16.msra.mxu0 0
        %1365 = vmatprep.subr.bf16.mxu0 0
        %1366 = vmatpush1.bf16.msra.mxu0 0
        %1367 = vmatprep.subr.bf16.mxu0 0
        %1368 = vmatpush1.bf16.msra.mxu0 0
        %1369 = vmatprep.subr.bf16.mxu0 0
        %1370 = vmatpush1.bf16.msra.mxu0 0
        %1371 = vmatprep.subr.bf16.mxu0 0
        %1372 = vmatpush1.bf16.msra.mxu0 0
        %1373 = vmatprep.subr.bf16.mxu0 0
        %1374 = vmatpush1.bf16.msra.mxu0 0
        %1375 = vmatprep.subr.bf16.mxu0 0
        %1376 = vmatpush1.bf16.msra.mxu0 0
        %1377 = vmatprep.subr.bf16.mxu0 0
        %1378 = vmatpush1.bf16.msra.mxu0 0
        %1379 = vmatprep.subr.bf16.mxu0 0
        %1380 = vmatpush1.bf16.msra.mxu0 0
        %1381 = vmatprep.mubr.bf16.mxu0 0
        %1382 = vmatmul.mubr.bf16.gmra.mrb[0].mxu0 %v1338
        %v1383 = vpop.f32.mrb[0].mxu0
        %v1384 = vadd.f32 0.0, %v1383
        %v1385 = vpop.f32.mrb[0].mxu0
        %v1386 = vpop.f32.mrb[0].mxu0
        %v1387 = vadd.f32 0.0, %v1386
        %v1388 = vpop.f32.mrb[0].mxu0
        %1389 = vmatprep.mubr.bf16.mxu0 0
        %1390 = vmatmul.mubr.bf16.gmra.mrb[0].mxu0 %v1341
        %v1391 = vpop.f32.mrb[0].mxu0
        %v1392 = vadd.f32 0.0, %v1391
        %v1393 = vpop.f32.mrb[0].mxu0
        %v1394 = vpop.f32.mrb[0].mxu0
        %v1395 = vadd.f32 0.0, %v1394
        %v1396 = vpop.f32.mrb[0].mxu0
        %1397 = vmatprep.mubr.bf16.mxu0 0
        %1398 = vmatmul.mubr.bf16.gmra.mrb[0].mxu0 %v1344
        %v1399 = vpop.f32.mrb[0].mxu0
        %v1400 = vadd.f32 0.0, %v1399
        %v1401 = vpop.f32.mrb[0].mxu0
        %v1402 = vpop.f32.mrb[0].mxu0
        %v1403 = vadd.f32 0.0, %v1402
        %v1404 = vpop.f32.mrb[0].mxu0
        %1405 = vmatprep.mubr.bf16.mxu0 0
        %1406 = vmatmul.mubr.bf16.gmra.mrb[0].mxu0 %v1347
        %v1407 = vpop.f32.mrb[0].mxu0
        %v1408 = vadd.f32 0.0, %v1407
        %v1409 = vpop.f32.mrb[0].mxu0
        %v1410 = vpop.f32.mrb[0].mxu0
        %v1411 = vadd.f32 0.0, %v1410
        %v1412 = vpop.f32.mrb[0].mxu0
        %1413 = vdwg.mxu0
        %v1414 = vadd.f32 %v1249, %v1384
        %v1415 = vadd.f32 %v1250, %v1387
        %v1416 = vadd.f32 %v1251, %v1392
        %v1417 = vadd.f32 %v1252, %v1395
        %v1418 = vadd.f32 %v1253, %v1400
        %v1419 = vadd.f32 %v1254, %v1403
        %v1420 = vadd.f32 %v1255, %v1408
        %v1421 = vadd.f32 %v1256, %v1411
        %v1422 = vld [vmem:[%s185 + $0x8] sm:$0xc]
        %v1423 = vld [vmem:[#allocation5 + $0x100] sm:$0xf]
        %v1424 = vld [vmem:[#allocation5 + $0x104] sm:$0xf]
        %v1425 = vld [vmem:[#allocation5 + $0x108] sm:$0xf]
        %v1426 = vld [vmem:[#allocation5 + $0x10c] sm:$0xf]
        %v1427 = vld [vmem:[#allocation5 + $0x110] sm:$0xf]
        %v1428 = vld [vmem:[#allocation5 + $0x114] sm:$0xf]
        %v1429 = vld [vmem:[#allocation5 + $0x118] sm:$0xf]
        %v1430 = vld [vmem:[#allocation5 + $0x11c] sm:$0xf]
        %v1432 = vunpack.c.l.b16 %v1422
        %v1433 = vpack.c.b16 %v1126, %v1432
        %vm1434 = vcmask 1045504
        %v1435 = vrot.slane %v1433, 2
        %v1436 = vrot.slane %v1135, 2
        %v1437 = vsel %vm1434, %v1435, %v1436
        %v1438 = vrot.slane %v1136, 2
        %v1439 = vsel %vm1434, %v1436, %v1438
        %v1440 = vrot.slane %v1137, 2
        %v1441 = vsel %vm1434, %v1438, %v1440
        %v1442 = vrot.slane %v1268, 2
        %v1443 = vsel %vm1434, %v1440, %v1442
        %v1452 = vunpack.c.l.b16 %v1423
        %v1453 = vunpack.c.l.b16 %v1424
        %v1454 = vunpack.c.l.b16 %v1425
        %v1455 = vunpack.c.l.b16 %v1426
        %v1456 = vunpack.c.l.b16 %v1427
        %v1457 = vunpack.c.l.b16 %v1428
        %v1458 = vunpack.c.l.b16 %v1429
        %v1459 = vunpack.c.l.b16 %v1430
        %v1460 = vpack.c.b16 %v1453, %v1452
        %v1461 = vpack.c.b16 %v1455, %v1454
        %v1462 = vpack.c.b16 %v1457, %v1456
        %v1463 = vpack.c.b16 %v1459, %v1458
        %v1469 = vsel %vm327, %v1437, 0
        %v1472 = vsel %vm327, %v1439, 0
        %v1475 = vsel %vm327, %v1441, 0
        %v1478 = vsel %vm327, %v1443, 0
        %1480 = vmatprep.subr.bf16.mxu0 0
        %1481 = vmatpush1.bf16.msra.mxu0 %v1460
        %1482 = vmatprep.subr.bf16.mxu0 0
        %1483 = vmatpush1.bf16.msra.mxu0 %v1461
        %1484 = vmatprep.subr.bf16.mxu0 0
        %1485 = vmatpush1.bf16.msra.mxu0 %v1462
        %1486 = vmatprep.subr.bf16.mxu0 0
        %1487 = vmatpush1.bf16.msra.mxu0 %v1463
        %1488 = vmatprep.subr.bf16.mxu0 0
        %1489 = vmatpush1.bf16.msra.mxu0 0
        %1490 = vmatprep.subr.bf16.mxu0 0
        %1491 = vmatpush1.bf16.msra.mxu0 0
        %1492 = vmatprep.subr.bf16.mxu0 0
        %1493 = vmatpush1.bf16.msra.mxu0 0
        %1494 = vmatprep.subr.bf16.mxu0 0
        %1495 = vmatpush1.bf16.msra.mxu0 0
        %1496 = vmatprep.subr.bf16.mxu0 0
        %1497 = vmatpush1.bf16.msra.mxu0 0
        %1498 = vmatprep.subr.bf16.mxu0 0
        %1499 = vmatpush1.bf16.msra.mxu0 0
        %1500 = vmatprep.subr.bf16.mxu0 0
        %1501 = vmatpush1.bf16.msra.mxu0 0
        %1502 = vmatprep.subr.bf16.mxu0 0
        %1503 = vmatpush1.bf16.msra.mxu0 0
        %1504 = vmatprep.subr.bf16.mxu0 0
        %1505 = vmatpush1.bf16.msra.mxu0 0
        %1506 = vmatprep.subr.bf16.mxu0 0
        %1507 = vmatpush1.bf16.msra.mxu0 0
        %1508 = vmatprep.subr.bf16.mxu0 0
        %1509 = vmatpush1.bf16.msra.mxu0 0
        %1510 = vmatprep.subr.bf16.mxu0 0
        %1511 = vmatpush1.bf16.msra.mxu0 0
        %1512 = vmatprep.mubr.bf16.mxu0 0
        %1513 = vmatmul.mubr.bf16.gmra.mrb[0].mxu0 %v1469
        %v1514 = vpop.f32.mrb[0].mxu0
        %v1515 = vadd.f32 0.0, %v1514
        %v1516 = vpop.f32.mrb[0].mxu0
        %v1517 = vpop.f32.mrb[0].mxu0
        %v1518 = vadd.f32 0.0, %v1517
        %v1519 = vpop.f32.mrb[0].mxu0
        %1520 = vmatprep.mubr.bf16.mxu0 0
        %1521 = vmatmul.mubr.bf16.gmra.mrb[0].mxu0 %v1472
        %v1522 = vpop.f32.mrb[0].mxu0
        %v1523 = vadd.f32 0.0, %v1522
        %v1524 = vpop.f32.mrb[0].mxu0
        %v1525 = vpop.f32.mrb[0].mxu0
        %v1526 = vadd.f32 0.0, %v1525
        %v1527 = vpop.f32.mrb[0].mxu0
        %1528 = vmatprep.mubr.bf16.mxu0 0
        %1529 = vmatmul.mubr.bf16.gmra.mrb[0].mxu0 %v1475
        %v1530 = vpop.f32.mrb[0].mxu0
        %v1531 = vadd.f32 0.0, %v1530
        %v1532 = vpop.f32.mrb[0].mxu0
        %v1533 = vpop.f32.mrb[0].mxu0
        %v1534 = vadd.f32 0.0, %v1533
        %v1535 = vpop.f32.mrb[0].mxu0
        %1536 = vmatprep.mubr.bf16.mxu0 0
        %1537 = vmatmul.mubr.bf16.gmra.mrb[0].mxu0 %v1478
        %v1538 = vpop.f32.mrb[0].mxu0
        %v1539 = vadd.f32 0.0, %v1538
        %v1540 = vpop.f32.mrb[0].mxu0
        %v1541 = vpop.f32.mrb[0].mxu0
        %v1542 = vadd.f32 0.0, %v1541
        %v1543 = vpop.f32.mrb[0].mxu0
        %1544 = vdwg.mxu0
        %v1545 = vadd.f32 %v1414, %v1515
        %v1546 = vadd.f32 %v1415, %v1518
        %v1547 = vadd.f32 %v1416, %v1523
        %v1548 = vadd.f32 %v1417, %v1526
        %v1549 = vadd.f32 %v1418, %v1531
        %v1550 = vadd.f32 %v1419, %v1534
        %v1551 = vadd.f32 %v1420, %v1539
        %v1552 = vadd.f32 %v1421, %v1542
        %v1553 = vld [vmem:[#allocation7] sm:$0x1]
        %v1555 = vlaneseq
        %v1556 = vshrl.u32 %v1555, 7
        %v1557 = vsub.s32 0, %v1556
        %v1558 = vrot.slane %v1553, %v1557
        %v1560 = vadd.f32 %v1545, %v1558
        %v1561 = vadd.f32 %v1546, %v1558
        %v1562 = vadd.f32 %v1547, %v1558
        %v1563 = vadd.f32 %v1548, %v1558
        %v1564 = vadd.f32 %v1549, %v1558
        %v1565 = vadd.f32 %v1550, %v1558
        %v1566 = vadd.f32 %v1551, %v1558
        %v1567 = vadd.f32 %v1552, %v1558
        %v1568 = vmax.f32 %v1560, 0.0
        %v1569 = vmax.f32 %v1561, 0.0
        %v1570 = vmax.f32 %v1562, 0.0
        %v1571 = vmax.f32 %v1563, 0.0
        %v1572 = vmax.f32 %v1564, 0.0
        %v1573 = vmax.f32 %v1565, 0.0
        %v1574 = vmax.f32 %v1566, 0.0
        %v1575 = vmax.f32 %v1567, 0.0
        %v1576 = vpack.c.bf16 %v1569, %v1568
        %v1577 = vpack.c.bf16 %v1571, %v1570
        %v1578 = vpack.c.bf16 %v1573, %v1572
        %v1579 = vpack.c.bf16 %v1575, %v1574
        %v1584 = vunpack.c.l.b16 %v1576
        %v1585 = vunpack.c.h.b16 %v1576
        %v1586 = vunpack.c.l.b16 %v1577
        %v1587 = vunpack.c.h.b16 %v1577
        %v1588 = vunpack.c.l.b16 %v1578
        %v1589 = vunpack.c.h.b16 %v1578
        %v1590 = vunpack.c.l.b16 %v1579
        %v1591 = vunpack.c.h.b16 %v1579
        %v1592 = vpack.c.b16 %v1584, %v1584
        %v1593 = vpack.c.b16 %v1585, %v1585
        %v1594 = vpack.c.b16 %v1586, %v1586
        %v1595 = vpack.c.b16 %v1587, %v1587
        %v1596 = vpack.c.b16 %v1588, %v1588
        %v1597 = vpack.c.b16 %v1589, %v1589
        %v1598 = vpack.c.b16 %v1590, %v1590
        %v1599 = vpack.c.b16 %v1591, %v1591
        %vm1608 = vcmask 519168
        %1609 = vst.msk [vmem:[%s215] sm:$0xf] %vm1608, %v1592
        %1610 = vst.msk [vmem:[%s215 + $0x4] sm:$0xf] %vm1608, %v1593
        %1611 = vst.msk [vmem:[%s215 + $0x8] sm:$0xf] %vm1608, %v1594
        %1612 = vst.msk [vmem:[%s215 + $0xc] sm:$0xf] %vm1608, %v1595
        %1613 = vst.msk [vmem:[%s215 + $0x10] sm:$0xf] %vm1608, %v1596
        %1614 = vst.msk [vmem:[%s215 + $0x14] sm:$0xf] %vm1608, %v1597
        %1615 = vst.msk [vmem:[%s215 + $0x18] sm:$0xf] %vm1608, %v1598
        %1616 = vst.msk [vmem:[%s215 + $0x1c] sm:$0xf] %vm1608, %v1599
        %s1617 = sand.u32 %s97, 1
        %s1618 = scalar_lea.sflag [#allocation4], %s1617
        %s1619 = sand.u32 %s97, 1
        %s1620 = smul.addr %s1619, 32
        %s1621 = scalar_lea.vmem [#allocation8], %s1620
        // Predicated region
        $region45: #{actor_critic_forward.6} parent=31 // pred_check
          %p1622 = pneg %p107
        $region46: #{actor_critic_forward.6} parent=31 // pred_check_branch
          %1624 = sbr.rel (%p1622) target = $region48
        $region47: #{actor_critic_forward.6} parent=31 // pred_region
          %s1625 = smul.u32 8, %s21
          %s1627 = ssub.s32 512, 512
          %1628 = vsyncadd %s1618, %s1627
          %s1629 = smul.addr %s1625, 64
          %s1630 = scalar_lea.hbm %s3, %s1629
          %s1631 = sshll.u32 %s1621, 4
          %s1632 = int_to_ptr.vmem [resolvable:$true] %s1631
          %1637 = dma.vmem_to_hbm [thread:$0]  %s1632, 512, %s1630, %s1618, 64, 64, 4
        $region48: #{actor_critic_forward.6} parent=31 // pred_fallthru
          _
      $region32: #{actor_critic_forward.6} parent=5 // pred_fallthru
        _
      %p1638 = scmp.le.s32.totalorder 2, %s16
      // Predicated region
      $region49: #{actor_critic_forward.6} parent=5 // pred_check
        %p1639 = pneg %p1638
      $region50: #{actor_critic_forward.6} parent=5 // pred_check_branch
        %1641 = sbr.rel (%p1639) target = $region52
      $region51: #{actor_critic_forward.6} parent=5 // pred_region
        %s1642 = ssub.s32 %s16, 2
        // Predicated region
        $region53: #{actor_critic_forward.6} parent=51 // pred_check
          %p1643 = pneg %p113
        $region54: #{actor_critic_forward.6} parent=51 // pred_check_branch
          %1645 = sbr.rel (%p1643) target = $region56
        $region55: #{actor_critic_forward.6} parent=51 // pred_region
          %s1646 = sand.u32 %s98, 1
          %s1647 = scalar_lea.sflag [#allocation4], %s1646
          %s1648 = sand.u32 %s98, 1
          %s1649 = smul.addr %s1648, 32
          %s1650 = scalar_lea.vmem [#allocation8], %s1649
          %1651 = dma.done %s1647, 512
        $region56: #{actor_critic_forward.6} parent=51 // pred_fallthru
          _
      $region52: #{actor_critic_forward.6} parent=5 // pred_fallthru
        _
    $region6: #{actor_critic_forward.6} parent=1 // loop_footer
      %s20 = sadd.s32 1, %s16
    $region7: #{actor_critic_forward.6} parent=1 // loop_footer_branch
      %15 = sbr.rel target = $region3
    $region8: #{actor_critic_forward.6} parent=1 // loop_exit
      _
    %1652 = vsyncpa [#allocation3], 1
    %s1653 = scalar_lea.sflag [#allocation3], 1
    %1654 = vsyncpa %s1653, 1
    %1655 = vsyncpa [#allocation6], 1
    %1656 = vsyncpa [#allocation4], 1
    %s1657 = scalar_lea.sflag [#allocation4], 1
    %1658 = vsyncpa %s1657, 1

// kernel: actor_critic_forward.7
$region0: #{actor_critic_forward.7}
  #allocation0 [shape = 'u32[]', space=smem, size = 0x4, offset = 0x4, fixed_abs, tag = 'smem constant byte address 0x4 - core index']
  #allocation1 [shape = 'u32[144,128]{1,0:T(1,128)}', space=vmem, size = 0x12000, scoped, tag = 'internal scratch']
  %s0 = inlined_call_operand.hbm [shape: bf16[2,3136], index: 0, kind: input, shape index: {}]
  %s1 = inlined_call_operand.hbm [shape: bf16[3136,512], index: 1, kind: input, shape index: {}]
  %s2 = inlined_call_operand.hbm [shape: f32[1,512], index: 2, kind: input, shape index: {}]
  %s3 = inlined_call_operand.hbm [shape: bf16[512,128], index: 3, kind: input, shape index: {}]
  %s4 = inlined_call_operand.hbm [shape: f32[1,128], index: 4, kind: input, shape index: {}]
  %s5 = inlined_call_operand.hbm [shape: f32[2,128], index: 5, kind: output, shape index: {}]
  %s6 = sld [smem:[#allocation0]]
  $region50: #{actor_critic_forward.7} parent=0
    _
  %s8 = ssub.s32 1, %s6
  %s9 = scalar_select 0, %s8, %s6
  $region1: #{actor_critic_forward.7} parent=0
    #allocation2 [shape = 'u8[12800]{0}', space=vmem, size = 0x3400, scoped, tag = 'input window, operand 0, single buffered']
    #allocation3 [shape = 's32[1]{0}', space=sflag, size = 0x4, scoped, tag = 'scoped memory for actor_critic_forward.7']
    #allocation4 [shape = 's32[1]{0}', space=sflag, size = 0x4, scoped, tag = 'scoped memory for actor_critic_forward.7']
    #allocation5 [shape = 'u8[3211264]{0}', space=vmem, size = 0x310000, scoped, tag = 'input window, operand 1, single buffered']
    #allocation6 [shape = 's32[1]{0}', space=sflag, size = 0x4, scoped, tag = 'scoped memory for actor_critic_forward.7']
    #allocation7 [shape = 'u8[2048]{0}', space=vmem, size = 0x800, scoped, tag = 'input window, operand 2, single buffered']
    #allocation8 [shape = 'u8[131072]{0}', space=vmem, size = 0x20000, scoped, tag = 'input window, operand 3, single buffered']
    #allocation9 [shape = 's32[1]{0}', space=sflag, size = 0x4, scoped, tag = 'scoped memory for actor_critic_forward.7']
    #allocation10 [shape = 'u8[512]{0}', space=vmem, size = 0x400, scoped, tag = 'input window, operand 4, single buffered']
    #allocation11 [shape = 'u8[1024]{0}', space=vmem, size = 0x400, scoped, tag = 'output window, operand 0, single buffered']
    %10 = vsyncpa [#allocation3], 0
    %11 = vsyncpa [#allocation6], 0
    %12 = vsyncpa [#allocation9], 0
    %13 = vsyncpa [#allocation4], 0
    // Predicated region
    $region2: #{actor_critic_forward.7} parent=1 // pred_check
      _
    $region3: #{actor_critic_forward.7} parent=1 // pred_check_branch
      %15 = sbr.rel (0) target = $region5
    $region4: #{actor_critic_forward.7} parent=1 // pred_region
      %s17 = ssub.s32 400, 400
      %18 = vsyncadd [#allocation3], %s17
      %s20 = sshll.u32 [#allocation2], 4
      %s21 = int_to_ptr.vmem [resolvable:$true] %s20
      %23 = dma.hbm_to_vmem [thread:$0]  %s0, 400, %s21, [#allocation3]
    $region5: #{actor_critic_forward.7} parent=1 // pred_fallthru
      _
    // Predicated region
    $region6: #{actor_critic_forward.7} parent=1 // pred_check
      _
    $region7: #{actor_critic_forward.7} parent=1 // pred_check_branch
      %25 = sbr.rel (0) target = $region9
    $region8: #{actor_critic_forward.7} parent=1 // pred_region
      %s27 = ssub.s32 100352, 100352
      %28 = vsyncadd [#allocation6], %s27
      %s29 = sshll.u32 [#allocation5], 4
      %s30 = int_to_ptr.vmem [resolvable:$true] %s29
      %35 = dma.hbm_to_vmem [thread:$0]  %s1, 100352, %s30, [#allocation6], 256, 256, 16
    $region9: #{actor_critic_forward.7} parent=1 // pred_fallthru
      _
    // Predicated region
    $region10: #{actor_critic_forward.7} parent=1 // pred_check
      _
    $region11: #{actor_critic_forward.7} parent=1 // pred_check_branch
      %37 = sbr.rel (0) target = $region13
    $region12: #{actor_critic_forward.7} parent=1 // pred_region
      %s39 = ssub.s32 64, 64
      %40 = vsyncadd [#allocation6], %s39
      %s42 = sshll.u32 [#allocation7], 4
      %s43 = int_to_ptr.vmem [resolvable:$true] %s42
      %45 = dma.hbm_to_vmem [thread:$0]  %s2, 64, %s43, [#allocation6]
    $region13: #{actor_critic_forward.7} parent=1 // pred_fallthru
      _
    // Predicated region
    $region14: #{actor_critic_forward.7} parent=1 // pred_check
      _
    $region15: #{actor_critic_forward.7} parent=1 // pred_check_branch
      %47 = sbr.rel (0) target = $region17
    $region16: #{actor_critic_forward.7} parent=1 // pred_region
      %s49 = ssub.s32 4096, 4096
      %50 = vsyncadd [#allocation9], %s49
      %s51 = sshll.u32 [#allocation8], 4
      %s52 = int_to_ptr.vmem [resolvable:$true] %s51
      %57 = dma.hbm_to_vmem [thread:$0]  %s3, 4096, %s52, [#allocation9], 64, 64, 4
    $region17: #{actor_critic_forward.7} parent=1 // pred_fallthru
      _
    // Predicated region
    $region18: #{actor_critic_forward.7} parent=1 // pred_check
      _
    $region19: #{actor_critic_forward.7} parent=1 // pred_check_branch
      %59 = sbr.rel (0) target = $region21
    $region20: #{actor_critic_forward.7} parent=1 // pred_region
      %s61 = ssub.s32 16, 16
      %62 = vsyncadd [#allocation9], %s61
      %s64 = sshll.u32 [#allocation10], 4
      %s65 = int_to_ptr.vmem [resolvable:$true] %s64
      %67 = dma.hbm_to_vmem [thread:$0]  %s4, 16, %s65, [#allocation9]
    $region21: #{actor_critic_forward.7} parent=1 // pred_fallthru
      _
    // Predicated region
    $region22: #{actor_critic_forward.7} parent=1 // pred_check
      _
    $region23: #{actor_critic_forward.7} parent=1 // pred_check_branch
      %69 = sbr.rel (0) target = $region25
    $region24: #{actor_critic_forward.7} parent=1 // pred_region
      %70 = dma.done [#allocation3], 400
    $region25: #{actor_critic_forward.7} parent=1 // pred_fallthru
      _
    // Predicated region
    $region26: #{actor_critic_forward.7} parent=1 // pred_check
      _
    $region27: #{actor_critic_forward.7} parent=1 // pred_check_branch
      %72 = sbr.rel (0) target = $region29
    $region28: #{actor_critic_forward.7} parent=1 // pred_region
      %73 = dma.done [#allocation6], 100352
    $region29: #{actor_critic_forward.7} parent=1 // pred_fallthru
      _
    // Predicated region
    $region30: #{actor_critic_forward.7} parent=1 // pred_check
      _
    $region31: #{actor_critic_forward.7} parent=1 // pred_check_branch
      %75 = sbr.rel (0) target = $region33
    $region32: #{actor_critic_forward.7} parent=1 // pred_region
      %76 = dma.done [#allocation6], 64
    $region33: #{actor_critic_forward.7} parent=1 // pred_fallthru
      _
    // Predicated region
    $region34: #{actor_critic_forward.7} parent=1 // pred_check
      _
    $region35: #{actor_critic_forward.7} parent=1 // pred_check_branch
      %78 = sbr.rel (0) target = $region37
    $region36: #{actor_critic_forward.7} parent=1 // pred_region
      %79 = dma.done [#allocation9], 4096
    $region37: #{actor_critic_forward.7} parent=1 // pred_fallthru
      _
    // Predicated region
    $region38: #{actor_critic_forward.7} parent=1 // pred_check
      _
    $region39: #{actor_critic_forward.7} parent=1 // pred_check_branch
      %81 = sbr.rel (0) target = $region41
    $region40: #{actor_critic_forward.7} parent=1 // pred_region
      %82 = dma.done [#allocation9], 16
    $region41: #{actor_critic_forward.7} parent=1 // pred_fallthru
      _
    %v84 = vld [vmem:[#allocation2] sm:$0xff]
    %v85 = vld [vmem:[#allocation2 + $0x8] sm:$0xff]
    %v86 = vld [vmem:[#allocation2 + $0x10] sm:$0xff]
    %v87 = vld [vmem:[#allocation2 + $0x18] sm:$0x1]
    %v88 = vld [vmem:[#allocation5] sm:$0xff]
    %v89 = vld [vmem:[#allocation5 + $0x8] sm:$0xff]
    %v90 = vld [vmem:[#allocation5 + $0x10] sm:$0xff]
    %v91 = vld [vmem:[#allocation5 + $0x18] sm:$0xff]
    %v92 = vld [vmem:[#allocation5 + $0x20] sm:$0xff]
    %v93 = vld [vmem:[#allocation5 + $0x28] sm:$0xff]
    %v94 = vld [vmem:[#allocation5 + $0x30] sm:$0xff]
    %v95 = vld [vmem:[#allocation5 + $0x38] sm:$0xff]
    %v96 = vld [vmem:[#allocation5 + $0x40] sm:$0xff]
    %v97 = vld [vmem:[#allocation5 + $0x48] sm:$0xff]
    %v98 = vld [vmem:[#allocation5 + $0x50] sm:$0xff]
    %v99 = vld [vmem:[#allocation5 + $0x58] sm:$0xff]
    %v100 = vld [vmem:[#allocation5 + $0x60] sm:$0xff]
    %v101 = vld [vmem:[#allocation5 + $0x68] sm:$0xff]
    %v102 = vld [vmem:[#allocation5 + $0x70] sm:$0xff]
    %v103 = vld [vmem:[#allocation5 + $0x78] sm:$0xff]
    %v104 = vld [vmem:[#allocation5 + $0x80] sm:$0xff]
    %v105 = vld [vmem:[#allocation5 + $0x88] sm:$0xff]
    %v106 = vld [vmem:[#allocation5 + $0x90] sm:$0xff]
    %v107 = vld [vmem:[#allocation5 + $0x98] sm:$0xff]
    %v108 = vld [vmem:[#allocation5 + $0xa0] sm:$0xff]
    %v109 = vld [vmem:[#allocation5 + $0xa8] sm:$0xff]
    %v110 = vld [vmem:[#allocation5 + $0xb0] sm:$0xff]
    %v111 = vld [vmem:[#allocation5 + $0xb8] sm:$0xff]
    %v112 = vld [vmem:[#allocation5 + $0xc0] sm:$0xff]
    %v113 = vld [vmem:[#allocation5 + $0xc8] sm:$0xff]
    %v114 = vld [vmem:[#allocation5 + $0xd0] sm:$0xff]
    %v115 = vld [vmem:[#allocation5 + $0xd8] sm:$0xff]
    %v116 = vld [vmem:[#allocation5 + $0xe0] sm:$0xff]
    %v117 = vld [vmem:[#allocation5 + $0xe8] sm:$0xff]
    %v118 = vld [vmem:[#allocation5 + $0xf0] sm:$0xff]
    %v119 = vld [vmem:[#allocation5 + $0xf8] sm:$0xff]
    %v120 = vld [vmem:[#allocation5 + $0x100] sm:$0xff]
    %v121 = vld [vmem:[#allocation5 + $0x108] sm:$0xff]
    %v122 = vld [vmem:[#allocation5 + $0x110] sm:$0xff]
    %v123 = vld [vmem:[#allocation5 + $0x118] sm:$0xff]
    %v124 = vld [vmem:[#allocation5 + $0x120] sm:$0xff]
    %v125 = vld [vmem:[#allocation5 + $0x128] sm:$0xff]
    %v126 = vld [vmem:[#allocation5 + $0x130] sm:$0xff]
    %v127 = vld [vmem:[#allocation5 + $0x138] sm:$0xff]
    %v128 = vld [vmem:[#allocation5 + $0x140] sm:$0xff]
    %v129 = vld [vmem:[#allocation5 + $0x148] sm:$0xff]
    %v130 = vld [vmem:[#allocation5 + $0x150] sm:$0xff]
    %v131 = vld [vmem:[#allocation5 + $0x158] sm:$0xff]
    %v132 = vld [vmem:[#allocation5 + $0x160] sm:$0xff]
    %v133 = vld [vmem:[#allocation5 + $0x168] sm:$0xff]
    %v134 = vld [vmem:[#allocation5 + $0x170] sm:$0xff]
    %v135 = vld [vmem:[#allocation5 + $0x178] sm:$0xff]
    %v136 = vld [vmem:[#allocation5 + $0x180] sm:$0xff]
    %v137 = vld [vmem:[#allocation5 + $0x188] sm:$0xff]
    %v138 = vld [vmem:[#allocation5 + $0x190] sm:$0xff]
    %v139 = vld [vmem:[#allocation5 + $0x198] sm:$0xff]
    %v140 = vld [vmem:[#allocation5 + $0x1a0] sm:$0xff]
    %v141 = vld [vmem:[#allocation5 + $0x1a8] sm:$0xff]
    %v142 = vld [vmem:[#allocation5 + $0x1b0] sm:$0xff]
    %v143 = vld [vmem:[#allocation5 + $0x1b8] sm:$0xff]
    %v144 = vld [vmem:[#allocation5 + $0x1c0] sm:$0xff]
    %v145 = vld [vmem:[#allocation5 + $0x1c8] sm:$0xff]
    %v146 = vld [vmem:[#allocation5 + $0x1d0] sm:$0xff]
    %v147 = vld [vmem:[#allocation5 + $0x1d8] sm:$0xff]
    %v148 = vld [vmem:[#allocation5 + $0x1e0] sm:$0xff]
    %v149 = vld [vmem:[#allocation5 + $0x1e8] sm:$0xff]
    %v150 = vld [vmem:[#allocation5 + $0x1f0] sm:$0xff]
    %v151 = vld [vmem:[#allocation5 + $0x1f8] sm:$0xff]
    %v152 = vld [vmem:[#allocation5 + $0x200] sm:$0xff]
    %v153 = vld [vmem:[#allocation5 + $0x208] sm:$0xff]
    %v154 = vld [vmem:[#allocation5 + $0x210] sm:$0xff]
    %v155 = vld [vmem:[#allocation5 + $0x218] sm:$0xff]
    %v156 = vld [vmem:[#allocation5 + $0x220] sm:$0xff]
    %v157 = vld [vmem:[#allocation5 + $0x228] sm:$0xff]
    %v158 = vld [vmem:[#allocation5 + $0x230] sm:$0xff]
    %v159 = vld [vmem:[#allocation5 + $0x238] sm:$0xff]
    %v160 = vld [vmem:[#allocation5 + $0x240] sm:$0xff]
    %v161 = vld [vmem:[#allocation5 + $0x248] sm:$0xff]
    %v162 = vld [vmem:[#allocation5 + $0x250] sm:$0xff]
    %v163 = vld [vmem:[#allocation5 + $0x258] sm:$0xff]
    %v164 = vld [vmem:[#allocation5 + $0x260] sm:$0xff]
    %v165 = vld [vmem:[#allocation5 + $0x268] sm:$0xff]
    %v166 = vld [vmem:[#allocation5 + $0x270] sm:$0xff]
    %v167 = vld [vmem:[#allocation5 + $0x278] sm:$0xff]
    %v168 = vld [vmem:[#allocation5 + $0x280] sm:$0xff]
    %v169 = vld [vmem:[#allocation5 + $0x288] sm:$0xff]
    %v170 = vld [vmem:[#allocation5 + $0x290] sm:$0xff]
    %v171 = vld [vmem:[#allocation5 + $0x298] sm:$0xff]
    %v172 = vld [vmem:[#allocation5 + $0x2a0] sm:$0xff]
    %v173 = vld [vmem:[#allocation5 + $0x2a8] sm:$0xff]
    %v174 = vld [vmem:[#allocation5 + $0x2b0] sm:$0xff]
    %v175 = vld [vmem:[#allocation5 + $0x2b8] sm:$0xff]
    %v176 = vld [vmem:[#allocation5 + $0x2c0] sm:$0xff]
    %v177 = vld [vmem:[#allocation5 + $0x2c8] sm:$0xff]
    %v178 = vld [vmem:[#allocation5 + $0x2d0] sm:$0xff]
    %v179 = vld [vmem:[#allocation5 + $0x2d8] sm:$0xff]
    %v180 = vld [vmem:[#allocation5 + $0x2e0] sm:$0xff]
    %v181 = vld [vmem:[#allocation5 + $0x2e8] sm:$0xff]
    %v182 = vld [vmem:[#allocation5 + $0x2f0] sm:$0xff]
    %v183 = vld [vmem:[#allocation5 + $0x2f8] sm:$0xff]
    %v184 = vld [vmem:[#allocation5 + $0x300] sm:$0xff]
    %v185 = vld [vmem:[#allocation5 + $0x308] sm:$0xff]
    %v186 = vld [vmem:[#allocation5 + $0x310] sm:$0xff]
    %v187 = vld [vmem:[#allocation5 + $0x318] sm:$0xff]
    %v188 = vld [vmem:[#allocation5 + $0x320] sm:$0xff]
    %v189 = vld [vmem:[#allocation5 + $0x328] sm:$0xff]
    %v190 = vld [vmem:[#allocation5 + $0x330] sm:$0xff]
    %v191 = vld [vmem:[#allocation5 + $0x338] sm:$0xff]
    %v192 = vld [vmem:[#allocation5 + $0x340] sm:$0xff]
    %v193 = vld [vmem:[#allocation5 + $0x348] sm:$0xff]
    %v194 = vld [vmem:[#allocation5 + $0x350] sm:$0xff]
    %v195 = vld [vmem:[#allocation5 + $0x358] sm:$0xff]
    %v196 = vld [vmem:[#allocation5 + $0x360] sm:$0xff]
    %v197 = vld [vmem:[#allocation5 + $0x368] sm:$0xff]
    %v198 = vld [vmem:[#allocation5 + $0x370] sm:$0xff]
    %v199 = vld [vmem:[#allocation5 + $0x378] sm:$0xff]
    %v200 = vld [vmem:[#allocation5 + $0x380] sm:$0xff]
    %v201 = vld [vmem:[#allocation5 + $0x388] sm:$0xff]
    %v202 = vld [vmem:[#allocation5 + $0x390] sm:$0xff]
    %v203 = vld [vmem:[#allocation5 + $0x398] sm:$0xff]
    %v204 = vld [vmem:[#allocation5 + $0x3a0] sm:$0xff]
    %v205 = vld [vmem:[#allocation5 + $0x3a8] sm:$0xff]
    %v206 = vld [vmem:[#allocation5 + $0x3b0] sm:$0xff]
    %v207 = vld [vmem:[#allocation5 + $0x3b8] sm:$0xff]
    %v208 = vld [vmem:[#allocation5 + $0x3c0] sm:$0xff]
    %v209 = vld [vmem:[#allocation5 + $0x3c8] sm:$0xff]
    %v210 = vld [vmem:[#allocation5 + $0x3d0] sm:$0xff]
    %v211 = vld [vmem:[#allocation5 + $0x3d8] sm:$0xff]
    %v212 = vld [vmem:[#allocation5 + $0x3e0] sm:$0xff]
    %v213 = vld [vmem:[#allocation5 + $0x3e8] sm:$0xff]
    %v214 = vld [vmem:[#allocation5 + $0x3f0] sm:$0xff]
    %v215 = vld [vmem:[#allocation5 + $0x3f8] sm:$0xff]
    %v216 = vld [vmem:[#allocation5 + $0x400] sm:$0xff]
    %v217 = vld [vmem:[#allocation5 + $0x408] sm:$0xff]
    %v218 = vld [vmem:[#allocation5 + $0x410] sm:$0xff]
    %v219 = vld [vmem:[#allocation5 + $0x418] sm:$0xff]
    %v220 = vld [vmem:[#allocation5 + $0x420] sm:$0xff]
    %v221 = vld [vmem:[#allocation5 + $0x428] sm:$0xff]
    %v222 = vld [vmem:[#allocation5 + $0x430] sm:$0xff]
    %v223 = vld [vmem:[#allocation5 + $0x438] sm:$0xff]
    %v224 = vld [vmem:[#allocation5 + $0x440] sm:$0xff]
    %v225 = vld [vmem:[#allocation5 + $0x448] sm:$0xff]
    %v226 = vld [vmem:[#allocation5 + $0x450] sm:$0xff]
    %v227 = vld [vmem:[#allocation5 + $0x458] sm:$0xff]
    %v228 = vld [vmem:[#allocation5 + $0x460] sm:$0xff]
    %v229 = vld [vmem:[#allocation5 + $0x468] sm:$0xff]
    %v230 = vld [vmem:[#allocation5 + $0x470] sm:$0xff]
    %v231 = vld [vmem:[#allocation5 + $0x478] sm:$0xff]
    %v232 = vld [vmem:[#allocation5 + $0x480] sm:$0xff]
    %v233 = vld [vmem:[#allocation5 + $0x488] sm:$0xff]
    %v234 = vld [vmem:[#allocation5 + $0x490] sm:$0xff]
    %v235 = vld [vmem:[#allocation5 + $0x498] sm:$0xff]
    %v236 = vld [vmem:[#allocation5 + $0x4a0] sm:$0xff]
    %v237 = vld [vmem:[#allocation5 + $0x4a8] sm:$0xff]
    %v238 = vld [vmem:[#allocation5 + $0x4b0] sm:$0xff]
    %v239 = vld [vmem:[#allocation5 + $0x4b8] sm:$0xff]
    %v240 = vld [vmem:[#allocation5 + $0x4c0] sm:$0xff]
    %v241 = vld [vmem:[#allocation5 + $0x4c8] sm:$0xff]
    %v242 = vld [vmem:[#allocation5 + $0x4d0] sm:$0xff]
    %v243 = vld [vmem:[#allocation5 + $0x4d8] sm:$0xff]
    %v244 = vld [vmem:[#allocation5 + $0x4e0] sm:$0xff]
    %v245 = vld [vmem:[#allocation5 + $0x4e8] sm:$0xff]
    %v246 = vld [vmem:[#allocation5 + $0x4f0] sm:$0xff]
    %v247 = vld [vmem:[#allocation5 + $0x4f8] sm:$0xff]
    %v248 = vld [vmem:[#allocation5 + $0x500] sm:$0xff]
    %v249 = vld [vmem:[#allocation5 + $0x508] sm:$0xff]
    %v250 = vld [vmem:[#allocation5 + $0x510] sm:$0xff]
    %v251 = vld [vmem:[#allocation5 + $0x518] sm:$0xff]
    %v252 = vld [vmem:[#allocation5 + $0x520] sm:$0xff]
    %v253 = vld [vmem:[#allocation5 + $0x528] sm:$0xff]
    %v254 = vld [vmem:[#allocation5 + $0x530] sm:$0xff]
    %v255 = vld [vmem:[#allocation5 + $0x538] sm:$0xff]
    %v256 = vld [vmem:[#allocation5 + $0x540] sm:$0xff]
    %v257 = vld [vmem:[#allocation5 + $0x548] sm:$0xff]
    %v258 = vld [vmem:[#allocation5 + $0x550] sm:$0xff]
    %v259 = vld [vmem:[#allocation5 + $0x558] sm:$0xff]
    %v260 = vld [vmem:[#allocation5 + $0x560] sm:$0xff]
    %v261 = vld [vmem:[#allocation5 + $0x568] sm:$0xff]
    %v262 = vld [vmem:[#allocation5 + $0x570] sm:$0xff]
    %v263 = vld [vmem:[#allocation5 + $0x578] sm:$0xff]
    %v264 = vld [vmem:[#allocation5 + $0x580] sm:$0xff]
    %v265 = vld [vmem:[#allocation5 + $0x588] sm:$0xff]
    %v266 = vld [vmem:[#allocation5 + $0x590] sm:$0xff]
    %v267 = vld [vmem:[#allocation5 + $0x598] sm:$0xff]
    %v268 = vld [vmem:[#allocation5 + $0x5a0] sm:$0xff]
    %v269 = vld [vmem:[#allocation5 + $0x5a8] sm:$0xff]
    %v270 = vld [vmem:[#allocation5 + $0x5b0] sm:$0xff]
    %v271 = vld [vmem:[#allocation5 + $0x5b8] sm:$0xff]
    %v272 = vld [vmem:[#allocation5 + $0x5c0] sm:$0xff]
    %v273 = vld [vmem:[#allocation5 + $0x5c8] sm:$0xff]
    %v274 = vld [vmem:[#allocation5 + $0x5d0] sm:$0xff]
    %v275 = vld [vmem:[#allocation5 + $0x5d8] sm:$0xff]
    %v276 = vld [vmem:[#allocation5 + $0x5e0] sm:$0xff]
    %v277 = vld [vmem:[#allocation5 + $0x5e8] sm:$0xff]
    %v278 = vld [vmem:[#allocation5 + $0x5f0] sm:$0xff]
    %v279 = vld [vmem:[#allocation5 + $0x5f8] sm:$0xff]
    %v280 = vld [vmem:[#allocation5 + $0x600] sm:$0xff]
    %v281 = vld [vmem:[#allocation5 + $0x608] sm:$0xff]
    %v282 = vld [vmem:[#allocation5 + $0x610] sm:$0xff]
    %v283 = vld [vmem:[#allocation5 + $0x618] sm:$0xff]
    %v284 = vld [vmem:[#allocation5 + $0x620] sm:$0xff]
    %v285 = vld [vmem:[#allocation5 + $0x628] sm:$0xff]
    %v286 = vld [vmem:[#allocation5 + $0x630] sm:$0xff]
    %v287 = vld [vmem:[#allocation5 + $0x638] sm:$0xff]
    %v288 = vld [vmem:[#allocation5 + $0x640] sm:$0xff]
    %v289 = vld [vmem:[#allocation5 + $0x648] sm:$0xff]
    %v290 = vld [vmem:[#allocation5 + $0x650] sm:$0xff]
    %v291 = vld [vmem:[#allocation5 + $0x658] sm:$0xff]
    %v292 = vld [vmem:[#allocation5 + $0x660] sm:$0xff]
    %v293 = vld [vmem:[#allocation5 + $0x668] sm:$0xff]
    %v294 = vld [vmem:[#allocation5 + $0x670] sm:$0xff]
    %v295 = vld [vmem:[#allocation5 + $0x678] sm:$0xff]
    %v296 = vld [vmem:[#allocation5 + $0x680] sm:$0xff]
    %v297 = vld [vmem:[#allocation5 + $0x688] sm:$0xff]
    %v298 = vld [vmem:[#allocation5 + $0x690] sm:$0xff]
    %v299 = vld [vmem:[#allocation5 + $0x698] sm:$0xff]
    %v300 = vld [vmem:[#allocation5 + $0x6a0] sm:$0xff]
    %v301 = vld [vmem:[#allocation5 + $0x6a8] sm:$0xff]
    %v302 = vld [vmem:[#allocation5 + $0x6b0] sm:$0xff]
    %v303 = vld [vmem:[#allocation5 + $0x6b8] sm:$0xff]
    %v304 = vld [vmem:[#allocation5 + $0x6c0] sm:$0xff]
    %v305 = vld [vmem:[#allocation5 + $0x6c8] sm:$0xff]
    %v306 = vld [vmem:[#allocation5 + $0x6d0] sm:$0xff]
    %v307 = vld [vmem:[#allocation5 + $0x6d8] sm:$0xff]
    %v308 = vld [vmem:[#allocation5 + $0x6e0] sm:$0xff]
    %v309 = vld [vmem:[#allocation5 + $0x6e8] sm:$0xff]
    %v310 = vld [vmem:[#allocation5 + $0x6f0] sm:$0xff]
    %v311 = vld [vmem:[#allocation5 + $0x6f8] sm:$0xff]
    %v312 = vld [vmem:[#allocation5 + $0x700] sm:$0xff]
    %v313 = vld [vmem:[#allocation5 + $0x708] sm:$0xff]
    %v314 = vld [vmem:[#allocation5 + $0x710] sm:$0xff]
    %v315 = vld [vmem:[#allocation5 + $0x718] sm:$0xff]
    %v316 = vld [vmem:[#allocation5 + $0x720] sm:$0xff]
    %v317 = vld [vmem:[#allocation5 + $0x728] sm:$0xff]
    %v318 = vld [vmem:[#allocation5 + $0x730] sm:$0xff]
    %v319 = vld [vmem:[#allocation5 + $0x738] sm:$0xff]
    %v320 = vld [vmem:[#allocation5 + $0x740] sm:$0xff]
    %v321 = vld [vmem:[#allocation5 + $0x748] sm:$0xff]
    %v322 = vld [vmem:[#allocation5 + $0x750] sm:$0xff]
    %v323 = vld [vmem:[#allocation5 + $0x758] sm:$0xff]
    %v324 = vld [vmem:[#allocation5 + $0x760] sm:$0xff]
    %v325 = vld [vmem:[#allocation5 + $0x768] sm:$0xff]
    %v326 = vld [vmem:[#allocation5 + $0x770] sm:$0xff]
    %v327 = vld [vmem:[#allocation5 + $0x778] sm:$0xff]
    %v328 = vld [vmem:[#allocation5 + $0x780] sm:$0xff]
    %v329 = vld [vmem:[#allocation5 + $0x788] sm:$0xff]
    %v330 = vld [vmem:[#allocation5 + $0x790] sm:$0xff]
    %v331 = vld [vmem:[#allocation5 + $0x798] sm:$0xff]
    %v332 = vld [vmem:[#allocation5 + $0x7a0] sm:$0xff]
    %v333 = vld [vmem:[#allocation5 + $0x7a8] sm:$0xff]
    %v334 = vld [vmem:[#allocation5 + $0x7b0] sm:$0xff]
    %v335 = vld [vmem:[#allocation5 + $0x7b8] sm:$0xff]
    %v336 = vld [vmem:[#allocation5 + $0x7c0] sm:$0xff]
    %v337 = vld [vmem:[#allocation5 + $0x7c8] sm:$0xff]
    %v338 = vld [vmem:[#allocation5 + $0x7d0] sm:$0xff]
    %v339 = vld [vmem:[#allocation5 + $0x7d8] sm:$0xff]
    %v340 = vld [vmem:[#allocation5 + $0x7e0] sm:$0xff]
    %v341 = vld [vmem:[#allocation5 + $0x7e8] sm:$0xff]
    %v342 = vld [vmem:[#allocation5 + $0x7f0] sm:$0xff]
    %v343 = vld [vmem:[#allocation5 + $0x7f8] sm:$0xff]
    %v344 = vld [vmem:[#allocation5 + $0x800] sm:$0xff]
    %v345 = vld [vmem:[#allocation5 + $0x808] sm:$0xff]
    %v346 = vld [vmem:[#allocation5 + $0x810] sm:$0xff]
    %v347 = vld [vmem:[#allocation5 + $0x818] sm:$0xff]
    %v348 = vld [vmem:[#allocation5 + $0x820] sm:$0xff]
    %v349 = vld [vmem:[#allocation5 + $0x828] sm:$0xff]
    %v350 = vld [vmem:[#allocation5 + $0x830] sm:$0xff]
    %v351 = vld [vmem:[#allocation5 + $0x838] sm:$0xff]
    %v352 = vld [vmem:[#allocation5 + $0x840] sm:$0xff]
    %v353 = vld [vmem:[#allocation5 + $0x848] sm:$0xff]
    %v354 = vld [vmem:[#allocation5 + $0x850] sm:$0xff]
    %v355 = vld [vmem:[#allocation5 + $0x858] sm:$0xff]
    %v356 = vld [vmem:[#allocation5 + $0x860] sm:$0xff]
    %v357 = vld [vmem:[#allocation5 + $0x868] sm:$0xff]
    %v358 = vld [vmem:[#allocation5 + $0x870] sm:$0xff]
    %v359 = vld [vmem:[#allocation5 + $0x878] sm:$0xff]
    %v360 = vld [vmem:[#allocation5 + $0x880] sm:$0xff]
    %v361 = vld [vmem:[#allocation5 + $0x888] sm:$0xff]
    %v362 = vld [vmem:[#allocation5 + $0x890] sm:$0xff]
    %v363 = vld [vmem:[#allocation5 + $0x898] sm:$0xff]
    %v364 = vld [vmem:[#allocation5 + $0x8a0] sm:$0xff]
    %v365 = vld [vmem:[#allocation5 + $0x8a8] sm:$0xff]
    %v366 = vld [vmem:[#allocation5 + $0x8b0] sm:$0xff]
    %v367 = vld [vmem:[#allocation5 + $0x8b8] sm:$0xff]
    %v368 = vld [vmem:[#allocation5 + $0x8c0] sm:$0xff]
    %v369 = vld [vmem:[#allocation5 + $0x8c8] sm:$0xff]
    %v370 = vld [vmem:[#allocation5 + $0x8d0] sm:$0xff]
    %v371 = vld [vmem:[#allocation5 + $0x8d8] sm:$0xff]
    %v372 = vld [vmem:[#allocation5 + $0x8e0] sm:$0xff]
    %v373 = vld [vmem:[#allocation5 + $0x8e8] sm:$0xff]
    %v374 = vld [vmem:[#allocation5 + $0x8f0] sm:$0xff]
    %v375 = vld [vmem:[#allocation5 + $0x8f8] sm:$0xff]
    %v376 = vld [vmem:[#allocation5 + $0x900] sm:$0xff]
    %v377 = vld [vmem:[#allocation5 + $0x908] sm:$0xff]
    %v378 = vld [vmem:[#allocation5 + $0x910] sm:$0xff]
    %v379 = vld [vmem:[#allocation5 + $0x918] sm:$0xff]
    %v380 = vld [vmem:[#allocation5 + $0x920] sm:$0xff]
    %v381 = vld [vmem:[#allocation5 + $0x928] sm:$0xff]
    %v382 = vld [vmem:[#allocation5 + $0x930] sm:$0xff]
    %v383 = vld [vmem:[#allocation5 + $0x938] sm:$0xff]
    %v384 = vld [vmem:[#allocation5 + $0x940] sm:$0xff]
    %v385 = vld [vmem:[#allocation5 + $0x948] sm:$0xff]
    %v386 = vld [vmem:[#allocation5 + $0x950] sm:$0xff]
    %v387 = vld [vmem:[#allocation5 + $0x958] sm:$0xff]
    %v388 = vld [vmem:[#allocation5 + $0x960] sm:$0xff]
    %v389 = vld [vmem:[#allocation5 + $0x968] sm:$0xff]
    %v390 = vld [vmem:[#allocation5 + $0x970] sm:$0xff]
    %v391 = vld [vmem:[#allocation5 + $0x978] sm:$0xff]
    %v392 = vld [vmem:[#allocation5 + $0x980] sm:$0xff]
    %v393 = vld [vmem:[#allocation5 + $0x988] sm:$0xff]
    %v394 = vld [vmem:[#allocation5 + $0x990] sm:$0xff]
    %v395 = vld [vmem:[#allocation5 + $0x998] sm:$0xff]
    %v396 = vld [vmem:[#allocation5 + $0x9a0] sm:$0xff]
    %v397 = vld [vmem:[#allocation5 + $0x9a8] sm:$0xff]
    %v398 = vld [vmem:[#allocation5 + $0x9b0] sm:$0xff]
    %v399 = vld [vmem:[#allocation5 + $0x9b8] sm:$0xff]
    %v400 = vld [vmem:[#allocation5 + $0x9c0] sm:$0xff]
    %v401 = vld [vmem:[#allocation5 + $0x9c8] sm:$0xff]
    %v402 = vld [vmem:[#allocation5 + $0x9d0] sm:$0xff]
    %v403 = vld [vmem:[#allocation5 + $0x9d8] sm:$0xff]
    %v404 = vld [vmem:[#allocation5 + $0x9e0] sm:$0xff]
    %v405 = vld [vmem:[#allocation5 + $0x9e8] sm:$0xff]
    %v406 = vld [vmem:[#allocation5 + $0x9f0] sm:$0xff]
    %v407 = vld [vmem:[#allocation5 + $0x9f8] sm:$0xff]
    %v408 = vld [vmem:[#allocation5 + $0xa00] sm:$0xff]
    %v409 = vld [vmem:[#allocation5 + $0xa08] sm:$0xff]
    %v410 = vld [vmem:[#allocation5 + $0xa10] sm:$0xff]
    %v411 = vld [vmem:[#allocation5 + $0xa18] sm:$0xff]
    %v412 = vld [vmem:[#allocation5 + $0xa20] sm:$0xff]
    %v413 = vld [vmem:[#allocation5 + $0xa28] sm:$0xff]
    %v414 = vld [vmem:[#allocation5 + $0xa30] sm:$0xff]
    %v415 = vld [vmem:[#allocation5 + $0xa38] sm:$0xff]
    %v416 = vld [vmem:[#allocation5 + $0xa40] sm:$0xff]
    %v417 = vld [vmem:[#allocation5 + $0xa48] sm:$0xff]
    %v418 = vld [vmem:[#allocation5 + $0xa50] sm:$0xff]
    %v419 = vld [vmem:[#allocation5 + $0xa58] sm:$0xff]
    %v420 = vld [vmem:[#allocation5 + $0xa60] sm:$0xff]
    %v421 = vld [vmem:[#allocation5 + $0xa68] sm:$0xff]
    %v422 = vld [vmem:[#allocation5 + $0xa70] sm:$0xff]
    %v423 = vld [vmem:[#allocation5 + $0xa78] sm:$0xff]
    %v424 = vld [vmem:[#allocation5 + $0xa80] sm:$0xff]
    %v425 = vld [vmem:[#allocation5 + $0xa88] sm:$0xff]
    %v426 = vld [vmem:[#allocation5 + $0xa90] sm:$0xff]
    %v427 = vld [vmem:[#allocation5 + $0xa98] sm:$0xff]
    %v428 = vld [vmem:[#allocation5 + $0xaa0] sm:$0xff]
    %v429 = vld [vmem:[#allocation5 + $0xaa8] sm:$0xff]
    %v430 = vld [vmem:[#allocation5 + $0xab0] sm:$0xff]
    %v431 = vld [vmem:[#allocation5 + $0xab8] sm:$0xff]
    %v432 = vld [vmem:[#allocation5 + $0xac0] sm:$0xff]
    %v433 = vld [vmem:[#allocation5 + $0xac8] sm:$0xff]
    %v434 = vld [vmem:[#allocation5 + $0xad0] sm:$0xff]
    %v435 = vld [vmem:[#allocation5 + $0xad8] sm:$0xff]
    %v436 = vld [vmem:[#allocation5 + $0xae0] sm:$0xff]
    %v437 = vld [vmem:[#allocation5 + $0xae8] sm:$0xff]
    %v438 = vld [vmem:[#allocation5 + $0xaf0] sm:$0xff]
    %v439 = vld [vmem:[#allocation5 + $0xaf8] sm:$0xff]
    %v440 = vld [vmem:[#allocation5 + $0xb00] sm:$0xff]
    %v441 = vld [vmem:[#allocation5 + $0xb08] sm:$0xff]
    %v442 = vld [vmem:[#allocation5 + $0xb10] sm:$0xff]
    %v443 = vld [vmem:[#allocation5 + $0xb18] sm:$0xff]
    %v444 = vld [vmem:[#allocation5 + $0xb20] sm:$0xff]
    %v445 = vld [vmem:[#allocation5 + $0xb28] sm:$0xff]
    %v446 = vld [vmem:[#allocation5 + $0xb30] sm:$0xff]
    %v447 = vld [vmem:[#allocation5 + $0xb38] sm:$0xff]
    %v448 = vld [vmem:[#allocation5 + $0xb40] sm:$0xff]
    %v449 = vld [vmem:[#allocation5 + $0xb48] sm:$0xff]
    %v450 = vld [vmem:[#allocation5 + $0xb50] sm:$0xff]
    %v451 = vld [vmem:[#allocation5 + $0xb58] sm:$0xff]
    %v452 = vld [vmem:[#allocation5 + $0xb60] sm:$0xff]
    %v453 = vld [vmem:[#allocation5 + $0xb68] sm:$0xff]
    %v454 = vld [vmem:[#allocation5 + $0xb70] sm:$0xff]
    %v455 = vld [vmem:[#allocation5 + $0xb78] sm:$0xff]
    %v456 = vld [vmem:[#allocation5 + $0xb80] sm:$0xff]
    %v457 = vld [vmem:[#allocation5 + $0xb88] sm:$0xff]
    %v458 = vld [vmem:[#allocation5 + $0xb90] sm:$0xff]
    %v459 = vld [vmem:[#allocation5 + $0xb98] sm:$0xff]
    %v460 = vld [vmem:[#allocation5 + $0xba0] sm:$0xff]
    %v461 = vld [vmem:[#allocation5 + $0xba8] sm:$0xff]
    %v462 = vld [vmem:[#allocation5 + $0xbb0] sm:$0xff]
    %v463 = vld [vmem:[#allocation5 + $0xbb8] sm:$0xff]
    %v464 = vld [vmem:[#allocation5 + $0xbc0] sm:$0xff]
    %v465 = vld [vmem:[#allocation5 + $0xbc8] sm:$0xff]
    %v466 = vld [vmem:[#allocation5 + $0xbd0] sm:$0xff]
    %v467 = vld [vmem:[#allocation5 + $0xbd8] sm:$0xff]
    %v468 = vld [vmem:[#allocation5 + $0xbe0] sm:$0xff]
    %v469 = vld [vmem:[#allocation5 + $0xbe8] sm:$0xff]
    %v470 = vld [vmem:[#allocation5 + $0xbf0] sm:$0xff]
    %v471 = vld [vmem:[#allocation5 + $0xbf8] sm:$0xff]
    %v472 = vld [vmem:[#allocation5 + $0xc00] sm:$0xff]
    %v473 = vld [vmem:[#allocation5 + $0xc08] sm:$0xff]
    %v474 = vld [vmem:[#allocation5 + $0xc10] sm:$0xff]
    %v475 = vld [vmem:[#allocation5 + $0xc18] sm:$0xff]
    %v476 = vld [vmem:[#allocation5 + $0xc20] sm:$0xff]
    %v477 = vld [vmem:[#allocation5 + $0xc28] sm:$0xff]
    %v478 = vld [vmem:[#allocation5 + $0xc30] sm:$0xff]
    %v479 = vld [vmem:[#allocation5 + $0xc38] sm:$0xff]
    %v480 = vld [vmem:[#allocation5 + $0xc40] sm:$0xff]
    %v481 = vld [vmem:[#allocation5 + $0xc48] sm:$0xff]
    %v482 = vld [vmem:[#allocation5 + $0xc50] sm:$0xff]
    %v483 = vld [vmem:[#allocation5 + $0xc58] sm:$0xff]
    %v484 = vld [vmem:[#allocation5 + $0xc60] sm:$0xff]
    %v485 = vld [vmem:[#allocation5 + $0xc68] sm:$0xff]
    %v486 = vld [vmem:[#allocation5 + $0xc70] sm:$0xff]
    %v487 = vld [vmem:[#allocation5 + $0xc78] sm:$0xff]
    %v488 = vld [vmem:[#allocation5 + $0xc80] sm:$0xff]
    %v489 = vld [vmem:[#allocation5 + $0xc88] sm:$0xff]
    %v490 = vld [vmem:[#allocation5 + $0xc90] sm:$0xff]
    %v491 = vld [vmem:[#allocation5 + $0xc98] sm:$0xff]
    %v492 = vld [vmem:[#allocation5 + $0xca0] sm:$0xff]
    %v493 = vld [vmem:[#allocation5 + $0xca8] sm:$0xff]
    %v494 = vld [vmem:[#allocation5 + $0xcb0] sm:$0xff]
    %v495 = vld [vmem:[#allocation5 + $0xcb8] sm:$0xff]
    %v496 = vld [vmem:[#allocation5 + $0xcc0] sm:$0xff]
    %v497 = vld [vmem:[#allocation5 + $0xcc8] sm:$0xff]
    %v498 = vld [vmem:[#allocation5 + $0xcd0] sm:$0xff]
    %v499 = vld [vmem:[#allocation5 + $0xcd8] sm:$0xff]
    %v500 = vld [vmem:[#allocation5 + $0xce0] sm:$0xff]
    %v501 = vld [vmem:[#allocation5 + $0xce8] sm:$0xff]
    %v502 = vld [vmem:[#allocation5 + $0xcf0] sm:$0xff]
    %v503 = vld [vmem:[#allocation5 + $0xcf8] sm:$0xff]
    %v504 = vld [vmem:[#allocation5 + $0xd00] sm:$0xff]
    %v505 = vld [vmem:[#allocation5 + $0xd08] sm:$0xff]
    %v506 = vld [vmem:[#allocation5 + $0xd10] sm:$0xff]
    %v507 = vld [vmem:[#allocation5 + $0xd18] sm:$0xff]
    %v508 = vld [vmem:[#allocation5 + $0xd20] sm:$0xff]
    %v509 = vld [vmem:[#allocation5 + $0xd28] sm:$0xff]
    %v510 = vld [vmem:[#allocation5 + $0xd30] sm:$0xff]
    %v511 = vld [vmem:[#allocation5 + $0xd38] sm:$0xff]
    %v512 = vld [vmem:[#allocation5 + $0xd40] sm:$0xff]
    %v513 = vld [vmem:[#allocation5 + $0xd48] sm:$0xff]
    %v514 = vld [vmem:[#allocation5 + $0xd50] sm:$0xff]
    %v515 = vld [vmem:[#allocation5 + $0xd58] sm:$0xff]
    %v516 = vld [vmem:[#allocation5 + $0xd60] sm:$0xff]
    %v517 = vld [vmem:[#allocation5 + $0xd68] sm:$0xff]
    %v518 = vld [vmem:[#allocation5 + $0xd70] sm:$0xff]
    %v519 = vld [vmem:[#allocation5 + $0xd78] sm:$0xff]
    %v520 = vld [vmem:[#allocation5 + $0xd80] sm:$0xff]
    %v521 = vld [vmem:[#allocation5 + $0xd88] sm:$0xff]
    %v522 = vld [vmem:[#allocation5 + $0xd90] sm:$0xff]
    %v523 = vld [vmem:[#allocation5 + $0xd98] sm:$0xff]
    %v524 = vld [vmem:[#allocation5 + $0xda0] sm:$0xff]
    %v525 = vld [vmem:[#allocation5 + $0xda8] sm:$0xff]
    %v526 = vld [vmem:[#allocation5 + $0xdb0] sm:$0xff]
    %v527 = vld [vmem:[#allocation5 + $0xdb8] sm:$0xff]
    %v528 = vld [vmem:[#allocation5 + $0xdc0] sm:$0xff]
    %v529 = vld [vmem:[#allocation5 + $0xdc8] sm:$0xff]
    %v530 = vld [vmem:[#allocation5 + $0xdd0] sm:$0xff]
    %v531 = vld [vmem:[#allocation5 + $0xdd8] sm:$0xff]
    %v532 = vld [vmem:[#allocation5 + $0xde0] sm:$0xff]
    %v533 = vld [vmem:[#allocation5 + $0xde8] sm:$0xff]
    %v534 = vld [vmem:[#allocation5 + $0xdf0] sm:$0xff]
    %v535 = vld [vmem:[#allocation5 + $0xdf8] sm:$0xff]
    %v536 = vld [vmem:[#allocation5 + $0xe00] sm:$0xff]
    %v537 = vld [vmem:[#allocation5 + $0xe08] sm:$0xff]
    %v538 = vld [vmem:[#allocation5 + $0xe10] sm:$0xff]
    %v539 = vld [vmem:[#allocation5 + $0xe18] sm:$0xff]
    %v540 = vld [vmem:[#allocation5 + $0xe20] sm:$0xff]
    %v541 = vld [vmem:[#allocation5 + $0xe28] sm:$0xff]
    %v542 = vld [vmem:[#allocation5 + $0xe30] sm:$0xff]
    %v543 = vld [vmem:[#allocation5 + $0xe38] sm:$0xff]
    %v544 = vld [vmem:[#allocation5 + $0xe40] sm:$0xff]
    %v545 = vld [vmem:[#allocation5 + $0xe48] sm:$0xff]
    %v546 = vld [vmem:[#allocation5 + $0xe50] sm:$0xff]
    %v547 = vld [vmem:[#allocation5 + $0xe58] sm:$0xff]
    %v548 = vld [vmem:[#allocation5 + $0xe60] sm:$0xff]
    %v549 = vld [vmem:[#allocation5 + $0xe68] sm:$0xff]
    %v550 = vld [vmem:[#allocation5 + $0xe70] sm:$0xff]
    %v551 = vld [vmem:[#allocation5 + $0xe78] sm:$0xff]
    %v552 = vld [vmem:[#allocation5 + $0xe80] sm:$0xff]
    %v553 = vld [vmem:[#allocation5 + $0xe88] sm:$0xff]
    %v554 = vld [vmem:[#allocation5 + $0xe90] sm:$0xff]
    %v555 = vld [vmem:[#allocation5 + $0xe98] sm:$0xff]
    %v556 = vld [vmem:[#allocation5 + $0xea0] sm:$0xff]
    %v557 = vld [vmem:[#allocation5 + $0xea8] sm:$0xff]
    %v558 = vld [vmem:[#allocation5 + $0xeb0] sm:$0xff]
    %v559 = vld [vmem:[#allocation5 + $0xeb8] sm:$0xff]
    %v560 = vld [vmem:[#allocation5 + $0xec0] sm:$0xff]
    %v561 = vld [vmem:[#allocation5 + $0xec8] sm:$0xff]
    %v562 = vld [vmem:[#allocation5 + $0xed0] sm:$0xff]
    %v563 = vld [vmem:[#allocation5 + $0xed8] sm:$0xff]
    %v564 = vld [vmem:[#allocation5 + $0xee0] sm:$0xff]
    %v565 = vld [vmem:[#allocation5 + $0xee8] sm:$0xff]
    %v566 = vld [vmem:[#allocation5 + $0xef0] sm:$0xff]
    %v567 = vld [vmem:[#allocation5 + $0xef8] sm:$0xff]
    %v568 = vld [vmem:[#allocation5 + $0xf00] sm:$0xff]
    %v569 = vld [vmem:[#allocation5 + $0xf08] sm:$0xff]
    %v570 = vld [vmem:[#allocation5 + $0xf10] sm:$0xff]
    %v571 = vld [vmem:[#allocation5 + $0xf18] sm:$0xff]
    %v572 = vld [vmem:[#allocation5 + $0xf20] sm:$0xff]
    %v573 = vld [vmem:[#allocation5 + $0xf28] sm:$0xff]
    %v574 = vld [vmem:[#allocation5 + $0xf30] sm:$0xff]
    %v575 = vld [vmem:[#allocation5 + $0xf38] sm:$0xff]
    %v576 = vld [vmem:[#allocation5 + $0xf40] sm:$0xff]
    %v577 = vld [vmem:[#allocation5 + $0xf48] sm:$0xff]
    %v578 = vld [vmem:[#allocation5 + $0xf50] sm:$0xff]
    %v579 = vld [vmem:[#allocation5 + $0xf58] sm:$0xff]
    %v580 = vld [vmem:[#allocation5 + $0xf60] sm:$0xff]
    %v581 = vld [vmem:[#allocation5 + $0xf68] sm:$0xff]
    %v582 = vld [vmem:[#allocation5 + $0xf70] sm:$0xff]
    %v583 = vld [vmem:[#allocation5 + $0xf78] sm:$0xff]
    %v584 = vld [vmem:[#allocation5 + $0xf80] sm:$0xff]
    %v585 = vld [vmem:[#allocation5 + $0xf88] sm:$0xff]
    %v586 = vld [vmem:[#allocation5 + $0xf90] sm:$0xff]
    %v587 = vld [vmem:[#allocation5 + $0xf98] sm:$0xff]
    %v588 = vld [vmem:[#allocation5 + $0xfa0] sm:$0xff]
    %v589 = vld [vmem:[#allocation5 + $0xfa8] sm:$0xff]
    %v590 = vld [vmem:[#allocation5 + $0xfb0] sm:$0xff]
    %v591 = vld [vmem:[#allocation5 + $0xfb8] sm:$0xff]
    %v592 = vld [vmem:[#allocation5 + $0xfc0] sm:$0xff]
    %v593 = vld [vmem:[#allocation5 + $0xfc8] sm:$0xff]
    %v594 = vld [vmem:[#allocation5 + $0xfd0] sm:$0xff]
    %v595 = vld [vmem:[#allocation5 + $0xfd8] sm:$0xff]
    %v596 = vld [vmem:[#allocation5 + $0xfe0] sm:$0xff]
    %v597 = vld [vmem:[#allocation5 + $0xfe8] sm:$0xff]
    %v598 = vld [vmem:[#allocation5 + $0xff0] sm:$0xff]
    %v599 = vld [vmem:[#allocation5 + $0xff8] sm:$0xff]
    %v600 = vld [vmem:[#allocation5 + $0x1000] sm:$0xff]
    %v601 = vld [vmem:[#allocation5 + $0x1008] sm:$0xff]
    %v602 = vld [vmem:[#allocation5 + $0x1010] sm:$0xff]
    %v603 = vld [vmem:[#allocation5 + $0x1018] sm:$0xff]
    %v604 = vld [vmem:[#allocation5 + $0x1020] sm:$0xff]
    %v605 = vld [vmem:[#allocation5 + $0x1028] sm:$0xff]
    %v606 = vld [vmem:[#allocation5 + $0x1030] sm:$0xff]
    %v607 = vld [vmem:[#allocation5 + $0x1038] sm:$0xff]
    %v608 = vld [vmem:[#allocation5 + $0x1040] sm:$0xff]
    %v609 = vld [vmem:[#allocation5 + $0x1048] sm:$0xff]
    %v610 = vld [vmem:[#allocation5 + $0x1050] sm:$0xff]
    %v611 = vld [vmem:[#allocation5 + $0x1058] sm:$0xff]
    %v612 = vld [vmem:[#allocation5 + $0x1060] sm:$0xff]
    %v613 = vld [vmem:[#allocation5 + $0x1068] sm:$0xff]
    %v614 = vld [vmem:[#allocation5 + $0x1070] sm:$0xff]
    %v615 = vld [vmem:[#allocation5 + $0x1078] sm:$0xff]
    %v616 = vld [vmem:[#allocation5 + $0x1080] sm:$0xff]
    %v617 = vld [vmem:[#allocation5 + $0x1088] sm:$0xff]
    %v618 = vld [vmem:[#allocation5 + $0x1090] sm:$0xff]
    %v619 = vld [vmem:[#allocation5 + $0x1098] sm:$0xff]
    %v620 = vld [vmem:[#allocation5 + $0x10a0] sm:$0xff]
    %v621 = vld [vmem:[#allocation5 + $0x10a8] sm:$0xff]
    %v622 = vld [vmem:[#allocation5 + $0x10b0] sm:$0xff]
    %v623 = vld [vmem:[#allocation5 + $0x10b8] sm:$0xff]
    %v624 = vld [vmem:[#allocation5 + $0x10c0] sm:$0xff]
    %v625 = vld [vmem:[#allocation5 + $0x10c8] sm:$0xff]
    %v626 = vld [vmem:[#allocation5 + $0x10d0] sm:$0xff]
    %v627 = vld [vmem:[#allocation5 + $0x10d8] sm:$0xff]
    %v628 = vld [vmem:[#allocation5 + $0x10e0] sm:$0xff]
    %v629 = vld [vmem:[#allocation5 + $0x10e8] sm:$0xff]
    %v630 = vld [vmem:[#allocation5 + $0x10f0] sm:$0xff]
    %v631 = vld [vmem:[#allocation5 + $0x10f8] sm:$0xff]
    %v632 = vld [vmem:[#allocation5 + $0x1100] sm:$0xff]
    %v633 = vld [vmem:[#allocation5 + $0x1108] sm:$0xff]
    %v634 = vld [vmem:[#allocation5 + $0x1110] sm:$0xff]
    %v635 = vld [vmem:[#allocation5 + $0x1118] sm:$0xff]
    %v636 = vld [vmem:[#allocation5 + $0x1120] sm:$0xff]
    %v637 = vld [vmem:[#allocation5 + $0x1128] sm:$0xff]
    %v638 = vld [vmem:[#allocation5 + $0x1130] sm:$0xff]
    %v639 = vld [vmem:[#allocation5 + $0x1138] sm:$0xff]
    %v640 = vld [vmem:[#allocation5 + $0x1140] sm:$0xff]
    %v641 = vld [vmem:[#allocation5 + $0x1148] sm:$0xff]
    %v642 = vld [vmem:[#allocation5 + $0x1150] sm:$0xff]
    %v643 = vld [vmem:[#allocation5 + $0x1158] sm:$0xff]
    %v644 = vld [vmem:[#allocation5 + $0x1160] sm:$0xff]
    %v645 = vld [vmem:[#allocation5 + $0x1168] sm:$0xff]
    %v646 = vld [vmem:[#allocation5 + $0x1170] sm:$0xff]
    %v647 = vld [vmem:[#allocation5 + $0x1178] sm:$0xff]
    %v648 = vld [vmem:[#allocation5 + $0x1180] sm:$0xff]
    %v649 = vld [vmem:[#allocation5 + $0x1188] sm:$0xff]
    %v650 = vld [vmem:[#allocation5 + $0x1190] sm:$0xff]
    %v651 = vld [vmem:[#allocation5 + $0x1198] sm:$0xff]
    %v652 = vld [vmem:[#allocation5 + $0x11a0] sm:$0xff]
    %v653 = vld [vmem:[#allocation5 + $0x11a8] sm:$0xff]
    %v654 = vld [vmem:[#allocation5 + $0x11b0] sm:$0xff]
    %v655 = vld [vmem:[#allocation5 + $0x11b8] sm:$0xff]
    %v656 = vld [vmem:[#allocation5 + $0x11c0] sm:$0xff]
    %v657 = vld [vmem:[#allocation5 + $0x11c8] sm:$0xff]
    %v658 = vld [vmem:[#allocation5 + $0x11d0] sm:$0xff]
    %v659 = vld [vmem:[#allocation5 + $0x11d8] sm:$0xff]
    %v660 = vld [vmem:[#allocation5 + $0x11e0] sm:$0xff]
    %v661 = vld [vmem:[#allocation5 + $0x11e8] sm:$0xff]
    %v662 = vld [vmem:[#allocation5 + $0x11f0] sm:$0xff]
    %v663 = vld [vmem:[#allocation5 + $0x11f8] sm:$0xff]
    %v664 = vld [vmem:[#allocation5 + $0x1200] sm:$0xff]
    %v665 = vld [vmem:[#allocation5 + $0x1208] sm:$0xff]
    %v666 = vld [vmem:[#allocation5 + $0x1210] sm:$0xff]
    %v667 = vld [vmem:[#allocation5 + $0x1218] sm:$0xff]
    %v668 = vld [vmem:[#allocation5 + $0x1220] sm:$0xff]
    %v669 = vld [vmem:[#allocation5 + $0x1228] sm:$0xff]
    %v670 = vld [vmem:[#allocation5 + $0x1230] sm:$0xff]
    %v671 = vld [vmem:[#allocation5 + $0x1238] sm:$0xff]
    %v672 = vld [vmem:[#allocation5 + $0x1240] sm:$0xff]
    %v673 = vld [vmem:[#allocation5 + $0x1248] sm:$0xff]
    %v674 = vld [vmem:[#allocation5 + $0x1250] sm:$0xff]
    %v675 = vld [vmem:[#allocation5 + $0x1258] sm:$0xff]
    %v676 = vld [vmem:[#allocation5 + $0x1260] sm:$0xff]
    %v677 = vld [vmem:[#allocation5 + $0x1268] sm:$0xff]
    %v678 = vld [vmem:[#allocation5 + $0x1270] sm:$0xff]
    %v679 = vld [vmem:[#allocation5 + $0x1278] sm:$0xff]
    %v680 = vld [vmem:[#allocation5 + $0x1280] sm:$0xff]
    %v681 = vld [vmem:[#allocation5 + $0x1288] sm:$0xff]
    %v682 = vld [vmem:[#allocation5 + $0x1290] sm:$0xff]
    %v683 = vld [vmem:[#allocation5 + $0x1298] sm:$0xff]
    %v684 = vld [vmem:[#allocation5 + $0x12a0] sm:$0xff]
    %v685 = vld [vmem:[#allocation5 + $0x12a8] sm:$0xff]
    %v686 = vld [vmem:[#allocation5 + $0x12b0] sm:$0xff]
    %v687 = vld [vmem:[#allocation5 + $0x12b8] sm:$0xff]
    %v688 = vld [vmem:[#allocation5 + $0x12c0] sm:$0xff]
    %v689 = vld [vmem:[#allocation5 + $0x12c8] sm:$0xff]
    %v690 = vld [vmem:[#allocation5 + $0x12d0] sm:$0xff]
    %v691 = vld [vmem:[#allocation5 + $0x12d8] sm:$0xff]
    %v692 = vld [vmem:[#allocation5 + $0x12e0] sm:$0xff]
    %v693 = vld [vmem:[#allocation5 + $0x12e8] sm:$0xff]
    %v694 = vld [vmem:[#allocation5 + $0x12f0] sm:$0xff]
    %v695 = vld [vmem:[#allocation5 + $0x12f8] sm:$0xff]
    %v696 = vld [vmem:[#allocation5 + $0x1300] sm:$0xff]
    %v697 = vld [vmem:[#allocation5 + $0x1308] sm:$0xff]
    %v698 = vld [vmem:[#allocation5 + $0x1310] sm:$0xff]
    %v699 = vld [vmem:[#allocation5 + $0x1318] sm:$0xff]
    %v700 = vld [vmem:[#allocation5 + $0x1320] sm:$0xff]
    %v701 = vld [vmem:[#allocation5 + $0x1328] sm:$0xff]
    %v702 = vld [vmem:[#allocation5 + $0x1330] sm:$0xff]
    %v703 = vld [vmem:[#allocation5 + $0x1338] sm:$0xff]
    %v704 = vld [vmem:[#allocation5 + $0x1340] sm:$0xff]
    %v705 = vld [vmem:[#allocation5 + $0x1348] sm:$0xff]
    %v706 = vld [vmem:[#allocation5 + $0x1350] sm:$0xff]
    %v707 = vld [vmem:[#allocation5 + $0x1358] sm:$0xff]
    %v708 = vld [vmem:[#allocation5 + $0x1360] sm:$0xff]
    %v709 = vld [vmem:[#allocation5 + $0x1368] sm:$0xff]
    %v710 = vld [vmem:[#allocation5 + $0x1370] sm:$0xff]
    %v711 = vld [vmem:[#allocation5 + $0x1378] sm:$0xff]
    %v712 = vld [vmem:[#allocation5 + $0x1380] sm:$0xff]
    %v713 = vld [vmem:[#allocation5 + $0x1388] sm:$0xff]
    %v714 = vld [vmem:[#allocation5 + $0x1390] sm:$0xff]
    %v715 = vld [vmem:[#allocation5 + $0x1398] sm:$0xff]
    %v716 = vld [vmem:[#allocation5 + $0x13a0] sm:$0xff]
    %v717 = vld [vmem:[#allocation5 + $0x13a8] sm:$0xff]
    %v718 = vld [vmem:[#allocation5 + $0x13b0] sm:$0xff]
    %v719 = vld [vmem:[#allocation5 + $0x13b8] sm:$0xff]
    %v720 = vld [vmem:[#allocation5 + $0x13c0] sm:$0xff]
    %v721 = vld [vmem:[#allocation5 + $0x13c8] sm:$0xff]
    %v722 = vld [vmem:[#allocation5 + $0x13d0] sm:$0xff]
    %v723 = vld [vmem:[#allocation5 + $0x13d8] sm:$0xff]
    %v724 = vld [vmem:[#allocation5 + $0x13e0] sm:$0xff]
    %v725 = vld [vmem:[#allocation5 + $0x13e8] sm:$0xff]
    %v726 = vld [vmem:[#allocation5 + $0x13f0] sm:$0xff]
    %v727 = vld [vmem:[#allocation5 + $0x13f8] sm:$0xff]
    %v728 = vld [vmem:[#allocation5 + $0x1400] sm:$0xff]
    %v729 = vld [vmem:[#allocation5 + $0x1408] sm:$0xff]
    %v730 = vld [vmem:[#allocation5 + $0x1410] sm:$0xff]
    %v731 = vld [vmem:[#allocation5 + $0x1418] sm:$0xff]
    %v732 = vld [vmem:[#allocation5 + $0x1420] sm:$0xff]
    %v733 = vld [vmem:[#allocation5 + $0x1428] sm:$0xff]
    %v734 = vld [vmem:[#allocation5 + $0x1430] sm:$0xff]
    %v735 = vld [vmem:[#allocation5 + $0x1438] sm:$0xff]
    %v736 = vld [vmem:[#allocation5 + $0x1440] sm:$0xff]
    %v737 = vld [vmem:[#allocation5 + $0x1448] sm:$0xff]
    %v738 = vld [vmem:[#allocation5 + $0x1450] sm:$0xff]
    %v739 = vld [vmem:[#allocation5 + $0x1458] sm:$0xff]
    %v740 = vld [vmem:[#allocation5 + $0x1460] sm:$0xff]
    %v741 = vld [vmem:[#allocation5 + $0x1468] sm:$0xff]
    %v742 = vld [vmem:[#allocation5 + $0x1470] sm:$0xff]
    %v743 = vld [vmem:[#allocation5 + $0x1478] sm:$0xff]
    %v744 = vld [vmem:[#allocation5 + $0x1480] sm:$0xff]
    %v745 = vld [vmem:[#allocation5 + $0x1488] sm:$0xff]
    %v746 = vld [vmem:[#allocation5 + $0x1490] sm:$0xff]
    %v747 = vld [vmem:[#allocation5 + $0x1498] sm:$0xff]
    %v748 = vld [vmem:[#allocation5 + $0x14a0] sm:$0xff]
    %v749 = vld [vmem:[#allocation5 + $0x14a8] sm:$0xff]
    %v750 = vld [vmem:[#allocation5 + $0x14b0] sm:$0xff]
    %v751 = vld [vmem:[#allocation5 + $0x14b8] sm:$0xff]
    %v752 = vld [vmem:[#allocation5 + $0x14c0] sm:$0xff]
    %v753 = vld [vmem:[#allocation5 + $0x14c8] sm:$0xff]
    %v754 = vld [vmem:[#allocation5 + $0x14d0] sm:$0xff]
    %v755 = vld [vmem:[#allocation5 + $0x14d8] sm:$0xff]
    %v756 = vld [vmem:[#allocation5 + $0x14e0] sm:$0xff]
    %v757 = vld [vmem:[#allocation5 + $0x14e8] sm:$0xff]
    %v758 = vld [vmem:[#allocation5 + $0x14f0] sm:$0xff]
    %v759 = vld [vmem:[#allocation5 + $0x14f8] sm:$0xff]
    %v760 = vld [vmem:[#allocation5 + $0x1500] sm:$0xff]
    %v761 = vld [vmem:[#allocation5 + $0x1508] sm:$0xff]
    %v762 = vld [vmem:[#allocation5 + $0x1510] sm:$0xff]
    %v763 = vld [vmem:[#allocation5 + $0x1518] sm:$0xff]
    %v764 = vld [vmem:[#allocation5 + $0x1520] sm:$0xff]
    %v765 = vld [vmem:[#allocation5 + $0x1528] sm:$0xff]
    %v766 = vld [vmem:[#allocation5 + $0x1530] sm:$0xff]
    %v767 = vld [vmem:[#allocation5 + $0x1538] sm:$0xff]
    %v768 = vld [vmem:[#allocation5 + $0x1540] sm:$0xff]
    %v769 = vld [vmem:[#allocation5 + $0x1548] sm:$0xff]
    %v770 = vld [vmem:[#allocation5 + $0x1550] sm:$0xff]
    %v771 = vld [vmem:[#allocation5 + $0x1558] sm:$0xff]
    %v772 = vld [vmem:[#allocation5 + $0x1560] sm:$0xff]
    %v773 = vld [vmem:[#allocation5 + $0x1568] sm:$0xff]
    %v774 = vld [vmem:[#allocation5 + $0x1570] sm:$0xff]
    %v775 = vld [vmem:[#allocation5 + $0x1578] sm:$0xff]
    %v776 = vld [vmem:[#allocation5 + $0x1580] sm:$0xff]
    %v777 = vld [vmem:[#allocation5 + $0x1588] sm:$0xff]
    %v778 = vld [vmem:[#allocation5 + $0x1590] sm:$0xff]
    %v779 = vld [vmem:[#allocation5 + $0x1598] sm:$0xff]
    %v780 = vld [vmem:[#allocation5 + $0x15a0] sm:$0xff]
    %v781 = vld [vmem:[#allocation5 + $0x15a8] sm:$0xff]
    %v782 = vld [vmem:[#allocation5 + $0x15b0] sm:$0xff]
    %v783 = vld [vmem:[#allocation5 + $0x15b8] sm:$0xff]
    %v784 = vld [vmem:[#allocation5 + $0x15c0] sm:$0xff]
    %v785 = vld [vmem:[#allocation5 + $0x15c8] sm:$0xff]
    %v786 = vld [vmem:[#allocation5 + $0x15d0] sm:$0xff]
    %v787 = vld [vmem:[#allocation5 + $0x15d8] sm:$0xff]
    %v788 = vld [vmem:[#allocation5 + $0x15e0] sm:$0xff]
    %v789 = vld [vmem:[#allocation5 + $0x15e8] sm:$0xff]
    %v790 = vld [vmem:[#allocation5 + $0x15f0] sm:$0xff]
    %v791 = vld [vmem:[#allocation5 + $0x15f8] sm:$0xff]
    %v792 = vld [vmem:[#allocation5 + $0x1600] sm:$0xff]
    %v793 = vld [vmem:[#allocation5 + $0x1608] sm:$0xff]
    %v794 = vld [vmem:[#allocation5 + $0x1610] sm:$0xff]
    %v795 = vld [vmem:[#allocation5 + $0x1618] sm:$0xff]
    %v796 = vld [vmem:[#allocation5 + $0x1620] sm:$0xff]
    %v797 = vld [vmem:[#allocation5 + $0x1628] sm:$0xff]
    %v798 = vld [vmem:[#allocation5 + $0x1630] sm:$0xff]
    %v799 = vld [vmem:[#allocation5 + $0x1638] sm:$0xff]
    %v800 = vld [vmem:[#allocation5 + $0x1640] sm:$0xff]
    %v801 = vld [vmem:[#allocation5 + $0x1648] sm:$0xff]
    %v802 = vld [vmem:[#allocation5 + $0x1650] sm:$0xff]
    %v803 = vld [vmem:[#allocation5 + $0x1658] sm:$0xff]
    %v804 = vld [vmem:[#allocation5 + $0x1660] sm:$0xff]
    %v805 = vld [vmem:[#allocation5 + $0x1668] sm:$0xff]
    %v806 = vld [vmem:[#allocation5 + $0x1670] sm:$0xff]
    %v807 = vld [vmem:[#allocation5 + $0x1678] sm:$0xff]
    %v808 = vld [vmem:[#allocation5 + $0x1680] sm:$0xff]
    %v809 = vld [vmem:[#allocation5 + $0x1688] sm:$0xff]
    %v810 = vld [vmem:[#allocation5 + $0x1690] sm:$0xff]
    %v811 = vld [vmem:[#allocation5 + $0x1698] sm:$0xff]
    %v812 = vld [vmem:[#allocation5 + $0x16a0] sm:$0xff]
    %v813 = vld [vmem:[#allocation5 + $0x16a8] sm:$0xff]
    %v814 = vld [vmem:[#allocation5 + $0x16b0] sm:$0xff]
    %v815 = vld [vmem:[#allocation5 + $0x16b8] sm:$0xff]
    %v816 = vld [vmem:[#allocation5 + $0x16c0] sm:$0xff]
    %v817 = vld [vmem:[#allocation5 + $0x16c8] sm:$0xff]
    %v818 = vld [vmem:[#allocation5 + $0x16d0] sm:$0xff]
    %v819 = vld [vmem:[#allocation5 + $0x16d8] sm:$0xff]
    %v820 = vld [vmem:[#allocation5 + $0x16e0] sm:$0xff]
    %v821 = vld [vmem:[#allocation5 + $0x16e8] sm:$0xff]
    %v822 = vld [vmem:[#allocation5 + $0x16f0] sm:$0xff]
    %v823 = vld [vmem:[#allocation5 + $0x16f8] sm:$0xff]
    %v824 = vld [vmem:[#allocation5 + $0x1700] sm:$0xff]
    %v825 = vld [vmem:[#allocation5 + $0x1708] sm:$0xff]
    %v826 = vld [vmem:[#allocation5 + $0x1710] sm:$0xff]
    %v827 = vld [vmem:[#allocation5 + $0x1718] sm:$0xff]
    %v828 = vld [vmem:[#allocation5 + $0x1720] sm:$0xff]
    %v829 = vld [vmem:[#allocation5 + $0x1728] sm:$0xff]
    %v830 = vld [vmem:[#allocation5 + $0x1730] sm:$0xff]
    %v831 = vld [vmem:[#allocation5 + $0x1738] sm:$0xff]
    %v832 = vld [vmem:[#allocation5 + $0x1740] sm:$0xff]
    %v833 = vld [vmem:[#allocation5 + $0x1748] sm:$0xff]
    %v834 = vld [vmem:[#allocation5 + $0x1750] sm:$0xff]
    %v835 = vld [vmem:[#allocation5 + $0x1758] sm:$0xff]
    %v836 = vld [vmem:[#allocation5 + $0x1760] sm:$0xff]
    %v837 = vld [vmem:[#allocation5 + $0x1768] sm:$0xff]
    %v838 = vld [vmem:[#allocation5 + $0x1770] sm:$0xff]
    %v839 = vld [vmem:[#allocation5 + $0x1778] sm:$0xff]
    %v840 = vld [vmem:[#allocation5 + $0x1780] sm:$0xff]
    %v841 = vld [vmem:[#allocation5 + $0x1788] sm:$0xff]
    %v842 = vld [vmem:[#allocation5 + $0x1790] sm:$0xff]
    %v843 = vld [vmem:[#allocation5 + $0x1798] sm:$0xff]
    %v844 = vld [vmem:[#allocation5 + $0x17a0] sm:$0xff]
    %v845 = vld [vmem:[#allocation5 + $0x17a8] sm:$0xff]
    %v846 = vld [vmem:[#allocation5 + $0x17b0] sm:$0xff]
    %v847 = vld [vmem:[#allocation5 + $0x17b8] sm:$0xff]
    %v848 = vld [vmem:[#allocation5 + $0x17c0] sm:$0xff]
    %v849 = vld [vmem:[#allocation5 + $0x17c8] sm:$0xff]
    %v850 = vld [vmem:[#allocation5 + $0x17d0] sm:$0xff]
    %v851 = vld [vmem:[#allocation5 + $0x17d8] sm:$0xff]
    %v852 = vld [vmem:[#allocation5 + $0x17e0] sm:$0xff]
    %v853 = vld [vmem:[#allocation5 + $0x17e8] sm:$0xff]
    %v854 = vld [vmem:[#allocation5 + $0x17f0] sm:$0xff]
    %v855 = vld [vmem:[#allocation5 + $0x17f8] sm:$0xff]
    %v856 = vld [vmem:[#allocation5 + $0x1800] sm:$0xff]
    %v857 = vld [vmem:[#allocation5 + $0x1808] sm:$0xff]
    %v858 = vld [vmem:[#allocation5 + $0x1810] sm:$0xff]
    %v859 = vld [vmem:[#allocation5 + $0x1818] sm:$0xff]
    %v860 = vld [vmem:[#allocation5 + $0x1820] sm:$0xff]
    %v861 = vld [vmem:[#allocation5 + $0x1828] sm:$0xff]
    %v862 = vld [vmem:[#allocation5 + $0x1830] sm:$0xff]
    %v863 = vld [vmem:[#allocation5 + $0x1838] sm:$0xff]
    %v864 = vld [vmem:[#allocation5 + $0x1840] sm:$0xff]
    %v865 = vld [vmem:[#allocation5 + $0x1848] sm:$0xff]
    %v866 = vld [vmem:[#allocation5 + $0x1850] sm:$0xff]
    %v867 = vld [vmem:[#allocation5 + $0x1858] sm:$0xff]
    %v868 = vld [vmem:[#allocation5 + $0x1860] sm:$0xff]
    %v869 = vld [vmem:[#allocation5 + $0x1868] sm:$0xff]
    %v870 = vld [vmem:[#allocation5 + $0x1870] sm:$0xff]
    %v871 = vld [vmem:[#allocation5 + $0x1878] sm:$0xff]
    %v872 = vld [vmem:[#allocation7] sm:$0xf]
    %v874 = vlaneseq
    %v875 = vshrl.u32 %v874, 7
    %v876 = vsub.s32 0, %v875
    %v877 = vrot.slane %v872, %v876
    %v878 = vlaneseq
    %v879 = vshrl.u32 %v878, 7
    %v880 = vsub.s32 1, %v879
    %v881 = vrot.slane %v872, %v880
    %v882 = vlaneseq
    %v883 = vshrl.u32 %v882, 7
    %v884 = vsub.s32 2, %v883
    %v885 = vrot.slane %v872, %v884
    %v886 = vlaneseq
    %v887 = vshrl.u32 %v886, 7
    %v888 = vsub.s32 3, %v887
    %v889 = vrot.slane %v872, %v888
    %v898 = vcombine.high %v84, %v84
    %v900 = vunpack.c.l.s4 1966171168
    %v901 = vunpack.c.0.s8 %v900
    %v902 = vlaneseq
    %v903 = vshrl.u32 %v902, 7
    %v904 = vsub.s32 %v901, %v903
    %v905 = vrot.slane %v84, %v904
    %v907 = vunpack.c.l.s4 1966171168
    %v908 = vunpack.c.0.s8 %v907
    %v909 = vlaneseq
    %v910 = vshrl.u32 %v909, 7
    %v911 = vsub.s32 %v908, %v910
    %v912 = vrot.slane %v898, %v911
    %v913 = vcombine.high %v905, %v905
    %v914 = vcombine.high %v912, %v912
    %v916 = vunpack.c.l.s4 1966171168
    %v917 = vunpack.c.0.s8 %v916
    %v918 = vlaneseq
    %v919 = vshrl.u32 %v918, 7
    %v920 = vsub.s32 %v917, %v919
    %v921 = vrot.slane %v905, %v920
    %v923 = vunpack.c.l.s4 1966171168
    %v924 = vunpack.c.0.s8 %v923
    %v925 = vlaneseq
    %v926 = vshrl.u32 %v925, 7
    %v927 = vsub.s32 %v924, %v926
    %v928 = vrot.slane %v912, %v927
    %v930 = vunpack.c.l.s4 1966171168
    %v931 = vunpack.c.0.s8 %v930
    %v932 = vlaneseq
    %v933 = vshrl.u32 %v932, 7
    %v934 = vsub.s32 %v931, %v933
    %v935 = vrot.slane %v913, %v934
    %v937 = vunpack.c.l.s4 1966171168
    %v938 = vunpack.c.0.s8 %v937
    %v939 = vlaneseq
    %v940 = vshrl.u32 %v939, 7
    %v941 = vsub.s32 %v938, %v940
    %v942 = vrot.slane %v914, %v941
    %v943 = vcombine.high %v921, %v921
    %v944 = vcombine.high %v928, %v928
    %v945 = vcombine.high %v935, %v935
    %v946 = vcombine.high %v942, %v942
    %v947 = vcombine.high %v85, %v85
    %v949 = vunpack.c.l.s4 1966171168
    %v950 = vunpack.c.0.s8 %v949
    %v951 = vlaneseq
    %v952 = vshrl.u32 %v951, 7
    %v953 = vsub.s32 %v950, %v952
    %v954 = vrot.slane %v85, %v953
    %v956 = vunpack.c.l.s4 1966171168
    %v957 = vunpack.c.0.s8 %v956
    %v958 = vlaneseq
    %v959 = vshrl.u32 %v958, 7
    %v960 = vsub.s32 %v957, %v959
    %v961 = vrot.slane %v947, %v960
    %v962 = vcombine.high %v954, %v954
    %v963 = vcombine.high %v961, %v961
    %v965 = vunpack.c.l.s4 1966171168
    %v966 = vunpack.c.0.s8 %v965
    %v967 = vlaneseq
    %v968 = vshrl.u32 %v967, 7
    %v969 = vsub.s32 %v966, %v968
    %v970 = vrot.slane %v954, %v969
    %v972 = vunpack.c.l.s4 1966171168
    %v973 = vunpack.c.0.s8 %v972
    %v974 = vlaneseq
    %v975 = vshrl.u32 %v974, 7
    %v976 = vsub.s32 %v973, %v975
    %v977 = vrot.slane %v961, %v976
    %v979 = vunpack.c.l.s4 1966171168
    %v980 = vunpack.c.0.s8 %v979
    %v981 = vlaneseq
    %v982 = vshrl.u32 %v981, 7
    %v983 = vsub.s32 %v980, %v982
    %v984 = vrot.slane %v962, %v983
    %v986 = vunpack.c.l.s4 1966171168
    %v987 = vunpack.c.0.s8 %v986
    %v988 = vlaneseq
    %v989 = vshrl.u32 %v988, 7
    %v990 = vsub.s32 %v987, %v989
    %v991 = vrot.slane %v963, %v990
    %v992 = vcombine.high %v970, %v970
    %v993 = vcombine.high %v977, %v977
    %v994 = vcombine.high %v984, %v984
    %v995 = vcombine.high %v991, %v991
    %v996 = vcombine.high %v86, %v86
    %v998 = vunpack.c.l.s4 1966171168
    %v999 = vunpack.c.0.s8 %v998
    %v1000 = vlaneseq
    %v1001 = vshrl.u32 %v1000, 7
    %v1002 = vsub.s32 %v999, %v1001
    %v1003 = vrot.slane %v86, %v1002
    %v1005 = vunpack.c.l.s4 1966171168
    %v1006 = vunpack.c.0.s8 %v1005
    %v1007 = vlaneseq
    %v1008 = vshrl.u32 %v1007, 7
    %v1009 = vsub.s32 %v1006, %v1008
    %v1010 = vrot.slane %v996, %v1009
    %v1011 = vcombine.high %v1003, %v1003
    %v1012 = vcombine.high %v1010, %v1010
    %v1014 = vunpack.c.l.s4 1966171168
    %v1015 = vunpack.c.0.s8 %v1014
    %v1016 = vlaneseq
    %v1017 = vshrl.u32 %v1016, 7
    %v1018 = vsub.s32 %v1015, %v1017
    %v1019 = vrot.slane %v1003, %v1018
    %v1021 = vunpack.c.l.s4 1966171168
    %v1022 = vunpack.c.0.s8 %v1021
    %v1023 = vlaneseq
    %v1024 = vshrl.u32 %v1023, 7
    %v1025 = vsub.s32 %v1022, %v1024
    %v1026 = vrot.slane %v1010, %v1025
    %v1028 = vunpack.c.l.s4 1966171168
    %v1029 = vunpack.c.0.s8 %v1028
    %v1030 = vlaneseq
    %v1031 = vshrl.u32 %v1030, 7
    %v1032 = vsub.s32 %v1029, %v1031
    %v1033 = vrot.slane %v1011, %v1032
    %v1035 = vunpack.c.l.s4 1966171168
    %v1036 = vunpack.c.0.s8 %v1035
    %v1037 = vlaneseq
    %v1038 = vshrl.u32 %v1037, 7
    %v1039 = vsub.s32 %v1036, %v1038
    %v1040 = vrot.slane %v1012, %v1039
    %v1041 = vcombine.high %v1019, %v1019
    %v1042 = vcombine.high %v1026, %v1026
    %v1043 = vcombine.high %v1033, %v1033
    %v1044 = vcombine.high %v1040, %v1040
    %v1046 = vunpack.c.l.s4 1966171168
    %v1047 = vunpack.c.0.s8 %v1046
    %v1048 = vlaneseq
    %v1049 = vshrl.u32 %v1048, 7
    %v1050 = vsub.s32 %v1047, %v1049
    %v1051 = vrot.slane %v87, %v1050
    %v1053 = vunpack.c.l.s4 1966171168
    %v1054 = vunpack.c.0.s8 %v1053
    %v1055 = vlaneseq
    %v1056 = vshrl.u32 %v1055, 7
    %v1057 = vsub.s32 %v1054, %v1056
    %v1058 = vrot.slane %v1051, %v1057
    %v1867 = vunpack.c.l.b16 %v88
    %v1868 = vunpack.c.h.b16 %v88
    %v1869 = vunpack.c.l.b16 %v89
    %v1870 = vunpack.c.h.b16 %v89
    %v1871 = vunpack.c.l.b16 %v90
    %v1872 = vunpack.c.h.b16 %v90
    %v1873 = vunpack.c.l.b16 %v91
    %v1874 = vunpack.c.h.b16 %v91
    %v1875 = vunpack.c.l.b16 %v92
    %v1876 = vunpack.c.h.b16 %v92
    %v1877 = vunpack.c.l.b16 %v93
    %v1878 = vunpack.c.h.b16 %v93
    %v1879 = vunpack.c.l.b16 %v94
    %v1880 = vunpack.c.h.b16 %v94
    %v1881 = vunpack.c.l.b16 %v95
    %v1882 = vunpack.c.h.b16 %v95
    %v1883 = vunpack.c.l.b16 %v96
    %v1884 = vunpack.c.h.b16 %v96
    %v1885 = vunpack.c.l.b16 %v97
    %v1886 = vunpack.c.h.b16 %v97
    %v1887 = vunpack.c.l.b16 %v98
    %v1888 = vunpack.c.h.b16 %v98
    %v1889 = vunpack.c.l.b16 %v99
    %v1890 = vunpack.c.h.b16 %v99
    %v1891 = vunpack.c.l.b16 %v100
    %v1892 = vunpack.c.h.b16 %v100
    %v1893 = vunpack.c.l.b16 %v101
    %v1894 = vunpack.c.h.b16 %v101
    %v1895 = vunpack.c.l.b16 %v102
    %v1896 = vunpack.c.h.b16 %v102
    %v1897 = vunpack.c.l.b16 %v103
    %v1898 = vunpack.c.h.b16 %v103
    %v1899 = vunpack.c.l.b16 %v104
    %v1900 = vunpack.c.h.b16 %v104
    %v1901 = vunpack.c.l.b16 %v105
    %v1902 = vunpack.c.h.b16 %v105
    %v1903 = vunpack.c.l.b16 %v106
    %v1904 = vunpack.c.h.b16 %v106
    %v1905 = vunpack.c.l.b16 %v107
    %v1906 = vunpack.c.h.b16 %v107
    %v1907 = vunpack.c.l.b16 %v108
    %v1908 = vunpack.c.h.b16 %v108
    %v1909 = vunpack.c.l.b16 %v109
    %v1910 = vunpack.c.h.b16 %v109
    %v1911 = vunpack.c.l.b16 %v110
    %v1912 = vunpack.c.h.b16 %v110
    %v1913 = vunpack.c.l.b16 %v111
    %v1914 = vunpack.c.h.b16 %v111
    %v1915 = vunpack.c.l.b16 %v112
    %v1916 = vunpack.c.h.b16 %v112
    %v1917 = vunpack.c.l.b16 %v113
    %v1918 = vunpack.c.h.b16 %v113
    %v1919 = vunpack.c.l.b16 %v114
    %v1920 = vunpack.c.h.b16 %v114
    %v1921 = vunpack.c.l.b16 %v115
    %v1922 = vunpack.c.h.b16 %v115
    %v1923 = vunpack.c.l.b16 %v116
    %v1924 = vunpack.c.h.b16 %v116
    %v1925 = vunpack.c.l.b16 %v117
    %v1926 = vunpack.c.h.b16 %v117
    %v1927 = vunpack.c.l.b16 %v118
    %v1928 = vunpack.c.h.b16 %v118
    %v1929 = vunpack.c.l.b16 %v119
    %v1930 = vunpack.c.h.b16 %v119
    %v1931 = vunpack.c.l.b16 %v120
    %v1932 = vunpack.c.h.b16 %v120
    %v1933 = vunpack.c.l.b16 %v121
    %v1934 = vunpack.c.h.b16 %v121
    %v1935 = vunpack.c.l.b16 %v122
    %v1936 = vunpack.c.h.b16 %v122
    %v1937 = vunpack.c.l.b16 %v123
    %v1938 = vunpack.c.h.b16 %v123
    %v1939 = vunpack.c.l.b16 %v124
    %v1940 = vunpack.c.h.b16 %v124
    %v1941 = vunpack.c.l.b16 %v125
    %v1942 = vunpack.c.h.b16 %v125
    %v1943 = vunpack.c.l.b16 %v126
    %v1944 = vunpack.c.h.b16 %v126
    %v1945 = vunpack.c.l.b16 %v127
    %v1946 = vunpack.c.h.b16 %v127
    %v1947 = vunpack.c.l.b16 %v128
    %v1948 = vunpack.c.h.b16 %v128
    %v1949 = vunpack.c.l.b16 %v129
    %v1950 = vunpack.c.h.b16 %v129
    %v1951 = vunpack.c.l.b16 %v130
    %v1952 = vunpack.c.h.b16 %v130
    %v1953 = vunpack.c.l.b16 %v131
    %v1954 = vunpack.c.h.b16 %v131
    %v1955 = vunpack.c.l.b16 %v132
    %v1956 = vunpack.c.h.b16 %v132
    %v1957 = vunpack.c.l.b16 %v133
    %v1958 = vunpack.c.h.b16 %v133
    %v1959 = vunpack.c.l.b16 %v134
    %v1960 = vunpack.c.h.b16 %v134
    %v1961 = vunpack.c.l.b16 %v135
    %v1962 = vunpack.c.h.b16 %v135
    %v1963 = vunpack.c.l.b16 %v136
    %v1964 = vunpack.c.h.b16 %v136
    %v1965 = vunpack.c.l.b16 %v137
    %v1966 = vunpack.c.h.b16 %v137
    %v1967 = vunpack.c.l.b16 %v138
    %v1968 = vunpack.c.h.b16 %v138
    %v1969 = vunpack.c.l.b16 %v139
    %v1970 = vunpack.c.h.b16 %v139
    %v1971 = vunpack.c.l.b16 %v140
    %v1972 = vunpack.c.h.b16 %v140
    %v1973 = vunpack.c.l.b16 %v141
    %v1974 = vunpack.c.h.b16 %v141
    %v1975 = vunpack.c.l.b16 %v142
    %v1976 = vunpack.c.h.b16 %v142
    %v1977 = vunpack.c.l.b16 %v143
    %v1978 = vunpack.c.h.b16 %v143
    %v1979 = vunpack.c.l.b16 %v144
    %v1980 = vunpack.c.h.b16 %v144
    %v1981 = vunpack.c.l.b16 %v145
    %v1982 = vunpack.c.h.b16 %v145
    %v1983 = vunpack.c.l.b16 %v146
    %v1984 = vunpack.c.h.b16 %v146
    %v1985 = vunpack.c.l.b16 %v147
    %v1986 = vunpack.c.h.b16 %v147
    %v1987 = vunpack.c.l.b16 %v148
    %v1988 = vunpack.c.h.b16 %v148
    %v1989 = vunpack.c.l.b16 %v149
    %v1990 = vunpack.c.h.b16 %v149
    %v1991 = vunpack.c.l.b16 %v150
    %v1992 = vunpack.c.h.b16 %v150
    %v1993 = vunpack.c.l.b16 %v151
    %v1994 = vunpack.c.h.b16 %v151
    %v1995 = vunpack.c.l.b16 %v152
    %v1996 = vunpack.c.h.b16 %v152
    %v1997 = vunpack.c.l.b16 %v153
    %v1998 = vunpack.c.h.b16 %v153
    %v1999 = vunpack.c.l.b16 %v154
    %v2000 = vunpack.c.h.b16 %v154
    %v2001 = vunpack.c.l.b16 %v155
    %v2002 = vunpack.c.h.b16 %v155
    %v2003 = vunpack.c.l.b16 %v156
    %v2004 = vunpack.c.h.b16 %v156
    %v2005 = vunpack.c.l.b16 %v157
    %v2006 = vunpack.c.h.b16 %v157
    %v2007 = vunpack.c.l.b16 %v158
    %v2008 = vunpack.c.h.b16 %v158
    %v2009 = vunpack.c.l.b16 %v159
    %v2010 = vunpack.c.h.b16 %v159
    %v2011 = vunpack.c.l.b16 %v160
    %v2012 = vunpack.c.h.b16 %v160
    %v2013 = vunpack.c.l.b16 %v161
    %v2014 = vunpack.c.h.b16 %v161
    %v2015 = vunpack.c.l.b16 %v162
    %v2016 = vunpack.c.h.b16 %v162
    %v2017 = vunpack.c.l.b16 %v163
    %v2018 = vunpack.c.h.b16 %v163
    %v2019 = vunpack.c.l.b16 %v164
    %v2020 = vunpack.c.h.b16 %v164
    %v2021 = vunpack.c.l.b16 %v165
    %v2022 = vunpack.c.h.b16 %v165
    %v2023 = vunpack.c.l.b16 %v166
    %v2024 = vunpack.c.h.b16 %v166
    %v2025 = vunpack.c.l.b16 %v167
    %v2026 = vunpack.c.h.b16 %v167
    %v2027 = vunpack.c.l.b16 %v168
    %v2028 = vunpack.c.h.b16 %v168
    %v2029 = vunpack.c.l.b16 %v169
    %v2030 = vunpack.c.h.b16 %v169
    %v2031 = vunpack.c.l.b16 %v170
    %v2032 = vunpack.c.h.b16 %v170
    %v2033 = vunpack.c.l.b16 %v171
    %v2034 = vunpack.c.h.b16 %v171
    %v2035 = vunpack.c.l.b16 %v172
    %v2036 = vunpack.c.h.b16 %v172
    %v2037 = vunpack.c.l.b16 %v173
    %v2038 = vunpack.c.h.b16 %v173
    %v2039 = vunpack.c.l.b16 %v174
    %v2040 = vunpack.c.h.b16 %v174
    %v2041 = vunpack.c.l.b16 %v175
    %v2042 = vunpack.c.h.b16 %v175
    %v2043 = vunpack.c.l.b16 %v176
    %v2044 = vunpack.c.h.b16 %v176
    %v2045 = vunpack.c.l.b16 %v177
    %v2046 = vunpack.c.h.b16 %v177
    %v2047 = vunpack.c.l.b16 %v178
    %v2048 = vunpack.c.h.b16 %v178
    %v2049 = vunpack.c.l.b16 %v179
    %v2050 = vunpack.c.h.b16 %v179
    %v2051 = vunpack.c.l.b16 %v180
    %v2052 = vunpack.c.h.b16 %v180
    %v2053 = vunpack.c.l.b16 %v181
    %v2054 = vunpack.c.h.b16 %v181
    %v2055 = vunpack.c.l.b16 %v182
    %v2056 = vunpack.c.h.b16 %v182
    %v2057 = vunpack.c.l.b16 %v183
    %v2058 = vunpack.c.h.b16 %v183
    %v2059 = vunpack.c.l.b16 %v184
    %v2060 = vunpack.c.h.b16 %v184
    %v2061 = vunpack.c.l.b16 %v185
    %v2062 = vunpack.c.h.b16 %v185
    %v2063 = vunpack.c.l.b16 %v186
    %v2064 = vunpack.c.h.b16 %v186
    %v2065 = vunpack.c.l.b16 %v187
    %v2066 = vunpack.c.h.b16 %v187
    %v2067 = vunpack.c.l.b16 %v188
    %v2068 = vunpack.c.h.b16 %v188
    %v2069 = vunpack.c.l.b16 %v189
    %v2070 = vunpack.c.h.b16 %v189
    %v2071 = vunpack.c.l.b16 %v190
    %v2072 = vunpack.c.h.b16 %v190
    %v2073 = vunpack.c.l.b16 %v191
    %v2074 = vunpack.c.h.b16 %v191
    %v2075 = vunpack.c.l.b16 %v192
    %v2076 = vunpack.c.h.b16 %v192
    %v2077 = vunpack.c.l.b16 %v193
    %v2078 = vunpack.c.h.b16 %v193
    %v2079 = vunpack.c.l.b16 %v194
    %v2080 = vunpack.c.h.b16 %v194
    %v2081 = vunpack.c.l.b16 %v195
    %v2082 = vunpack.c.h.b16 %v195
    %v2083 = vunpack.c.l.b16 %v196
    %v2084 = vunpack.c.h.b16 %v196
    %v2085 = vunpack.c.l.b16 %v197
    %v2086 = vunpack.c.h.b16 %v197
    %v2087 = vunpack.c.l.b16 %v198
    %v2088 = vunpack.c.h.b16 %v198
    %v2089 = vunpack.c.l.b16 %v199
    %v2090 = vunpack.c.h.b16 %v199
    %v2091 = vunpack.c.l.b16 %v200
    %v2092 = vunpack.c.h.b16 %v200
    %v2093 = vunpack.c.l.b16 %v201
    %v2094 = vunpack.c.h.b16 %v201
    %v2095 = vunpack.c.l.b16 %v202
    %v2096 = vunpack.c.h.b16 %v202
    %v2097 = vunpack.c.l.b16 %v203
    %v2098 = vunpack.c.h.b16 %v203
    %v2099 = vunpack.c.l.b16 %v204
    %v2100 = vunpack.c.h.b16 %v204
    %v2101 = vunpack.c.l.b16 %v205
    %v2102 = vunpack.c.h.b16 %v205
    %v2103 = vunpack.c.l.b16 %v206
    %v2104 = vunpack.c.h.b16 %v206
    %v2105 = vunpack.c.l.b16 %v207
    %v2106 = vunpack.c.h.b16 %v207
    %v2107 = vunpack.c.l.b16 %v208
    %v2108 = vunpack.c.h.b16 %v208
    %v2109 = vunpack.c.l.b16 %v209
    %v2110 = vunpack.c.h.b16 %v209
    %v2111 = vunpack.c.l.b16 %v210
    %v2112 = vunpack.c.h.b16 %v210
    %v2113 = vunpack.c.l.b16 %v211
    %v2114 = vunpack.c.h.b16 %v211
    %v2115 = vunpack.c.l.b16 %v212
    %v2116 = vunpack.c.h.b16 %v212
    %v2117 = vunpack.c.l.b16 %v213
    %v2118 = vunpack.c.h.b16 %v213
    %v2119 = vunpack.c.l.b16 %v214
    %v2120 = vunpack.c.h.b16 %v214
    %v2121 = vunpack.c.l.b16 %v215
    %v2122 = vunpack.c.h.b16 %v215
    %v2123 = vunpack.c.l.b16 %v216
    %v2124 = vunpack.c.h.b16 %v216
    %v2125 = vunpack.c.l.b16 %v217
    %v2126 = vunpack.c.h.b16 %v217
    %v2127 = vunpack.c.l.b16 %v218
    %v2128 = vunpack.c.h.b16 %v218
    %v2129 = vunpack.c.l.b16 %v219
    %v2130 = vunpack.c.h.b16 %v219
    %v2131 = vunpack.c.l.b16 %v220
    %v2132 = vunpack.c.h.b16 %v220
    %v2133 = vunpack.c.l.b16 %v221
    %v2134 = vunpack.c.h.b16 %v221
    %v2135 = vunpack.c.l.b16 %v222
    %v2136 = vunpack.c.h.b16 %v222
    %v2137 = vunpack.c.l.b16 %v223
    %v2138 = vunpack.c.h.b16 %v223
    %v2139 = vunpack.c.l.b16 %v224
    %v2140 = vunpack.c.h.b16 %v224
    %v2141 = vunpack.c.l.b16 %v225
    %v2142 = vunpack.c.h.b16 %v225
    %v2143 = vunpack.c.l.b16 %v226
    %v2144 = vunpack.c.h.b16 %v226
    %v2145 = vunpack.c.l.b16 %v227
    %v2146 = vunpack.c.h.b16 %v227
    %v2147 = vunpack.c.l.b16 %v228
    %v2148 = vunpack.c.h.b16 %v228
    %v2149 = vunpack.c.l.b16 %v229
    %v2150 = vunpack.c.h.b16 %v229
    %v2151 = vunpack.c.l.b16 %v230
    %v2152 = vunpack.c.h.b16 %v230
    %v2153 = vunpack.c.l.b16 %v231
    %v2154 = vunpack.c.h.b16 %v231
    %v2155 = vunpack.c.l.b16 %v232
    %v2156 = vunpack.c.h.b16 %v232
    %v2157 = vunpack.c.l.b16 %v233
    %v2158 = vunpack.c.h.b16 %v233
    %v2159 = vunpack.c.l.b16 %v234
    %v2160 = vunpack.c.h.b16 %v234
    %v2161 = vunpack.c.l.b16 %v235
    %v2162 = vunpack.c.h.b16 %v235
    %v2163 = vunpack.c.l.b16 %v236
    %v2164 = vunpack.c.h.b16 %v236
    %v2165 = vunpack.c.l.b16 %v237
    %v2166 = vunpack.c.h.b16 %v237
    %v2167 = vunpack.c.l.b16 %v238
    %v2168 = vunpack.c.h.b16 %v238
    %v2169 = vunpack.c.l.b16 %v239
    %v2170 = vunpack.c.h.b16 %v239
    %v2171 = vunpack.c.l.b16 %v240
    %v2172 = vunpack.c.h.b16 %v240
    %v2173 = vunpack.c.l.b16 %v241
    %v2174 = vunpack.c.h.b16 %v241
    %v2175 = vunpack.c.l.b16 %v242
    %v2176 = vunpack.c.h.b16 %v242
    %v2177 = vunpack.c.l.b16 %v243
    %v2178 = vunpack.c.h.b16 %v243
    %v2179 = vunpack.c.l.b16 %v244
    %v2180 = vunpack.c.h.b16 %v244
    %v2181 = vunpack.c.l.b16 %v245
    %v2182 = vunpack.c.h.b16 %v245
    %v2183 = vunpack.c.l.b16 %v246
    %v2184 = vunpack.c.h.b16 %v246
    %v2185 = vunpack.c.l.b16 %v247
    %v2186 = vunpack.c.h.b16 %v247
    %v2187 = vunpack.c.l.b16 %v248
    %v2188 = vunpack.c.h.b16 %v248
    %v2189 = vunpack.c.l.b16 %v249
    %v2190 = vunpack.c.h.b16 %v249
    %v2191 = vunpack.c.l.b16 %v250
    %v2192 = vunpack.c.h.b16 %v250
    %v2193 = vunpack.c.l.b16 %v251
    %v2194 = vunpack.c.h.b16 %v251
    %v2195 = vunpack.c.l.b16 %v252
    %v2196 = vunpack.c.h.b16 %v252
    %v2197 = vunpack.c.l.b16 %v253
    %v2198 = vunpack.c.h.b16 %v253
    %v2199 = vunpack.c.l.b16 %v254
    %v2200 = vunpack.c.h.b16 %v254
    %v2201 = vunpack.c.l.b16 %v255
    %v2202 = vunpack.c.h.b16 %v255
    %v2203 = vunpack.c.l.b16 %v256
    %v2204 = vunpack.c.h.b16 %v256
    %v2205 = vunpack.c.l.b16 %v257
    %v2206 = vunpack.c.h.b16 %v257
    %v2207 = vunpack.c.l.b16 %v258
    %v2208 = vunpack.c.h.b16 %v258
    %v2209 = vunpack.c.l.b16 %v259
    %v2210 = vunpack.c.h.b16 %v259
    %v2211 = vunpack.c.l.b16 %v260
    %v2212 = vunpack.c.h.b16 %v260
    %v2213 = vunpack.c.l.b16 %v261
    %v2214 = vunpack.c.h.b16 %v261
    %v2215 = vunpack.c.l.b16 %v262
    %v2216 = vunpack.c.h.b16 %v262
    %v2217 = vunpack.c.l.b16 %v263
    %v2218 = vunpack.c.h.b16 %v263
    %v2219 = vunpack.c.l.b16 %v264
    %v2220 = vunpack.c.h.b16 %v264
    %v2221 = vunpack.c.l.b16 %v265
    %v2222 = vunpack.c.h.b16 %v265
    %v2223 = vunpack.c.l.b16 %v266
    %v2224 = vunpack.c.h.b16 %v266
    %v2225 = vunpack.c.l.b16 %v267
    %v2226 = vunpack.c.h.b16 %v267
    %v2227 = vunpack.c.l.b16 %v268
    %v2228 = vunpack.c.h.b16 %v268
    %v2229 = vunpack.c.l.b16 %v269
    %v2230 = vunpack.c.h.b16 %v269
    %v2231 = vunpack.c.l.b16 %v270
    %v2232 = vunpack.c.h.b16 %v270
    %v2233 = vunpack.c.l.b16 %v271
    %v2234 = vunpack.c.h.b16 %v271
    %v2235 = vunpack.c.l.b16 %v272
    %v2236 = vunpack.c.h.b16 %v272
    %v2237 = vunpack.c.l.b16 %v273
    %v2238 = vunpack.c.h.b16 %v273
    %v2239 = vunpack.c.l.b16 %v274
    %v2240 = vunpack.c.h.b16 %v274
    %v2241 = vunpack.c.l.b16 %v275
    %v2242 = vunpack.c.h.b16 %v275
    %v2243 = vunpack.c.l.b16 %v276
    %v2244 = vunpack.c.h.b16 %v276
    %v2245 = vunpack.c.l.b16 %v277
    %v2246 = vunpack.c.h.b16 %v277
    %v2247 = vunpack.c.l.b16 %v278
    %v2248 = vunpack.c.h.b16 %v278
    %v2249 = vunpack.c.l.b16 %v279
    %v2250 = vunpack.c.h.b16 %v279
    %v2251 = vunpack.c.l.b16 %v280
    %v2252 = vunpack.c.h.b16 %v280
    %v2253 = vunpack.c.l.b16 %v281
    %v2254 = vunpack.c.h.b16 %v281
    %v2255 = vunpack.c.l.b16 %v282
    %v2256 = vunpack.c.h.b16 %v282
    %v2257 = vunpack.c.l.b16 %v283
    %v2258 = vunpack.c.h.b16 %v283
    %v2259 = vunpack.c.l.b16 %v284
    %v2260 = vunpack.c.h.b16 %v284
    %v2261 = vunpack.c.l.b16 %v285
    %v2262 = vunpack.c.h.b16 %v285
    %v2263 = vunpack.c.l.b16 %v286
    %v2264 = vunpack.c.h.b16 %v286
    %v2265 = vunpack.c.l.b16 %v287
    %v2266 = vunpack.c.h.b16 %v287
    %v2267 = vunpack.c.l.b16 %v288
    %v2268 = vunpack.c.h.b16 %v288
    %v2269 = vunpack.c.l.b16 %v289
    %v2270 = vunpack.c.h.b16 %v289
    %v2271 = vunpack.c.l.b16 %v290
    %v2272 = vunpack.c.h.b16 %v290
    %v2273 = vunpack.c.l.b16 %v291
    %v2274 = vunpack.c.h.b16 %v291
    %v2275 = vunpack.c.l.b16 %v292
    %v2276 = vunpack.c.h.b16 %v292
    %v2277 = vunpack.c.l.b16 %v293
    %v2278 = vunpack.c.h.b16 %v293
    %v2279 = vunpack.c.l.b16 %v294
    %v2280 = vunpack.c.h.b16 %v294
    %v2281 = vunpack.c.l.b16 %v295
    %v2282 = vunpack.c.h.b16 %v295
    %v2283 = vunpack.c.l.b16 %v296
    %v2284 = vunpack.c.h.b16 %v296
    %v2285 = vunpack.c.l.b16 %v297
    %v2286 = vunpack.c.h.b16 %v297
    %v2287 = vunpack.c.l.b16 %v298
    %v2288 = vunpack.c.h.b16 %v298
    %v2289 = vunpack.c.l.b16 %v299
    %v2290 = vunpack.c.h.b16 %v299
    %v2291 = vunpack.c.l.b16 %v300
    %v2292 = vunpack.c.h.b16 %v300
    %v2293 = vunpack.c.l.b16 %v301
    %v2294 = vunpack.c.h.b16 %v301
    %v2295 = vunpack.c.l.b16 %v302
    %v2296 = vunpack.c.h.b16 %v302
    %v2297 = vunpack.c.l.b16 %v303
    %v2298 = vunpack.c.h.b16 %v303
    %v2299 = vunpack.c.l.b16 %v304
    %v2300 = vunpack.c.h.b16 %v304
    %v2301 = vunpack.c.l.b16 %v305
    %v2302 = vunpack.c.h.b16 %v305
    %v2303 = vunpack.c.l.b16 %v306
    %v2304 = vunpack.c.h.b16 %v306
    %v2305 = vunpack.c.l.b16 %v307
    %v2306 = vunpack.c.h.b16 %v307
    %v2307 = vunpack.c.l.b16 %v308
    %v2308 = vunpack.c.h.b16 %v308
    %v2309 = vunpack.c.l.b16 %v309
    %v2310 = vunpack.c.h.b16 %v309
    %v2311 = vunpack.c.l.b16 %v310
    %v2312 = vunpack.c.h.b16 %v310
    %v2313 = vunpack.c.l.b16 %v311
    %v2314 = vunpack.c.h.b16 %v311
    %v2315 = vunpack.c.l.b16 %v312
    %v2316 = vunpack.c.h.b16 %v312
    %v2317 = vunpack.c.l.b16 %v313
    %v2318 = vunpack.c.h.b16 %v313
    %v2319 = vunpack.c.l.b16 %v314
    %v2320 = vunpack.c.h.b16 %v314
    %v2321 = vunpack.c.l.b16 %v315
    %v2322 = vunpack.c.h.b16 %v315
    %v2323 = vunpack.c.l.b16 %v316
    %v2324 = vunpack.c.h.b16 %v316
    %v2325 = vunpack.c.l.b16 %v317
    %v2326 = vunpack.c.h.b16 %v317
    %v2327 = vunpack.c.l.b16 %v318
    %v2328 = vunpack.c.h.b16 %v318
    %v2329 = vunpack.c.l.b16 %v319
    %v2330 = vunpack.c.h.b16 %v319
    %v2331 = vunpack.c.l.b16 %v320
    %v2332 = vunpack.c.h.b16 %v320
    %v2333 = vunpack.c.l.b16 %v321
    %v2334 = vunpack.c.h.b16 %v321
    %v2335 = vunpack.c.l.b16 %v322
    %v2336 = vunpack.c.h.b16 %v322
    %v2337 = vunpack.c.l.b16 %v323
    %v2338 = vunpack.c.h.b16 %v323
    %v2339 = vunpack.c.l.b16 %v324
    %v2340 = vunpack.c.h.b16 %v324
    %v2341 = vunpack.c.l.b16 %v325
    %v2342 = vunpack.c.h.b16 %v325
    %v2343 = vunpack.c.l.b16 %v326
    %v2344 = vunpack.c.h.b16 %v326
    %v2345 = vunpack.c.l.b16 %v327
    %v2346 = vunpack.c.h.b16 %v327
    %v2347 = vunpack.c.l.b16 %v328
    %v2348 = vunpack.c.h.b16 %v328
    %v2349 = vunpack.c.l.b16 %v329
    %v2350 = vunpack.c.h.b16 %v329
    %v2351 = vunpack.c.l.b16 %v330
    %v2352 = vunpack.c.h.b16 %v330
    %v2353 = vunpack.c.l.b16 %v331
    %v2354 = vunpack.c.h.b16 %v331
    %v2355 = vunpack.c.l.b16 %v332
    %v2356 = vunpack.c.h.b16 %v332
    %v2357 = vunpack.c.l.b16 %v333
    %v2358 = vunpack.c.h.b16 %v333
    %v2359 = vunpack.c.l.b16 %v334
    %v2360 = vunpack.c.h.b16 %v334
    %v2361 = vunpack.c.l.b16 %v335
    %v2362 = vunpack.c.h.b16 %v335
    %v2363 = vunpack.c.l.b16 %v336
    %v2364 = vunpack.c.h.b16 %v336
    %v2365 = vunpack.c.l.b16 %v337
    %v2366 = vunpack.c.h.b16 %v337
    %v2367 = vunpack.c.l.b16 %v338
    %v2368 = vunpack.c.h.b16 %v338
    %v2369 = vunpack.c.l.b16 %v339
    %v2370 = vunpack.c.h.b16 %v339
    %v2371 = vunpack.c.l.b16 %v340
    %v2372 = vunpack.c.h.b16 %v340
    %v2373 = vunpack.c.l.b16 %v341
    %v2374 = vunpack.c.h.b16 %v341
    %v2375 = vunpack.c.l.b16 %v342
    %v2376 = vunpack.c.h.b16 %v342
    %v2377 = vunpack.c.l.b16 %v343
    %v2378 = vunpack.c.h.b16 %v343
    %v2379 = vunpack.c.l.b16 %v344
    %v2380 = vunpack.c.h.b16 %v344
    %v2381 = vunpack.c.l.b16 %v345
    %v2382 = vunpack.c.h.b16 %v345
    %v2383 = vunpack.c.l.b16 %v346
    %v2384 = vunpack.c.h.b16 %v346
    %v2385 = vunpack.c.l.b16 %v347
    %v2386 = vunpack.c.h.b16 %v347
    %v2387 = vunpack.c.l.b16 %v348
    %v2388 = vunpack.c.h.b16 %v348
    %v2389 = vunpack.c.l.b16 %v349
    %v2390 = vunpack.c.h.b16 %v349
    %v2391 = vunpack.c.l.b16 %v350
    %v2392 = vunpack.c.h.b16 %v350
    %v2393 = vunpack.c.l.b16 %v351
    %v2394 = vunpack.c.h.b16 %v351
    %v2395 = vunpack.c.l.b16 %v352
    %v2396 = vunpack.c.h.b16 %v352
    %v2397 = vunpack.c.l.b16 %v353
    %v2398 = vunpack.c.h.b16 %v353
    %v2399 = vunpack.c.l.b16 %v354
    %v2400 = vunpack.c.h.b16 %v354
    %v2401 = vunpack.c.l.b16 %v355
    %v2402 = vunpack.c.h.b16 %v355
    %v2403 = vunpack.c.l.b16 %v356
    %v2404 = vunpack.c.h.b16 %v356
    %v2405 = vunpack.c.l.b16 %v357
    %v2406 = vunpack.c.h.b16 %v357
    %v2407 = vunpack.c.l.b16 %v358
    %v2408 = vunpack.c.h.b16 %v358
    %v2409 = vunpack.c.l.b16 %v359
    %v2410 = vunpack.c.h.b16 %v359
    %v2411 = vunpack.c.l.b16 %v360
    %v2412 = vunpack.c.h.b16 %v360
    %v2413 = vunpack.c.l.b16 %v361
    %v2414 = vunpack.c.h.b16 %v361
    %v2415 = vunpack.c.l.b16 %v362
    %v2416 = vunpack.c.h.b16 %v362
    %v2417 = vunpack.c.l.b16 %v363
    %v2418 = vunpack.c.h.b16 %v363
    %v2419 = vunpack.c.l.b16 %v364
    %v2420 = vunpack.c.h.b16 %v364
    %v2421 = vunpack.c.l.b16 %v365
    %v2422 = vunpack.c.h.b16 %v365
    %v2423 = vunpack.c.l.b16 %v366
    %v2424 = vunpack.c.h.b16 %v366
    %v2425 = vunpack.c.l.b16 %v367
    %v2426 = vunpack.c.h.b16 %v367
    %v2427 = vunpack.c.l.b16 %v368
    %v2428 = vunpack.c.h.b16 %v368
    %v2429 = vunpack.c.l.b16 %v369
    %v2430 = vunpack.c.h.b16 %v369
    %v2431 = vunpack.c.l.b16 %v370
    %v2432 = vunpack.c.h.b16 %v370
    %v2433 = vunpack.c.l.b16 %v371
    %v2434 = vunpack.c.h.b16 %v371
    %v2435 = vunpack.c.l.b16 %v372
    %v2436 = vunpack.c.h.b16 %v372
    %v2437 = vunpack.c.l.b16 %v373
    %v2438 = vunpack.c.h.b16 %v373
    %v2439 = vunpack.c.l.b16 %v374
    %v2440 = vunpack.c.h.b16 %v374
    %v2441 = vunpack.c.l.b16 %v375
    %v2442 = vunpack.c.h.b16 %v375
    %v2443 = vunpack.c.l.b16 %v376
    %v2444 = vunpack.c.h.b16 %v376
    %v2445 = vunpack.c.l.b16 %v377
    %v2446 = vunpack.c.h.b16 %v377
    %v2447 = vunpack.c.l.b16 %v378
    %v2448 = vunpack.c.h.b16 %v378
    %v2449 = vunpack.c.l.b16 %v379
    %v2450 = vunpack.c.h.b16 %v379
    %v2451 = vunpack.c.l.b16 %v380
    %v2452 = vunpack.c.h.b16 %v380
    %v2453 = vunpack.c.l.b16 %v381
    %v2454 = vunpack.c.h.b16 %v381
    %v2455 = vunpack.c.l.b16 %v382
    %v2456 = vunpack.c.h.b16 %v382
    %v2457 = vunpack.c.l.b16 %v383
    %v2458 = vunpack.c.h.b16 %v383
    %v2459 = vunpack.c.l.b16 %v384
    %v2460 = vunpack.c.h.b16 %v384
    %v2461 = vunpack.c.l.b16 %v385
    %v2462 = vunpack.c.h.b16 %v385
    %v2463 = vunpack.c.l.b16 %v386
    %v2464 = vunpack.c.h.b16 %v386
    %v2465 = vunpack.c.l.b16 %v387
    %v2466 = vunpack.c.h.b16 %v387
    %v2467 = vunpack.c.l.b16 %v388
    %v2468 = vunpack.c.h.b16 %v388
    %v2469 = vunpack.c.l.b16 %v389
    %v2470 = vunpack.c.h.b16 %v389
    %v2471 = vunpack.c.l.b16 %v390
    %v2472 = vunpack.c.h.b16 %v390
    %v2473 = vunpack.c.l.b16 %v391
    %v2474 = vunpack.c.h.b16 %v391
    %v2475 = vunpack.c.l.b16 %v392
    %v2476 = vunpack.c.h.b16 %v392
    %v2477 = vunpack.c.l.b16 %v393
    %v2478 = vunpack.c.h.b16 %v393
    %v2479 = vunpack.c.l.b16 %v394
    %v2480 = vunpack.c.h.b16 %v394
    %v2481 = vunpack.c.l.b16 %v395
    %v2482 = vunpack.c.h.b16 %v395
    %v2483 = vunpack.c.l.b16 %v396
    %v2484 = vunpack.c.h.b16 %v396
    %v2485 = vunpack.c.l.b16 %v397
    %v2486 = vunpack.c.h.b16 %v397
    %v2487 = vunpack.c.l.b16 %v398
    %v2488 = vunpack.c.h.b16 %v398
    %v2489 = vunpack.c.l.b16 %v399
    %v2490 = vunpack.c.h.b16 %v399
    %v2491 = vunpack.c.l.b16 %v400
    %v2492 = vunpack.c.h.b16 %v400
    %v2493 = vunpack.c.l.b16 %v401
    %v2494 = vunpack.c.h.b16 %v401
    %v2495 = vunpack.c.l.b16 %v402
    %v2496 = vunpack.c.h.b16 %v402
    %v2497 = vunpack.c.l.b16 %v403
    %v2498 = vunpack.c.h.b16 %v403
    %v2499 = vunpack.c.l.b16 %v404
    %v2500 = vunpack.c.h.b16 %v404
    %v2501 = vunpack.c.l.b16 %v405
    %v2502 = vunpack.c.h.b16 %v405
    %v2503 = vunpack.c.l.b16 %v406
    %v2504 = vunpack.c.h.b16 %v406
    %v2505 = vunpack.c.l.b16 %v407
    %v2506 = vunpack.c.h.b16 %v407
    %v2507 = vunpack.c.l.b16 %v408
    %v2508 = vunpack.c.h.b16 %v408
    %v2509 = vunpack.c.l.b16 %v409
    %v2510 = vunpack.c.h.b16 %v409
    %v2511 = vunpack.c.l.b16 %v410
    %v2512 = vunpack.c.h.b16 %v410
    %v2513 = vunpack.c.l.b16 %v411
    %v2514 = vunpack.c.h.b16 %v411
    %v2515 = vunpack.c.l.b16 %v412
    %v2516 = vunpack.c.h.b16 %v412
    %v2517 = vunpack.c.l.b16 %v413
    %v2518 = vunpack.c.h.b16 %v413
    %v2519 = vunpack.c.l.b16 %v414
    %v2520 = vunpack.c.h.b16 %v414
    %v2521 = vunpack.c.l.b16 %v415
    %v2522 = vunpack.c.h.b16 %v415
    %v2523 = vunpack.c.l.b16 %v416
    %v2524 = vunpack.c.h.b16 %v416
    %v2525 = vunpack.c.l.b16 %v417
    %v2526 = vunpack.c.h.b16 %v417
    %v2527 = vunpack.c.l.b16 %v418
    %v2528 = vunpack.c.h.b16 %v418
    %v2529 = vunpack.c.l.b16 %v419
    %v2530 = vunpack.c.h.b16 %v419
    %v2531 = vunpack.c.l.b16 %v420
    %v2532 = vunpack.c.h.b16 %v420
    %v2533 = vunpack.c.l.b16 %v421
    %v2534 = vunpack.c.h.b16 %v421
    %v2535 = vunpack.c.l.b16 %v422
    %v2536 = vunpack.c.h.b16 %v422
    %v2537 = vunpack.c.l.b16 %v423
    %v2538 = vunpack.c.h.b16 %v423
    %v2539 = vunpack.c.l.b16 %v424
    %v2540 = vunpack.c.h.b16 %v424
    %v2541 = vunpack.c.l.b16 %v425
    %v2542 = vunpack.c.h.b16 %v425
    %v2543 = vunpack.c.l.b16 %v426
    %v2544 = vunpack.c.h.b16 %v426
    %v2545 = vunpack.c.l.b16 %v427
    %v2546 = vunpack.c.h.b16 %v427
    %v2547 = vunpack.c.l.b16 %v428
    %v2548 = vunpack.c.h.b16 %v428
    %v2549 = vunpack.c.l.b16 %v429
    %v2550 = vunpack.c.h.b16 %v429
    %v2551 = vunpack.c.l.b16 %v430
    %v2552 = vunpack.c.h.b16 %v430
    %v2553 = vunpack.c.l.b16 %v431
    %v2554 = vunpack.c.h.b16 %v431
    %v2555 = vunpack.c.l.b16 %v432
    %v2556 = vunpack.c.h.b16 %v432
    %v2557 = vunpack.c.l.b16 %v433
    %v2558 = vunpack.c.h.b16 %v433
    %v2559 = vunpack.c.l.b16 %v434
    %v2560 = vunpack.c.h.b16 %v434
    %v2561 = vunpack.c.l.b16 %v435
    %v2562 = vunpack.c.h.b16 %v435
    %v2563 = vunpack.c.l.b16 %v436
    %v2564 = vunpack.c.h.b16 %v436
    %v2565 = vunpack.c.l.b16 %v437
    %v2566 = vunpack.c.h.b16 %v437
    %v2567 = vunpack.c.l.b16 %v438
    %v2568 = vunpack.c.h.b16 %v438
    %v2569 = vunpack.c.l.b16 %v439
    %v2570 = vunpack.c.h.b16 %v439
    %v2571 = vunpack.c.l.b16 %v440
    %v2572 = vunpack.c.h.b16 %v440
    %v2573 = vunpack.c.l.b16 %v441
    %v2574 = vunpack.c.h.b16 %v441
    %v2575 = vunpack.c.l.b16 %v442
    %v2576 = vunpack.c.h.b16 %v442
    %v2577 = vunpack.c.l.b16 %v443
    %v2578 = vunpack.c.h.b16 %v443
    %v2579 = vunpack.c.l.b16 %v444
    %v2580 = vunpack.c.h.b16 %v444
    %v2581 = vunpack.c.l.b16 %v445
    %v2582 = vunpack.c.h.b16 %v445
    %v2583 = vunpack.c.l.b16 %v446
    %v2584 = vunpack.c.h.b16 %v446
    %v2585 = vunpack.c.l.b16 %v447
    %v2586 = vunpack.c.h.b16 %v447
    %v2587 = vunpack.c.l.b16 %v448
    %v2588 = vunpack.c.h.b16 %v448
    %v2589 = vunpack.c.l.b16 %v449
    %v2590 = vunpack.c.h.b16 %v449
    %v2591 = vunpack.c.l.b16 %v450
    %v2592 = vunpack.c.h.b16 %v450
    %v2593 = vunpack.c.l.b16 %v451
    %v2594 = vunpack.c.h.b16 %v451
    %v2595 = vunpack.c.l.b16 %v452
    %v2596 = vunpack.c.h.b16 %v452
    %v2597 = vunpack.c.l.b16 %v453
    %v2598 = vunpack.c.h.b16 %v453
    %v2599 = vunpack.c.l.b16 %v454
    %v2600 = vunpack.c.h.b16 %v454
    %v2601 = vunpack.c.l.b16 %v455
    %v2602 = vunpack.c.h.b16 %v455
    %v2603 = vunpack.c.l.b16 %v456
    %v2604 = vunpack.c.h.b16 %v456
    %v2605 = vunpack.c.l.b16 %v457
    %v2606 = vunpack.c.h.b16 %v457
    %v2607 = vunpack.c.l.b16 %v458
    %v2608 = vunpack.c.h.b16 %v458
    %v2609 = vunpack.c.l.b16 %v459
    %v2610 = vunpack.c.h.b16 %v459
    %v2611 = vunpack.c.l.b16 %v460
    %v2612 = vunpack.c.h.b16 %v460
    %v2613 = vunpack.c.l.b16 %v461
    %v2614 = vunpack.c.h.b16 %v461
    %v2615 = vunpack.c.l.b16 %v462
    %v2616 = vunpack.c.h.b16 %v462
    %v2617 = vunpack.c.l.b16 %v463
    %v2618 = vunpack.c.h.b16 %v463
    %v2619 = vunpack.c.l.b16 %v464
    %v2620 = vunpack.c.h.b16 %v464
    %v2621 = vunpack.c.l.b16 %v465
    %v2622 = vunpack.c.h.b16 %v465
    %v2623 = vunpack.c.l.b16 %v466
    %v2624 = vunpack.c.h.b16 %v466
    %v2625 = vunpack.c.l.b16 %v467
    %v2626 = vunpack.c.h.b16 %v467
    %v2627 = vunpack.c.l.b16 %v468
    %v2628 = vunpack.c.h.b16 %v468
    %v2629 = vunpack.c.l.b16 %v469
    %v2630 = vunpack.c.h.b16 %v469
    %v2631 = vunpack.c.l.b16 %v470
    %v2632 = vunpack.c.h.b16 %v470
    %v2633 = vunpack.c.l.b16 %v471
    %v2634 = vunpack.c.h.b16 %v471
    %v2635 = vunpack.c.l.b16 %v472
    %v2636 = vunpack.c.h.b16 %v472
    %v2637 = vunpack.c.l.b16 %v473
    %v2638 = vunpack.c.h.b16 %v473
    %v2639 = vunpack.c.l.b16 %v474
    %v2640 = vunpack.c.h.b16 %v474
    %v2641 = vunpack.c.l.b16 %v475
    %v2642 = vunpack.c.h.b16 %v475
    %v2643 = vunpack.c.l.b16 %v476
    %v2644 = vunpack.c.h.b16 %v476
    %v2645 = vunpack.c.l.b16 %v477
    %v2646 = vunpack.c.h.b16 %v477
    %v2647 = vunpack.c.l.b16 %v478
    %v2648 = vunpack.c.h.b16 %v478
    %v2649 = vunpack.c.l.b16 %v479
    %v2650 = vunpack.c.h.b16 %v479
    %v2651 = vunpack.c.l.b16 %v480
    %v2652 = vunpack.c.h.b16 %v480
    %v2653 = vunpack.c.l.b16 %v481
    %v2654 = vunpack.c.h.b16 %v481
    %v2655 = vunpack.c.l.b16 %v482
    %v2656 = vunpack.c.h.b16 %v482
    %v2657 = vunpack.c.l.b16 %v483
    %v2658 = vunpack.c.h.b16 %v483
    %v2659 = vunpack.c.l.b16 %v484
    %v2660 = vunpack.c.h.b16 %v484
    %v2661 = vunpack.c.l.b16 %v485
    %v2662 = vunpack.c.h.b16 %v485
    %v2663 = vunpack.c.l.b16 %v486
    %v2664 = vunpack.c.h.b16 %v486
    %v2665 = vunpack.c.l.b16 %v487
    %v2666 = vunpack.c.h.b16 %v487
    %v2667 = vunpack.c.l.b16 %v488
    %v2668 = vunpack.c.h.b16 %v488
    %v2669 = vunpack.c.l.b16 %v489
    %v2670 = vunpack.c.h.b16 %v489
    %v2671 = vunpack.c.l.b16 %v490
    %v2672 = vunpack.c.h.b16 %v490
    %v2673 = vunpack.c.l.b16 %v491
    %v2674 = vunpack.c.h.b16 %v491
    %v2675 = vunpack.c.l.b16 %v492
    %v2676 = vunpack.c.h.b16 %v492
    %v2677 = vunpack.c.l.b16 %v493
    %v2678 = vunpack.c.h.b16 %v493
    %v2679 = vunpack.c.l.b16 %v494
    %v2680 = vunpack.c.h.b16 %v494
    %v2681 = vunpack.c.l.b16 %v495
    %v2682 = vunpack.c.h.b16 %v495
    %v2683 = vunpack.c.l.b16 %v496
    %v2684 = vunpack.c.h.b16 %v496
    %v2685 = vunpack.c.l.b16 %v497
    %v2686 = vunpack.c.h.b16 %v497
    %v2687 = vunpack.c.l.b16 %v498
    %v2688 = vunpack.c.h.b16 %v498
    %v2689 = vunpack.c.l.b16 %v499
    %v2690 = vunpack.c.h.b16 %v499
    %v2691 = vunpack.c.l.b16 %v500
    %v2692 = vunpack.c.h.b16 %v500
    %v2693 = vunpack.c.l.b16 %v501
    %v2694 = vunpack.c.h.b16 %v501
    %v2695 = vunpack.c.l.b16 %v502
    %v2696 = vunpack.c.h.b16 %v502
    %v2697 = vunpack.c.l.b16 %v503
    %v2698 = vunpack.c.h.b16 %v503
    %v2699 = vunpack.c.l.b16 %v504
    %v2700 = vunpack.c.h.b16 %v504
    %v2701 = vunpack.c.l.b16 %v505
    %v2702 = vunpack.c.h.b16 %v505
    %v2703 = vunpack.c.l.b16 %v506
    %v2704 = vunpack.c.h.b16 %v506
    %v2705 = vunpack.c.l.b16 %v507
    %v2706 = vunpack.c.h.b16 %v507
    %v2707 = vunpack.c.l.b16 %v508
    %v2708 = vunpack.c.h.b16 %v508
    %v2709 = vunpack.c.l.b16 %v509
    %v2710 = vunpack.c.h.b16 %v509
    %v2711 = vunpack.c.l.b16 %v510
    %v2712 = vunpack.c.h.b16 %v510
    %v2713 = vunpack.c.l.b16 %v511
    %v2714 = vunpack.c.h.b16 %v511
    %v2715 = vunpack.c.l.b16 %v512
    %v2716 = vunpack.c.h.b16 %v512
    %v2717 = vunpack.c.l.b16 %v513
    %v2718 = vunpack.c.h.b16 %v513
    %v2719 = vunpack.c.l.b16 %v514
    %v2720 = vunpack.c.h.b16 %v514
    %v2721 = vunpack.c.l.b16 %v515
    %v2722 = vunpack.c.h.b16 %v515
    %v2723 = vunpack.c.l.b16 %v516
    %v2724 = vunpack.c.h.b16 %v516
    %v2725 = vunpack.c.l.b16 %v517
    %v2726 = vunpack.c.h.b16 %v517
    %v2727 = vunpack.c.l.b16 %v518
    %v2728 = vunpack.c.h.b16 %v518
    %v2729 = vunpack.c.l.b16 %v519
    %v2730 = vunpack.c.h.b16 %v519
    %v2731 = vunpack.c.l.b16 %v520
    %v2732 = vunpack.c.h.b16 %v520
    %v2733 = vunpack.c.l.b16 %v521
    %v2734 = vunpack.c.h.b16 %v521
    %v2735 = vunpack.c.l.b16 %v522
    %v2736 = vunpack.c.h.b16 %v522
    %v2737 = vunpack.c.l.b16 %v523
    %v2738 = vunpack.c.h.b16 %v523
    %v2739 = vunpack.c.l.b16 %v524
    %v2740 = vunpack.c.h.b16 %v524
    %v2741 = vunpack.c.l.b16 %v525
    %v2742 = vunpack.c.h.b16 %v525
    %v2743 = vunpack.c.l.b16 %v526
    %v2744 = vunpack.c.h.b16 %v526
    %v2745 = vunpack.c.l.b16 %v527
    %v2746 = vunpack.c.h.b16 %v527
    %v2747 = vunpack.c.l.b16 %v528
    %v2748 = vunpack.c.h.b16 %v528
    %v2749 = vunpack.c.l.b16 %v529
    %v2750 = vunpack.c.h.b16 %v529
    %v2751 = vunpack.c.l.b16 %v530
    %v2752 = vunpack.c.h.b16 %v530
    %v2753 = vunpack.c.l.b16 %v531
    %v2754 = vunpack.c.h.b16 %v531
    %v2755 = vunpack.c.l.b16 %v532
    %v2756 = vunpack.c.h.b16 %v532
    %v2757 = vunpack.c.l.b16 %v533
    %v2758 = vunpack.c.h.b16 %v533
    %v2759 = vunpack.c.l.b16 %v534
    %v2760 = vunpack.c.h.b16 %v534
    %v2761 = vunpack.c.l.b16 %v535
    %v2762 = vunpack.c.h.b16 %v535
    %v2763 = vunpack.c.l.b16 %v536
    %v2764 = vunpack.c.h.b16 %v536
    %v2765 = vunpack.c.l.b16 %v537
    %v2766 = vunpack.c.h.b16 %v537
    %v2767 = vunpack.c.l.b16 %v538
    %v2768 = vunpack.c.h.b16 %v538
    %v2769 = vunpack.c.l.b16 %v539
    %v2770 = vunpack.c.h.b16 %v539
    %v2771 = vunpack.c.l.b16 %v540
    %v2772 = vunpack.c.h.b16 %v540
    %v2773 = vunpack.c.l.b16 %v541
    %v2774 = vunpack.c.h.b16 %v541
    %v2775 = vunpack.c.l.b16 %v542
    %v2776 = vunpack.c.h.b16 %v542
    %v2777 = vunpack.c.l.b16 %v543
    %v2778 = vunpack.c.h.b16 %v543
    %v2779 = vunpack.c.l.b16 %v544
    %v2780 = vunpack.c.h.b16 %v544
    %v2781 = vunpack.c.l.b16 %v545
    %v2782 = vunpack.c.h.b16 %v545
    %v2783 = vunpack.c.l.b16 %v546
    %v2784 = vunpack.c.h.b16 %v546
    %v2785 = vunpack.c.l.b16 %v547
    %v2786 = vunpack.c.h.b16 %v547
    %v2787 = vunpack.c.l.b16 %v548
    %v2788 = vunpack.c.h.b16 %v548
    %v2789 = vunpack.c.l.b16 %v549
    %v2790 = vunpack.c.h.b16 %v549
    %v2791 = vunpack.c.l.b16 %v550
    %v2792 = vunpack.c.h.b16 %v550
    %v2793 = vunpack.c.l.b16 %v551
    %v2794 = vunpack.c.h.b16 %v551
    %v2795 = vunpack.c.l.b16 %v552
    %v2796 = vunpack.c.h.b16 %v552
    %v2797 = vunpack.c.l.b16 %v553
    %v2798 = vunpack.c.h.b16 %v553
    %v2799 = vunpack.c.l.b16 %v554
    %v2800 = vunpack.c.h.b16 %v554
    %v2801 = vunpack.c.l.b16 %v555
    %v2802 = vunpack.c.h.b16 %v555
    %v2803 = vunpack.c.l.b16 %v556
    %v2804 = vunpack.c.h.b16 %v556
    %v2805 = vunpack.c.l.b16 %v557
    %v2806 = vunpack.c.h.b16 %v557
    %v2807 = vunpack.c.l.b16 %v558
    %v2808 = vunpack.c.h.b16 %v558
    %v2809 = vunpack.c.l.b16 %v559
    %v2810 = vunpack.c.h.b16 %v559
    %v2811 = vunpack.c.l.b16 %v560
    %v2812 = vunpack.c.h.b16 %v560
    %v2813 = vunpack.c.l.b16 %v561
    %v2814 = vunpack.c.h.b16 %v561
    %v2815 = vunpack.c.l.b16 %v562
    %v2816 = vunpack.c.h.b16 %v562
    %v2817 = vunpack.c.l.b16 %v563
    %v2818 = vunpack.c.h.b16 %v563
    %v2819 = vunpack.c.l.b16 %v564
    %v2820 = vunpack.c.h.b16 %v564
    %v2821 = vunpack.c.l.b16 %v565
    %v2822 = vunpack.c.h.b16 %v565
    %v2823 = vunpack.c.l.b16 %v566
    %v2824 = vunpack.c.h.b16 %v566
    %v2825 = vunpack.c.l.b16 %v567
    %v2826 = vunpack.c.h.b16 %v567
    %v2827 = vunpack.c.l.b16 %v568
    %v2828 = vunpack.c.h.b16 %v568
    %v2829 = vunpack.c.l.b16 %v569
    %v2830 = vunpack.c.h.b16 %v569
    %v2831 = vunpack.c.l.b16 %v570
    %v2832 = vunpack.c.h.b16 %v570
    %v2833 = vunpack.c.l.b16 %v571
    %v2834 = vunpack.c.h.b16 %v571
    %v2835 = vunpack.c.l.b16 %v572
    %v2836 = vunpack.c.h.b16 %v572
    %v2837 = vunpack.c.l.b16 %v573
    %v2838 = vunpack.c.h.b16 %v573
    %v2839 = vunpack.c.l.b16 %v574
    %v2840 = vunpack.c.h.b16 %v574
    %v2841 = vunpack.c.l.b16 %v575
    %v2842 = vunpack.c.h.b16 %v575
    %v2843 = vunpack.c.l.b16 %v576
    %v2844 = vunpack.c.h.b16 %v576
    %v2845 = vunpack.c.l.b16 %v577
    %v2846 = vunpack.c.h.b16 %v577
    %v2847 = vunpack.c.l.b16 %v578
    %v2848 = vunpack.c.h.b16 %v578
    %v2849 = vunpack.c.l.b16 %v579
    %v2850 = vunpack.c.h.b16 %v579
    %v2851 = vunpack.c.l.b16 %v580
    %v2852 = vunpack.c.h.b16 %v580
    %v2853 = vunpack.c.l.b16 %v581
    %v2854 = vunpack.c.h.b16 %v581
    %v2855 = vunpack.c.l.b16 %v582
    %v2856 = vunpack.c.h.b16 %v582
    %v2857 = vunpack.c.l.b16 %v583
    %v2858 = vunpack.c.h.b16 %v583
    %v2859 = vunpack.c.l.b16 %v584
    %v2860 = vunpack.c.h.b16 %v584
    %v2861 = vunpack.c.l.b16 %v585
    %v2862 = vunpack.c.h.b16 %v585
    %v2863 = vunpack.c.l.b16 %v586
    %v2864 = vunpack.c.h.b16 %v586
    %v2865 = vunpack.c.l.b16 %v587
    %v2866 = vunpack.c.h.b16 %v587
    %v2867 = vunpack.c.l.b16 %v588
    %v2868 = vunpack.c.h.b16 %v588
    %v2869 = vunpack.c.l.b16 %v589
    %v2870 = vunpack.c.h.b16 %v589
    %v2871 = vunpack.c.l.b16 %v590
    %v2872 = vunpack.c.h.b16 %v590
    %v2873 = vunpack.c.l.b16 %v591
    %v2874 = vunpack.c.h.b16 %v591
    %v2875 = vunpack.c.l.b16 %v592
    %v2876 = vunpack.c.h.b16 %v592
    %v2877 = vunpack.c.l.b16 %v593
    %v2878 = vunpack.c.h.b16 %v593
    %v2879 = vunpack.c.l.b16 %v594
    %v2880 = vunpack.c.h.b16 %v594
    %v2881 = vunpack.c.l.b16 %v595
    %v2882 = vunpack.c.h.b16 %v595
    %v2883 = vunpack.c.l.b16 %v596
    %v2884 = vunpack.c.h.b16 %v596
    %v2885 = vunpack.c.l.b16 %v597
    %v2886 = vunpack.c.h.b16 %v597
    %v2887 = vunpack.c.l.b16 %v598
    %v2888 = vunpack.c.h.b16 %v598
    %v2889 = vunpack.c.l.b16 %v599
    %v2890 = vunpack.c.h.b16 %v599
    %v2891 = vunpack.c.l.b16 %v600
    %v2892 = vunpack.c.h.b16 %v600
    %v2893 = vunpack.c.l.b16 %v601
    %v2894 = vunpack.c.h.b16 %v601
    %v2895 = vunpack.c.l.b16 %v602
    %v2896 = vunpack.c.h.b16 %v602
    %v2897 = vunpack.c.l.b16 %v603
    %v2898 = vunpack.c.h.b16 %v603
    %v2899 = vunpack.c.l.b16 %v604
    %v2900 = vunpack.c.h.b16 %v604
    %v2901 = vunpack.c.l.b16 %v605
    %v2902 = vunpack.c.h.b16 %v605
    %v2903 = vunpack.c.l.b16 %v606
    %v2904 = vunpack.c.h.b16 %v606
    %v2905 = vunpack.c.l.b16 %v607
    %v2906 = vunpack.c.h.b16 %v607
    %v2907 = vunpack.c.l.b16 %v608
    %v2908 = vunpack.c.h.b16 %v608
    %v2909 = vunpack.c.l.b16 %v609
    %v2910 = vunpack.c.h.b16 %v609
    %v2911 = vunpack.c.l.b16 %v610
    %v2912 = vunpack.c.h.b16 %v610
    %v2913 = vunpack.c.l.b16 %v611
    %v2914 = vunpack.c.h.b16 %v611
    %v2915 = vunpack.c.l.b16 %v612
    %v2916 = vunpack.c.h.b16 %v612
    %v2917 = vunpack.c.l.b16 %v613
    %v2918 = vunpack.c.h.b16 %v613
    %v2919 = vunpack.c.l.b16 %v614
    %v2920 = vunpack.c.h.b16 %v614
    %v2921 = vunpack.c.l.b16 %v615
    %v2922 = vunpack.c.h.b16 %v615
    %v2923 = vunpack.c.l.b16 %v616
    %v2924 = vunpack.c.h.b16 %v616
    %v2925 = vunpack.c.l.b16 %v617
    %v2926 = vunpack.c.h.b16 %v617
    %v2927 = vunpack.c.l.b16 %v618
    %v2928 = vunpack.c.h.b16 %v618
    %v2929 = vunpack.c.l.b16 %v619
    %v2930 = vunpack.c.h.b16 %v619
    %v2931 = vunpack.c.l.b16 %v620
    %v2932 = vunpack.c.h.b16 %v620
    %v2933 = vunpack.c.l.b16 %v621
    %v2934 = vunpack.c.h.b16 %v621
    %v2935 = vunpack.c.l.b16 %v622
    %v2936 = vunpack.c.h.b16 %v622
    %v2937 = vunpack.c.l.b16 %v623
    %v2938 = vunpack.c.h.b16 %v623
    %v2939 = vunpack.c.l.b16 %v624
    %v2940 = vunpack.c.h.b16 %v624
    %v2941 = vunpack.c.l.b16 %v625
    %v2942 = vunpack.c.h.b16 %v625
    %v2943 = vunpack.c.l.b16 %v626
    %v2944 = vunpack.c.h.b16 %v626
    %v2945 = vunpack.c.l.b16 %v627
    %v2946 = vunpack.c.h.b16 %v627
    %v2947 = vunpack.c.l.b16 %v628
    %v2948 = vunpack.c.h.b16 %v628
    %v2949 = vunpack.c.l.b16 %v629
    %v2950 = vunpack.c.h.b16 %v629
    %v2951 = vunpack.c.l.b16 %v630
    %v2952 = vunpack.c.h.b16 %v630
    %v2953 = vunpack.c.l.b16 %v631
    %v2954 = vunpack.c.h.b16 %v631
    %v2955 = vunpack.c.l.b16 %v632
    %v2956 = vunpack.c.h.b16 %v632
    %v2957 = vunpack.c.l.b16 %v633
    %v2958 = vunpack.c.h.b16 %v633
    %v2959 = vunpack.c.l.b16 %v634
    %v2960 = vunpack.c.h.b16 %v634
    %v2961 = vunpack.c.l.b16 %v635
    %v2962 = vunpack.c.h.b16 %v635
    %v2963 = vunpack.c.l.b16 %v636
    %v2964 = vunpack.c.h.b16 %v636
    %v2965 = vunpack.c.l.b16 %v637
    %v2966 = vunpack.c.h.b16 %v637
    %v2967 = vunpack.c.l.b16 %v638
    %v2968 = vunpack.c.h.b16 %v638
    %v2969 = vunpack.c.l.b16 %v639
    %v2970 = vunpack.c.h.b16 %v639
    %v2971 = vunpack.c.l.b16 %v640
    %v2972 = vunpack.c.h.b16 %v640
    %v2973 = vunpack.c.l.b16 %v641
    %v2974 = vunpack.c.h.b16 %v641
    %v2975 = vunpack.c.l.b16 %v642
    %v2976 = vunpack.c.h.b16 %v642
    %v2977 = vunpack.c.l.b16 %v643
    %v2978 = vunpack.c.h.b16 %v643
    %v2979 = vunpack.c.l.b16 %v644
    %v2980 = vunpack.c.h.b16 %v644
    %v2981 = vunpack.c.l.b16 %v645
    %v2982 = vunpack.c.h.b16 %v645
    %v2983 = vunpack.c.l.b16 %v646
    %v2984 = vunpack.c.h.b16 %v646
    %v2985 = vunpack.c.l.b16 %v647
    %v2986 = vunpack.c.h.b16 %v647
    %v2987 = vunpack.c.l.b16 %v648
    %v2988 = vunpack.c.h.b16 %v648
    %v2989 = vunpack.c.l.b16 %v649
    %v2990 = vunpack.c.h.b16 %v649
    %v2991 = vunpack.c.l.b16 %v650
    %v2992 = vunpack.c.h.b16 %v650
    %v2993 = vunpack.c.l.b16 %v651
    %v2994 = vunpack.c.h.b16 %v651
    %v2995 = vunpack.c.l.b16 %v652
    %v2996 = vunpack.c.h.b16 %v652
    %v2997 = vunpack.c.l.b16 %v653
    %v2998 = vunpack.c.h.b16 %v653
    %v2999 = vunpack.c.l.b16 %v654
    %v3000 = vunpack.c.h.b16 %v654
    %v3001 = vunpack.c.l.b16 %v655
    %v3002 = vunpack.c.h.b16 %v655
    %v3003 = vunpack.c.l.b16 %v656
    %v3004 = vunpack.c.h.b16 %v656
    %v3005 = vunpack.c.l.b16 %v657
    %v3006 = vunpack.c.h.b16 %v657
    %v3007 = vunpack.c.l.b16 %v658
    %v3008 = vunpack.c.h.b16 %v658
    %v3009 = vunpack.c.l.b16 %v659
    %v3010 = vunpack.c.h.b16 %v659
    %v3011 = vunpack.c.l.b16 %v660
    %v3012 = vunpack.c.h.b16 %v660
    %v3013 = vunpack.c.l.b16 %v661
    %v3014 = vunpack.c.h.b16 %v661
    %v3015 = vunpack.c.l.b16 %v662
    %v3016 = vunpack.c.h.b16 %v662
    %v3017 = vunpack.c.l.b16 %v663
    %v3018 = vunpack.c.h.b16 %v663
    %v3019 = vunpack.c.l.b16 %v664
    %v3020 = vunpack.c.h.b16 %v664
    %v3021 = vunpack.c.l.b16 %v665
    %v3022 = vunpack.c.h.b16 %v665
    %v3023 = vunpack.c.l.b16 %v666
    %v3024 = vunpack.c.h.b16 %v666
    %v3025 = vunpack.c.l.b16 %v667
    %v3026 = vunpack.c.h.b16 %v667
    %v3027 = vunpack.c.l.b16 %v668
    %v3028 = vunpack.c.h.b16 %v668
    %v3029 = vunpack.c.l.b16 %v669
    %v3030 = vunpack.c.h.b16 %v669
    %v3031 = vunpack.c.l.b16 %v670
    %v3032 = vunpack.c.h.b16 %v670
    %v3033 = vunpack.c.l.b16 %v671
    %v3034 = vunpack.c.h.b16 %v671
    %v3035 = vunpack.c.l.b16 %v672
    %v3036 = vunpack.c.h.b16 %v672
    %v3037 = vunpack.c.l.b16 %v673
    %v3038 = vunpack.c.h.b16 %v673
    %v3039 = vunpack.c.l.b16 %v674
    %v3040 = vunpack.c.h.b16 %v674
    %v3041 = vunpack.c.l.b16 %v675
    %v3042 = vunpack.c.h.b16 %v675
    %v3043 = vunpack.c.l.b16 %v676
    %v3044 = vunpack.c.h.b16 %v676
    %v3045 = vunpack.c.l.b16 %v677
    %v3046 = vunpack.c.h.b16 %v677
    %v3047 = vunpack.c.l.b16 %v678
    %v3048 = vunpack.c.h.b16 %v678
    %v3049 = vunpack.c.l.b16 %v679
    %v3050 = vunpack.c.h.b16 %v679
    %v3051 = vunpack.c.l.b16 %v680
    %v3052 = vunpack.c.h.b16 %v680
    %v3053 = vunpack.c.l.b16 %v681
    %v3054 = vunpack.c.h.b16 %v681
    %v3055 = vunpack.c.l.b16 %v682
    %v3056 = vunpack.c.h.b16 %v682
    %v3057 = vunpack.c.l.b16 %v683
    %v3058 = vunpack.c.h.b16 %v683
    %v3059 = vunpack.c.l.b16 %v684
    %v3060 = vunpack.c.h.b16 %v684
    %v3061 = vunpack.c.l.b16 %v685
    %v3062 = vunpack.c.h.b16 %v685
    %v3063 = vunpack.c.l.b16 %v686
    %v3064 = vunpack.c.h.b16 %v686
    %v3065 = vunpack.c.l.b16 %v687
    %v3066 = vunpack.c.h.b16 %v687
    %v3067 = vunpack.c.l.b16 %v688
    %v3068 = vunpack.c.h.b16 %v688
    %v3069 = vunpack.c.l.b16 %v689
    %v3070 = vunpack.c.h.b16 %v689
    %v3071 = vunpack.c.l.b16 %v690
    %v3072 = vunpack.c.h.b16 %v690
    %v3073 = vunpack.c.l.b16 %v691
    %v3074 = vunpack.c.h.b16 %v691
    %v3075 = vunpack.c.l.b16 %v692
    %v3076 = vunpack.c.h.b16 %v692
    %v3077 = vunpack.c.l.b16 %v693
    %v3078 = vunpack.c.h.b16 %v693
    %v3079 = vunpack.c.l.b16 %v694
    %v3080 = vunpack.c.h.b16 %v694
    %v3081 = vunpack.c.l.b16 %v695
    %v3082 = vunpack.c.h.b16 %v695
    %v3083 = vunpack.c.l.b16 %v696
    %v3084 = vunpack.c.h.b16 %v696
    %v3085 = vunpack.c.l.b16 %v697
    %v3086 = vunpack.c.h.b16 %v697
    %v3087 = vunpack.c.l.b16 %v698
    %v3088 = vunpack.c.h.b16 %v698
    %v3089 = vunpack.c.l.b16 %v699
    %v3090 = vunpack.c.h.b16 %v699
    %v3091 = vunpack.c.l.b16 %v700
    %v3092 = vunpack.c.h.b16 %v700
    %v3093 = vunpack.c.l.b16 %v701
    %v3094 = vunpack.c.h.b16 %v701
    %v3095 = vunpack.c.l.b16 %v702
    %v3096 = vunpack.c.h.b16 %v702
    %v3097 = vunpack.c.l.b16 %v703
    %v3098 = vunpack.c.h.b16 %v703
    %v3099 = vunpack.c.l.b16 %v704
    %v3100 = vunpack.c.h.b16 %v704
    %v3101 = vunpack.c.l.b16 %v705
    %v3102 = vunpack.c.h.b16 %v705
    %v3103 = vunpack.c.l.b16 %v706
    %v3104 = vunpack.c.h.b16 %v706
    %v3105 = vunpack.c.l.b16 %v707
    %v3106 = vunpack.c.h.b16 %v707
    %v3107 = vunpack.c.l.b16 %v708
    %v3108 = vunpack.c.h.b16 %v708
    %v3109 = vunpack.c.l.b16 %v709
    %v3110 = vunpack.c.h.b16 %v709
    %v3111 = vunpack.c.l.b16 %v710
    %v3112 = vunpack.c.h.b16 %v710
    %v3113 = vunpack.c.l.b16 %v711
    %v3114 = vunpack.c.h.b16 %v711
    %v3115 = vunpack.c.l.b16 %v712
    %v3116 = vunpack.c.h.b16 %v712
    %v3117 = vunpack.c.l.b16 %v713
    %v3118 = vunpack.c.h.b16 %v713
    %v3119 = vunpack.c.l.b16 %v714
    %v3120 = vunpack.c.h.b16 %v714
    %v3121 = vunpack.c.l.b16 %v715
    %v3122 = vunpack.c.h.b16 %v715
    %v3123 = vunpack.c.l.b16 %v716
    %v3124 = vunpack.c.h.b16 %v716
    %v3125 = vunpack.c.l.b16 %v717
    %v3126 = vunpack.c.h.b16 %v717
    %v3127 = vunpack.c.l.b16 %v718
    %v3128 = vunpack.c.h.b16 %v718
    %v3129 = vunpack.c.l.b16 %v719
    %v3130 = vunpack.c.h.b16 %v719
    %v3131 = vunpack.c.l.b16 %v720
    %v3132 = vunpack.c.h.b16 %v720
    %v3133 = vunpack.c.l.b16 %v721
    %v3134 = vunpack.c.h.b16 %v721
    %v3135 = vunpack.c.l.b16 %v722
    %v3136 = vunpack.c.h.b16 %v722
    %v3137 = vunpack.c.l.b16 %v723
    %v3138 = vunpack.c.h.b16 %v723
    %v3139 = vunpack.c.l.b16 %v724
    %v3140 = vunpack.c.h.b16 %v724
    %v3141 = vunpack.c.l.b16 %v725
    %v3142 = vunpack.c.h.b16 %v725
    %v3143 = vunpack.c.l.b16 %v726
    %v3144 = vunpack.c.h.b16 %v726
    %v3145 = vunpack.c.l.b16 %v727
    %v3146 = vunpack.c.h.b16 %v727
    %v3147 = vunpack.c.l.b16 %v728
    %v3148 = vunpack.c.h.b16 %v728
    %v3149 = vunpack.c.l.b16 %v729
    %v3150 = vunpack.c.h.b16 %v729
    %v3151 = vunpack.c.l.b16 %v730
    %v3152 = vunpack.c.h.b16 %v730
    %v3153 = vunpack.c.l.b16 %v731
    %v3154 = vunpack.c.h.b16 %v731
    %v3155 = vunpack.c.l.b16 %v732
    %v3156 = vunpack.c.h.b16 %v732
    %v3157 = vunpack.c.l.b16 %v733
    %v3158 = vunpack.c.h.b16 %v733
    %v3159 = vunpack.c.l.b16 %v734
    %v3160 = vunpack.c.h.b16 %v734
    %v3161 = vunpack.c.l.b16 %v735
    %v3162 = vunpack.c.h.b16 %v735
    %v3163 = vunpack.c.l.b16 %v736
    %v3164 = vunpack.c.h.b16 %v736
    %v3165 = vunpack.c.l.b16 %v737
    %v3166 = vunpack.c.h.b16 %v737
    %v3167 = vunpack.c.l.b16 %v738
    %v3168 = vunpack.c.h.b16 %v738
    %v3169 = vunpack.c.l.b16 %v739
    %v3170 = vunpack.c.h.b16 %v739
    %v3171 = vunpack.c.l.b16 %v740
    %v3172 = vunpack.c.h.b16 %v740
    %v3173 = vunpack.c.l.b16 %v741
    %v3174 = vunpack.c.h.b16 %v741
    %v3175 = vunpack.c.l.b16 %v742
    %v3176 = vunpack.c.h.b16 %v742
    %v3177 = vunpack.c.l.b16 %v743
    %v3178 = vunpack.c.h.b16 %v743
    %v3179 = vunpack.c.l.b16 %v744
    %v3180 = vunpack.c.h.b16 %v744
    %v3181 = vunpack.c.l.b16 %v745
    %v3182 = vunpack.c.h.b16 %v745
    %v3183 = vunpack.c.l.b16 %v746
    %v3184 = vunpack.c.h.b16 %v746
    %v3185 = vunpack.c.l.b16 %v747
    %v3186 = vunpack.c.h.b16 %v747
    %v3187 = vunpack.c.l.b16 %v748
    %v3188 = vunpack.c.h.b16 %v748
    %v3189 = vunpack.c.l.b16 %v749
    %v3190 = vunpack.c.h.b16 %v749
    %v3191 = vunpack.c.l.b16 %v750
    %v3192 = vunpack.c.h.b16 %v750
    %v3193 = vunpack.c.l.b16 %v751
    %v3194 = vunpack.c.h.b16 %v751
    %v3195 = vunpack.c.l.b16 %v752
    %v3196 = vunpack.c.h.b16 %v752
    %v3197 = vunpack.c.l.b16 %v753
    %v3198 = vunpack.c.h.b16 %v753
    %v3199 = vunpack.c.l.b16 %v754
    %v3200 = vunpack.c.h.b16 %v754
    %v3201 = vunpack.c.l.b16 %v755
    %v3202 = vunpack.c.h.b16 %v755
    %v3203 = vunpack.c.l.b16 %v756
    %v3204 = vunpack.c.h.b16 %v756
    %v3205 = vunpack.c.l.b16 %v757
    %v3206 = vunpack.c.h.b16 %v757
    %v3207 = vunpack.c.l.b16 %v758
    %v3208 = vunpack.c.h.b16 %v758
    %v3209 = vunpack.c.l.b16 %v759
    %v3210 = vunpack.c.h.b16 %v759
    %v3211 = vunpack.c.l.b16 %v760
    %v3212 = vunpack.c.h.b16 %v760
    %v3213 = vunpack.c.l.b16 %v761
    %v3214 = vunpack.c.h.b16 %v761
    %v3215 = vunpack.c.l.b16 %v762
    %v3216 = vunpack.c.h.b16 %v762
    %v3217 = vunpack.c.l.b16 %v763
    %v3218 = vunpack.c.h.b16 %v763
    %v3219 = vunpack.c.l.b16 %v764
    %v3220 = vunpack.c.h.b16 %v764
    %v3221 = vunpack.c.l.b16 %v765
    %v3222 = vunpack.c.h.b16 %v765
    %v3223 = vunpack.c.l.b16 %v766
    %v3224 = vunpack.c.h.b16 %v766
    %v3225 = vunpack.c.l.b16 %v767
    %v3226 = vunpack.c.h.b16 %v767
    %v3227 = vunpack.c.l.b16 %v768
    %v3228 = vunpack.c.h.b16 %v768
    %v3229 = vunpack.c.l.b16 %v769
    %v3230 = vunpack.c.h.b16 %v769
    %v3231 = vunpack.c.l.b16 %v770
    %v3232 = vunpack.c.h.b16 %v770
    %v3233 = vunpack.c.l.b16 %v771
    %v3234 = vunpack.c.h.b16 %v771
    %v3235 = vunpack.c.l.b16 %v772
    %v3236 = vunpack.c.h.b16 %v772
    %v3237 = vunpack.c.l.b16 %v773
    %v3238 = vunpack.c.h.b16 %v773
    %v3239 = vunpack.c.l.b16 %v774
    %v3240 = vunpack.c.h.b16 %v774
    %v3241 = vunpack.c.l.b16 %v775
    %v3242 = vunpack.c.h.b16 %v775
    %v3243 = vunpack.c.l.b16 %v776
    %v3244 = vunpack.c.h.b16 %v776
    %v3245 = vunpack.c.l.b16 %v777
    %v3246 = vunpack.c.h.b16 %v777
    %v3247 = vunpack.c.l.b16 %v778
    %v3248 = vunpack.c.h.b16 %v778
    %v3249 = vunpack.c.l.b16 %v779
    %v3250 = vunpack.c.h.b16 %v779
    %v3251 = vunpack.c.l.b16 %v780
    %v3252 = vunpack.c.h.b16 %v780
    %v3253 = vunpack.c.l.b16 %v781
    %v3254 = vunpack.c.h.b16 %v781
    %v3255 = vunpack.c.l.b16 %v782
    %v3256 = vunpack.c.h.b16 %v782
    %v3257 = vunpack.c.l.b16 %v783
    %v3258 = vunpack.c.h.b16 %v783
    %v3259 = vunpack.c.l.b16 %v784
    %v3260 = vunpack.c.h.b16 %v784
    %v3261 = vunpack.c.l.b16 %v785
    %v3262 = vunpack.c.h.b16 %v785
    %v3263 = vunpack.c.l.b16 %v786
    %v3264 = vunpack.c.h.b16 %v786
    %v3265 = vunpack.c.l.b16 %v787
    %v3266 = vunpack.c.h.b16 %v787
    %v3267 = vunpack.c.l.b16 %v788
    %v3268 = vunpack.c.h.b16 %v788
    %v3269 = vunpack.c.l.b16 %v789
    %v3270 = vunpack.c.h.b16 %v789
    %v3271 = vunpack.c.l.b16 %v790
    %v3272 = vunpack.c.h.b16 %v790
    %v3273 = vunpack.c.l.b16 %v791
    %v3274 = vunpack.c.h.b16 %v791
    %v3275 = vunpack.c.l.b16 %v792
    %v3276 = vunpack.c.h.b16 %v792
    %v3277 = vunpack.c.l.b16 %v793
    %v3278 = vunpack.c.h.b16 %v793
    %v3279 = vunpack.c.l.b16 %v794
    %v3280 = vunpack.c.h.b16 %v794
    %v3281 = vunpack.c.l.b16 %v795
    %v3282 = vunpack.c.h.b16 %v795
    %v3283 = vunpack.c.l.b16 %v796
    %v3284 = vunpack.c.h.b16 %v796
    %v3285 = vunpack.c.l.b16 %v797
    %v3286 = vunpack.c.h.b16 %v797
    %v3287 = vunpack.c.l.b16 %v798
    %v3288 = vunpack.c.h.b16 %v798
    %v3289 = vunpack.c.l.b16 %v799
    %v3290 = vunpack.c.h.b16 %v799
    %v3291 = vunpack.c.l.b16 %v800
    %v3292 = vunpack.c.h.b16 %v800
    %v3293 = vunpack.c.l.b16 %v801
    %v3294 = vunpack.c.h.b16 %v801
    %v3295 = vunpack.c.l.b16 %v802
    %v3296 = vunpack.c.h.b16 %v802
    %v3297 = vunpack.c.l.b16 %v803
    %v3298 = vunpack.c.h.b16 %v803
    %v3299 = vunpack.c.l.b16 %v804
    %v3300 = vunpack.c.h.b16 %v804
    %v3301 = vunpack.c.l.b16 %v805
    %v3302 = vunpack.c.h.b16 %v805
    %v3303 = vunpack.c.l.b16 %v806
    %v3304 = vunpack.c.h.b16 %v806
    %v3305 = vunpack.c.l.b16 %v807
    %v3306 = vunpack.c.h.b16 %v807
    %v3307 = vunpack.c.l.b16 %v808
    %v3308 = vunpack.c.h.b16 %v808
    %v3309 = vunpack.c.l.b16 %v809
    %v3310 = vunpack.c.h.b16 %v809
    %v3311 = vunpack.c.l.b16 %v810
    %v3312 = vunpack.c.h.b16 %v810
    %v3313 = vunpack.c.l.b16 %v811
    %v3314 = vunpack.c.h.b16 %v811
    %v3315 = vunpack.c.l.b16 %v812
    %v3316 = vunpack.c.h.b16 %v812
    %v3317 = vunpack.c.l.b16 %v813
    %v3318 = vunpack.c.h.b16 %v813
    %v3319 = vunpack.c.l.b16 %v814
    %v3320 = vunpack.c.h.b16 %v814
    %v3321 = vunpack.c.l.b16 %v815
    %v3322 = vunpack.c.h.b16 %v815
    %v3323 = vunpack.c.l.b16 %v816
    %v3324 = vunpack.c.h.b16 %v816
    %v3325 = vunpack.c.l.b16 %v817
    %v3326 = vunpack.c.h.b16 %v817
    %v3327 = vunpack.c.l.b16 %v818
    %v3328 = vunpack.c.h.b16 %v818
    %v3329 = vunpack.c.l.b16 %v819
    %v3330 = vunpack.c.h.b16 %v819
    %v3331 = vunpack.c.l.b16 %v820
    %v3332 = vunpack.c.h.b16 %v820
    %v3333 = vunpack.c.l.b16 %v821
    %v3334 = vunpack.c.h.b16 %v821
    %v3335 = vunpack.c.l.b16 %v822
    %v3336 = vunpack.c.h.b16 %v822
    %v3337 = vunpack.c.l.b16 %v823
    %v3338 = vunpack.c.h.b16 %v823
    %v3339 = vunpack.c.l.b16 %v824
    %v3340 = vunpack.c.h.b16 %v824
    %v3341 = vunpack.c.l.b16 %v825
    %v3342 = vunpack.c.h.b16 %v825
    %v3343 = vunpack.c.l.b16 %v826
    %v3344 = vunpack.c.h.b16 %v826
    %v3345 = vunpack.c.l.b16 %v827
    %v3346 = vunpack.c.h.b16 %v827
    %v3347 = vunpack.c.l.b16 %v828
    %v3348 = vunpack.c.h.b16 %v828
    %v3349 = vunpack.c.l.b16 %v829
    %v3350 = vunpack.c.h.b16 %v829
    %v3351 = vunpack.c.l.b16 %v830
    %v3352 = vunpack.c.h.b16 %v830
    %v3353 = vunpack.c.l.b16 %v831
    %v3354 = vunpack.c.h.b16 %v831
    %v3355 = vunpack.c.l.b16 %v832
    %v3356 = vunpack.c.h.b16 %v832
    %v3357 = vunpack.c.l.b16 %v833
    %v3358 = vunpack.c.h.b16 %v833
    %v3359 = vunpack.c.l.b16 %v834
    %v3360 = vunpack.c.h.b16 %v834
    %v3361 = vunpack.c.l.b16 %v835
    %v3362 = vunpack.c.h.b16 %v835
    %v3363 = vunpack.c.l.b16 %v836
    %v3364 = vunpack.c.h.b16 %v836
    %v3365 = vunpack.c.l.b16 %v837
    %v3366 = vunpack.c.h.b16 %v837
    %v3367 = vunpack.c.l.b16 %v838
    %v3368 = vunpack.c.h.b16 %v838
    %v3369 = vunpack.c.l.b16 %v839
    %v3370 = vunpack.c.h.b16 %v839
    %v3371 = vunpack.c.l.b16 %v840
    %v3372 = vunpack.c.h.b16 %v840
    %v3373 = vunpack.c.l.b16 %v841
    %v3374 = vunpack.c.h.b16 %v841
    %v3375 = vunpack.c.l.b16 %v842
    %v3376 = vunpack.c.h.b16 %v842
    %v3377 = vunpack.c.l.b16 %v843
    %v3378 = vunpack.c.h.b16 %v843
    %v3379 = vunpack.c.l.b16 %v844
    %v3380 = vunpack.c.h.b16 %v844
    %v3381 = vunpack.c.l.b16 %v845
    %v3382 = vunpack.c.h.b16 %v845
    %v3383 = vunpack.c.l.b16 %v846
    %v3384 = vunpack.c.h.b16 %v846
    %v3385 = vunpack.c.l.b16 %v847
    %v3386 = vunpack.c.h.b16 %v847
    %v3387 = vunpack.c.l.b16 %v848
    %v3388 = vunpack.c.h.b16 %v848
    %v3389 = vunpack.c.l.b16 %v849
    %v3390 = vunpack.c.h.b16 %v849
    %v3391 = vunpack.c.l.b16 %v850
    %v3392 = vunpack.c.h.b16 %v850
    %v3393 = vunpack.c.l.b16 %v851
    %v3394 = vunpack.c.h.b16 %v851
    %v3395 = vunpack.c.l.b16 %v852
    %v3396 = vunpack.c.h.b16 %v852
    %v3397 = vunpack.c.l.b16 %v853
    %v3398 = vunpack.c.h.b16 %v853
    %v3399 = vunpack.c.l.b16 %v854
    %v3400 = vunpack.c.h.b16 %v854
    %v3401 = vunpack.c.l.b16 %v855
    %v3402 = vunpack.c.h.b16 %v855
    %v3403 = vunpack.c.l.b16 %v856
    %v3404 = vunpack.c.h.b16 %v856
    %v3405 = vunpack.c.l.b16 %v857
    %v3406 = vunpack.c.h.b16 %v857
    %v3407 = vunpack.c.l.b16 %v858
    %v3408 = vunpack.c.h.b16 %v858
    %v3409 = vunpack.c.l.b16 %v859
    %v3410 = vunpack.c.h.b16 %v859
    %v3411 = vunpack.c.l.b16 %v860
    %v3412 = vunpack.c.h.b16 %v860
    %v3413 = vunpack.c.l.b16 %v861
    %v3414 = vunpack.c.h.b16 %v861
    %v3415 = vunpack.c.l.b16 %v862
    %v3416 = vunpack.c.h.b16 %v862
    %v3417 = vunpack.c.l.b16 %v863
    %v3418 = vunpack.c.h.b16 %v863
    %v3419 = vunpack.c.l.b16 %v864
    %v3420 = vunpack.c.h.b16 %v864
    %v3421 = vunpack.c.l.b16 %v865
    %v3422 = vunpack.c.h.b16 %v865
    %v3423 = vunpack.c.l.b16 %v866
    %v3424 = vunpack.c.h.b16 %v866
    %v3425 = vunpack.c.l.b16 %v867
    %v3426 = vunpack.c.h.b16 %v867
    %v3427 = vunpack.c.l.b16 %v868
    %v3428 = vunpack.c.h.b16 %v868
    %v3429 = vunpack.c.l.b16 %v869
    %v3430 = vunpack.c.h.b16 %v869
    %v3431 = vunpack.c.l.b16 %v870
    %v3432 = vunpack.c.h.b16 %v870
    %v3433 = vunpack.c.l.b16 %v871
    %v3434 = vunpack.c.h.b16 %v871
    %v3435 = vpack.c.b16 %v1871, %v1867
    %v3436 = vpack.c.b16 %v1872, %v1868
    %v3437 = vpack.c.b16 %v1873, %v1869
    %v3438 = vpack.c.b16 %v1874, %v1870
    %v3439 = vpack.c.b16 %v1879, %v1875
    %v3440 = vpack.c.b16 %v1880, %v1876
    %v3441 = vpack.c.b16 %v1881, %v1877
    %v3442 = vpack.c.b16 %v1882, %v1878
    %v3443 = vpack.c.b16 %v1887, %v1883
    %v3444 = vpack.c.b16 %v1888, %v1884
    %v3445 = vpack.c.b16 %v1889, %v1885
    %v3446 = vpack.c.b16 %v1890, %v1886
    %v3447 = vpack.c.b16 %v1895, %v1891
    %v3448 = vpack.c.b16 %v1896, %v1892
    %v3449 = vpack.c.b16 %v1897, %v1893
    %v3450 = vpack.c.b16 %v1898, %v1894
    %v3451 = vpack.c.b16 %v1903, %v1899
    %v3452 = vpack.c.b16 %v1904, %v1900
    %v3453 = vpack.c.b16 %v1905, %v1901
    %v3454 = vpack.c.b16 %v1906, %v1902
    %v3455 = vpack.c.b16 %v1911, %v1907
    %v3456 = vpack.c.b16 %v1912, %v1908
    %v3457 = vpack.c.b16 %v1913, %v1909
    %v3458 = vpack.c.b16 %v1914, %v1910
    %v3459 = vpack.c.b16 %v1919, %v1915
    %v3460 = vpack.c.b16 %v1920, %v1916
    %v3461 = vpack.c.b16 %v1921, %v1917
    %v3462 = vpack.c.b16 %v1922, %v1918
    %v3463 = vpack.c.b16 %v1927, %v1923
    %v3464 = vpack.c.b16 %v1928, %v1924
    %v3465 = vpack.c.b16 %v1929, %v1925
    %v3466 = vpack.c.b16 %v1930, %v1926
    %v3467 = vpack.c.b16 %v1935, %v1931
    %v3468 = vpack.c.b16 %v1936, %v1932
    %v3469 = vpack.c.b16 %v1937, %v1933
    %v3470 = vpack.c.b16 %v1938, %v1934
    %v3471 = vpack.c.b16 %v1943, %v1939
    %v3472 = vpack.c.b16 %v1944, %v1940
    %v3473 = vpack.c.b16 %v1945, %v1941
    %v3474 = vpack.c.b16 %v1946, %v1942
    %v3475 = vpack.c.b16 %v1951, %v1947
    %v3476 = vpack.c.b16 %v1952, %v1948
    %v3477 = vpack.c.b16 %v1953, %v1949
    %v3478 = vpack.c.b16 %v1954, %v1950
    %v3479 = vpack.c.b16 %v1959, %v1955
    %v3480 = vpack.c.b16 %v1960, %v1956
    %v3481 = vpack.c.b16 %v1961, %v1957
    %v3482 = vpack.c.b16 %v1962, %v1958
    %v3483 = vpack.c.b16 %v1967, %v1963
    %v3484 = vpack.c.b16 %v1968, %v1964
    %v3485 = vpack.c.b16 %v1969, %v1965
    %v3486 = vpack.c.b16 %v1970, %v1966
    %v3487 = vpack.c.b16 %v1975, %v1971
    %v3488 = vpack.c.b16 %v1976, %v1972
    %v3489 = vpack.c.b16 %v1977, %v1973
    %v3490 = vpack.c.b16 %v1978, %v1974
    %v3491 = vpack.c.b16 %v1983, %v1979
    %v3492 = vpack.c.b16 %v1984, %v1980
    %v3493 = vpack.c.b16 %v1985, %v1981
    %v3494 = vpack.c.b16 %v1986, %v1982
    %v3495 = vpack.c.b16 %v1991, %v1987
    %v3496 = vpack.c.b16 %v1992, %v1988
    %v3497 = vpack.c.b16 %v1993, %v1989
    %v3498 = vpack.c.b16 %v1994, %v1990
    %v3499 = vpack.c.b16 %v1999, %v1995
    %v3500 = vpack.c.b16 %v2000, %v1996
    %v3501 = vpack.c.b16 %v2001, %v1997
    %v3502 = vpack.c.b16 %v2002, %v1998
    %v3503 = vpack.c.b16 %v2007, %v2003
    %v3504 = vpack.c.b16 %v2008, %v2004
    %v3505 = vpack.c.b16 %v2009, %v2005
    %v3506 = vpack.c.b16 %v2010, %v2006
    %v3507 = vpack.c.b16 %v2015, %v2011
    %v3508 = vpack.c.b16 %v2016, %v2012
    %v3509 = vpack.c.b16 %v2017, %v2013
    %v3510 = vpack.c.b16 %v2018, %v2014
    %v3511 = vpack.c.b16 %v2023, %v2019
    %v3512 = vpack.c.b16 %v2024, %v2020
    %v3513 = vpack.c.b16 %v2025, %v2021
    %v3514 = vpack.c.b16 %v2026, %v2022
    %v3515 = vpack.c.b16 %v2031, %v2027
    %v3516 = vpack.c.b16 %v2032, %v2028
    %v3517 = vpack.c.b16 %v2033, %v2029
    %v3518 = vpack.c.b16 %v2034, %v2030
    %v3519 = vpack.c.b16 %v2039, %v2035
    %v3520 = vpack.c.b16 %v2040, %v2036
    %v3521 = vpack.c.b16 %v2041, %v2037
    %v3522 = vpack.c.b16 %v2042, %v2038
    %v3523 = vpack.c.b16 %v2047, %v2043
    %v3524 = vpack.c.b16 %v2048, %v2044
    %v3525 = vpack.c.b16 %v2049, %v2045
    %v3526 = vpack.c.b16 %v2050, %v2046
    %v3527 = vpack.c.b16 %v2055, %v2051
    %v3528 = vpack.c.b16 %v2056, %v2052
    %v3529 = vpack.c.b16 %v2057, %v2053
    %v3530 = vpack.c.b16 %v2058, %v2054
    %v3531 = vpack.c.b16 %v2063, %v2059
    %v3532 = vpack.c.b16 %v2064, %v2060
    %v3533 = vpack.c.b16 %v2065, %v2061
    %v3534 = vpack.c.b16 %v2066, %v2062
    %v3535 = vpack.c.b16 %v2071, %v2067
    %v3536 = vpack.c.b16 %v2072, %v2068
    %v3537 = vpack.c.b16 %v2073, %v2069
    %v3538 = vpack.c.b16 %v2074, %v2070
    %v3539 = vpack.c.b16 %v2079, %v2075
    %v3540 = vpack.c.b16 %v2080, %v2076
    %v3541 = vpack.c.b16 %v2081, %v2077
    %v3542 = vpack.c.b16 %v2082, %v2078
    %v3543 = vpack.c.b16 %v2087, %v2083
    %v3544 = vpack.c.b16 %v2088, %v2084
    %v3545 = vpack.c.b16 %v2089, %v2085
    %v3546 = vpack.c.b16 %v2090, %v2086
    %v3547 = vpack.c.b16 %v2095, %v2091
    %v3548 = vpack.c.b16 %v2096, %v2092
    %v3549 = vpack.c.b16 %v2097, %v2093
    %v3550 = vpack.c.b16 %v2098, %v2094
    %v3551 = vpack.c.b16 %v2103, %v2099
    %v3552 = vpack.c.b16 %v2104, %v2100
    %v3553 = vpack.c.b16 %v2105, %v2101
    %v3554 = vpack.c.b16 %v2106, %v2102
    %v3555 = vpack.c.b16 %v2111, %v2107
    %v3556 = vpack.c.b16 %v2112, %v2108
    %v3557 = vpack.c.b16 %v2113, %v2109
    %v3558 = vpack.c.b16 %v2114, %v2110
    %v3559 = vpack.c.b16 %v2119, %v2115
    %v3560 = vpack.c.b16 %v2120, %v2116
    %v3561 = vpack.c.b16 %v2121, %v2117
    %v3562 = vpack.c.b16 %v2122, %v2118
    %v3563 = vpack.c.b16 %v2127, %v2123
    %v3564 = vpack.c.b16 %v2128, %v2124
    %v3565 = vpack.c.b16 %v2129, %v2125
    %v3566 = vpack.c.b16 %v2130, %v2126
    %v3567 = vpack.c.b16 %v2135, %v2131
    %v3568 = vpack.c.b16 %v2136, %v2132
    %v3569 = vpack.c.b16 %v2137, %v2133
    %v3570 = vpack.c.b16 %v2138, %v2134
    %v3571 = vpack.c.b16 %v2143, %v2139
    %v3572 = vpack.c.b16 %v2144, %v2140
    %v3573 = vpack.c.b16 %v2145, %v2141
    %v3574 = vpack.c.b16 %v2146, %v2142
    %v3575 = vpack.c.b16 %v2151, %v2147
    %v3576 = vpack.c.b16 %v2152, %v2148
    %v3577 = vpack.c.b16 %v2153, %v2149
    %v3578 = vpack.c.b16 %v2154, %v2150
    %v3579 = vpack.c.b16 %v2159, %v2155
    %v3580 = vpack.c.b16 %v2160, %v2156
    %v3581 = vpack.c.b16 %v2161, %v2157
    %v3582 = vpack.c.b16 %v2162, %v2158
    %v3583 = vpack.c.b16 %v2167, %v2163
    %v3584 = vpack.c.b16 %v2168, %v2164
    %v3585 = vpack.c.b16 %v2169, %v2165
    %v3586 = vpack.c.b16 %v2170, %v2166
    %v3587 = vpack.c.b16 %v2175, %v2171
    %v3588 = vpack.c.b16 %v2176, %v2172
    %v3589 = vpack.c.b16 %v2177, %v2173
    %v3590 = vpack.c.b16 %v2178, %v2174
    %v3591 = vpack.c.b16 %v2183, %v2179
    %v3592 = vpack.c.b16 %v2184, %v2180
    %v3593 = vpack.c.b16 %v2185, %v2181
    %v3594 = vpack.c.b16 %v2186, %v2182
    %v3595 = vpack.c.b16 %v2191, %v2187
    %v3596 = vpack.c.b16 %v2192, %v2188
    %v3597 = vpack.c.b16 %v2193, %v2189
    %v3598 = vpack.c.b16 %v2194, %v2190
    %v3599 = vpack.c.b16 %v2199, %v2195
    %v3600 = vpack.c.b16 %v2200, %v2196
    %v3601 = vpack.c.b16 %v2201, %v2197
    %v3602 = vpack.c.b16 %v2202, %v2198
    %v3603 = vpack.c.b16 %v2207, %v2203
    %v3604 = vpack.c.b16 %v2208, %v2204
    %v3605 = vpack.c.b16 %v2209, %v2205
    %v3606 = vpack.c.b16 %v2210, %v2206
    %v3607 = vpack.c.b16 %v2215, %v2211
    %v3608 = vpack.c.b16 %v2216, %v2212
    %v3609 = vpack.c.b16 %v2217, %v2213
    %v3610 = vpack.c.b16 %v2218, %v2214
    %v3611 = vpack.c.b16 %v2223, %v2219
    %v3612 = vpack.c.b16 %v2224, %v2220
    %v3613 = vpack.c.b16 %v2225, %v2221
    %v3614 = vpack.c.b16 %v2226, %v2222
    %v3615 = vpack.c.b16 %v2231, %v2227
    %v3616 = vpack.c.b16 %v2232, %v2228
    %v3617 = vpack.c.b16 %v2233, %v2229
    %v3618 = vpack.c.b16 %v2234, %v2230
    %v3619 = vpack.c.b16 %v2239, %v2235
    %v3620 = vpack.c.b16 %v2240, %v2236
    %v3621 = vpack.c.b16 %v2241, %v2237
    %v3622 = vpack.c.b16 %v2242, %v2238
    %v3623 = vpack.c.b16 %v2247, %v2243
    %v3624 = vpack.c.b16 %v2248, %v2244
    %v3625 = vpack.c.b16 %v2249, %v2245
    %v3626 = vpack.c.b16 %v2250, %v2246
    %v3627 = vpack.c.b16 %v2255, %v2251
    %v3628 = vpack.c.b16 %v2256, %v2252
    %v3629 = vpack.c.b16 %v2257, %v2253
    %v3630 = vpack.c.b16 %v2258, %v2254
    %v3631 = vpack.c.b16 %v2263, %v2259
    %v3632 = vpack.c.b16 %v2264, %v2260
    %v3633 = vpack.c.b16 %v2265, %v2261
    %v3634 = vpack.c.b16 %v2266, %v2262
    %v3635 = vpack.c.b16 %v2271, %v2267
    %v3636 = vpack.c.b16 %v2272, %v2268
    %v3637 = vpack.c.b16 %v2273, %v2269
    %v3638 = vpack.c.b16 %v2274, %v2270
    %v3639 = vpack.c.b16 %v2279, %v2275
    %v3640 = vpack.c.b16 %v2280, %v2276
    %v3641 = vpack.c.b16 %v2281, %v2277
    %v3642 = vpack.c.b16 %v2282, %v2278
    %v3643 = vpack.c.b16 %v2287, %v2283
    %v3644 = vpack.c.b16 %v2288, %v2284
    %v3645 = vpack.c.b16 %v2289, %v2285
    %v3646 = vpack.c.b16 %v2290, %v2286
    %v3647 = vpack.c.b16 %v2295, %v2291
    %v3648 = vpack.c.b16 %v2296, %v2292
    %v3649 = vpack.c.b16 %v2297, %v2293
    %v3650 = vpack.c.b16 %v2298, %v2294
    %v3651 = vpack.c.b16 %v2303, %v2299
    %v3652 = vpack.c.b16 %v2304, %v2300
    %v3653 = vpack.c.b16 %v2305, %v2301
    %v3654 = vpack.c.b16 %v2306, %v2302
    %v3655 = vpack.c.b16 %v2311, %v2307
    %v3656 = vpack.c.b16 %v2312, %v2308
    %v3657 = vpack.c.b16 %v2313, %v2309
    %v3658 = vpack.c.b16 %v2314, %v2310
    %v3659 = vpack.c.b16 %v2319, %v2315
    %v3660 = vpack.c.b16 %v2320, %v2316
    %v3661 = vpack.c.b16 %v2321, %v2317
    %v3662 = vpack.c.b16 %v2322, %v2318
    %v3663 = vpack.c.b16 %v2327, %v2323
    %v3664 = vpack.c.b16 %v2328, %v2324
    %v3665 = vpack.c.b16 %v2329, %v2325
    %v3666 = vpack.c.b16 %v2330, %v2326
    %v3667 = vpack.c.b16 %v2335, %v2331
    %v3668 = vpack.c.b16 %v2336, %v2332
    %v3669 = vpack.c.b16 %v2337, %v2333
    %v3670 = vpack.c.b16 %v2338, %v2334
    %v3671 = vpack.c.b16 %v2343, %v2339
    %v3672 = vpack.c.b16 %v2344, %v2340
    %v3673 = vpack.c.b16 %v2345, %v2341
    %v3674 = vpack.c.b16 %v2346, %v2342
    %v3675 = vpack.c.b16 %v2351, %v2347
    %v3676 = vpack.c.b16 %v2352, %v2348
    %v3677 = vpack.c.b16 %v2353, %v2349
    %v3678 = vpack.c.b16 %v2354, %v2350
    %v3679 = vpack.c.b16 %v2359, %v2355
    %v3680 = vpack.c.b16 %v2360, %v2356
    %v3681 = vpack.c.b16 %v2361, %v2357
    %v3682 = vpack.c.b16 %v2362, %v2358
    %v3683 = vpack.c.b16 %v2367, %v2363
    %v3684 = vpack.c.b16 %v2368, %v2364
    %v3685 = vpack.c.b16 %v2369, %v2365
    %v3686 = vpack.c.b16 %v2370, %v2366
    %v3687 = vpack.c.b16 %v2375, %v2371
    %v3688 = vpack.c.b16 %v2376, %v2372
    %v3689 = vpack.c.b16 %v2377, %v2373
    %v3690 = vpack.c.b16 %v2378, %v2374
    %v3691 = vpack.c.b16 %v2383, %v2379
    %v3692 = vpack.c.b16 %v2384, %v2380
    %v3693 = vpack.c.b16 %v2385, %v2381
    %v3694 = vpack.c.b16 %v2386, %v2382
    %v3695 = vpack.c.b16 %v2391, %v2387
    %v3696 = vpack.c.b16 %v2392, %v2388
    %v3697 = vpack.c.b16 %v2393, %v2389
    %v3698 = vpack.c.b16 %v2394, %v2390
    %v3699 = vpack.c.b16 %v2399, %v2395
    %v3700 = vpack.c.b16 %v2400, %v2396
    %v3701 = vpack.c.b16 %v2401, %v2397
    %v3702 = vpack.c.b16 %v2402, %v2398
    %v3703 = vpack.c.b16 %v2407, %v2403
    %v3704 = vpack.c.b16 %v2408, %v2404
    %v3705 = vpack.c.b16 %v2409, %v2405
    %v3706 = vpack.c.b16 %v2410, %v2406
    %v3707 = vpack.c.b16 %v2415, %v2411
    %v3708 = vpack.c.b16 %v2416, %v2412
    %v3709 = vpack.c.b16 %v2417, %v2413
    %v3710 = vpack.c.b16 %v2418, %v2414
    %v3711 = vpack.c.b16 %v2423, %v2419
    %v3712 = vpack.c.b16 %v2424, %v2420
    %v3713 = vpack.c.b16 %v2425, %v2421
    %v3714 = vpack.c.b16 %v2426, %v2422
    %v3715 = vpack.c.b16 %v2431, %v2427
    %v3716 = vpack.c.b16 %v2432, %v2428
    %v3717 = vpack.c.b16 %v2433, %v2429
    %v3718 = vpack.c.b16 %v2434, %v2430
    %v3719 = vpack.c.b16 %v2439, %v2435
    %v3720 = vpack.c.b16 %v2440, %v2436
    %v3721 = vpack.c.b16 %v2441, %v2437
    %v3722 = vpack.c.b16 %v2442, %v2438
    %v3723 = vpack.c.b16 %v2447, %v2443
    %v3724 = vpack.c.b16 %v2448, %v2444
    %v3725 = vpack.c.b16 %v2449, %v2445
    %v3726 = vpack.c.b16 %v2450, %v2446
    %v3727 = vpack.c.b16 %v2455, %v2451
    %v3728 = vpack.c.b16 %v2456, %v2452
    %v3729 = vpack.c.b16 %v2457, %v2453
    %v3730 = vpack.c.b16 %v2458, %v2454
    %v3731 = vpack.c.b16 %v2463, %v2459
    %v3732 = vpack.c.b16 %v2464, %v2460
    %v3733 = vpack.c.b16 %v2465, %v2461
    %v3734 = vpack.c.b16 %v2466, %v2462
    %v3735 = vpack.c.b16 %v2471, %v2467
    %v3736 = vpack.c.b16 %v2472, %v2468
    %v3737 = vpack.c.b16 %v2473, %v2469
    %v3738 = vpack.c.b16 %v2474, %v2470
    %v3739 = vpack.c.b16 %v2479, %v2475
    %v3740 = vpack.c.b16 %v2480, %v2476
    %v3741 = vpack.c.b16 %v2481, %v2477
    %v3742 = vpack.c.b16 %v2482, %v2478
    %v3743 = vpack.c.b16 %v2487, %v2483
    %v3744 = vpack.c.b16 %v2488, %v2484
    %v3745 = vpack.c.b16 %v2489, %v2485
    %v3746 = vpack.c.b16 %v2490, %v2486
    %v3747 = vpack.c.b16 %v2495, %v2491
    %v3748 = vpack.c.b16 %v2496, %v2492
    %v3749 = vpack.c.b16 %v2497, %v2493
    %v3750 = vpack.c.b16 %v2498, %v2494
    %v3751 = vpack.c.b16 %v2503, %v2499
    %v3752 = vpack.c.b16 %v2504, %v2500
    %v3753 = vpack.c.b16 %v2505, %v2501
    %v3754 = vpack.c.b16 %v2506, %v2502
    %v3755 = vpack.c.b16 %v2511, %v2507
    %v3756 = vpack.c.b16 %v2512, %v2508
    %v3757 = vpack.c.b16 %v2513, %v2509
    %v3758 = vpack.c.b16 %v2514, %v2510
    %v3759 = vpack.c.b16 %v2519, %v2515
    %v3760 = vpack.c.b16 %v2520, %v2516
    %v3761 = vpack.c.b16 %v2521, %v2517
    %v3762 = vpack.c.b16 %v2522, %v2518
    %v3763 = vpack.c.b16 %v2527, %v2523
    %v3764 = vpack.c.b16 %v2528, %v2524
    %v3765 = vpack.c.b16 %v2529, %v2525
    %v3766 = vpack.c.b16 %v2530, %v2526
    %v3767 = vpack.c.b16 %v2535, %v2531
    %v3768 = vpack.c.b16 %v2536, %v2532
    %v3769 = vpack.c.b16 %v2537, %v2533
    %v3770 = vpack.c.b16 %v2538, %v2534
    %v3771 = vpack.c.b16 %v2543, %v2539
    %v3772 = vpack.c.b16 %v2544, %v2540
    %v3773 = vpack.c.b16 %v2545, %v2541
    %v3774 = vpack.c.b16 %v2546, %v2542
    %v3775 = vpack.c.b16 %v2551, %v2547
    %v3776 = vpack.c.b16 %v2552, %v2548
    %v3777 = vpack.c.b16 %v2553, %v2549
    %v3778 = vpack.c.b16 %v2554, %v2550
    %v3779 = vpack.c.b16 %v2559, %v2555
    %v3780 = vpack.c.b16 %v2560, %v2556
    %v3781 = vpack.c.b16 %v2561, %v2557
    %v3782 = vpack.c.b16 %v2562, %v2558
    %v3783 = vpack.c.b16 %v2567, %v2563
    %v3784 = vpack.c.b16 %v2568, %v2564
    %v3785 = vpack.c.b16 %v2569, %v2565
    %v3786 = vpack.c.b16 %v2570, %v2566
    %v3787 = vpack.c.b16 %v2575, %v2571
    %v3788 = vpack.c.b16 %v2576, %v2572
    %v3789 = vpack.c.b16 %v2577, %v2573
    %v3790 = vpack.c.b16 %v2578, %v2574
    %v3791 = vpack.c.b16 %v2583, %v2579
    %v3792 = vpack.c.b16 %v2584, %v2580
    %v3793 = vpack.c.b16 %v2585, %v2581
    %v3794 = vpack.c.b16 %v2586, %v2582
    %v3795 = vpack.c.b16 %v2591, %v2587
    %v3796 = vpack.c.b16 %v2592, %v2588
    %v3797 = vpack.c.b16 %v2593, %v2589
    %v3798 = vpack.c.b16 %v2594, %v2590
    %v3799 = vpack.c.b16 %v2599, %v2595
    %v3800 = vpack.c.b16 %v2600, %v2596
    %v3801 = vpack.c.b16 %v2601, %v2597
    %v3802 = vpack.c.b16 %v2602, %v2598
    %v3803 = vpack.c.b16 %v2607, %v2603
    %v3804 = vpack.c.b16 %v2608, %v2604
    %v3805 = vpack.c.b16 %v2609, %v2605
    %v3806 = vpack.c.b16 %v2610, %v2606
    %v3807 = vpack.c.b16 %v2615, %v2611
    %v3808 = vpack.c.b16 %v2616, %v2612
    %v3809 = vpack.c.b16 %v2617, %v2613
    %v3810 = vpack.c.b16 %v2618, %v2614
    %v3811 = vpack.c.b16 %v2623, %v2619
    %v3812 = vpack.c.b16 %v2624, %v2620
    %v3813 = vpack.c.b16 %v2625, %v2621
    %v3814 = vpack.c.b16 %v2626, %v2622
    %v3815 = vpack.c.b16 %v2631, %v2627
    %v3816 = vpack.c.b16 %v2632, %v2628
    %v3817 = vpack.c.b16 %v2633, %v2629
    %v3818 = vpack.c.b16 %v2634, %v2630
    %v3819 = vpack.c.b16 %v2639, %v2635
    %v3820 = vpack.c.b16 %v2640, %v2636
    %v3821 = vpack.c.b16 %v2641, %v2637
    %v3822 = vpack.c.b16 %v2642, %v2638
    %v3823 = vpack.c.b16 %v2647, %v2643
    %v3824 = vpack.c.b16 %v2648, %v2644
    %v3825 = vpack.c.b16 %v2649, %v2645
    %v3826 = vpack.c.b16 %v2650, %v2646
    %v3827 = vpack.c.b16 %v2655, %v2651
    %v3828 = vpack.c.b16 %v2656, %v2652
    %v3829 = vpack.c.b16 %v2657, %v2653
    %v3830 = vpack.c.b16 %v2658, %v2654
    %v3831 = vpack.c.b16 %v2663, %v2659
    %v3832 = vpack.c.b16 %v2664, %v2660
    %v3833 = vpack.c.b16 %v2665, %v2661
    %v3834 = vpack.c.b16 %v2666, %v2662
    %v3835 = vpack.c.b16 %v2671, %v2667
    %v3836 = vpack.c.b16 %v2672, %v2668
    %v3837 = vpack.c.b16 %v2673, %v2669
    %v3838 = vpack.c.b16 %v2674, %v2670
    %v3839 = vpack.c.b16 %v2679, %v2675
    %v3840 = vpack.c.b16 %v2680, %v2676
    %v3841 = vpack.c.b16 %v2681, %v2677
    %v3842 = vpack.c.b16 %v2682, %v2678
    %v3843 = vpack.c.b16 %v2687, %v2683
    %v3844 = vpack.c.b16 %v2688, %v2684
    %v3845 = vpack.c.b16 %v2689, %v2685
    %v3846 = vpack.c.b16 %v2690, %v2686
    %v3847 = vpack.c.b16 %v2695, %v2691
    %v3848 = vpack.c.b16 %v2696, %v2692
    %v3849 = vpack.c.b16 %v2697, %v2693
    %v3850 = vpack.c.b16 %v2698, %v2694
    %v3851 = vpack.c.b16 %v2703, %v2699
    %v3852 = vpack.c.b16 %v2704, %v2700
    %v3853 = vpack.c.b16 %v2705, %v2701
    %v3854 = vpack.c.b16 %v2706, %v2702
    %v3855 = vpack.c.b16 %v2711, %v2707
    %v3856 = vpack.c.b16 %v2712, %v2708
    %v3857 = vpack.c.b16 %v2713, %v2709
    %v3858 = vpack.c.b16 %v2714, %v2710
    %v3859 = vpack.c.b16 %v2719, %v2715
    %v3860 = vpack.c.b16 %v2720, %v2716
    %v3861 = vpack.c.b16 %v2721, %v2717
    %v3862 = vpack.c.b16 %v2722, %v2718
    %v3863 = vpack.c.b16 %v2727, %v2723
    %v3864 = vpack.c.b16 %v2728, %v2724
    %v3865 = vpack.c.b16 %v2729, %v2725
    %v3866 = vpack.c.b16 %v2730, %v2726
    %v3867 = vpack.c.b16 %v2735, %v2731
    %v3868 = vpack.c.b16 %v2736, %v2732
    %v3869 = vpack.c.b16 %v2737, %v2733
    %v3870 = vpack.c.b16 %v2738, %v2734
    %v3871 = vpack.c.b16 %v2743, %v2739
    %v3872 = vpack.c.b16 %v2744, %v2740
    %v3873 = vpack.c.b16 %v2745, %v2741
    %v3874 = vpack.c.b16 %v2746, %v2742
    %v3875 = vpack.c.b16 %v2751, %v2747
    %v3876 = vpack.c.b16 %v2752, %v2748
    %v3877 = vpack.c.b16 %v2753, %v2749
    %v3878 = vpack.c.b16 %v2754, %v2750
    %v3879 = vpack.c.b16 %v2759, %v2755
    %v3880 = vpack.c.b16 %v2760, %v2756
    %v3881 = vpack.c.b16 %v2761, %v2757
    %v3882 = vpack.c.b16 %v2762, %v2758
    %v3883 = vpack.c.b16 %v2767, %v2763
    %v3884 = vpack.c.b16 %v2768, %v2764
    %v3885 = vpack.c.b16 %v2769, %v2765
    %v3886 = vpack.c.b16 %v2770, %v2766
    %v3887 = vpack.c.b16 %v2775, %v2771
    %v3888 = vpack.c.b16 %v2776, %v2772
    %v3889 = vpack.c.b16 %v2777, %v2773
    %v3890 = vpack.c.b16 %v2778, %v2774
    %v3891 = vpack.c.b16 %v2783, %v2779
    %v3892 = vpack.c.b16 %v2784, %v2780
    %v3893 = vpack.c.b16 %v2785, %v2781
    %v3894 = vpack.c.b16 %v2786, %v2782
    %v3895 = vpack.c.b16 %v2791, %v2787
    %v3896 = vpack.c.b16 %v2792, %v2788
    %v3897 = vpack.c.b16 %v2793, %v2789
    %v3898 = vpack.c.b16 %v2794, %v2790
    %v3899 = vpack.c.b16 %v2799, %v2795
    %v3900 = vpack.c.b16 %v2800, %v2796
    %v3901 = vpack.c.b16 %v2801, %v2797
    %v3902 = vpack.c.b16 %v2802, %v2798
    %v3903 = vpack.c.b16 %v2807, %v2803
    %v3904 = vpack.c.b16 %v2808, %v2804
    %v3905 = vpack.c.b16 %v2809, %v2805
    %v3906 = vpack.c.b16 %v2810, %v2806
    %v3907 = vpack.c.b16 %v2815, %v2811
    %v3908 = vpack.c.b16 %v2816, %v2812
    %v3909 = vpack.c.b16 %v2817, %v2813
    %v3910 = vpack.c.b16 %v2818, %v2814
    %v3911 = vpack.c.b16 %v2823, %v2819
    %v3912 = vpack.c.b16 %v2824, %v2820
    %v3913 = vpack.c.b16 %v2825, %v2821
    %v3914 = vpack.c.b16 %v2826, %v2822
    %v3915 = vpack.c.b16 %v2831, %v2827
    %v3916 = vpack.c.b16 %v2832, %v2828
    %v3917 = vpack.c.b16 %v2833, %v2829
    %v3918 = vpack.c.b16 %v2834, %v2830
    %v3919 = vpack.c.b16 %v2839, %v2835
    %v3920 = vpack.c.b16 %v2840, %v2836
    %v3921 = vpack.c.b16 %v2841, %v2837
    %v3922 = vpack.c.b16 %v2842, %v2838
    %v3923 = vpack.c.b16 %v2847, %v2843
    %v3924 = vpack.c.b16 %v2848, %v2844
    %v3925 = vpack.c.b16 %v2849, %v2845
    %v3926 = vpack.c.b16 %v2850, %v2846
    %v3927 = vpack.c.b16 %v2855, %v2851
    %v3928 = vpack.c.b16 %v2856, %v2852
    %v3929 = vpack.c.b16 %v2857, %v2853
    %v3930 = vpack.c.b16 %v2858, %v2854
    %v3931 = vpack.c.b16 %v2863, %v2859
    %v3932 = vpack.c.b16 %v2864, %v2860
    %v3933 = vpack.c.b16 %v2865, %v2861
    %v3934 = vpack.c.b16 %v2866, %v2862
    %v3935 = vpack.c.b16 %v2871, %v2867
    %v3936 = vpack.c.b16 %v2872, %v2868
    %v3937 = vpack.c.b16 %v2873, %v2869
    %v3938 = vpack.c.b16 %v2874, %v2870
    %v3939 = vpack.c.b16 %v2879, %v2875
    %v3940 = vpack.c.b16 %v2880, %v2876
    %v3941 = vpack.c.b16 %v2881, %v2877
    %v3942 = vpack.c.b16 %v2882, %v2878
    %v3943 = vpack.c.b16 %v2887, %v2883
    %v3944 = vpack.c.b16 %v2888, %v2884
    %v3945 = vpack.c.b16 %v2889, %v2885
    %v3946 = vpack.c.b16 %v2890, %v2886
    %v3947 = vpack.c.b16 %v2895, %v2891
    %v3948 = vpack.c.b16 %v2896, %v2892
    %v3949 = vpack.c.b16 %v2897, %v2893
    %v3950 = vpack.c.b16 %v2898, %v2894
    %v3951 = vpack.c.b16 %v2903, %v2899
    %v3952 = vpack.c.b16 %v2904, %v2900
    %v3953 = vpack.c.b16 %v2905, %v2901
    %v3954 = vpack.c.b16 %v2906, %v2902
    %v3955 = vpack.c.b16 %v2911, %v2907
    %v3956 = vpack.c.b16 %v2912, %v2908
    %v3957 = vpack.c.b16 %v2913, %v2909
    %v3958 = vpack.c.b16 %v2914, %v2910
    %v3959 = vpack.c.b16 %v2919, %v2915
    %v3960 = vpack.c.b16 %v2920, %v2916
    %v3961 = vpack.c.b16 %v2921, %v2917
    %v3962 = vpack.c.b16 %v2922, %v2918
    %v3963 = vpack.c.b16 %v2927, %v2923
    %v3964 = vpack.c.b16 %v2928, %v2924
    %v3965 = vpack.c.b16 %v2929, %v2925
    %v3966 = vpack.c.b16 %v2930, %v2926
    %v3967 = vpack.c.b16 %v2935, %v2931
    %v3968 = vpack.c.b16 %v2936, %v2932
    %v3969 = vpack.c.b16 %v2937, %v2933
    %v3970 = vpack.c.b16 %v2938, %v2934
    %v3971 = vpack.c.b16 %v2943, %v2939
    %v3972 = vpack.c.b16 %v2944, %v2940
    %v3973 = vpack.c.b16 %v2945, %v2941
    %v3974 = vpack.c.b16 %v2946, %v2942
    %v3975 = vpack.c.b16 %v2951, %v2947
    %v3976 = vpack.c.b16 %v2952, %v2948
    %v3977 = vpack.c.b16 %v2953, %v2949
    %v3978 = vpack.c.b16 %v2954, %v2950
    %v3979 = vpack.c.b16 %v2959, %v2955
    %v3980 = vpack.c.b16 %v2960, %v2956
    %v3981 = vpack.c.b16 %v2961, %v2957
    %v3982 = vpack.c.b16 %v2962, %v2958
    %v3983 = vpack.c.b16 %v2967, %v2963
    %v3984 = vpack.c.b16 %v2968, %v2964
    %v3985 = vpack.c.b16 %v2969, %v2965
    %v3986 = vpack.c.b16 %v2970, %v2966
    %v3987 = vpack.c.b16 %v2975, %v2971
    %v3988 = vpack.c.b16 %v2976, %v2972
    %v3989 = vpack.c.b16 %v2977, %v2973
    %v3990 = vpack.c.b16 %v2978, %v2974
    %v3991 = vpack.c.b16 %v2983, %v2979
    %v3992 = vpack.c.b16 %v2984, %v2980
    %v3993 = vpack.c.b16 %v2985, %v2981
    %v3994 = vpack.c.b16 %v2986, %v2982
    %v3995 = vpack.c.b16 %v2991, %v2987
    %v3996 = vpack.c.b16 %v2992, %v2988
    %v3997 = vpack.c.b16 %v2993, %v2989
    %v3998 = vpack.c.b16 %v2994, %v2990
    %v3999 = vpack.c.b16 %v2999, %v2995
    %v4000 = vpack.c.b16 %v3000, %v2996
    %v4001 = vpack.c.b16 %v3001, %v2997
    %v4002 = vpack.c.b16 %v3002, %v2998
    %v4003 = vpack.c.b16 %v3007, %v3003
    %v4004 = vpack.c.b16 %v3008, %v3004
    %v4005 = vpack.c.b16 %v3009, %v3005
    %v4006 = vpack.c.b16 %v3010, %v3006
    %v4007 = vpack.c.b16 %v3015, %v3011
    %v4008 = vpack.c.b16 %v3016, %v3012
    %v4009 = vpack.c.b16 %v3017, %v3013
    %v4010 = vpack.c.b16 %v3018, %v3014
    %v4011 = vpack.c.b16 %v3023, %v3019
    %v4012 = vpack.c.b16 %v3024, %v3020
    %v4013 = vpack.c.b16 %v3025, %v3021
    %v4014 = vpack.c.b16 %v3026, %v3022
    %v4015 = vpack.c.b16 %v3031, %v3027
    %v4016 = vpack.c.b16 %v3032, %v3028
    %v4017 = vpack.c.b16 %v3033, %v3029
    %v4018 = vpack.c.b16 %v3034, %v3030
    %v4019 = vpack.c.b16 %v3039, %v3035
    %v4020 = vpack.c.b16 %v3040, %v3036
    %v4021 = vpack.c.b16 %v3041, %v3037
    %v4022 = vpack.c.b16 %v3042, %v3038
    %v4023 = vpack.c.b16 %v3047, %v3043
    %v4024 = vpack.c.b16 %v3048, %v3044
    %v4025 = vpack.c.b16 %v3049, %v3045
    %v4026 = vpack.c.b16 %v3050, %v3046
    %v4027 = vpack.c.b16 %v3055, %v3051
    %v4028 = vpack.c.b16 %v3056, %v3052
    %v4029 = vpack.c.b16 %v3057, %v3053
    %v4030 = vpack.c.b16 %v3058, %v3054
    %v4031 = vpack.c.b16 %v3063, %v3059
    %v4032 = vpack.c.b16 %v3064, %v3060
    %v4033 = vpack.c.b16 %v3065, %v3061
    %v4034 = vpack.c.b16 %v3066, %v3062
    %v4035 = vpack.c.b16 %v3071, %v3067
    %v4036 = vpack.c.b16 %v3072, %v3068
    %v4037 = vpack.c.b16 %v3073, %v3069
    %v4038 = vpack.c.b16 %v3074, %v3070
    %v4039 = vpack.c.b16 %v3079, %v3075
    %v4040 = vpack.c.b16 %v3080, %v3076
    %v4041 = vpack.c.b16 %v3081, %v3077
    %v4042 = vpack.c.b16 %v3082, %v3078
    %v4043 = vpack.c.b16 %v3087, %v3083
    %v4044 = vpack.c.b16 %v3088, %v3084
    %v4045 = vpack.c.b16 %v3089, %v3085
    %v4046 = vpack.c.b16 %v3090, %v3086
    %v4047 = vpack.c.b16 %v3095, %v3091
    %v4048 = vpack.c.b16 %v3096, %v3092
    %v4049 = vpack.c.b16 %v3097, %v3093
    %v4050 = vpack.c.b16 %v3098, %v3094
    %v4051 = vpack.c.b16 %v3103, %v3099
    %v4052 = vpack.c.b16 %v3104, %v3100
    %v4053 = vpack.c.b16 %v3105, %v3101
    %v4054 = vpack.c.b16 %v3106, %v3102
    %v4055 = vpack.c.b16 %v3111, %v3107
    %v4056 = vpack.c.b16 %v3112, %v3108
    %v4057 = vpack.c.b16 %v3113, %v3109
    %v4058 = vpack.c.b16 %v3114, %v3110
    %v4059 = vpack.c.b16 %v3119, %v3115
    %v4060 = vpack.c.b16 %v3120, %v3116
    %v4061 = vpack.c.b16 %v3121, %v3117
    %v4062 = vpack.c.b16 %v3122, %v3118
    %v4063 = vpack.c.b16 %v3127, %v3123
    %v4064 = vpack.c.b16 %v3128, %v3124
    %v4065 = vpack.c.b16 %v3129, %v3125
    %v4066 = vpack.c.b16 %v3130, %v3126
    %v4067 = vpack.c.b16 %v3135, %v3131
    %v4068 = vpack.c.b16 %v3136, %v3132
    %v4069 = vpack.c.b16 %v3137, %v3133
    %v4070 = vpack.c.b16 %v3138, %v3134
    %v4071 = vpack.c.b16 %v3143, %v3139
    %v4072 = vpack.c.b16 %v3144, %v3140
    %v4073 = vpack.c.b16 %v3145, %v3141
    %v4074 = vpack.c.b16 %v3146, %v3142
    %v4075 = vpack.c.b16 %v3151, %v3147
    %v4076 = vpack.c.b16 %v3152, %v3148
    %v4077 = vpack.c.b16 %v3153, %v3149
    %v4078 = vpack.c.b16 %v3154, %v3150
    %v4079 = vpack.c.b16 %v3159, %v3155
    %v4080 = vpack.c.b16 %v3160, %v3156
    %v4081 = vpack.c.b16 %v3161, %v3157
    %v4082 = vpack.c.b16 %v3162, %v3158
    %v4083 = vpack.c.b16 %v3167, %v3163
    %v4084 = vpack.c.b16 %v3168, %v3164
    %v4085 = vpack.c.b16 %v3169, %v3165
    %v4086 = vpack.c.b16 %v3170, %v3166
    %v4087 = vpack.c.b16 %v3175, %v3171
    %v4088 = vpack.c.b16 %v3176, %v3172
    %v4089 = vpack.c.b16 %v3177, %v3173
    %v4090 = vpack.c.b16 %v3178, %v3174
    %v4091 = vpack.c.b16 %v3183, %v3179
    %v4092 = vpack.c.b16 %v3184, %v3180
    %v4093 = vpack.c.b16 %v3185, %v3181
    %v4094 = vpack.c.b16 %v3186, %v3182
    %v4095 = vpack.c.b16 %v3191, %v3187
    %v4096 = vpack.c.b16 %v3192, %v3188
    %v4097 = vpack.c.b16 %v3193, %v3189
    %v4098 = vpack.c.b16 %v3194, %v3190
    %v4099 = vpack.c.b16 %v3199, %v3195
    %v4100 = vpack.c.b16 %v3200, %v3196
    %v4101 = vpack.c.b16 %v3201, %v3197
    %v4102 = vpack.c.b16 %v3202, %v3198
    %v4103 = vpack.c.b16 %v3207, %v3203
    %v4104 = vpack.c.b16 %v3208, %v3204
    %v4105 = vpack.c.b16 %v3209, %v3205
    %v4106 = vpack.c.b16 %v3210, %v3206
    %v4107 = vpack.c.b16 %v3215, %v3211
    %v4108 = vpack.c.b16 %v3216, %v3212
    %v4109 = vpack.c.b16 %v3217, %v3213
    %v4110 = vpack.c.b16 %v3218, %v3214
    %v4111 = vpack.c.b16 %v3223, %v3219
    %v4112 = vpack.c.b16 %v3224, %v3220
    %v4113 = vpack.c.b16 %v3225, %v3221
    %v4114 = vpack.c.b16 %v3226, %v3222
    %v4115 = vpack.c.b16 %v3231, %v3227
    %v4116 = vpack.c.b16 %v3232, %v3228
    %v4117 = vpack.c.b16 %v3233, %v3229
    %v4118 = vpack.c.b16 %v3234, %v3230
    %v4119 = vpack.c.b16 %v3239, %v3235
    %v4120 = vpack.c.b16 %v3240, %v3236
    %v4121 = vpack.c.b16 %v3241, %v3237
    %v4122 = vpack.c.b16 %v3242, %v3238
    %v4123 = vpack.c.b16 %v3247, %v3243
    %v4124 = vpack.c.b16 %v3248, %v3244
    %v4125 = vpack.c.b16 %v3249, %v3245
    %v4126 = vpack.c.b16 %v3250, %v3246
    %v4127 = vpack.c.b16 %v3255, %v3251
    %v4128 = vpack.c.b16 %v3256, %v3252
    %v4129 = vpack.c.b16 %v3257, %v3253
    %v4130 = vpack.c.b16 %v3258, %v3254
    %v4131 = vpack.c.b16 %v3263, %v3259
    %v4132 = vpack.c.b16 %v3264, %v3260
    %v4133 = vpack.c.b16 %v3265, %v3261
    %v4134 = vpack.c.b16 %v3266, %v3262
    %v4135 = vpack.c.b16 %v3271, %v3267
    %v4136 = vpack.c.b16 %v3272, %v3268
    %v4137 = vpack.c.b16 %v3273, %v3269
    %v4138 = vpack.c.b16 %v3274, %v3270
    %v4139 = vpack.c.b16 %v3279, %v3275
    %v4140 = vpack.c.b16 %v3280, %v3276
    %v4141 = vpack.c.b16 %v3281, %v3277
    %v4142 = vpack.c.b16 %v3282, %v3278
    %v4143 = vpack.c.b16 %v3287, %v3283
    %v4144 = vpack.c.b16 %v3288, %v3284
    %v4145 = vpack.c.b16 %v3289, %v3285
    %v4146 = vpack.c.b16 %v3290, %v3286
    %v4147 = vpack.c.b16 %v3295, %v3291
    %v4148 = vpack.c.b16 %v3296, %v3292
    %v4149 = vpack.c.b16 %v3297, %v3293
    %v4150 = vpack.c.b16 %v3298, %v3294
    %v4151 = vpack.c.b16 %v3303, %v3299
    %v4152 = vpack.c.b16 %v3304, %v3300
    %v4153 = vpack.c.b16 %v3305, %v3301
    %v4154 = vpack.c.b16 %v3306, %v3302
    %v4155 = vpack.c.b16 %v3311, %v3307
    %v4156 = vpack.c.b16 %v3312, %v3308
    %v4157 = vpack.c.b16 %v3313, %v3309
    %v4158 = vpack.c.b16 %v3314, %v3310
    %v4159 = vpack.c.b16 %v3319, %v3315
    %v4160 = vpack.c.b16 %v3320, %v3316
    %v4161 = vpack.c.b16 %v3321, %v3317
    %v4162 = vpack.c.b16 %v3322, %v3318
    %v4163 = vpack.c.b16 %v3327, %v3323
    %v4164 = vpack.c.b16 %v3328, %v3324
    %v4165 = vpack.c.b16 %v3329, %v3325
    %v4166 = vpack.c.b16 %v3330, %v3326
    %v4167 = vpack.c.b16 %v3335, %v3331
    %v4168 = vpack.c.b16 %v3336, %v3332
    %v4169 = vpack.c.b16 %v3337, %v3333
    %v4170 = vpack.c.b16 %v3338, %v3334
    %v4171 = vpack.c.b16 %v3343, %v3339
    %v4172 = vpack.c.b16 %v3344, %v3340
    %v4173 = vpack.c.b16 %v3345, %v3341
    %v4174 = vpack.c.b16 %v3346, %v3342
    %v4175 = vpack.c.b16 %v3351, %v3347
    %v4176 = vpack.c.b16 %v3352, %v3348
    %v4177 = vpack.c.b16 %v3353, %v3349
    %v4178 = vpack.c.b16 %v3354, %v3350
    %v4179 = vpack.c.b16 %v3359, %v3355
    %v4180 = vpack.c.b16 %v3360, %v3356
    %v4181 = vpack.c.b16 %v3361, %v3357
    %v4182 = vpack.c.b16 %v3362, %v3358
    %v4183 = vpack.c.b16 %v3367, %v3363
    %v4184 = vpack.c.b16 %v3368, %v3364
    %v4185 = vpack.c.b16 %v3369, %v3365
    %v4186 = vpack.c.b16 %v3370, %v3366
    %v4187 = vpack.c.b16 %v3375, %v3371
    %v4188 = vpack.c.b16 %v3376, %v3372
    %v4189 = vpack.c.b16 %v3377, %v3373
    %v4190 = vpack.c.b16 %v3378, %v3374
    %v4191 = vpack.c.b16 %v3383, %v3379
    %v4192 = vpack.c.b16 %v3384, %v3380
    %v4193 = vpack.c.b16 %v3385, %v3381
    %v4194 = vpack.c.b16 %v3386, %v3382
    %v4195 = vpack.c.b16 %v3391, %v3387
    %v4196 = vpack.c.b16 %v3392, %v3388
    %v4197 = vpack.c.b16 %v3393, %v3389
    %v4198 = vpack.c.b16 %v3394, %v3390
    %v4199 = vpack.c.b16 %v3399, %v3395
    %v4200 = vpack.c.b16 %v3400, %v3396
    %v4201 = vpack.c.b16 %v3401, %v3397
    %v4202 = vpack.c.b16 %v3402, %v3398
    %v4203 = vpack.c.b16 %v3407, %v3403
    %v4204 = vpack.c.b16 %v3408, %v3404
    %v4205 = vpack.c.b16 %v3409, %v3405
    %v4206 = vpack.c.b16 %v3410, %v3406
    %v4207 = vpack.c.b16 %v3415, %v3411
    %v4208 = vpack.c.b16 %v3416, %v3412
    %v4209 = vpack.c.b16 %v3417, %v3413
    %v4210 = vpack.c.b16 %v3418, %v3414
    %v4211 = vpack.c.b16 %v3423, %v3419
    %v4212 = vpack.c.b16 %v3424, %v3420
    %v4213 = vpack.c.b16 %v3425, %v3421
    %v4214 = vpack.c.b16 %v3426, %v3422
    %v4215 = vpack.c.b16 %v3431, %v3427
    %v4216 = vpack.c.b16 %v3432, %v3428
    %v4217 = vpack.c.b16 %v3433, %v3429
    %v4218 = vpack.c.b16 %v3434, %v3430
    %vm5003 = vcmask 523264
    %v5005 = vsel %vm5003, %v1058, 0
    %5007 = vmatprep.subr.bf16.mxu0 %v3436
    %5008 = vmatpush1.bf16.msra.mxu0 %v3435
    %5009 = vmatprep.subr.bf16.mxu0 %v3440
    %5010 = vmatpush1.bf16.msra.mxu0 %v3439
    %5011 = vmatprep.subr.bf16.mxu0 %v3444
    %5012 = vmatpush1.bf16.msra.mxu0 %v3443
    %5013 = vmatprep.subr.bf16.mxu0 %v3448
    %5014 = vmatpush1.bf16.msra.mxu0 %v3447
    %5015 = vmatprep.subr.bf16.mxu0 %v3452
    %5016 = vmatpush1.bf16.msra.mxu0 %v3451
    %5017 = vmatprep.subr.bf16.mxu0 %v3456
    %5018 = vmatpush1.bf16.msra.mxu0 %v3455
    %5019 = vmatprep.subr.bf16.mxu0 %v3460
    %5020 = vmatpush1.bf16.msra.mxu0 %v3459
    %5021 = vmatprep.subr.bf16.mxu0 %v3464
    %5022 = vmatpush1.bf16.msra.mxu0 %v3463
    %5023 = vmatprep.subr.bf16.mxu0 %v3468
    %5024 = vmatpush1.bf16.msra.mxu0 %v3467
    %5025 = vmatprep.subr.bf16.mxu0 %v3472
    %5026 = vmatpush1.bf16.msra.mxu0 %v3471
    %5027 = vmatprep.subr.bf16.mxu0 %v3476
    %5028 = vmatpush1.bf16.msra.mxu0 %v3475
    %5029 = vmatprep.subr.bf16.mxu0 %v3480
    %5030 = vmatpush1.bf16.msra.mxu0 %v3479
    %5031 = vmatprep.subr.bf16.mxu0 %v3484
    %5032 = vmatpush1.bf16.msra.mxu0 %v3483
    %5033 = vmatprep.subr.bf16.mxu0 %v3488
    %5034 = vmatpush1.bf16.msra.mxu0 %v3487
    %5035 = vmatprep.subr.bf16.mxu0 %v3492
    %5036 = vmatpush1.bf16.msra.mxu0 %v3491
    %5037 = vmatprep.subr.bf16.mxu0 %v3496
    %5038 = vmatpush1.bf16.msra.mxu0 %v3495
    %5039 = vmatprep.mubr.bf16.mxu0 %v935
    %5040 = vmatmul.mubr.bf16.gmra.mrb[0].mxu0 %v921
    %v5041 = vpop.f32.mrb[0].mxu0
    %v5042 = vadd.f32 %v877, %v5041
    %v5043 = vpop.f32.mrb[0].mxu0
    %v5044 = vadd.f32 %v881, %v5043
    %v5045 = vpop.f32.mrb[0].mxu0
    %v5046 = vpop.f32.mrb[0].mxu0
    %5047 = vdwg.mxu0
    %5048 = vmatprep.subr.bf16.mxu0 %v3500
    %5049 = vmatpush1.bf16.msra.mxu0 %v3499
    %5050 = vmatprep.subr.bf16.mxu0 %v3504
    %5051 = vmatpush1.bf16.msra.mxu0 %v3503
    %5052 = vmatprep.subr.bf16.mxu0 %v3508
    %5053 = vmatpush1.bf16.msra.mxu0 %v3507
    %5054 = vmatprep.subr.bf16.mxu0 %v3512
    %5055 = vmatpush1.bf16.msra.mxu0 %v3511
    %5056 = vmatprep.subr.bf16.mxu0 %v3516
    %5057 = vmatpush1.bf16.msra.mxu0 %v3515
    %5058 = vmatprep.subr.bf16.mxu0 %v3520
    %5059 = vmatpush1.bf16.msra.mxu0 %v3519
    %5060 = vmatprep.subr.bf16.mxu0 %v3524
    %5061 = vmatpush1.bf16.msra.mxu0 %v3523
    %5062 = vmatprep.subr.bf16.mxu0 %v3528
    %5063 = vmatpush1.bf16.msra.mxu0 %v3527
    %5064 = vmatprep.subr.bf16.mxu0 %v3532
    %5065 = vmatpush1.bf16.msra.mxu0 %v3531
    %5066 = vmatprep.subr.bf16.mxu0 %v3536
    %5067 = vmatpush1.bf16.msra.mxu0 %v3535
    %5068 = vmatprep.subr.bf16.mxu0 %v3540
    %5069 = vmatpush1.bf16.msra.mxu0 %v3539
    %5070 = vmatprep.subr.bf16.mxu0 %v3544
    %5071 = vmatpush1.bf16.msra.mxu0 %v3543
    %5072 = vmatprep.subr.bf16.mxu0 %v3548
    %5073 = vmatpush1.bf16.msra.mxu0 %v3547
    %5074 = vmatprep.subr.bf16.mxu0 %v3552
    %5075 = vmatpush1.bf16.msra.mxu0 %v3551
    %5076 = vmatprep.subr.bf16.mxu0 %v3556
    %5077 = vmatpush1.bf16.msra.mxu0 %v3555
    %5078 = vmatprep.subr.bf16.mxu0 %v3560
    %5079 = vmatpush1.bf16.msra.mxu0 %v3559
    %5080 = vmatprep.mubr.bf16.mxu0 %v945
    %5081 = vmatmul.mubr.bf16.gmra.mrb[0].mxu0 %v943
    %v5082 = vpop.f32.mrb[0].mxu0
    %v5083 = vadd.f32 %v5042, %v5082
    %v5084 = vpop.f32.mrb[0].mxu0
    %v5085 = vadd.f32 %v5044, %v5084
    %v5086 = vpop.f32.mrb[0].mxu0
    %v5087 = vpop.f32.mrb[0].mxu0
    %5088 = vdwg.mxu0
    %5089 = vmatprep.subr.bf16.mxu0 %v3564
    %5090 = vmatpush1.bf16.msra.mxu0 %v3563
    %5091 = vmatprep.subr.bf16.mxu0 %v3568
    %5092 = vmatpush1.bf16.msra.mxu0 %v3567
    %5093 = vmatprep.subr.bf16.mxu0 %v3572
    %5094 = vmatpush1.bf16.msra.mxu0 %v3571
    %5095 = vmatprep.subr.bf16.mxu0 %v3576
    %5096 = vmatpush1.bf16.msra.mxu0 %v3575
    %5097 = vmatprep.subr.bf16.mxu0 %v3580
    %5098 = vmatpush1.bf16.msra.mxu0 %v3579
    %5099 = vmatprep.subr.bf16.mxu0 %v3584
    %5100 = vmatpush1.bf16.msra.mxu0 %v3583
    %5101 = vmatprep.subr.bf16.mxu0 %v3588
    %5102 = vmatpush1.bf16.msra.mxu0 %v3587
    %5103 = vmatprep.subr.bf16.mxu0 %v3592
    %5104 = vmatpush1.bf16.msra.mxu0 %v3591
    %5105 = vmatprep.subr.bf16.mxu0 %v3596
    %5106 = vmatpush1.bf16.msra.mxu0 %v3595
    %5107 = vmatprep.subr.bf16.mxu0 %v3600
    %5108 = vmatpush1.bf16.msra.mxu0 %v3599
    %5109 = vmatprep.subr.bf16.mxu0 %v3604
    %5110 = vmatpush1.bf16.msra.mxu0 %v3603
    %5111 = vmatprep.subr.bf16.mxu0 %v3608
    %5112 = vmatpush1.bf16.msra.mxu0 %v3607
    %5113 = vmatprep.subr.bf16.mxu0 %v3612
    %5114 = vmatpush1.bf16.msra.mxu0 %v3611
    %5115 = vmatprep.subr.bf16.mxu0 %v3616
    %5116 = vmatpush1.bf16.msra.mxu0 %v3615
    %5117 = vmatprep.subr.bf16.mxu0 %v3620
    %5118 = vmatpush1.bf16.msra.mxu0 %v3619
    %5119 = vmatprep.subr.bf16.mxu0 %v3624
    %5120 = vmatpush1.bf16.msra.mxu0 %v3623
    %5121 = vmatprep.mubr.bf16.mxu0 %v942
    %5122 = vmatmul.mubr.bf16.gmra.mrb[0].mxu0 %v928
    %v5123 = vpop.f32.mrb[0].mxu0
    %v5124 = vadd.f32 %v5083, %v5123
    %v5125 = vpop.f32.mrb[0].mxu0
    %v5126 = vadd.f32 %v5085, %v5125
    %v5127 = vpop.f32.mrb[0].mxu0
    %v5128 = vpop.f32.mrb[0].mxu0
    %5129 = vdwg.mxu0
    %5130 = vmatprep.subr.bf16.mxu0 %v3628
    %5131 = vmatpush1.bf16.msra.mxu0 %v3627
    %5132 = vmatprep.subr.bf16.mxu0 %v3632
    %5133 = vmatpush1.bf16.msra.mxu0 %v3631
    %5134 = vmatprep.subr.bf16.mxu0 %v3636
    %5135 = vmatpush1.bf16.msra.mxu0 %v3635
    %5136 = vmatprep.subr.bf16.mxu0 %v3640
    %5137 = vmatpush1.bf16.msra.mxu0 %v3639
    %5138 = vmatprep.subr.bf16.mxu0 %v3644
    %5139 = vmatpush1.bf16.msra.mxu0 %v3643
    %5140 = vmatprep.subr.bf16.mxu0 %v3648
    %5141 = vmatpush1.bf16.msra.mxu0 %v3647
    %5142 = vmatprep.subr.bf16.mxu0 %v3652
    %5143 = vmatpush1.bf16.msra.mxu0 %v3651
    %5144 = vmatprep.subr.bf16.mxu0 %v3656
    %5145 = vmatpush1.bf16.msra.mxu0 %v3655
    %5146 = vmatprep.subr.bf16.mxu0 %v3660
    %5147 = vmatpush1.bf16.msra.mxu0 %v3659
    %5148 = vmatprep.subr.bf16.mxu0 %v3664
    %5149 = vmatpush1.bf16.msra.mxu0 %v3663
    %5150 = vmatprep.subr.bf16.mxu0 %v3668
    %5151 = vmatpush1.bf16.msra.mxu0 %v3667
    %5152 = vmatprep.subr.bf16.mxu0 %v3672
    %5153 = vmatpush1.bf16.msra.mxu0 %v3671
    %5154 = vmatprep.subr.bf16.mxu0 %v3676
    %5155 = vmatpush1.bf16.msra.mxu0 %v3675
    %5156 = vmatprep.subr.bf16.mxu0 %v3680
    %5157 = vmatpush1.bf16.msra.mxu0 %v3679
    %5158 = vmatprep.subr.bf16.mxu0 %v3684
    %5159 = vmatpush1.bf16.msra.mxu0 %v3683
    %5160 = vmatprep.subr.bf16.mxu0 %v3688
    %5161 = vmatpush1.bf16.msra.mxu0 %v3687
    %5162 = vmatprep.mubr.bf16.mxu0 %v946
    %5163 = vmatmul.mubr.bf16.gmra.mrb[0].mxu0 %v944
    %v5164 = vpop.f32.mrb[0].mxu0
    %v5165 = vadd.f32 %v5124, %v5164
    %v5166 = vpop.f32.mrb[0].mxu0
    %v5167 = vadd.f32 %v5126, %v5166
    %v5168 = vpop.f32.mrb[0].mxu0
    %v5169 = vpop.f32.mrb[0].mxu0
    %5170 = vdwg.mxu0
    %5171 = vmatprep.subr.bf16.mxu0 %v3692
    %5172 = vmatpush1.bf16.msra.mxu0 %v3691
    %5173 = vmatprep.subr.bf16.mxu0 %v3696
    %5174 = vmatpush1.bf16.msra.mxu0 %v3695
    %5175 = vmatprep.subr.bf16.mxu0 %v3700
    %5176 = vmatpush1.bf16.msra.mxu0 %v3699
    %5177 = vmatprep.subr.bf16.mxu0 %v3704
    %5178 = vmatpush1.bf16.msra.mxu0 %v3703
    %5179 = vmatprep.subr.bf16.mxu0 %v3708
    %5180 = vmatpush1.bf16.msra.mxu0 %v3707
    %5181 = vmatprep.subr.bf16.mxu0 %v3712
    %5182 = vmatpush1.bf16.msra.mxu0 %v3711
    %5183 = vmatprep.subr.bf16.mxu0 %v3716
    %5184 = vmatpush1.bf16.msra.mxu0 %v3715
    %5185 = vmatprep.subr.bf16.mxu0 %v3720
    %5186 = vmatpush1.bf16.msra.mxu0 %v3719
    %5187 = vmatprep.subr.bf16.mxu0 %v3724
    %5188 = vmatpush1.bf16.msra.mxu0 %v3723
    %5189 = vmatprep.subr.bf16.mxu0 %v3728
    %5190 = vmatpush1.bf16.msra.mxu0 %v3727
    %5191 = vmatprep.subr.bf16.mxu0 %v3732
    %5192 = vmatpush1.bf16.msra.mxu0 %v3731
    %5193 = vmatprep.subr.bf16.mxu0 %v3736
    %5194 = vmatpush1.bf16.msra.mxu0 %v3735
    %5195 = vmatprep.subr.bf16.mxu0 %v3740
    %5196 = vmatpush1.bf16.msra.mxu0 %v3739
    %5197 = vmatprep.subr.bf16.mxu0 %v3744
    %5198 = vmatpush1.bf16.msra.mxu0 %v3743
    %5199 = vmatprep.subr.bf16.mxu0 %v3748
    %5200 = vmatpush1.bf16.msra.mxu0 %v3747
    %5201 = vmatprep.subr.bf16.mxu0 %v3752
    %5202 = vmatpush1.bf16.msra.mxu0 %v3751
    %5203 = vmatprep.mubr.bf16.mxu0 %v984
    %5204 = vmatmul.mubr.bf16.gmra.mrb[0].mxu0 %v970
    %v5205 = vpop.f32.mrb[0].mxu0
    %v5206 = vadd.f32 %v5165, %v5205
    %v5207 = vpop.f32.mrb[0].mxu0
    %v5208 = vadd.f32 %v5167, %v5207
    %v5209 = vpop.f32.mrb[0].mxu0
    %v5210 = vpop.f32.mrb[0].mxu0
    %5211 = vdwg.mxu0
    %5212 = vmatprep.subr.bf16.mxu0 %v3756
    %5213 = vmatpush1.bf16.msra.mxu0 %v3755
    %5214 = vmatprep.subr.bf16.mxu0 %v3760
    %5215 = vmatpush1.bf16.msra.mxu0 %v3759
    %5216 = vmatprep.subr.bf16.mxu0 %v3764
    %5217 = vmatpush1.bf16.msra.mxu0 %v3763
    %5218 = vmatprep.subr.bf16.mxu0 %v3768
    %5219 = vmatpush1.bf16.msra.mxu0 %v3767
    %5220 = vmatprep.subr.bf16.mxu0 %v3772
    %5221 = vmatpush1.bf16.msra.mxu0 %v3771
    %5222 = vmatprep.subr.bf16.mxu0 %v3776
    %5223 = vmatpush1.bf16.msra.mxu0 %v3775
    %5224 = vmatprep.subr.bf16.mxu0 %v3780
    %5225 = vmatpush1.bf16.msra.mxu0 %v3779
    %5226 = vmatprep.subr.bf16.mxu0 %v3784
    %5227 = vmatpush1.bf16.msra.mxu0 %v3783
    %5228 = vmatprep.subr.bf16.mxu0 %v3788
    %5229 = vmatpush1.bf16.msra.mxu0 %v3787
    %5230 = vmatprep.subr.bf16.mxu0 %v3792
    %5231 = vmatpush1.bf16.msra.mxu0 %v3791
    %5232 = vmatprep.subr.bf16.mxu0 %v3796
    %5233 = vmatpush1.bf16.msra.mxu0 %v3795
    %5234 = vmatprep.subr.bf16.mxu0 %v3800
    %5235 = vmatpush1.bf16.msra.mxu0 %v3799
    %5236 = vmatprep.subr.bf16.mxu0 %v3804
    %5237 = vmatpush1.bf16.msra.mxu0 %v3803
    %5238 = vmatprep.subr.bf16.mxu0 %v3808
    %5239 = vmatpush1.bf16.msra.mxu0 %v3807
    %5240 = vmatprep.subr.bf16.mxu0 %v3812
    %5241 = vmatpush1.bf16.msra.mxu0 %v3811
    %5242 = vmatprep.subr.bf16.mxu0 %v3816
    %5243 = vmatpush1.bf16.msra.mxu0 %v3815
    %5244 = vmatprep.mubr.bf16.mxu0 %v994
    %5245 = vmatmul.mubr.bf16.gmra.mrb[0].mxu0 %v992
    %v5246 = vpop.f32.mrb[0].mxu0
    %v5247 = vadd.f32 %v5206, %v5246
    %v5248 = vpop.f32.mrb[0].mxu0
    %v5249 = vadd.f32 %v5208, %v5248
    %v5250 = vpop.f32.mrb[0].mxu0
    %v5251 = vpop.f32.mrb[0].mxu0
    %5252 = vdwg.mxu0
    %5253 = vmatprep.subr.bf16.mxu0 %v3820
    %5254 = vmatpush1.bf16.msra.mxu0 %v3819
    %5255 = vmatprep.subr.bf16.mxu0 %v3824
    %5256 = vmatpush1.bf16.msra.mxu0 %v3823
    %5257 = vmatprep.subr.bf16.mxu0 %v3828
    %5258 = vmatpush1.bf16.msra.mxu0 %v3827
    %5259 = vmatprep.subr.bf16.mxu0 %v3832
    %5260 = vmatpush1.bf16.msra.mxu0 %v3831
    %5261 = vmatprep.subr.bf16.mxu0 %v3836
    %5262 = vmatpush1.bf16.msra.mxu0 %v3835
    %5263 = vmatprep.subr.bf16.mxu0 %v3840
    %5264 = vmatpush1.bf16.msra.mxu0 %v3839
    %5265 = vmatprep.subr.bf16.mxu0 %v3844
    %5266 = vmatpush1.bf16.msra.mxu0 %v3843
    %5267 = vmatprep.subr.bf16.mxu0 %v3848
    %5268 = vmatpush1.bf16.msra.mxu0 %v3847
    %5269 = vmatprep.subr.bf16.mxu0 %v3852
    %5270 = vmatpush1.bf16.msra.mxu0 %v3851
    %5271 = vmatprep.subr.bf16.mxu0 %v3856
    %5272 = vmatpush1.bf16.msra.mxu0 %v3855
    %5273 = vmatprep.subr.bf16.mxu0 %v3860
    %5274 = vmatpush1.bf16.msra.mxu0 %v3859
    %5275 = vmatprep.subr.bf16.mxu0 %v3864
    %5276 = vmatpush1.bf16.msra.mxu0 %v3863
    %5277 = vmatprep.subr.bf16.mxu0 %v3868
    %5278 = vmatpush1.bf16.msra.mxu0 %v3867
    %5279 = vmatprep.subr.bf16.mxu0 %v3872
    %5280 = vmatpush1.bf16.msra.mxu0 %v3871
    %5281 = vmatprep.subr.bf16.mxu0 %v3876
    %5282 = vmatpush1.bf16.msra.mxu0 %v3875
    %5283 = vmatprep.subr.bf16.mxu0 %v3880
    %5284 = vmatpush1.bf16.msra.mxu0 %v3879
    %5285 = vmatprep.mubr.bf16.mxu0 %v991
    %5286 = vmatmul.mubr.bf16.gmra.mrb[0].mxu0 %v977
    %v5287 = vpop.f32.mrb[0].mxu0
    %v5288 = vadd.f32 %v5247, %v5287
    %v5289 = vpop.f32.mrb[0].mxu0
    %v5290 = vadd.f32 %v5249, %v5289
    %v5291 = vpop.f32.mrb[0].mxu0
    %v5292 = vpop.f32.mrb[0].mxu0
    %5293 = vdwg.mxu0
    %5294 = vmatprep.subr.bf16.mxu0 %v3884
    %5295 = vmatpush1.bf16.msra.mxu0 %v3883
    %5296 = vmatprep.subr.bf16.mxu0 %v3888
    %5297 = vmatpush1.bf16.msra.mxu0 %v3887
    %5298 = vmatprep.subr.bf16.mxu0 %v3892
    %5299 = vmatpush1.bf16.msra.mxu0 %v3891
    %5300 = vmatprep.subr.bf16.mxu0 %v3896
    %5301 = vmatpush1.bf16.msra.mxu0 %v3895
    %5302 = vmatprep.subr.bf16.mxu0 %v3900
    %5303 = vmatpush1.bf16.msra.mxu0 %v3899
    %5304 = vmatprep.subr.bf16.mxu0 %v3904
    %5305 = vmatpush1.bf16.msra.mxu0 %v3903
    %5306 = vmatprep.subr.bf16.mxu0 %v3908
    %5307 = vmatpush1.bf16.msra.mxu0 %v3907
    %5308 = vmatprep.subr.bf16.mxu0 %v3912
    %5309 = vmatpush1.bf16.msra.mxu0 %v3911
    %5310 = vmatprep.subr.bf16.mxu0 %v3916
    %5311 = vmatpush1.bf16.msra.mxu0 %v3915
    %5312 = vmatprep.subr.bf16.mxu0 %v3920
    %5313 = vmatpush1.bf16.msra.mxu0 %v3919
    %5314 = vmatprep.subr.bf16.mxu0 %v3924
    %5315 = vmatpush1.bf16.msra.mxu0 %v3923
    %5316 = vmatprep.subr.bf16.mxu0 %v3928
    %5317 = vmatpush1.bf16.msra.mxu0 %v3927
    %5318 = vmatprep.subr.bf16.mxu0 %v3932
    %5319 = vmatpush1.bf16.msra.mxu0 %v3931
    %5320 = vmatprep.subr.bf16.mxu0 %v3936
    %5321 = vmatpush1.bf16.msra.mxu0 %v3935
    %5322 = vmatprep.subr.bf16.mxu0 %v3940
    %5323 = vmatpush1.bf16.msra.mxu0 %v3939
    %5324 = vmatprep.subr.bf16.mxu0 %v3944
    %5325 = vmatpush1.bf16.msra.mxu0 %v3943
    %5326 = vmatprep.mubr.bf16.mxu0 %v995
    %5327 = vmatmul.mubr.bf16.gmra.mrb[0].mxu0 %v993
    %v5328 = vpop.f32.mrb[0].mxu0
    %v5329 = vadd.f32 %v5288, %v5328
    %v5330 = vpop.f32.mrb[0].mxu0
    %v5331 = vadd.f32 %v5290, %v5330
    %v5332 = vpop.f32.mrb[0].mxu0
    %v5333 = vpop.f32.mrb[0].mxu0
    %5334 = vdwg.mxu0
    %5335 = vmatprep.subr.bf16.mxu0 %v3948
    %5336 = vmatpush1.bf16.msra.mxu0 %v3947
    %5337 = vmatprep.subr.bf16.mxu0 %v3952
    %5338 = vmatpush1.bf16.msra.mxu0 %v3951
    %5339 = vmatprep.subr.bf16.mxu0 %v3956
    %5340 = vmatpush1.bf16.msra.mxu0 %v3955
    %5341 = vmatprep.subr.bf16.mxu0 %v3960
    %5342 = vmatpush1.bf16.msra.mxu0 %v3959
    %5343 = vmatprep.subr.bf16.mxu0 %v3964
    %5344 = vmatpush1.bf16.msra.mxu0 %v3963
    %5345 = vmatprep.subr.bf16.mxu0 %v3968
    %5346 = vmatpush1.bf16.msra.mxu0 %v3967
    %5347 = vmatprep.subr.bf16.mxu0 %v3972
    %5348 = vmatpush1.bf16.msra.mxu0 %v3971
    %5349 = vmatprep.subr.bf16.mxu0 %v3976
    %5350 = vmatpush1.bf16.msra.mxu0 %v3975
    %5351 = vmatprep.subr.bf16.mxu0 %v3980
    %5352 = vmatpush1.bf16.msra.mxu0 %v3979
    %5353 = vmatprep.subr.bf16.mxu0 %v3984
    %5354 = vmatpush1.bf16.msra.mxu0 %v3983
    %5355 = vmatprep.subr.bf16.mxu0 %v3988
    %5356 = vmatpush1.bf16.msra.mxu0 %v3987
    %5357 = vmatprep.subr.bf16.mxu0 %v3992
    %5358 = vmatpush1.bf16.msra.mxu0 %v3991
    %5359 = vmatprep.subr.bf16.mxu0 %v3996
    %5360 = vmatpush1.bf16.msra.mxu0 %v3995
    %5361 = vmatprep.subr.bf16.mxu0 %v4000
    %5362 = vmatpush1.bf16.msra.mxu0 %v3999
    %5363 = vmatprep.subr.bf16.mxu0 %v4004
    %5364 = vmatpush1.bf16.msra.mxu0 %v4003
    %5365 = vmatprep.subr.bf16.mxu0 %v4008
    %5366 = vmatpush1.bf16.msra.mxu0 %v4007
    %5367 = vmatprep.mubr.bf16.mxu0 %v1033
    %5368 = vmatmul.mubr.bf16.gmra.mrb[0].mxu0 %v1019
    %v5369 = vpop.f32.mrb[0].mxu0
    %v5370 = vadd.f32 %v5329, %v5369
    %v5371 = vpop.f32.mrb[0].mxu0
    %v5372 = vadd.f32 %v5331, %v5371
    %v5373 = vpop.f32.mrb[0].mxu0
    %v5374 = vpop.f32.mrb[0].mxu0
    %5375 = vdwg.mxu0
    %5376 = vmatprep.subr.bf16.mxu0 %v4012
    %5377 = vmatpush1.bf16.msra.mxu0 %v4011
    %5378 = vmatprep.subr.bf16.mxu0 %v4016
    %5379 = vmatpush1.bf16.msra.mxu0 %v4015
    %5380 = vmatprep.subr.bf16.mxu0 %v4020
    %5381 = vmatpush1.bf16.msra.mxu0 %v4019
    %5382 = vmatprep.subr.bf16.mxu0 %v4024
    %5383 = vmatpush1.bf16.msra.mxu0 %v4023
    %5384 = vmatprep.subr.bf16.mxu0 %v4028
    %5385 = vmatpush1.bf16.msra.mxu0 %v4027
    %5386 = vmatprep.subr.bf16.mxu0 %v4032
    %5387 = vmatpush1.bf16.msra.mxu0 %v4031
    %5388 = vmatprep.subr.bf16.mxu0 %v4036
    %5389 = vmatpush1.bf16.msra.mxu0 %v4035
    %5390 = vmatprep.subr.bf16.mxu0 %v4040
    %5391 = vmatpush1.bf16.msra.mxu0 %v4039
    %5392 = vmatprep.subr.bf16.mxu0 %v4044
    %5393 = vmatpush1.bf16.msra.mxu0 %v4043
    %5394 = vmatprep.subr.bf16.mxu0 %v4048
    %5395 = vmatpush1.bf16.msra.mxu0 %v4047
    %5396 = vmatprep.subr.bf16.mxu0 %v4052
    %5397 = vmatpush1.bf16.msra.mxu0 %v4051
    %5398 = vmatprep.subr.bf16.mxu0 %v4056
    %5399 = vmatpush1.bf16.msra.mxu0 %v4055
    %5400 = vmatprep.subr.bf16.mxu0 %v4060
    %5401 = vmatpush1.bf16.msra.mxu0 %v4059
    %5402 = vmatprep.subr.bf16.mxu0 %v4064
    %5403 = vmatpush1.bf16.msra.mxu0 %v4063
    %5404 = vmatprep.subr.bf16.mxu0 %v4068
    %5405 = vmatpush1.bf16.msra.mxu0 %v4067
    %5406 = vmatprep.subr.bf16.mxu0 %v4072
    %5407 = vmatpush1.bf16.msra.mxu0 %v4071
    %5408 = vmatprep.mubr.bf16.mxu0 %v1043
    %5409 = vmatmul.mubr.bf16.gmra.mrb[0].mxu0 %v1041
    %v5410 = vpop.f32.mrb[0].mxu0
    %v5411 = vadd.f32 %v5370, %v5410
    %v5412 = vpop.f32.mrb[0].mxu0
    %v5413 = vadd.f32 %v5372, %v5412
    %v5414 = vpop.f32.mrb[0].mxu0
    %v5415 = vpop.f32.mrb[0].mxu0
    %5416 = vdwg.mxu0
    %5417 = vmatprep.subr.bf16.mxu0 %v4076
    %5418 = vmatpush1.bf16.msra.mxu0 %v4075
    %5419 = vmatprep.subr.bf16.mxu0 %v4080
    %5420 = vmatpush1.bf16.msra.mxu0 %v4079
    %5421 = vmatprep.subr.bf16.mxu0 %v4084
    %5422 = vmatpush1.bf16.msra.mxu0 %v4083
    %5423 = vmatprep.subr.bf16.mxu0 %v4088
    %5424 = vmatpush1.bf16.msra.mxu0 %v4087
    %5425 = vmatprep.subr.bf16.mxu0 %v4092
    %5426 = vmatpush1.bf16.msra.mxu0 %v4091
    %5427 = vmatprep.subr.bf16.mxu0 %v4096
    %5428 = vmatpush1.bf16.msra.mxu0 %v4095
    %5429 = vmatprep.subr.bf16.mxu0 %v4100
    %5430 = vmatpush1.bf16.msra.mxu0 %v4099
    %5431 = vmatprep.subr.bf16.mxu0 %v4104
    %5432 = vmatpush1.bf16.msra.mxu0 %v4103
    %5433 = vmatprep.subr.bf16.mxu0 %v4108
    %5434 = vmatpush1.bf16.msra.mxu0 %v4107
    %5435 = vmatprep.subr.bf16.mxu0 %v4112
    %5436 = vmatpush1.bf16.msra.mxu0 %v4111
    %5437 = vmatprep.subr.bf16.mxu0 %v4116
    %5438 = vmatpush1.bf16.msra.mxu0 %v4115
    %5439 = vmatprep.subr.bf16.mxu0 %v4120
    %5440 = vmatpush1.bf16.msra.mxu0 %v4119
    %5441 = vmatprep.subr.bf16.mxu0 %v4124
    %5442 = vmatpush1.bf16.msra.mxu0 %v4123
    %5443 = vmatprep.subr.bf16.mxu0 %v4128
    %5444 = vmatpush1.bf16.msra.mxu0 %v4127
    %5445 = vmatprep.subr.bf16.mxu0 %v4132
    %5446 = vmatpush1.bf16.msra.mxu0 %v4131
    %5447 = vmatprep.subr.bf16.mxu0 %v4136
    %5448 = vmatpush1.bf16.msra.mxu0 %v4135
    %5449 = vmatprep.mubr.bf16.mxu0 %v1040
    %5450 = vmatmul.mubr.bf16.gmra.mrb[0].mxu0 %v1026
    %v5451 = vpop.f32.mrb[0].mxu0
    %v5452 = vadd.f32 %v5411, %v5451
    %v5453 = vpop.f32.mrb[0].mxu0
    %v5454 = vadd.f32 %v5413, %v5453
    %v5455 = vpop.f32.mrb[0].mxu0
    %v5456 = vpop.f32.mrb[0].mxu0
    %5457 = vdwg.mxu0
    %5458 = vmatprep.subr.bf16.mxu0 %v4140
    %5459 = vmatpush1.bf16.msra.mxu0 %v4139
    %5460 = vmatprep.subr.bf16.mxu0 %v4144
    %5461 = vmatpush1.bf16.msra.mxu0 %v4143
    %5462 = vmatprep.subr.bf16.mxu0 %v4148
    %5463 = vmatpush1.bf16.msra.mxu0 %v4147
    %5464 = vmatprep.subr.bf16.mxu0 %v4152
    %5465 = vmatpush1.bf16.msra.mxu0 %v4151
    %5466 = vmatprep.subr.bf16.mxu0 %v4156
    %5467 = vmatpush1.bf16.msra.mxu0 %v4155
    %5468 = vmatprep.subr.bf16.mxu0 %v4160
    %5469 = vmatpush1.bf16.msra.mxu0 %v4159
    %5470 = vmatprep.subr.bf16.mxu0 %v4164
    %5471 = vmatpush1.bf16.msra.mxu0 %v4163
    %5472 = vmatprep.subr.bf16.mxu0 %v4168
    %5473 = vmatpush1.bf16.msra.mxu0 %v4167
    %5474 = vmatprep.subr.bf16.mxu0 %v4172
    %5475 = vmatpush1.bf16.msra.mxu0 %v4171
    %5476 = vmatprep.subr.bf16.mxu0 %v4176
    %5477 = vmatpush1.bf16.msra.mxu0 %v4175
    %5478 = vmatprep.subr.bf16.mxu0 %v4180
    %5479 = vmatpush1.bf16.msra.mxu0 %v4179
    %5480 = vmatprep.subr.bf16.mxu0 %v4184
    %5481 = vmatpush1.bf16.msra.mxu0 %v4183
    %5482 = vmatprep.subr.bf16.mxu0 %v4188
    %5483 = vmatpush1.bf16.msra.mxu0 %v4187
    %5484 = vmatprep.subr.bf16.mxu0 %v4192
    %5485 = vmatpush1.bf16.msra.mxu0 %v4191
    %5486 = vmatprep.subr.bf16.mxu0 %v4196
    %5487 = vmatpush1.bf16.msra.mxu0 %v4195
    %5488 = vmatprep.subr.bf16.mxu0 %v4200
    %5489 = vmatpush1.bf16.msra.mxu0 %v4199
    %5490 = vmatprep.mubr.bf16.mxu0 %v1044
    %5491 = vmatmul.mubr.bf16.gmra.mrb[0].mxu0 %v1042
    %v5492 = vpop.f32.mrb[0].mxu0
    %v5493 = vadd.f32 %v5452, %v5492
    %v5494 = vpop.f32.mrb[0].mxu0
    %v5495 = vadd.f32 %v5454, %v5494
    %v5496 = vpop.f32.mrb[0].mxu0
    %v5497 = vpop.f32.mrb[0].mxu0
    %5498 = vdwg.mxu0
    %5499 = vmatprep.subr.bf16.mxu0 %v4204
    %5500 = vmatpush1.bf16.msra.mxu0 %v4203
    %5501 = vmatprep.subr.bf16.mxu0 %v4208
    %5502 = vmatpush1.bf16.msra.mxu0 %v4207
    %5503 = vmatprep.subr.bf16.mxu0 %v4212
    %5504 = vmatpush1.bf16.msra.mxu0 %v4211
    %5505 = vmatprep.subr.bf16.mxu0 %v4216
    %5506 = vmatpush1.bf16.msra.mxu0 %v4215
    %5507 = vmatprep.subr.bf16.mxu0 0
    %5508 = vmatpush1.bf16.msra.mxu0 0
    %5509 = vmatprep.subr.bf16.mxu0 0
    %5510 = vmatpush1.bf16.msra.mxu0 0
    %5511 = vmatprep.subr.bf16.mxu0 0
    %5512 = vmatpush1.bf16.msra.mxu0 0
    %5513 = vmatprep.subr.bf16.mxu0 0
    %5514 = vmatpush1.bf16.msra.mxu0 0
    %5515 = vmatprep.subr.bf16.mxu0 0
    %5516 = vmatpush1.bf16.msra.mxu0 0
    %5517 = vmatprep.subr.bf16.mxu0 0
    %5518 = vmatpush1.bf16.msra.mxu0 0
    %5519 = vmatprep.subr.bf16.mxu0 0
    %5520 = vmatpush1.bf16.msra.mxu0 0
    %5521 = vmatprep.subr.bf16.mxu0 0
    %5522 = vmatpush1.bf16.msra.mxu0 0
    %5523 = vmatprep.subr.bf16.mxu0 0
    %5524 = vmatpush1.bf16.msra.mxu0 0
    %5525 = vmatprep.subr.bf16.mxu0 0
    %5526 = vmatpush1.bf16.msra.mxu0 0
    %5527 = vmatprep.subr.bf16.mxu0 0
    %5528 = vmatpush1.bf16.msra.mxu0 0
    %5529 = vmatprep.subr.bf16.mxu0 0
    %5530 = vmatpush1.bf16.msra.mxu0 0
    %5531 = vmatprep.mubr.bf16.mxu0 0
    %5532 = vmatmul.mubr.bf16.gmra.mrb[0].mxu0 %v5005
    %v5533 = vpop.f32.mrb[0].mxu0
    %v5534 = vadd.f32 %v5493, %v5533
    %v5535 = vpop.f32.mrb[0].mxu0
    %v5536 = vadd.f32 %v5495, %v5535
    %v5537 = vpop.f32.mrb[0].mxu0
    %v5538 = vpop.f32.mrb[0].mxu0
    %5539 = vdwg.mxu0
    %5540 = vmatprep.subr.bf16.mxu0 %v3438
    %5541 = vmatpush1.bf16.msra.mxu0 %v3437
    %5542 = vmatprep.subr.bf16.mxu0 %v3442
    %5543 = vmatpush1.bf16.msra.mxu0 %v3441
    %5544 = vmatprep.subr.bf16.mxu0 %v3446
    %5545 = vmatpush1.bf16.msra.mxu0 %v3445
    %5546 = vmatprep.subr.bf16.mxu0 %v3450
    %5547 = vmatpush1.bf16.msra.mxu0 %v3449
    %5548 = vmatprep.subr.bf16.mxu0 %v3454
    %5549 = vmatpush1.bf16.msra.mxu0 %v3453
    %5550 = vmatprep.subr.bf16.mxu0 %v3458
    %5551 = vmatpush1.bf16.msra.mxu0 %v3457
    %5552 = vmatprep.subr.bf16.mxu0 %v3462
    %5553 = vmatpush1.bf16.msra.mxu0 %v3461
    %5554 = vmatprep.subr.bf16.mxu0 %v3466
    %5555 = vmatpush1.bf16.msra.mxu0 %v3465
    %5556 = vmatprep.subr.bf16.mxu0 %v3470
    %5557 = vmatpush1.bf16.msra.mxu0 %v3469
    %5558 = vmatprep.subr.bf16.mxu0 %v3474
    %5559 = vmatpush1.bf16.msra.mxu0 %v3473
    %5560 = vmatprep.subr.bf16.mxu0 %v3478
    %5561 = vmatpush1.bf16.msra.mxu0 %v3477
    %5562 = vmatprep.subr.bf16.mxu0 %v3482
    %5563 = vmatpush1.bf16.msra.mxu0 %v3481
    %5564 = vmatprep.subr.bf16.mxu0 %v3486
    %5565 = vmatpush1.bf16.msra.mxu0 %v3485
    %5566 = vmatprep.subr.bf16.mxu0 %v3490
    %5567 = vmatpush1.bf16.msra.mxu0 %v3489
    %5568 = vmatprep.subr.bf16.mxu0 %v3494
    %5569 = vmatpush1.bf16.msra.mxu0 %v3493
    %5570 = vmatprep.subr.bf16.mxu0 %v3498
    %5571 = vmatpush1.bf16.msra.mxu0 %v3497
    %5572 = vmatprep.mubr.bf16.mxu0 %v935
    %5573 = vmatmul.mubr.bf16.gmra.mrb[0].mxu0 %v921
    %v5574 = vpop.f32.mrb[0].mxu0
    %v5575 = vadd.f32 %v885, %v5574
    %v5576 = vpop.f32.mrb[0].mxu0
    %v5577 = vadd.f32 %v889, %v5576
    %v5578 = vpop.f32.mrb[0].mxu0
    %v5579 = vpop.f32.mrb[0].mxu0
    %5580 = vdwg.mxu0
    %5581 = vmatprep.subr.bf16.mxu0 %v3502
    %5582 = vmatpush1.bf16.msra.mxu0 %v3501
    %5583 = vmatprep.subr.bf16.mxu0 %v3506
    %5584 = vmatpush1.bf16.msra.mxu0 %v3505
    %5585 = vmatprep.subr.bf16.mxu0 %v3510
    %5586 = vmatpush1.bf16.msra.mxu0 %v3509
    %5587 = vmatprep.subr.bf16.mxu0 %v3514
    %5588 = vmatpush1.bf16.msra.mxu0 %v3513
    %5589 = vmatprep.subr.bf16.mxu0 %v3518
    %5590 = vmatpush1.bf16.msra.mxu0 %v3517
    %5591 = vmatprep.subr.bf16.mxu0 %v3522
    %5592 = vmatpush1.bf16.msra.mxu0 %v3521
    %5593 = vmatprep.subr.bf16.mxu0 %v3526
    %5594 = vmatpush1.bf16.msra.mxu0 %v3525
    %5595 = vmatprep.subr.bf16.mxu0 %v3530
    %5596 = vmatpush1.bf16.msra.mxu0 %v3529
    %5597 = vmatprep.subr.bf16.mxu0 %v3534
    %5598 = vmatpush1.bf16.msra.mxu0 %v3533
    %5599 = vmatprep.subr.bf16.mxu0 %v3538
    %5600 = vmatpush1.bf16.msra.mxu0 %v3537
    %5601 = vmatprep.subr.bf16.mxu0 %v3542
    %5602 = vmatpush1.bf16.msra.mxu0 %v3541
    %5603 = vmatprep.subr.bf16.mxu0 %v3546
    %5604 = vmatpush1.bf16.msra.mxu0 %v3545
    %5605 = vmatprep.subr.bf16.mxu0 %v3550
    %5606 = vmatpush1.bf16.msra.mxu0 %v3549
    %5607 = vmatprep.subr.bf16.mxu0 %v3554
    %5608 = vmatpush1.bf16.msra.mxu0 %v3553
    %5609 = vmatprep.subr.bf16.mxu0 %v3558
    %5610 = vmatpush1.bf16.msra.mxu0 %v3557
    %5611 = vmatprep.subr.bf16.mxu0 %v3562
    %5612 = vmatpush1.bf16.msra.mxu0 %v3561
    %5613 = vmatprep.mubr.bf16.mxu0 %v945
    %5614 = vmatmul.mubr.bf16.gmra.mrb[0].mxu0 %v943
    %v5615 = vpop.f32.mrb[0].mxu0
    %v5616 = vadd.f32 %v5575, %v5615
    %v5617 = vpop.f32.mrb[0].mxu0
    %v5618 = vadd.f32 %v5577, %v5617
    %v5619 = vpop.f32.mrb[0].mxu0
    %v5620 = vpop.f32.mrb[0].mxu0
    %5621 = vdwg.mxu0
    %5622 = vmatprep.subr.bf16.mxu0 %v3566
    %5623 = vmatpush1.bf16.msra.mxu0 %v3565
    %5624 = vmatprep.subr.bf16.mxu0 %v3570
    %5625 = vmatpush1.bf16.msra.mxu0 %v3569
    %5626 = vmatprep.subr.bf16.mxu0 %v3574
    %5627 = vmatpush1.bf16.msra.mxu0 %v3573
    %5628 = vmatprep.subr.bf16.mxu0 %v3578
    %5629 = vmatpush1.bf16.msra.mxu0 %v3577
    %5630 = vmatprep.subr.bf16.mxu0 %v3582
    %5631 = vmatpush1.bf16.msra.mxu0 %v3581
    %5632 = vmatprep.subr.bf16.mxu0 %v3586
    %5633 = vmatpush1.bf16.msra.mxu0 %v3585
    %5634 = vmatprep.subr.bf16.mxu0 %v3590
    %5635 = vmatpush1.bf16.msra.mxu0 %v3589
    %5636 = vmatprep.subr.bf16.mxu0 %v3594
    %5637 = vmatpush1.bf16.msra.mxu0 %v3593
    %5638 = vmatprep.subr.bf16.mxu0 %v3598
    %5639 = vmatpush1.bf16.msra.mxu0 %v3597
    %5640 = vmatprep.subr.bf16.mxu0 %v3602
    %5641 = vmatpush1.bf16.msra.mxu0 %v3601
    %5642 = vmatprep.subr.bf16.mxu0 %v3606
    %5643 = vmatpush1.bf16.msra.mxu0 %v3605
    %5644 = vmatprep.subr.bf16.mxu0 %v3610
    %5645 = vmatpush1.bf16.msra.mxu0 %v3609
    %5646 = vmatprep.subr.bf16.mxu0 %v3614
    %5647 = vmatpush1.bf16.msra.mxu0 %v3613
    %5648 = vmatprep.subr.bf16.mxu0 %v3618
    %5649 = vmatpush1.bf16.msra.mxu0 %v3617
    %5650 = vmatprep.subr.bf16.mxu0 %v3622
    %5651 = vmatpush1.bf16.msra.mxu0 %v3621
    %5652 = vmatprep.subr.bf16.mxu0 %v3626
    %5653 = vmatpush1.bf16.msra.mxu0 %v3625
    %5654 = vmatprep.mubr.bf16.mxu0 %v942
    %5655 = vmatmul.mubr.bf16.gmra.mrb[0].mxu0 %v928
    %v5656 = vpop.f32.mrb[0].mxu0
    %v5657 = vadd.f32 %v5616, %v5656
    %v5658 = vpop.f32.mrb[0].mxu0
    %v5659 = vadd.f32 %v5618, %v5658
    %v5660 = vpop.f32.mrb[0].mxu0
    %v5661 = vpop.f32.mrb[0].mxu0
    %5662 = vdwg.mxu0
    %5663 = vmatprep.subr.bf16.mxu0 %v3630
    %5664 = vmatpush1.bf16.msra.mxu0 %v3629
    %5665 = vmatprep.subr.bf16.mxu0 %v3634
    %5666 = vmatpush1.bf16.msra.mxu0 %v3633
    %5667 = vmatprep.subr.bf16.mxu0 %v3638
    %5668 = vmatpush1.bf16.msra.mxu0 %v3637
    %5669 = vmatprep.subr.bf16.mxu0 %v3642
    %5670 = vmatpush1.bf16.msra.mxu0 %v3641
    %5671 = vmatprep.subr.bf16.mxu0 %v3646
    %5672 = vmatpush1.bf16.msra.mxu0 %v3645
    %5673 = vmatprep.subr.bf16.mxu0 %v3650
    %5674 = vmatpush1.bf16.msra.mxu0 %v3649
    %5675 = vmatprep.subr.bf16.mxu0 %v3654
    %5676 = vmatpush1.bf16.msra.mxu0 %v3653
    %5677 = vmatprep.subr.bf16.mxu0 %v3658
    %5678 = vmatpush1.bf16.msra.mxu0 %v3657
    %5679 = vmatprep.subr.bf16.mxu0 %v3662
    %5680 = vmatpush1.bf16.msra.mxu0 %v3661
    %5681 = vmatprep.subr.bf16.mxu0 %v3666
    %5682 = vmatpush1.bf16.msra.mxu0 %v3665
    %5683 = vmatprep.subr.bf16.mxu0 %v3670
    %5684 = vmatpush1.bf16.msra.mxu0 %v3669
    %5685 = vmatprep.subr.bf16.mxu0 %v3674
    %5686 = vmatpush1.bf16.msra.mxu0 %v3673
    %5687 = vmatprep.subr.bf16.mxu0 %v3678
    %5688 = vmatpush1.bf16.msra.mxu0 %v3677
    %5689 = vmatprep.subr.bf16.mxu0 %v3682
    %5690 = vmatpush1.bf16.msra.mxu0 %v3681
    %5691 = vmatprep.subr.bf16.mxu0 %v3686
    %5692 = vmatpush1.bf16.msra.mxu0 %v3685
    %5693 = vmatprep.subr.bf16.mxu0 %v3690
    %5694 = vmatpush1.bf16.msra.mxu0 %v3689
    %5695 = vmatprep.mubr.bf16.mxu0 %v946
    %5696 = vmatmul.mubr.bf16.gmra.mrb[0].mxu0 %v944
    %v5697 = vpop.f32.mrb[0].mxu0
    %v5698 = vadd.f32 %v5657, %v5697
    %v5699 = vpop.f32.mrb[0].mxu0
    %v5700 = vadd.f32 %v5659, %v5699
    %v5701 = vpop.f32.mrb[0].mxu0
    %v5702 = vpop.f32.mrb[0].mxu0
    %5703 = vdwg.mxu0
    %5704 = vmatprep.subr.bf16.mxu0 %v3694
    %5705 = vmatpush1.bf16.msra.mxu0 %v3693
    %5706 = vmatprep.subr.bf16.mxu0 %v3698
    %5707 = vmatpush1.bf16.msra.mxu0 %v3697
    %5708 = vmatprep.subr.bf16.mxu0 %v3702
    %5709 = vmatpush1.bf16.msra.mxu0 %v3701
    %5710 = vmatprep.subr.bf16.mxu0 %v3706
    %5711 = vmatpush1.bf16.msra.mxu0 %v3705
    %5712 = vmatprep.subr.bf16.mxu0 %v3710
    %5713 = vmatpush1.bf16.msra.mxu0 %v3709
    %5714 = vmatprep.subr.bf16.mxu0 %v3714
    %5715 = vmatpush1.bf16.msra.mxu0 %v3713
    %5716 = vmatprep.subr.bf16.mxu0 %v3718
    %5717 = vmatpush1.bf16.msra.mxu0 %v3717
    %5718 = vmatprep.subr.bf16.mxu0 %v3722
    %5719 = vmatpush1.bf16.msra.mxu0 %v3721
    %5720 = vmatprep.subr.bf16.mxu0 %v3726
    %5721 = vmatpush1.bf16.msra.mxu0 %v3725
    %5722 = vmatprep.subr.bf16.mxu0 %v3730
    %5723 = vmatpush1.bf16.msra.mxu0 %v3729
    %5724 = vmatprep.subr.bf16.mxu0 %v3734
    %5725 = vmatpush1.bf16.msra.mxu0 %v3733
    %5726 = vmatprep.subr.bf16.mxu0 %v3738
    %5727 = vmatpush1.bf16.msra.mxu0 %v3737
    %5728 = vmatprep.subr.bf16.mxu0 %v3742
    %5729 = vmatpush1.bf16.msra.mxu0 %v3741
    %5730 = vmatprep.subr.bf16.mxu0 %v3746
    %5731 = vmatpush1.bf16.msra.mxu0 %v3745
    %5732 = vmatprep.subr.bf16.mxu0 %v3750
    %5733 = vmatpush1.bf16.msra.mxu0 %v3749
    %5734 = vmatprep.subr.bf16.mxu0 %v3754
    %5735 = vmatpush1.bf16.msra.mxu0 %v3753
    %5736 = vmatprep.mubr.bf16.mxu0 %v984
    %5737 = vmatmul.mubr.bf16.gmra.mrb[0].mxu0 %v970
    %v5738 = vpop.f32.mrb[0].mxu0
    %v5739 = vadd.f32 %v5698, %v5738
    %v5740 = vpop.f32.mrb[0].mxu0
    %v5741 = vadd.f32 %v5700, %v5740
    %v5742 = vpop.f32.mrb[0].mxu0
    %v5743 = vpop.f32.mrb[0].mxu0
    %5744 = vdwg.mxu0
    %5745 = vmatprep.subr.bf16.mxu0 %v3758
    %5746 = vmatpush1.bf16.msra.mxu0 %v3757
    %5747 = vmatprep.subr.bf16.mxu0 %v3762
    %5748 = vmatpush1.bf16.msra.mxu0 %v3761
    %5749 = vmatprep.subr.bf16.mxu0 %v3766
    %5750 = vmatpush1.bf16.msra.mxu0 %v3765
    %5751 = vmatprep.subr.bf16.mxu0 %v3770
    %5752 = vmatpush1.bf16.msra.mxu0 %v3769
    %5753 = vmatprep.subr.bf16.mxu0 %v3774
    %5754 = vmatpush1.bf16.msra.mxu0 %v3773
    %5755 = vmatprep.subr.bf16.mxu0 %v3778
    %5756 = vmatpush1.bf16.msra.mxu0 %v3777
    %5757 = vmatprep.subr.bf16.mxu0 %v3782
    %5758 = vmatpush1.bf16.msra.mxu0 %v3781
    %5759 = vmatprep.subr.bf16.mxu0 %v3786
    %5760 = vmatpush1.bf16.msra.mxu0 %v3785
    %5761 = vmatprep.subr.bf16.mxu0 %v3790
    %5762 = vmatpush1.bf16.msra.mxu0 %v3789
    %5763 = vmatprep.subr.bf16.mxu0 %v3794
    %5764 = vmatpush1.bf16.msra.mxu0 %v3793
    %5765 = vmatprep.subr.bf16.mxu0 %v3798
    %5766 = vmatpush1.bf16.msra.mxu0 %v3797
    %5767 = vmatprep.subr.bf16.mxu0 %v3802
    %5768 = vmatpush1.bf16.msra.mxu0 %v3801
    %5769 = vmatprep.subr.bf16.mxu0 %v3806
    %5770 = vmatpush1.bf16.msra.mxu0 %v3805
    %5771 = vmatprep.subr.bf16.mxu0 %v3810
    %5772 = vmatpush1.bf16.msra.mxu0 %v3809
    %5773 = vmatprep.subr.bf16.mxu0 %v3814
    %5774 = vmatpush1.bf16.msra.mxu0 %v3813
    %5775 = vmatprep.subr.bf16.mxu0 %v3818
    %5776 = vmatpush1.bf16.msra.mxu0 %v3817
    %5777 = vmatprep.mubr.bf16.mxu0 %v994
    %5778 = vmatmul.mubr.bf16.gmra.mrb[0].mxu0 %v992
    %v5779 = vpop.f32.mrb[0].mxu0
    %v5780 = vadd.f32 %v5739, %v5779
    %v5781 = vpop.f32.mrb[0].mxu0
    %v5782 = vadd.f32 %v5741, %v5781
    %v5783 = vpop.f32.mrb[0].mxu0
    %v5784 = vpop.f32.mrb[0].mxu0
    %5785 = vdwg.mxu0
    %5786 = vmatprep.subr.bf16.mxu0 %v3822
    %5787 = vmatpush1.bf16.msra.mxu0 %v3821
    %5788 = vmatprep.subr.bf16.mxu0 %v3826
    %5789 = vmatpush1.bf16.msra.mxu0 %v3825
    %5790 = vmatprep.subr.bf16.mxu0 %v3830
    %5791 = vmatpush1.bf16.msra.mxu0 %v3829
    %5792 = vmatprep.subr.bf16.mxu0 %v3834
    %5793 = vmatpush1.bf16.msra.mxu0 %v3833
    %5794 = vmatprep.subr.bf16.mxu0 %v3838
    %5795 = vmatpush1.bf16.msra.mxu0 %v3837
    %5796 = vmatprep.subr.bf16.mxu0 %v3842
    %5797 = vmatpush1.bf16.msra.mxu0 %v3841
    %5798 = vmatprep.subr.bf16.mxu0 %v3846
    %5799 = vmatpush1.bf16.msra.mxu0 %v3845
    %5800 = vmatprep.subr.bf16.mxu0 %v3850
    %5801 = vmatpush1.bf16.msra.mxu0 %v3849
    %5802 = vmatprep.subr.bf16.mxu0 %v3854
    %5803 = vmatpush1.bf16.msra.mxu0 %v3853
    %5804 = vmatprep.subr.bf16.mxu0 %v3858
    %5805 = vmatpush1.bf16.msra.mxu0 %v3857
    %5806 = vmatprep.subr.bf16.mxu0 %v3862
    %5807 = vmatpush1.bf16.msra.mxu0 %v3861
    %5808 = vmatprep.subr.bf16.mxu0 %v3866
    %5809 = vmatpush1.bf16.msra.mxu0 %v3865
    %5810 = vmatprep.subr.bf16.mxu0 %v3870
    %5811 = vmatpush1.bf16.msra.mxu0 %v3869
    %5812 = vmatprep.subr.bf16.mxu0 %v3874
    %5813 = vmatpush1.bf16.msra.mxu0 %v3873
    %5814 = vmatprep.subr.bf16.mxu0 %v3878
    %5815 = vmatpush1.bf16.msra.mxu0 %v3877
    %5816 = vmatprep.subr.bf16.mxu0 %v3882
    %5817 = vmatpush1.bf16.msra.mxu0 %v3881
    %5818 = vmatprep.mubr.bf16.mxu0 %v991
    %5819 = vmatmul.mubr.bf16.gmra.mrb[0].mxu0 %v977
    %v5820 = vpop.f32.mrb[0].mxu0
    %v5821 = vadd.f32 %v5780, %v5820
    %v5822 = vpop.f32.mrb[0].mxu0
    %v5823 = vadd.f32 %v5782, %v5822
    %v5824 = vpop.f32.mrb[0].mxu0
    %v5825 = vpop.f32.mrb[0].mxu0
    %5826 = vdwg.mxu0
    %5827 = vmatprep.subr.bf16.mxu0 %v3886
    %5828 = vmatpush1.bf16.msra.mxu0 %v3885
    %5829 = vmatprep.subr.bf16.mxu0 %v3890
    %5830 = vmatpush1.bf16.msra.mxu0 %v3889
    %5831 = vmatprep.subr.bf16.mxu0 %v3894
    %5832 = vmatpush1.bf16.msra.mxu0 %v3893
    %5833 = vmatprep.subr.bf16.mxu0 %v3898
    %5834 = vmatpush1.bf16.msra.mxu0 %v3897
    %5835 = vmatprep.subr.bf16.mxu0 %v3902
    %5836 = vmatpush1.bf16.msra.mxu0 %v3901
    %5837 = vmatprep.subr.bf16.mxu0 %v3906
    %5838 = vmatpush1.bf16.msra.mxu0 %v3905
    %5839 = vmatprep.subr.bf16.mxu0 %v3910
    %5840 = vmatpush1.bf16.msra.mxu0 %v3909
    %5841 = vmatprep.subr.bf16.mxu0 %v3914
    %5842 = vmatpush1.bf16.msra.mxu0 %v3913
    %5843 = vmatprep.subr.bf16.mxu0 %v3918
    %5844 = vmatpush1.bf16.msra.mxu0 %v3917
    %5845 = vmatprep.subr.bf16.mxu0 %v3922
    %5846 = vmatpush1.bf16.msra.mxu0 %v3921
    %5847 = vmatprep.subr.bf16.mxu0 %v3926
    %5848 = vmatpush1.bf16.msra.mxu0 %v3925
    %5849 = vmatprep.subr.bf16.mxu0 %v3930
    %5850 = vmatpush1.bf16.msra.mxu0 %v3929
    %5851 = vmatprep.subr.bf16.mxu0 %v3934
    %5852 = vmatpush1.bf16.msra.mxu0 %v3933
    %5853 = vmatprep.subr.bf16.mxu0 %v3938
    %5854 = vmatpush1.bf16.msra.mxu0 %v3937
    %5855 = vmatprep.subr.bf16.mxu0 %v3942
    %5856 = vmatpush1.bf16.msra.mxu0 %v3941
    %5857 = vmatprep.subr.bf16.mxu0 %v3946
    %5858 = vmatpush1.bf16.msra.mxu0 %v3945
    %5859 = vmatprep.mubr.bf16.mxu0 %v995
    %5860 = vmatmul.mubr.bf16.gmra.mrb[0].mxu0 %v993
    %v5861 = vpop.f32.mrb[0].mxu0
    %v5862 = vadd.f32 %v5821, %v5861
    %v5863 = vpop.f32.mrb[0].mxu0
    %v5864 = vadd.f32 %v5823, %v5863
    %v5865 = vpop.f32.mrb[0].mxu0
    %v5866 = vpop.f32.mrb[0].mxu0
    %5867 = vdwg.mxu0
    %5868 = vmatprep.subr.bf16.mxu0 %v3950
    %5869 = vmatpush1.bf16.msra.mxu0 %v3949
    %5870 = vmatprep.subr.bf16.mxu0 %v3954
    %5871 = vmatpush1.bf16.msra.mxu0 %v3953
    %5872 = vmatprep.subr.bf16.mxu0 %v3958
    %5873 = vmatpush1.bf16.msra.mxu0 %v3957
    %5874 = vmatprep.subr.bf16.mxu0 %v3962
    %5875 = vmatpush1.bf16.msra.mxu0 %v3961
    %5876 = vmatprep.subr.bf16.mxu0 %v3966
    %5877 = vmatpush1.bf16.msra.mxu0 %v3965
    %5878 = vmatprep.subr.bf16.mxu0 %v3970
    %5879 = vmatpush1.bf16.msra.mxu0 %v3969
    %5880 = vmatprep.subr.bf16.mxu0 %v3974
    %5881 = vmatpush1.bf16.msra.mxu0 %v3973
    %5882 = vmatprep.subr.bf16.mxu0 %v3978
    %5883 = vmatpush1.bf16.msra.mxu0 %v3977
    %5884 = vmatprep.subr.bf16.mxu0 %v3982
    %5885 = vmatpush1.bf16.msra.mxu0 %v3981
    %5886 = vmatprep.subr.bf16.mxu0 %v3986
    %5887 = vmatpush1.bf16.msra.mxu0 %v3985
    %5888 = vmatprep.subr.bf16.mxu0 %v3990
    %5889 = vmatpush1.bf16.msra.mxu0 %v3989
    %5890 = vmatprep.subr.bf16.mxu0 %v3994
    %5891 = vmatpush1.bf16.msra.mxu0 %v3993
    %5892 = vmatprep.subr.bf16.mxu0 %v3998
    %5893 = vmatpush1.bf16.msra.mxu0 %v3997
    %5894 = vmatprep.subr.bf16.mxu0 %v4002
    %5895 = vmatpush1.bf16.msra.mxu0 %v4001
    %5896 = vmatprep.subr.bf16.mxu0 %v4006
    %5897 = vmatpush1.bf16.msra.mxu0 %v4005
    %5898 = vmatprep.subr.bf16.mxu0 %v4010
    %5899 = vmatpush1.bf16.msra.mxu0 %v4009
    %5900 = vmatprep.mubr.bf16.mxu0 %v1033
    %5901 = vmatmul.mubr.bf16.gmra.mrb[0].mxu0 %v1019
    %v5902 = vpop.f32.mrb[0].mxu0
    %v5903 = vadd.f32 %v5862, %v5902
    %v5904 = vpop.f32.mrb[0].mxu0
    %v5905 = vadd.f32 %v5864, %v5904
    %v5906 = vpop.f32.mrb[0].mxu0
    %v5907 = vpop.f32.mrb[0].mxu0
    %5908 = vdwg.mxu0
    %5909 = vmatprep.subr.bf16.mxu0 %v4014
    %5910 = vmatpush1.bf16.msra.mxu0 %v4013
    %5911 = vmatprep.subr.bf16.mxu0 %v4018
    %5912 = vmatpush1.bf16.msra.mxu0 %v4017
    %5913 = vmatprep.subr.bf16.mxu0 %v4022
    %5914 = vmatpush1.bf16.msra.mxu0 %v4021
    %5915 = vmatprep.subr.bf16.mxu0 %v4026
    %5916 = vmatpush1.bf16.msra.mxu0 %v4025
    %5917 = vmatprep.subr.bf16.mxu0 %v4030
    %5918 = vmatpush1.bf16.msra.mxu0 %v4029
    %5919 = vmatprep.subr.bf16.mxu0 %v4034
    %5920 = vmatpush1.bf16.msra.mxu0 %v4033
    %5921 = vmatprep.subr.bf16.mxu0 %v4038
    %5922 = vmatpush1.bf16.msra.mxu0 %v4037
    %5923 = vmatprep.subr.bf16.mxu0 %v4042
    %5924 = vmatpush1.bf16.msra.mxu0 %v4041
    %5925 = vmatprep.subr.bf16.mxu0 %v4046
    %5926 = vmatpush1.bf16.msra.mxu0 %v4045
    %5927 = vmatprep.subr.bf16.mxu0 %v4050
    %5928 = vmatpush1.bf16.msra.mxu0 %v4049
    %5929 = vmatprep.subr.bf16.mxu0 %v4054
    %5930 = vmatpush1.bf16.msra.mxu0 %v4053
    %5931 = vmatprep.subr.bf16.mxu0 %v4058
    %5932 = vmatpush1.bf16.msra.mxu0 %v4057
    %5933 = vmatprep.subr.bf16.mxu0 %v4062
    %5934 = vmatpush1.bf16.msra.mxu0 %v4061
    %5935 = vmatprep.subr.bf16.mxu0 %v4066
    %5936 = vmatpush1.bf16.msra.mxu0 %v4065
    %5937 = vmatprep.subr.bf16.mxu0 %v4070
    %5938 = vmatpush1.bf16.msra.mxu0 %v4069
    %5939 = vmatprep.subr.bf16.mxu0 %v4074
    %5940 = vmatpush1.bf16.msra.mxu0 %v4073
    %5941 = vmatprep.mubr.bf16.mxu0 %v1043
    %5942 = vmatmul.mubr.bf16.gmra.mrb[0].mxu0 %v1041
    %v5943 = vpop.f32.mrb[0].mxu0
    %v5944 = vadd.f32 %v5903, %v5943
    %v5945 = vpop.f32.mrb[0].mxu0
    %v5946 = vadd.f32 %v5905, %v5945
    %v5947 = vpop.f32.mrb[0].mxu0
    %v5948 = vpop.f32.mrb[0].mxu0
    %5949 = vdwg.mxu0
    %5950 = vmatprep.subr.bf16.mxu0 %v4078
    %5951 = vmatpush1.bf16.msra.mxu0 %v4077
    %5952 = vmatprep.subr.bf16.mxu0 %v4082
    %5953 = vmatpush1.bf16.msra.mxu0 %v4081
    %5954 = vmatprep.subr.bf16.mxu0 %v4086
    %5955 = vmatpush1.bf16.msra.mxu0 %v4085
    %5956 = vmatprep.subr.bf16.mxu0 %v4090
    %5957 = vmatpush1.bf16.msra.mxu0 %v4089
    %5958 = vmatprep.subr.bf16.mxu0 %v4094
    %5959 = vmatpush1.bf16.msra.mxu0 %v4093
    %5960 = vmatprep.subr.bf16.mxu0 %v4098
    %5961 = vmatpush1.bf16.msra.mxu0 %v4097
    %5962 = vmatprep.subr.bf16.mxu0 %v4102
    %5963 = vmatpush1.bf16.msra.mxu0 %v4101
    %5964 = vmatprep.subr.bf16.mxu0 %v4106
    %5965 = vmatpush1.bf16.msra.mxu0 %v4105
    %5966 = vmatprep.subr.bf16.mxu0 %v4110
    %5967 = vmatpush1.bf16.msra.mxu0 %v4109
    %5968 = vmatprep.subr.bf16.mxu0 %v4114
    %5969 = vmatpush1.bf16.msra.mxu0 %v4113
    %5970 = vmatprep.subr.bf16.mxu0 %v4118
    %5971 = vmatpush1.bf16.msra.mxu0 %v4117
    %5972 = vmatprep.subr.bf16.mxu0 %v4122
    %5973 = vmatpush1.bf16.msra.mxu0 %v4121
    %5974 = vmatprep.subr.bf16.mxu0 %v4126
    %5975 = vmatpush1.bf16.msra.mxu0 %v4125
    %5976 = vmatprep.subr.bf16.mxu0 %v4130
    %5977 = vmatpush1.bf16.msra.mxu0 %v4129
    %5978 = vmatprep.subr.bf16.mxu0 %v4134
    %5979 = vmatpush1.bf16.msra.mxu0 %v4133
    %5980 = vmatprep.subr.bf16.mxu0 %v4138
    %5981 = vmatpush1.bf16.msra.mxu0 %v4137
    %5982 = vmatprep.mubr.bf16.mxu0 %v1040
    %5983 = vmatmul.mubr.bf16.gmra.mrb[0].mxu0 %v1026
    %v5984 = vpop.f32.mrb[0].mxu0
    %v5985 = vadd.f32 %v5944, %v5984
    %v5986 = vpop.f32.mrb[0].mxu0
    %v5987 = vadd.f32 %v5946, %v5986
    %v5988 = vpop.f32.mrb[0].mxu0
    %v5989 = vpop.f32.mrb[0].mxu0
    %5990 = vdwg.mxu0
    %5991 = vmatprep.subr.bf16.mxu0 %v4142
    %5992 = vmatpush1.bf16.msra.mxu0 %v4141
    %5993 = vmatprep.subr.bf16.mxu0 %v4146
    %5994 = vmatpush1.bf16.msra.mxu0 %v4145
    %5995 = vmatprep.subr.bf16.mxu0 %v4150
    %5996 = vmatpush1.bf16.msra.mxu0 %v4149
    %5997 = vmatprep.subr.bf16.mxu0 %v4154
    %5998 = vmatpush1.bf16.msra.mxu0 %v4153
    %5999 = vmatprep.subr.bf16.mxu0 %v4158
    %6000 = vmatpush1.bf16.msra.mxu0 %v4157
    %6001 = vmatprep.subr.bf16.mxu0 %v4162
    %6002 = vmatpush1.bf16.msra.mxu0 %v4161
    %6003 = vmatprep.subr.bf16.mxu0 %v4166
    %6004 = vmatpush1.bf16.msra.mxu0 %v4165
    %6005 = vmatprep.subr.bf16.mxu0 %v4170
    %6006 = vmatpush1.bf16.msra.mxu0 %v4169
    %6007 = vmatprep.subr.bf16.mxu0 %v4174
    %6008 = vmatpush1.bf16.msra.mxu0 %v4173
    %6009 = vmatprep.subr.bf16.mxu0 %v4178
    %6010 = vmatpush1.bf16.msra.mxu0 %v4177
    %6011 = vmatprep.subr.bf16.mxu0 %v4182
    %6012 = vmatpush1.bf16.msra.mxu0 %v4181
    %6013 = vmatprep.subr.bf16.mxu0 %v4186
    %6014 = vmatpush1.bf16.msra.mxu0 %v4185
    %6015 = vmatprep.subr.bf16.mxu0 %v4190
    %6016 = vmatpush1.bf16.msra.mxu0 %v4189
    %6017 = vmatprep.subr.bf16.mxu0 %v4194
    %6018 = vmatpush1.bf16.msra.mxu0 %v4193
    %6019 = vmatprep.subr.bf16.mxu0 %v4198
    %6020 = vmatpush1.bf16.msra.mxu0 %v4197
    %6021 = vmatprep.subr.bf16.mxu0 %v4202
    %6022 = vmatpush1.bf16.msra.mxu0 %v4201
    %6023 = vmatprep.mubr.bf16.mxu0 %v1044
    %6024 = vmatmul.mubr.bf16.gmra.mrb[0].mxu0 %v1042
    %v6025 = vpop.f32.mrb[0].mxu0
    %v6026 = vadd.f32 %v5985, %v6025
    %v6027 = vpop.f32.mrb[0].mxu0
    %v6028 = vadd.f32 %v5987, %v6027
    %v6029 = vpop.f32.mrb[0].mxu0
    %v6030 = vpop.f32.mrb[0].mxu0
    %6031 = vdwg.mxu0
    %6032 = vmatprep.subr.bf16.mxu0 %v4206
    %6033 = vmatpush1.bf16.msra.mxu0 %v4205
    %6034 = vmatprep.subr.bf16.mxu0 %v4210
    %6035 = vmatpush1.bf16.msra.mxu0 %v4209
    %6036 = vmatprep.subr.bf16.mxu0 %v4214
    %6037 = vmatpush1.bf16.msra.mxu0 %v4213
    %6038 = vmatprep.subr.bf16.mxu0 %v4218
    %6039 = vmatpush1.bf16.msra.mxu0 %v4217
    %6040 = vmatprep.subr.bf16.mxu0 0
    %6041 = vmatpush1.bf16.msra.mxu0 0
    %6042 = vmatprep.subr.bf16.mxu0 0
    %6043 = vmatpush1.bf16.msra.mxu0 0
    %6044 = vmatprep.subr.bf16.mxu0 0
    %6045 = vmatpush1.bf16.msra.mxu0 0
    %6046 = vmatprep.subr.bf16.mxu0 0
    %6047 = vmatpush1.bf16.msra.mxu0 0
    %6048 = vmatprep.subr.bf16.mxu0 0
    %6049 = vmatpush1.bf16.msra.mxu0 0
    %6050 = vmatprep.subr.bf16.mxu0 0
    %6051 = vmatpush1.bf16.msra.mxu0 0
    %6052 = vmatprep.subr.bf16.mxu0 0
    %6053 = vmatpush1.bf16.msra.mxu0 0
    %6054 = vmatprep.subr.bf16.mxu0 0
    %6055 = vmatpush1.bf16.msra.mxu0 0
    %6056 = vmatprep.subr.bf16.mxu0 0
    %6057 = vmatpush1.bf16.msra.mxu0 0
    %6058 = vmatprep.subr.bf16.mxu0 0
    %6059 = vmatpush1.bf16.msra.mxu0 0
    %6060 = vmatprep.subr.bf16.mxu0 0
    %6061 = vmatpush1.bf16.msra.mxu0 0
    %6062 = vmatprep.subr.bf16.mxu0 0
    %6063 = vmatpush1.bf16.msra.mxu0 0
    %6064 = vmatprep.mubr.bf16.mxu0 0
    %6065 = vmatmul.mubr.bf16.gmra.mrb[0].mxu0 %v5005
    %v6066 = vpop.f32.mrb[0].mxu0
    %v6067 = vadd.f32 %v6026, %v6066
    %v6068 = vpop.f32.mrb[0].mxu0
    %v6069 = vadd.f32 %v6028, %v6068
    %v6070 = vpop.f32.mrb[0].mxu0
    %v6071 = vpop.f32.mrb[0].mxu0
    %6072 = vdwg.mxu0
    %v6073 = vmax.f32 %v5534, 0.0
    %v6074 = vmax.f32 %v5536, 0.0
    %v6075 = vmax.f32 %v6067, 0.0
    %v6076 = vmax.f32 %v6069, 0.0
    %v6077 = vpack.c.bf16 %v6073, %v6073
    %v6078 = vpack.c.bf16 %v6074, %v6074
    %v6079 = vpack.c.bf16 %v6075, %v6075
    %v6080 = vpack.c.bf16 %v6076, %v6076
    %v6081 = vld [vmem:[#allocation8] sm:$0xf]
    %v6082 = vld [vmem:[#allocation8 + $0x4] sm:$0xf]
    %v6083 = vld [vmem:[#allocation8 + $0x8] sm:$0xf]
    %v6084 = vld [vmem:[#allocation8 + $0xc] sm:$0xf]
    %v6085 = vld [vmem:[#allocation8 + $0x10] sm:$0xf]
    %v6086 = vld [vmem:[#allocation8 + $0x14] sm:$0xf]
    %v6087 = vld [vmem:[#allocation8 + $0x18] sm:$0xf]
    %v6088 = vld [vmem:[#allocation8 + $0x1c] sm:$0xf]
    %v6089 = vld [vmem:[#allocation8 + $0x20] sm:$0xf]
    %v6090 = vld [vmem:[#allocation8 + $0x24] sm:$0xf]
    %v6091 = vld [vmem:[#allocation8 + $0x28] sm:$0xf]
    %v6092 = vld [vmem:[#allocation8 + $0x2c] sm:$0xf]
    %v6093 = vld [vmem:[#allocation8 + $0x30] sm:$0xf]
    %v6094 = vld [vmem:[#allocation8 + $0x34] sm:$0xf]
    %v6095 = vld [vmem:[#allocation8 + $0x38] sm:$0xf]
    %v6096 = vld [vmem:[#allocation8 + $0x3c] sm:$0xf]
    %v6097 = vld [vmem:[#allocation8 + $0x40] sm:$0xf]
    %v6098 = vld [vmem:[#allocation8 + $0x44] sm:$0xf]
    %v6099 = vld [vmem:[#allocation8 + $0x48] sm:$0xf]
    %v6100 = vld [vmem:[#allocation8 + $0x4c] sm:$0xf]
    %v6101 = vld [vmem:[#allocation8 + $0x50] sm:$0xf]
    %v6102 = vld [vmem:[#allocation8 + $0x54] sm:$0xf]
    %v6103 = vld [vmem:[#allocation8 + $0x58] sm:$0xf]
    %v6104 = vld [vmem:[#allocation8 + $0x5c] sm:$0xf]
    %v6105 = vld [vmem:[#allocation8 + $0x60] sm:$0xf]
    %v6106 = vld [vmem:[#allocation8 + $0x64] sm:$0xf]
    %v6107 = vld [vmem:[#allocation8 + $0x68] sm:$0xf]
    %v6108 = vld [vmem:[#allocation8 + $0x6c] sm:$0xf]
    %v6109 = vld [vmem:[#allocation8 + $0x70] sm:$0xf]
    %v6110 = vld [vmem:[#allocation8 + $0x74] sm:$0xf]
    %v6111 = vld [vmem:[#allocation8 + $0x78] sm:$0xf]
    %v6112 = vld [vmem:[#allocation8 + $0x7c] sm:$0xf]
    %v6113 = vld [vmem:[#allocation8 + $0x80] sm:$0xf]
    %v6114 = vld [vmem:[#allocation8 + $0x84] sm:$0xf]
    %v6115 = vld [vmem:[#allocation8 + $0x88] sm:$0xf]
    %v6116 = vld [vmem:[#allocation8 + $0x8c] sm:$0xf]
    %v6117 = vld [vmem:[#allocation8 + $0x90] sm:$0xf]
    %v6118 = vld [vmem:[#allocation8 + $0x94] sm:$0xf]
    %v6119 = vld [vmem:[#allocation8 + $0x98] sm:$0xf]
    %v6120 = vld [vmem:[#allocation8 + $0x9c] sm:$0xf]
    %v6121 = vld [vmem:[#allocation8 + $0xa0] sm:$0xf]
    %v6122 = vld [vmem:[#allocation8 + $0xa4] sm:$0xf]
    %v6123 = vld [vmem:[#allocation8 + $0xa8] sm:$0xf]
    %v6124 = vld [vmem:[#allocation8 + $0xac] sm:$0xf]
    %v6125 = vld [vmem:[#allocation8 + $0xb0] sm:$0xf]
    %v6126 = vld [vmem:[#allocation8 + $0xb4] sm:$0xf]
    %v6127 = vld [vmem:[#allocation8 + $0xb8] sm:$0xf]
    %v6128 = vld [vmem:[#allocation8 + $0xbc] sm:$0xf]
    %v6129 = vld [vmem:[#allocation8 + $0xc0] sm:$0xf]
    %v6130 = vld [vmem:[#allocation8 + $0xc4] sm:$0xf]
    %v6131 = vld [vmem:[#allocation8 + $0xc8] sm:$0xf]
    %v6132 = vld [vmem:[#allocation8 + $0xcc] sm:$0xf]
    %v6133 = vld [vmem:[#allocation8 + $0xd0] sm:$0xf]
    %v6134 = vld [vmem:[#allocation8 + $0xd4] sm:$0xf]
    %v6135 = vld [vmem:[#allocation8 + $0xd8] sm:$0xf]
    %v6136 = vld [vmem:[#allocation8 + $0xdc] sm:$0xf]
    %v6137 = vld [vmem:[#allocation8 + $0xe0] sm:$0xf]
    %v6138 = vld [vmem:[#allocation8 + $0xe4] sm:$0xf]
    %v6139 = vld [vmem:[#allocation8 + $0xe8] sm:$0xf]
    %v6140 = vld [vmem:[#allocation8 + $0xec] sm:$0xf]
    %v6141 = vld [vmem:[#allocation8 + $0xf0] sm:$0xf]
    %v6142 = vld [vmem:[#allocation8 + $0xf4] sm:$0xf]
    %v6143 = vld [vmem:[#allocation8 + $0xf8] sm:$0xf]
    %v6144 = vld [vmem:[#allocation8 + $0xfc] sm:$0xf]
    %v6145 = vld [vmem:[#allocation10] sm:$0x1]
    %v6147 = vlaneseq
    %v6148 = vshrl.u32 %v6147, 7
    %v6149 = vsub.s32 0, %v6148
    %v6150 = vrot.slane %v6145, %v6149
    %v6216 = vunpack.c.l.b16 %v6081
    %v6217 = vunpack.c.l.b16 %v6082
    %v6218 = vunpack.c.l.b16 %v6083
    %v6219 = vunpack.c.l.b16 %v6084
    %v6220 = vunpack.c.l.b16 %v6085
    %v6221 = vunpack.c.l.b16 %v6086
    %v6222 = vunpack.c.l.b16 %v6087
    %v6223 = vunpack.c.l.b16 %v6088
    %v6224 = vunpack.c.l.b16 %v6089
    %v6225 = vunpack.c.l.b16 %v6090
    %v6226 = vunpack.c.l.b16 %v6091
    %v6227 = vunpack.c.l.b16 %v6092
    %v6228 = vunpack.c.l.b16 %v6093
    %v6229 = vunpack.c.l.b16 %v6094
    %v6230 = vunpack.c.l.b16 %v6095
    %v6231 = vunpack.c.l.b16 %v6096
    %v6232 = vunpack.c.l.b16 %v6097
    %v6233 = vunpack.c.l.b16 %v6098
    %v6234 = vunpack.c.l.b16 %v6099
    %v6235 = vunpack.c.l.b16 %v6100
    %v6236 = vunpack.c.l.b16 %v6101
    %v6237 = vunpack.c.l.b16 %v6102
    %v6238 = vunpack.c.l.b16 %v6103
    %v6239 = vunpack.c.l.b16 %v6104
    %v6240 = vunpack.c.l.b16 %v6105
    %v6241 = vunpack.c.l.b16 %v6106
    %v6242 = vunpack.c.l.b16 %v6107
    %v6243 = vunpack.c.l.b16 %v6108
    %v6244 = vunpack.c.l.b16 %v6109
    %v6245 = vunpack.c.l.b16 %v6110
    %v6246 = vunpack.c.l.b16 %v6111
    %v6247 = vunpack.c.l.b16 %v6112
    %v6248 = vunpack.c.l.b16 %v6113
    %v6249 = vunpack.c.l.b16 %v6114
    %v6250 = vunpack.c.l.b16 %v6115
    %v6251 = vunpack.c.l.b16 %v6116
    %v6252 = vunpack.c.l.b16 %v6117
    %v6253 = vunpack.c.l.b16 %v6118
    %v6254 = vunpack.c.l.b16 %v6119
    %v6255 = vunpack.c.l.b16 %v6120
    %v6256 = vunpack.c.l.b16 %v6121
    %v6257 = vunpack.c.l.b16 %v6122
    %v6258 = vunpack.c.l.b16 %v6123
    %v6259 = vunpack.c.l.b16 %v6124
    %v6260 = vunpack.c.l.b16 %v6125
    %v6261 = vunpack.c.l.b16 %v6126
    %v6262 = vunpack.c.l.b16 %v6127
    %v6263 = vunpack.c.l.b16 %v6128
    %v6264 = vunpack.c.l.b16 %v6129
    %v6265 = vunpack.c.l.b16 %v6130
    %v6266 = vunpack.c.l.b16 %v6131
    %v6267 = vunpack.c.l.b16 %v6132
    %v6268 = vunpack.c.l.b16 %v6133
    %v6269 = vunpack.c.l.b16 %v6134
    %v6270 = vunpack.c.l.b16 %v6135
    %v6271 = vunpack.c.l.b16 %v6136
    %v6272 = vunpack.c.l.b16 %v6137
    %v6273 = vunpack.c.l.b16 %v6138
    %v6274 = vunpack.c.l.b16 %v6139
    %v6275 = vunpack.c.l.b16 %v6140
    %v6276 = vunpack.c.l.b16 %v6141
    %v6277 = vunpack.c.l.b16 %v6142
    %v6278 = vunpack.c.l.b16 %v6143
    %v6279 = vunpack.c.l.b16 %v6144
    %v6280 = vpack.c.b16 %v6217, %v6216
    %v6281 = vpack.c.b16 %v6219, %v6218
    %v6282 = vpack.c.b16 %v6221, %v6220
    %v6283 = vpack.c.b16 %v6223, %v6222
    %v6284 = vpack.c.b16 %v6225, %v6224
    %v6285 = vpack.c.b16 %v6227, %v6226
    %v6286 = vpack.c.b16 %v6229, %v6228
    %v6287 = vpack.c.b16 %v6231, %v6230
    %v6288 = vpack.c.b16 %v6233, %v6232
    %v6289 = vpack.c.b16 %v6235, %v6234
    %v6290 = vpack.c.b16 %v6237, %v6236
    %v6291 = vpack.c.b16 %v6239, %v6238
    %v6292 = vpack.c.b16 %v6241, %v6240
    %v6293 = vpack.c.b16 %v6243, %v6242
    %v6294 = vpack.c.b16 %v6245, %v6244
    %v6295 = vpack.c.b16 %v6247, %v6246
    %v6296 = vpack.c.b16 %v6249, %v6248
    %v6297 = vpack.c.b16 %v6251, %v6250
    %v6298 = vpack.c.b16 %v6253, %v6252
    %v6299 = vpack.c.b16 %v6255, %v6254
    %v6300 = vpack.c.b16 %v6257, %v6256
    %v6301 = vpack.c.b16 %v6259, %v6258
    %v6302 = vpack.c.b16 %v6261, %v6260
    %v6303 = vpack.c.b16 %v6263, %v6262
    %v6304 = vpack.c.b16 %v6265, %v6264
    %v6305 = vpack.c.b16 %v6267, %v6266
    %v6306 = vpack.c.b16 %v6269, %v6268
    %v6307 = vpack.c.b16 %v6271, %v6270
    %v6308 = vpack.c.b16 %v6273, %v6272
    %v6309 = vpack.c.b16 %v6275, %v6274
    %v6310 = vpack.c.b16 %v6277, %v6276
    %v6311 = vpack.c.b16 %v6279, %v6278
    %6344 = vmatprep.subr.bf16.mxu0 0
    %6345 = vmatpush1.bf16.msra.mxu0 %v6280
    %6346 = vmatprep.subr.bf16.mxu0 0
    %6347 = vmatpush1.bf16.msra.mxu0 %v6281
    %6348 = vmatprep.subr.bf16.mxu0 0
    %6349 = vmatpush1.bf16.msra.mxu0 %v6282
    %6350 = vmatprep.subr.bf16.mxu0 0
    %6351 = vmatpush1.bf16.msra.mxu0 %v6283
    %6352 = vmatprep.subr.bf16.mxu0 0
    %6353 = vmatpush1.bf16.msra.mxu0 %v6284
    %6354 = vmatprep.subr.bf16.mxu0 0
    %6355 = vmatpush1.bf16.msra.mxu0 %v6285
    %6356 = vmatprep.subr.bf16.mxu0 0
    %6357 = vmatpush1.bf16.msra.mxu0 %v6286
    %6358 = vmatprep.subr.bf16.mxu0 0
    %6359 = vmatpush1.bf16.msra.mxu0 %v6287
    %6360 = vmatprep.subr.bf16.mxu0 0
    %6361 = vmatpush1.bf16.msra.mxu0 %v6288
    %6362 = vmatprep.subr.bf16.mxu0 0
    %6363 = vmatpush1.bf16.msra.mxu0 %v6289
    %6364 = vmatprep.subr.bf16.mxu0 0
    %6365 = vmatpush1.bf16.msra.mxu0 %v6290
    %6366 = vmatprep.subr.bf16.mxu0 0
    %6367 = vmatpush1.bf16.msra.mxu0 %v6291
    %6368 = vmatprep.subr.bf16.mxu0 0
    %6369 = vmatpush1.bf16.msra.mxu0 %v6292
    %6370 = vmatprep.subr.bf16.mxu0 0
    %6371 = vmatpush1.bf16.msra.mxu0 %v6293
    %6372 = vmatprep.subr.bf16.mxu0 0
    %6373 = vmatpush1.bf16.msra.mxu0 %v6294
    %6374 = vmatprep.subr.bf16.mxu0 0
    %6375 = vmatpush1.bf16.msra.mxu0 %v6295
    %6376 = vmatprep.mubr.bf16.mxu0 %v6078
    %6377 = vmatmul.mubr.bf16.gmra.mrb[0].mxu0 %v6077
    %v6378 = vpop.f32.mrb[0].mxu0
    %v6379 = vadd.f32 %v6150, %v6378
    %v6380 = vpop.f32.mrb[0].mxu0
    %v6381 = vpop.f32.mrb[0].mxu0
    %v6382 = vpop.f32.mrb[0].mxu0
    %6383 = vdwg.mxu0
    %6384 = vmatprep.subr.bf16.mxu0 0
    %6385 = vmatpush1.bf16.msra.mxu0 %v6296
    %6386 = vmatprep.subr.bf16.mxu0 0
    %6387 = vmatpush1.bf16.msra.mxu0 %v6297
    %6388 = vmatprep.subr.bf16.mxu0 0
    %6389 = vmatpush1.bf16.msra.mxu0 %v6298
    %6390 = vmatprep.subr.bf16.mxu0 0
    %6391 = vmatpush1.bf16.msra.mxu0 %v6299
    %6392 = vmatprep.subr.bf16.mxu0 0
    %6393 = vmatpush1.bf16.msra.mxu0 %v6300
    %6394 = vmatprep.subr.bf16.mxu0 0
    %6395 = vmatpush1.bf16.msra.mxu0 %v6301
    %6396 = vmatprep.subr.bf16.mxu0 0
    %6397 = vmatpush1.bf16.msra.mxu0 %v6302
    %6398 = vmatprep.subr.bf16.mxu0 0
    %6399 = vmatpush1.bf16.msra.mxu0 %v6303
    %6400 = vmatprep.subr.bf16.mxu0 0
    %6401 = vmatpush1.bf16.msra.mxu0 %v6304
    %6402 = vmatprep.subr.bf16.mxu0 0
    %6403 = vmatpush1.bf16.msra.mxu0 %v6305
    %6404 = vmatprep.subr.bf16.mxu0 0
    %6405 = vmatpush1.bf16.msra.mxu0 %v6306
    %6406 = vmatprep.subr.bf16.mxu0 0
    %6407 = vmatpush1.bf16.msra.mxu0 %v6307
    %6408 = vmatprep.subr.bf16.mxu0 0
    %6409 = vmatpush1.bf16.msra.mxu0 %v6308
    %6410 = vmatprep.subr.bf16.mxu0 0
    %6411 = vmatpush1.bf16.msra.mxu0 %v6309
    %6412 = vmatprep.subr.bf16.mxu0 0
    %6413 = vmatpush1.bf16.msra.mxu0 %v6310
    %6414 = vmatprep.subr.bf16.mxu0 0
    %6415 = vmatpush1.bf16.msra.mxu0 %v6311
    %6416 = vmatprep.mubr.bf16.mxu0 %v6080
    %6417 = vmatmul.mubr.bf16.gmra.mrb[0].mxu0 %v6079
    %v6418 = vpop.f32.mrb[0].mxu0
    %v6419 = vadd.f32 %v6379, %v6418
    %v6420 = vpop.f32.mrb[0].mxu0
    %v6421 = vpop.f32.mrb[0].mxu0
    %v6422 = vpop.f32.mrb[0].mxu0
    %6423 = vdwg.mxu0
    %v6424 = vlaneseq
    %v6425 = vand.u32 %v6424, 127
    %vm6426 = vcmp.lt.s32.totalorder %v6425, 7
    %v6427 = vsel %vm6426, %v6419, -1e+30
    %vm6428 = vcmask 1041408
    %v6429 = vsel %vm6428, %v6427, -inf
    %6430 = vmax.xlane.f32.xlu0 %v6429
    %v6431 = vpop.xlane.xlu0 %6430
    %v6432 = vsub.f32 %v6419, %v6431
    %v6433 = vmul.f32 %v6432, 1.442695
    %v6434 = vpow.pop %v6433
    %v6435 = vsel %vm6426, %v6434, 0.0
    %v6436 = vsel %vm6428, %v6435, 0.0
    %6437 = vadd.xlane.f32.xlu0 %v6436
    %v6438 = vpop.xlane.xlu0 %6437
    %v6439 = vrcp.pop %v6438
    %v6440 = vmul.f32 %v6435, %v6439
    %vm6441 = vcmp.eq.s32.totalorder %v6425, 7
    %v6442 = vsel %vm6441, %v6419, 0.0
    %v6443 = vadd.f32 %v6440, %v6442
    %6444 = vst [vmem:[#allocation11] sm:$0x3] %v6443
    // Predicated region
    $region42: #{actor_critic_forward.7} parent=1 // pred_check
      _
    $region43: #{actor_critic_forward.7} parent=1 // pred_check_branch
      %6446 = sbr.rel (0) target = $region45
    $region44: #{actor_critic_forward.7} parent=1 // pred_region
      %s6448 = ssub.s32 32, 32
      %6449 = vsyncadd [#allocation4], %s6448
      %s6451 = sshll.u32 [#allocation11], 4
      %s6452 = int_to_ptr.vmem [resolvable:$true] %s6451
      %6454 = dma.vmem_to_hbm [thread:$0]  %s6452, 32, %s5, [#allocation4]
    $region45: #{actor_critic_forward.7} parent=1 // pred_fallthru
      _
    // Predicated region
    $region46: #{actor_critic_forward.7} parent=1 // pred_check
      _
    $region47: #{actor_critic_forward.7} parent=1 // pred_check_branch
      %6456 = sbr.rel (0) target = $region49
    $region48: #{actor_critic_forward.7} parent=1 // pred_region
      %6457 = dma.done [#allocation4], 32
    $region49: #{actor_critic_forward.7} parent=1 // pred_fallthru
      _
    %6458 = vsyncpa [#allocation3], 1
    %6459 = vsyncpa [#allocation6], 1
    %6460 = vsyncpa [#allocation9], 1
    %6461 = vsyncpa [#allocation4], 1

</llo_original>
